<compile_context>
chip_gen: v6e
topology: v6e:2x2x1
jax: 0.10.0
libtpu: 0.0.40
codegen_flags: <defaults>
</compile_context>

<pallas_src>
import numpy as np
import jax
import jax.numpy as jnp
from jax.experimental import pallas as pl
from jax.experimental.pallas import tpu as pltpu


# ----------------------------------------------------------------------------
# Config (small synthetic T5; lane dims are multiples of 128)
# ----------------------------------------------------------------------------
D_MODEL = 128
N_HEADS = 4
D_HEAD = D_MODEL // N_HEADS
D_FF = 256
N_LAYERS = 2
NUM_BUCKETS = 8
MAX_DISTANCE = 32
VOCAB = 128            # lane-dense lm_head output
L_ENC = 16             # latent / encoder length
L_DEC = 16             # max decoder length
EPS = 1e-6
NEG_INF = -1e9
BF16 = jnp.bfloat16
F32 = jnp.float32

PAD_ID = 0             # also T5 decoder_start_token_id
EOS_ID = 1
UNK_ID = 2
_AA = "ACDEFGHIKLMNPQRSTVWXY"
_ID_TO_AA = {3 + i: c for i, c in enumerate(_AA)}


# ----------------------------------------------------------------------------
# In-kernel helpers
# ----------------------------------------------------------------------------
def _rmsnorm(x, w):
    # T5 LayerNorm: no mean subtraction, variance = mean(x^2), eps = 1e-6.
    var = jnp.mean(x * x, axis=-1, keepdims=True)
    return x * jax.lax.rsqrt(var + EPS) * w


def _softmax(s):
    s = s - jnp.max(s, axis=-1, keepdims=True)
    p = jnp.exp(s)
    return p * pl.reciprocal(jnp.sum(p, axis=-1, keepdims=True), approx=False)


def _split_heads(x):
    # [L, D_MODEL] -> [H, L, D_HEAD] via static lane slices + stack (bf16).
    return jnp.stack(
        [x[:, h * D_HEAD:(h + 1) * D_HEAD] for h in range(N_HEADS)], axis=0
    ).astype(BF16)


def _attend(qp, k, v, bias, w_o):
    """All-head attention in one batched einsum + single output projection.

    qp [Lq, D] projected queries (f32); k, v [Lk, D] (f32);
    bias [H, Lq, Lk] additive (rel-pos + mask) or None; w_o [D, D] bf16.
    T5: no 1/sqrt(d) scaling.  Returns [Lq, D] f32.
    """
    qh, kh, vh = _split_heads(qp), _split_heads(k), _split_heads(v)
    s = jnp.einsum('hqd,hkd->hqk', qh, kh, preferred_element_type=F32)
    if bias is not None:
        s = s + bias
    p = _softmax(s).astype(BF16)
    o = jnp.einsum('hqk,hkd->hqd', p, vh, preferred_element_type=F32)   # [H,Lq,Dh]
    o = jnp.concatenate([o[h] for h in range(N_HEADS)], axis=-1).astype(BF16)
    return jnp.dot(o, w_o, preferred_element_type=F32)                  # [Lq, D]


# ----------------------------------------------------------------------------
# ONE fused kernel: encoder + cross-KV precompute + full greedy decode loop
# ----------------------------------------------------------------------------
def prott5_kernel(latent_ref, embed_ref, enc_bias_ref, dec_bias_ref,
                  e_ln1, e_wq, e_wkv, e_wo, e_ln2, e_wi, e_wf, e_fln,
                  d_ln1, d_wq_s, d_wkv_s, d_wo_s,
                  d_ln2, d_wq_c, d_wkv_c, d_wo_c,
                  d_ln3, d_wi, d_wf, d_fln, lmh,
                  ids_ref, enc_out_ref,
                  self_kv):
    # Zero the self-attn KV cache (scratch persists across grid iterations;
    # stale/uninitialized VMEM could otherwise contain NaN bit patterns).
    self_kv[...] = jnp.zeros_like(self_kv)

    # ---------------- encoder stack ----------------
    x = latent_ref[0].astype(F32)                       # [L_ENC, D]
    enc_bias = enc_bias_ref[...]                        # [H, Le, Le]
    for l in range(N_LAYERS):
        n = _rmsnorm(x, e_ln1[l])
        qp = jnp.dot(n.astype(BF16), e_wq[l], preferred_element_type=F32)
        kv = jnp.dot(n.astype(BF16), e_wkv[l], preferred_element_type=F32)
        x = x + _attend(qp, kv[:, :D_MODEL], kv[:, D_MODEL:], enc_bias, e_wo[l])
        n = _rmsnorm(x, e_ln2[l])
        h = jnp.maximum(
            jnp.dot(n.astype(BF16), e_wi[l], preferred_element_type=F32), 0.0)
        x = x + jnp.dot(h.astype(BF16), e_wf[l], preferred_element_type=F32)
    enc = _rmsnorm(x, e_fln[...])                       # [L_ENC, D]
    enc_out_ref[0] = enc.astype(enc_out_ref.dtype)

    # ---------------- cross-attention K/V, computed ONCE ----------------
    enc_bf = enc.astype(BF16)
    cross_kv = [jnp.dot(enc_bf, d_wkv_c[l], preferred_element_type=F32)
                for l in range(N_LAYERS)]               # each [L_ENC, 2D]

    # ---------------- fused greedy decode loop (KV-cached) ----------------
    embed = embed_ref[...]                              # [VOCAB, D] bf16 (tied)
    lm_w = lmh[...]                                     # [D, VOCAB] bf16 (tied)
    lane = jax.lax.broadcasted_iota(jnp.int32, (1, VOCAB), 1)

    def step(t, carry):
        ids_vec, prev, finished = carry
        # embedding of the previous token as a one-hot MXU matmul (no gather)
        onehot = (lane == prev).astype(BF16)            # [1, VOCAB]
        y = jnp.dot(onehot, embed, preferred_element_type=F32)          # [1, D]
        for l in range(N_LAYERS):
            # causal self-attention with incremental KV cache
            n = _rmsnorm(y, d_ln1[l])
            qp = jnp.dot(n.astype(BF16), d_wq_s[l], preferred_element_type=F32)
            kv = jnp.dot(n.astype(BF16), d_wkv_s[l], preferred_element_type=F32)
            self_kv[l, pl.ds(t, 1), :] = kv             # write row t
            cache = self_kv[l]                          # [L_DEC, 2D]
            bias_row = dec_bias_ref[:, pl.ds(t, 1), :]  # [H,1,L_DEC] rel+causal
            y = y + _attend(qp, cache[:, :D_MODEL], cache[:, D_MODEL:],
                            bias_row, d_wo_s[l])
            # cross-attention to the encoder (no bias)
            n = _rmsnorm(y, d_ln2[l])
            qp = jnp.dot(n.astype(BF16), d_wq_c[l], preferred_element_type=F32)
            y = y + _attend(qp, cross_kv[l][:, :D_MODEL], cross_kv[l][:, D_MODEL:],
                            None, d_wo_c[l])
            # ReLU FFN
            n = _rmsnorm(y, d_ln3[l])
            h = jnp.maximum(
                jnp.dot(n.astype(BF16), d_wi[l], preferred_element_type=F32), 0.0)
            y = y + jnp.dot(h.astype(BF16), d_wf[l], preferred_element_type=F32)
        # final RMSNorm + tied lm_head (T5 d_model**-0.5 rescale), row t only
        y = _rmsnorm(y, d_fln[...])
        logits = jnp.dot((y * (D_MODEL ** -0.5)).astype(BF16), lm_w,
                         preferred_element_type=F32)                    # [1,VOCAB]
        # in-kernel argmax (first max index), stays fully vectorized
        mx = jnp.max(logits, axis=-1, keepdims=True)
        nxt = jnp.min(jnp.where(logits == mx, lane, VOCAB)).astype(jnp.int32)
        nxt = jnp.where(finished, jnp.int32(PAD_ID), nxt).astype(jnp.int32)
        finished = jnp.logical_or(finished, nxt == EOS_ID)
        ids_vec = jnp.where(lane == (t + 1), nxt, ids_vec)
        return ids_vec, nxt, finished

    ids0 = jnp.full((1, VOCAB), PAD_ID, jnp.int32)      # position 0 = start token
    ids_vec, _, _ = jax.lax.fori_loop(
        0, L_DEC - 1, step,
        (ids0, jnp.full((), PAD_ID, jnp.int32), jnp.zeros((), jnp.bool_)))
    ids_ref[0] = ids_vec


# ----------------------------------------------------------------------------
# pallas_call wrapper: whole batch in one launch, grid parallel over sequences
# ----------------------------------------------------------------------------
WEIGHT_KEYS = ("embed", "enc_bias", "dec_bias",
               "enc_ln1", "enc_wq", "enc_wkv", "enc_wo", "enc_ln2",
               "enc_wi", "enc_wf", "enc_final_ln",
               "dec_ln1", "dec_wq_s", "dec_wkv_s", "dec_wo_s",
               "dec_ln2", "dec_wq_c", "dec_wkv_c", "dec_wo_c",
               "dec_ln3", "dec_wi", "dec_wf", "dec_final_ln", "lm_head")


def _const_full_spec(shape):
    # Whole array as one block, same block for every grid point (fetched once).
    zeros = (0,) * len(shape)
    return pl.BlockSpec(shape, lambda b, _z=zeros: _z)


@jax.jit
def generate_ids(params, latent):
    """latent [B, L_ENC, D_MODEL] f32 -> (token ids [B, L_DEC] i32, enc_out)."""
    B = latent.shape[0]
    weights = [params[k] for k in WEIGHT_KEYS]
    in_specs = ([pl.BlockSpec((1, L_ENC, D_MODEL), lambda b: (b, 0, 0))]
                + [_const_full_spec(w.shape) for w in weights])
    out_specs = (pl.BlockSpec((1, 1, VOCAB), lambda b: (b, 0, 0)),
                 pl.BlockSpec((1, L_ENC, D_MODEL), lambda b: (b, 0, 0)))
    out_shape = (jax.ShapeDtypeStruct((B, 1, VOCAB), jnp.int32),
                 jax.ShapeDtypeStruct((B, L_ENC, D_MODEL), F32))
    ids, enc_out = pl.pallas_call(
        prott5_kernel,
        grid=(B,),
        in_specs=in_specs,
        out_specs=out_specs,
        out_shape=out_shape,
        scratch_shapes=[pltpu.VMEM((N_LAYERS, L_DEC, 2 * D_MODEL), F32)],
        compiler_params=pltpu.CompilerParams(
            dimension_semantics=("parallel",),          # v7x: 2 TCs, 2 sequences
            vmem_limit_bytes=32 * 1024 * 1024),
    )(latent, *weights)
    return ids[:, 0, :L_DEC], enc_out


# ----------------------------------------------------------------------------
# Relative-position buckets (numpy, static) + parameter init
# ----------------------------------------------------------------------------
def _relative_position_bucket(rel_pos, bidirectional, num_buckets, max_distance):
    if bidirectional:
        num_buckets //= 2
        ret = (rel_pos > 0).astype(np.int32) * num_buckets
        n = np.abs(rel_pos)
    else:
        ret = np.zeros_like(rel_pos, dtype=np.int32)
        n = np.maximum(-rel_pos, 0)
    max_exact = num_buckets // 2
    is_small = n < max_exact
    n_safe = np.maximum(n, 1).astype(np.float32)
    val_if_large = max_exact + (
        np.log(n_safe / max_exact) / np.log(max_distance / max_exact)
        * (num_buckets - max_exact)).astype(np.int32)
    val_if_large = np.minimum(val_if_large, num_buckets - 1)
    return (ret + np.where(is_small, n, val_if_large)).astype(np.int32)


def _make_rel_buckets(length, bidirectional):
    ctx = np.arange(length)[:, None]
    mem = np.arange(length)[None, :]
    return _relative_position_bucket(mem - ctx, bidirectional,
                                     NUM_BUCKETS, MAX_DISTANCE)


def init_params(key):
    ks = iter(jax.random.split(key, 24))

    def nrm(shape, scale=0.05, dtype=BF16):
        return (scale * jax.random.normal(next(ks), shape, F32)).astype(dtype)

    p = {}
    # True weight tying: embed table and lm_head share identical bf16 values.
    p["embed"] = nrm((VOCAB, D_MODEL), 0.5, BF16)
    p["lm_head"] = jnp.transpose(p["embed"])

    # encoder stack (weights stacked over layers; bf16 for MXU, f32 accum)
    p["enc_ln1"] = jnp.ones((N_LAYERS, 1, D_MODEL), F32)
    p["enc_wq"] = nrm((N_LAYERS, D_MODEL, D_MODEL))
    p["enc_wkv"] = nrm((N_LAYERS, D_MODEL, 2 * D_MODEL))
    p["enc_wo"] = nrm((N_LAYERS, D_MODEL, D_MODEL))
    p["enc_ln2"] = jnp.ones((N_LAYERS, 1, D_MODEL), F32)
    p["enc_wi"] = nrm((N_LAYERS, D_MODEL, D_FF))
    p["enc_wf"] = nrm((N_LAYERS, D_FF, D_MODEL))
    p["enc_final_ln"] = jnp.ones((1, D_MODEL), F32)

    # decoder stack
    p["dec_ln1"] = jnp.ones((N_LAYERS, 1, D_MODEL), F32)
    p["dec_wq_s"] = nrm((N_LAYERS, D_MODEL, D_MODEL))
    p["dec_wkv_s"] = nrm((N_LAYERS, D_MODEL, 2 * D_MODEL))
    p["dec_wo_s"] = nrm((N_LAYERS, D_MODEL, D_MODEL))
    p["dec_ln2"] = jnp.ones((N_LAYERS, 1, D_MODEL), F32)
    p["dec_wq_c"] = nrm((N_LAYERS, D_MODEL, D_MODEL))
    p["dec_wkv_c"] = nrm((N_LAYERS, D_MODEL, 2 * D_MODEL))
    p["dec_wo_c"] = nrm((N_LAYERS, D_MODEL, D_MODEL))
    p["dec_ln3"] = jnp.ones((N_LAYERS, 1, D_MODEL), F32)
    p["dec_wi"] = nrm((N_LAYERS, D_MODEL, D_FF))
    p["dec_wf"] = nrm((N_LAYERS, D_FF, D_MODEL))
    p["dec_final_ln"] = jnp.ones((1, D_MODEL), F32)

    # Relative-position biases precomputed ONCE (shared across layers, T5-style).
    enc_rel_w = nrm((NUM_BUCKETS, N_HEADS), 0.1, F32)
    enc_buckets = jnp.asarray(_make_rel_buckets(L_ENC, bidirectional=True))
    p["enc_bias"] = jnp.transpose(jnp.take(enc_rel_w, enc_buckets, axis=0),
                                  (2, 0, 1)).astype(F32)           # [H, Le, Le]
    # Decoder bias includes the causal mask: future keys get +NEG_INF added.
    dec_rel_w = nrm((NUM_BUCKETS, N_HEADS), 0.1, F32)
    dec_buckets = jnp.asarray(_make_rel_buckets(L_DEC, bidirectional=False))
    dec_bias = jnp.transpose(jnp.take(dec_rel_w, dec_buckets, axis=0), (2, 0, 1))
    causal = np.tril(np.ones((L_DEC, L_DEC), np.float32))
    mask_add = np.where(causal > 0.0, 0.0, NEG_INF).astype(np.float32)
    p["dec_bias"] = (dec_bias + jnp.asarray(mask_add)[None]).astype(F32)
    return p


# ----------------------------------------------------------------------------
# Token decoding + module wrapper
# ----------------------------------------------------------------------------
def _decode_ids(ids, n_keep):
    # tokenizer.batch_decode(..., skip_special_tokens=True) stand-in.
    chars = []
    for tok in ids[1:n_keep]:                  # drop the decoder start token
        tok = int(tok)
        if tok in (PAD_ID, EOS_ID):
            break
        if tok == UNK_ID:
            continue
        chars.append(_ID_TO_AA.get(tok, "X"))
    return "".join(chars)


class ProtT5DecodingModule:
    """Greedy-decode stand-in for the PyTorch ProtT5DecodingModule."""
    # TODO(synk): num_beams=4 beam search / early_stopping from HF generate()
    # is host-side control flow with no clean Pallas equivalent; greedy decode
    # with EOS early-exit masking is used instead.

    def __init__(self, key=jax.random.PRNGKey(0)):
        self.params = init_params(key)

    def forward(self, latent_repr, max_length=200):
        ids, _ = generate_ids(self.params, latent_repr)   # ONE fused kernel call
        ids = np.asarray(jax.block_until_ready(ids))
        n_keep = int(min(max_length, L_DEC))
        return [_decode_ids(ids[b], n_keep) for b in range(ids.shape[0])]


# ----------------------------------------------------------------------------
# Main
# ----------------------------------------------------------------------------
if __name__ == "__main__":
    key = jax.random.PRNGKey(0)
    module = ProtT5DecodingModule(key)

    # Deterministic latent representation (inputs_embeds): [batch=2, L_ENC, D].
    latent = 0.5 * jax.random.normal(jax.random.fold_in(key, 7),
                                     (2, L_ENC, D_MODEL), F32)

    # Sanity: raw ids + encoder output for the whole batch.
    ids, enc_out = generate_ids(module.params, latent)
    ids = jax.block_until_ready(ids)
    assert bool(jnp.all(jnp.isfinite(enc_out)))
    ids_np = np.asarray(ids)
    assert ids_np.shape == (2, L_DEC)
    assert (ids_np >= 0).all() and (ids_np < VOCAB).all()

    # Full module forward: latent_repr -> decoded amino-acid strings.
    seqs = module.forward(latent, max_length=L_DEC)
    assert len(seqs) == 2 and all(isinstance(s, str) for s in seqs)

    print("KERNEL_OK")
</pallas_src>

<mosaic_0001>
module attributes {stable_mosaic.version = 11 : i64} {
  func.func @prott5_kernel(%arg0: i32, %arg1: memref<1x16x128xf32, #tpu.memory_space<vmem>>, %arg2: memref<128x128xbf16, #tpu.memory_space<vmem>>, %arg3: memref<4x16x16xf32, #tpu.memory_space<vmem>>, %arg4: memref<4x16x16xf32, #tpu.memory_space<vmem>>, %arg5: memref<2x1x128xf32, #tpu.memory_space<vmem>>, %arg6: memref<2x128x128xbf16, #tpu.memory_space<vmem>>, %arg7: memref<2x128x256xbf16, #tpu.memory_space<vmem>>, %arg8: memref<2x128x128xbf16, #tpu.memory_space<vmem>>, %arg9: memref<2x1x128xf32, #tpu.memory_space<vmem>>, %arg10: memref<2x128x256xbf16, #tpu.memory_space<vmem>>, %arg11: memref<2x256x128xbf16, #tpu.memory_space<vmem>>, %arg12: memref<1x128xf32, #tpu.memory_space<vmem>>, %arg13: memref<2x1x128xf32, #tpu.memory_space<vmem>>, %arg14: memref<2x128x128xbf16, #tpu.memory_space<vmem>>, %arg15: memref<2x128x256xbf16, #tpu.memory_space<vmem>>, %arg16: memref<2x128x128xbf16, #tpu.memory_space<vmem>>, %arg17: memref<2x1x128xf32, #tpu.memory_space<vmem>>, %arg18: memref<2x128x128xbf16, #tpu.memory_space<vmem>>, %arg19: memref<2x128x256xbf16, #tpu.memory_space<vmem>>, %arg20: memref<2x128x128xbf16, #tpu.memory_space<vmem>>, %arg21: memref<2x1x128xf32, #tpu.memory_space<vmem>>, %arg22: memref<2x128x256xbf16, #tpu.memory_space<vmem>>, %arg23: memref<2x256x128xbf16, #tpu.memory_space<vmem>>, %arg24: memref<1x128xf32, #tpu.memory_space<vmem>>, %arg25: memref<128x128xbf16, #tpu.memory_space<vmem>>, %arg26: memref<1x1x128xi32, #tpu.memory_space<vmem>>, %arg27: memref<1x16x128xf32, #tpu.memory_space<vmem>>, %arg28: memref<2x16x256xf32, #tpu.memory_space<vmem>>) attributes {dimension_semantics = [#tpu.dimension_semantics<parallel>], iteration_bounds = array<i64: 2>, scalar_prefetch = 0 : i64, scratch_operands = 1 : i64, tpu.core_type = #tpu.core_type<tc>, window_params = [{transform_indices = @transform_0, window_bounds = array<i64: 1, 16, 128>}, {pipeline_mode = #tpu.pipeline_mode<synchronous>, transform_indices = @transform_1, window_bounds = array<i64: 128, 128>}, {pipeline_mode = #tpu.pipeline_mode<synchronous>, transform_indices = @transform_2, window_bounds = array<i64: 4, 16, 16>}, {pipeline_mode = #tpu.pipeline_mode<synchronous>, transform_indices = @transform_3, window_bounds = array<i64: 4, 16, 16>}, {pipeline_mode = #tpu.pipeline_mode<synchronous>, transform_indices = @transform_4, window_bounds = array<i64: 2, 1, 128>}, {pipeline_mode = #tpu.pipeline_mode<synchronous>, transform_indices = @transform_5, window_bounds = array<i64: 2, 128, 128>}, {pipeline_mode = #tpu.pipeline_mode<synchronous>, transform_indices = @transform_6, window_bounds = array<i64: 2, 128, 256>}, {pipeline_mode = #tpu.pipeline_mode<synchronous>, transform_indices = @transform_7, window_bounds = array<i64: 2, 128, 128>}, {pipeline_mode = #tpu.pipeline_mode<synchronous>, transform_indices = @transform_8, window_bounds = array<i64: 2, 1, 128>}, {pipeline_mode = #tpu.pipeline_mode<synchronous>, transform_indices = @transform_9, window_bounds = array<i64: 2, 128, 256>}, {pipeline_mode = #tpu.pipeline_mode<synchronous>, transform_indices = @transform_10, window_bounds = array<i64: 2, 256, 128>}, {pipeline_mode = #tpu.pipeline_mode<synchronous>, transform_indices = @transform_11, window_bounds = array<i64: 1, 128>}, {pipeline_mode = #tpu.pipeline_mode<synchronous>, transform_indices = @transform_12, window_bounds = array<i64: 2, 1, 128>}, {pipeline_mode = #tpu.pipeline_mode<synchronous>, transform_indices = @transform_13, window_bounds = array<i64: 2, 128, 128>}, {pipeline_mode = #tpu.pipeline_mode<synchronous>, transform_indices = @transform_14, window_bounds = array<i64: 2, 128, 256>}, {pipeline_mode = #tpu.pipeline_mode<synchronous>, transform_indices = @transform_15, window_bounds = array<i64: 2, 128, 128>}, {pipeline_mode = #tpu.pipeline_mode<synchronous>, transform_indices = @transform_16, window_bounds = array<i64: 2, 1, 128>}, {pipeline_mode = #tpu.pipeline_mode<synchronous>, transform_indices = @transform_17, window_bounds = array<i64: 2, 128, 128>}, {pipeline_mode = #tpu.pipeline_mode<synchronous>, transform_indices = @transform_18, window_bounds = array<i64: 2, 128, 256>}, {pipeline_mode = #tpu.pipeline_mode<synchronous>, transform_indices = @transform_19, window_bounds = array<i64: 2, 128, 128>}, {pipeline_mode = #tpu.pipeline_mode<synchronous>, transform_indices = @transform_20, window_bounds = array<i64: 2, 1, 128>}, {pipeline_mode = #tpu.pipeline_mode<synchronous>, transform_indices = @transform_21, window_bounds = array<i64: 2, 128, 256>}, {pipeline_mode = #tpu.pipeline_mode<synchronous>, transform_indices = @transform_22, window_bounds = array<i64: 2, 256, 128>}, {pipeline_mode = #tpu.pipeline_mode<synchronous>, transform_indices = @transform_23, window_bounds = array<i64: 1, 128>}, {pipeline_mode = #tpu.pipeline_mode<synchronous>, transform_indices = @transform_24, window_bounds = array<i64: 128, 128>}, {transform_indices = @transform_25, window_bounds = array<i64: 1, 1, 128>}, {transform_indices = @transform_26, window_bounds = array<i64: 1, 16, 128>}]} {
    %cst = arith.constant 0.000000e+00 : f32
    %0 = vector.broadcast %cst : f32 to vector<2x16x256xf32>
    %c0 = arith.constant 0 : index
    %c0_0 = arith.constant 0 : index
    %c0_1 = arith.constant 0 : index
    %1 = vector.load %arg28[%c0, %c0_0, %c0_1] : memref<2x16x256xf32, #tpu.memory_space<vmem>>, vector<2x16x256xf32>
    tpu.vector_store %arg28[%c0, %c0_0, %c0_1], %0 {strides = array<i32>} : memref<2x16x256xf32, #tpu.memory_space<vmem>>, vector<2x16x256xf32>,
    %c0_2 = arith.constant 0 : index
    %c0_3 = arith.constant 0 : index
    %c0_4 = arith.constant 0 : index
    %2 = vector.load %arg1[%c0_2, %c0_3, %c0_4] : memref<1x16x128xf32, #tpu.memory_space<vmem>>, vector<1x16x128xf32>
    %3 = vector.shape_cast %2 : vector<1x16x128xf32> to vector<16x128xf32>
    %c0_5 = arith.constant 0 : index
    %c0_6 = arith.constant 0 : index
    %c0_7 = arith.constant 0 : index
    %4 = vector.load %arg3[%c0_5, %c0_6, %c0_7] : memref<4x16x16xf32, #tpu.memory_space<vmem>>, vector<4x16x16xf32>
    %c0_8 = arith.constant 0 : index
    %c0_9 = arith.constant 0 : index
    %c0_10 = arith.constant 0 : index
    %5 = vector.load %arg5[%c0_8, %c0_9, %c0_10] : memref<2x1x128xf32, #tpu.memory_space<vmem>>, vector<1x1x128xf32>
    %6 = vector.shape_cast %5 : vector<1x1x128xf32> to vector<1x128xf32>
    %7 = arith.mulf %3, %3 : vector<16x128xf32>
    %cst_11 = arith.constant dense<0.000000e+00> : vector<16xf32>
    %8 = vector.multi_reduction <add>, %7, %cst_11 [1] : vector<16x128xf32> to vector<16xf32>
    %9 = vector.shape_cast %8 : vector<16xf32> to vector<16x1xf32>
    %cst_12 = arith.constant 1.280000e+02 : f32
    %10 = vector.broadcast %cst_12 : f32 to vector<16x1xf32>
    %11 = arith.divf %9, %10 : vector<16x1xf32>
    %cst_13 = arith.constant 9.99999997E-7 : f32
    %12 = vector.broadcast %cst_13 : f32 to vector<16x1xf32>
    %13 = arith.addf %11, %12 : vector<16x1xf32>
    %14 = math.rsqrt %13 : vector<16x1xf32>
    %15 = vector.broadcast %14 : vector<16x1xf32> to vector<16x128xf32>
    %16 = arith.mulf %3, %15 : vector<16x128xf32>
    %17 = vector.broadcast %6 : vector<1x128xf32> to vector<16x128xf32>
    %18 = arith.mulf %16, %17 : vector<16x128xf32>
    %19 = arith.truncf %18 : vector<16x128xf32> to vector<16x128xbf16>
    %c0_14 = arith.constant 0 : index
    %c0_15 = arith.constant 0 : index
    %c0_16 = arith.constant 0 : index
    %20 = vector.load %arg6[%c0_14, %c0_15, %c0_16] : memref<2x128x128xbf16, #tpu.memory_space<vmem>>, vector<1x128x128xbf16>
    %21 = vector.shape_cast %20 : vector<1x128x128xbf16> to vector<128x128xbf16>
    %cst_17 = arith.constant dense<0.000000e+00> : vector<16x128xf32>
    %22 = tpu.matmul %19, %21, %cst_17 {dimension_numbers = #tpu.dot_dimension_numbers<[1], [0], [0], [1], [0, 0, 1, 1], [], []>} : vector<16x128xbf16>, vector<128x128xbf16>, vector<16x128xf32> -> vector<16x128xf32>
    %23 = arith.truncf %18 : vector<16x128xf32> to vector<16x128xbf16>
    %c0_18 = arith.constant 0 : index
    %c0_19 = arith.constant 0 : index
    %c0_20 = arith.constant 0 : index
    %24 = vector.load %arg7[%c0_18, %c0_19, %c0_20] : memref<2x128x256xbf16, #tpu.memory_space<vmem>>, vector<1x128x256xbf16>
    %25 = vector.shape_cast %24 : vector<1x128x256xbf16> to vector<128x256xbf16>
    %cst_21 = arith.constant dense<0.000000e+00> : vector<16x256xf32>
    %26 = tpu.matmul %23, %25, %cst_21 {dimension_numbers = #tpu.dot_dimension_numbers<[1], [0], [0], [1], [0, 0, 1, 1], [], []>} : vector<16x128xbf16>, vector<128x256xbf16>, vector<16x256xf32> -> vector<16x256xf32>
    %27 = vector.extract_strided_slice %26 {offsets = [0, 0], sizes = [16, 128], strides = [1, 1]} : vector<16x256xf32> to vector<16x128xf32>
    %28 = vector.extract_strided_slice %26 {offsets = [0, 128], sizes = [16, 128], strides = [1, 1]} : vector<16x256xf32> to vector<16x128xf32>
    %c0_22 = arith.constant 0 : index
    %c0_23 = arith.constant 0 : index
    %c0_24 = arith.constant 0 : index
    %29 = vector.load %arg8[%c0_22, %c0_23, %c0_24] : memref<2x128x128xbf16, #tpu.memory_space<vmem>>, vector<1x128x128xbf16>
    %30 = vector.shape_cast %29 : vector<1x128x128xbf16> to vector<128x128xbf16>
    %31 = vector.extract_strided_slice %22 {offsets = [0, 0], sizes = [16, 32], strides = [1, 1]} : vector<16x128xf32> to vector<16x32xf32>
    %32 = vector.extract_strided_slice %22 {offsets = [0, 32], sizes = [16, 32], strides = [1, 1]} : vector<16x128xf32> to vector<16x32xf32>
    %33 = vector.extract_strided_slice %22 {offsets = [0, 64], sizes = [16, 32], strides = [1, 1]} : vector<16x128xf32> to vector<16x32xf32>
    %34 = vector.extract_strided_slice %22 {offsets = [0, 96], sizes = [16, 32], strides = [1, 1]} : vector<16x128xf32> to vector<16x32xf32>
    %35 = vector.shape_cast %31 : vector<16x32xf32> to vector<1x16x32xf32>
    %36 = vector.shape_cast %32 : vector<16x32xf32> to vector<1x16x32xf32>
    %37 = vector.shape_cast %33 : vector<16x32xf32> to vector<1x16x32xf32>
    %38 = vector.shape_cast %34 : vector<16x32xf32> to vector<1x16x32xf32>
    %39 = tpu.concatenate %35, %36, %37, %38 in 0 : vector<1x16x32xf32>, vector<1x16x32xf32>, vector<1x16x32xf32>, vector<1x16x32xf32> -> vector<4x16x32xf32>
    %40 = arith.truncf %39 : vector<4x16x32xf32> to vector<4x16x32xbf16>
    %41 = vector.extract_strided_slice %27 {offsets = [0, 0], sizes = [16, 32], strides = [1, 1]} : vector<16x128xf32> to vector<16x32xf32>
    %42 = vector.extract_strided_slice %27 {offsets = [0, 32], sizes = [16, 32], strides = [1, 1]} : vector<16x128xf32> to vector<16x32xf32>
    %43 = vector.extract_strided_slice %27 {offsets = [0, 64], sizes = [16, 32], strides = [1, 1]} : vector<16x128xf32> to vector<16x32xf32>
    %44 = vector.extract_strided_slice %27 {offsets = [0, 96], sizes = [16, 32], strides = [1, 1]} : vector<16x128xf32> to vector<16x32xf32>
    %45 = vector.shape_cast %41 : vector<16x32xf32> to vector<1x16x32xf32>
    %46 = vector.shape_cast %42 : vector<16x32xf32> to vector<1x16x32xf32>
    %47 = vector.shape_cast %43 : vector<16x32xf32> to vector<1x16x32xf32>
    %48 = vector.shape_cast %44 : vector<16x32xf32> to vector<1x16x32xf32>
    %49 = tpu.concatenate %45, %46, %47, %48 in 0 : vector<1x16x32xf32>, vector<1x16x32xf32>, vector<1x16x32xf32>, vector<1x16x32xf32> -> vector<4x16x32xf32>
    %50 = arith.truncf %49 : vector<4x16x32xf32> to vector<4x16x32xbf16>
    %51 = vector.extract_strided_slice %28 {offsets = [0, 0], sizes = [16, 32], strides = [1, 1]} : vector<16x128xf32> to vector<16x32xf32>
    %52 = vector.extract_strided_slice %28 {offsets = [0, 32], sizes = [16, 32], strides = [1, 1]} : vector<16x128xf32> to vector<16x32xf32>
    %53 = vector.extract_strided_slice %28 {offsets = [0, 64], sizes = [16, 32], strides = [1, 1]} : vector<16x128xf32> to vector<16x32xf32>
    %54 = vector.extract_strided_slice %28 {offsets = [0, 96], sizes = [16, 32], strides = [1, 1]} : vector<16x128xf32> to vector<16x32xf32>
    %55 = vector.shape_cast %51 : vector<16x32xf32> to vector<1x16x32xf32>
    %56 = vector.shape_cast %52 : vector<16x32xf32> to vector<1x16x32xf32>
    %57 = vector.shape_cast %53 : vector<16x32xf32> to vector<1x16x32xf32>
    %58 = vector.shape_cast %54 : vector<16x32xf32> to vector<1x16x32xf32>
    %59 = tpu.concatenate %55, %56, %57, %58 in 0 : vector<1x16x32xf32>, vector<1x16x32xf32>, vector<1x16x32xf32>, vector<1x16x32xf32> -> vector<4x16x32xf32>
    %60 = arith.truncf %59 : vector<4x16x32xf32> to vector<4x16x32xbf16>
    "tpu.trace_start"() <{level = 10 : i32, message = "hqd,hkd->hqk"}> : () -> ()
    %cst_25 = arith.constant dense<0.000000e+00> : vector<4x16x16xf32>
    %61 = tpu.matmul %40, %50, %cst_25 {dimension_numbers = #tpu.dot_dimension_numbers<[2], [2], [1], [1], [0, 0, 0, 1, 1, 1], [0], [0]>} : vector<4x16x32xbf16>, vector<4x16x32xbf16>, vector<4x16x16xf32> -> vector<4x16x16xf32>
    "tpu.trace_stop"() : () -> ()
    %62 = arith.addf %61, %4 : vector<4x16x16xf32>
    %cst_26 = arith.constant dense<0xFF800000> : vector<4x16xf32>
    %63 = vector.multi_reduction <maximumf>, %62, %cst_26 [2] : vector<4x16x16xf32> to vector<4x16xf32>
    %64 = vector.shape_cast %63 : vector<4x16xf32> to vector<4x16x1xf32>
    %65 = vector.broadcast %64 : vector<4x16x1xf32> to vector<4x16x16xf32>
    %66 = arith.subf %62, %65 : vector<4x16x16xf32>
    %67 = math.exp %66 : vector<4x16x16xf32>
    %cst_27 = arith.constant dense<0.000000e+00> : vector<4x16xf32>
    %68 = vector.multi_reduction <add>, %67, %cst_27 [2] : vector<4x16x16xf32> to vector<4x16xf32>
    %69 = vector.shape_cast %68 : vector<4x16xf32> to vector<4x16x1xf32>
    %70 = tpu.reciprocal %69 : vector<4x16x1xf32> -> vector<4x16x1xf32>
    %71 = vector.broadcast %70 : vector<4x16x1xf32> to vector<4x16x16xf32>
    %72 = arith.mulf %67, %71 : vector<4x16x16xf32>
    %73 = arith.truncf %72 : vector<4x16x16xf32> to vector<4x16x16xbf16>
    "tpu.trace_start"() <{level = 10 : i32, message = "hqk,hkd->hqd"}> : () -> ()
    %cst_28 = arith.constant dense<0.000000e+00> : vector<4x16x32xf32>
    %74 = tpu.matmul %73, %60, %cst_28 {dimension_numbers = #tpu.dot_dimension_numbers<[2], [1], [1], [2], [0, 0, 0, 1, 1, 2], [0], [0]>} : vector<4x16x16xbf16>, vector<4x16x32xbf16>, vector<4x16x32xf32> -> vector<4x16x32xf32>
    "tpu.trace_stop"() : () -> ()
    %75 = vector.extract_strided_slice %74 {offsets = [0, 0, 0], sizes = [1, 16, 32], strides = [1, 1, 1]} : vector<4x16x32xf32> to vector<1x16x32xf32>
    %76 = vector.shape_cast %75 : vector<1x16x32xf32> to vector<16x32xf32>
    %77 = vector.extract_strided_slice %74 {offsets = [1, 0, 0], sizes = [1, 16, 32], strides = [1, 1, 1]} : vector<4x16x32xf32> to vector<1x16x32xf32>
    %78 = vector.shape_cast %77 : vector<1x16x32xf32> to vector<16x32xf32>
    %79 = vector.extract_strided_slice %74 {offsets = [2, 0, 0], sizes = [1, 16, 32], strides = [1, 1, 1]} : vector<4x16x32xf32> to vector<1x16x32xf32>
    %80 = vector.shape_cast %79 : vector<1x16x32xf32> to vector<16x32xf32>
    %81 = vector.extract_strided_slice %74 {offsets = [3, 0, 0], sizes = [1, 16, 32], strides = [1, 1, 1]} : vector<4x16x32xf32> to vector<1x16x32xf32>
    %82 = vector.shape_cast %81 : vector<1x16x32xf32> to vector<16x32xf32>
    %83 = tpu.concatenate %76, %78, %80, %82 in 1 : vector<16x32xf32>, vector<16x32xf32>, vector<16x32xf32>, vector<16x32xf32> -> vector<16x128xf32>
    %84 = arith.truncf %83 : vector<16x128xf32> to vector<16x128xbf16>
    %cst_29 = arith.constant dense<0.000000e+00> : vector<16x128xf32>
    %85 = tpu.matmul %84, %30, %cst_29 {dimension_numbers = #tpu.dot_dimension_numbers<[1], [0], [0], [1], [0, 0, 1, 1], [], []>} : vector<16x128xbf16>, vector<128x128xbf16>, vector<16x128xf32> -> vector<16x128xf32>
    %86 = arith.addf %3, %85 : vector<16x128xf32>
    %c0_30 = arith.constant 0 : index
    %c0_31 = arith.constant 0 : index
    %c0_32 = arith.constant 0 : index
    %87 = vector.load %arg9[%c0_30, %c0_31, %c0_32] : memref<2x1x128xf32, #tpu.memory_space<vmem>>, vector<1x1x128xf32>
    %88 = vector.shape_cast %87 : vector<1x1x128xf32> to vector<1x128xf32>
    %89 = arith.mulf %86, %86 : vector<16x128xf32>
    %cst_33 = arith.constant dense<0.000000e+00> : vector<16xf32>
    %90 = vector.multi_reduction <add>, %89, %cst_33 [1] : vector<16x128xf32> to vector<16xf32>
    %91 = vector.shape_cast %90 : vector<16xf32> to vector<16x1xf32>
    %cst_34 = arith.constant 1.280000e+02 : f32
    %92 = vector.broadcast %cst_34 : f32 to vector<16x1xf32>
    %93 = arith.divf %91, %92 : vector<16x1xf32>
    %cst_35 = arith.constant 9.99999997E-7 : f32
    %94 = vector.broadcast %cst_35 : f32 to vector<16x1xf32>
    %95 = arith.addf %93, %94 : vector<16x1xf32>
    %96 = math.rsqrt %95 : vector<16x1xf32>
    %97 = vector.broadcast %96 : vector<16x1xf32> to vector<16x128xf32>
    %98 = arith.mulf %86, %97 : vector<16x128xf32>
    %99 = vector.broadcast %88 : vector<1x128xf32> to vector<16x128xf32>
    %100 = arith.mulf %98, %99 : vector<16x128xf32>
    %101 = arith.truncf %100 : vector<16x128xf32> to vector<16x128xbf16>
    %c0_36 = arith.constant 0 : index
    %c0_37 = arith.constant 0 : index
    %c0_38 = arith.constant 0 : index
    %102 = vector.load %arg10[%c0_36, %c0_37, %c0_38] : memref<2x128x256xbf16, #tpu.memory_space<vmem>>, vector<1x128x256xbf16>
    %103 = vector.shape_cast %102 : vector<1x128x256xbf16> to vector<128x256xbf16>
    %cst_39 = arith.constant dense<0.000000e+00> : vector<16x256xf32>
    %104 = tpu.matmul %101, %103, %cst_39 {dimension_numbers = #tpu.dot_dimension_numbers<[1], [0], [0], [1], [0, 0, 1, 1], [], []>} : vector<16x128xbf16>, vector<128x256xbf16>, vector<16x256xf32> -> vector<16x256xf32>
    %cst_40 = arith.constant 0.000000e+00 : f32
    %105 = vector.broadcast %cst_40 : f32 to vector<16x256xf32>
    %106 = arith.maximumf %104, %105 : vector<16x256xf32>
    %107 = arith.truncf %106 : vector<16x256xf32> to vector<16x256xbf16>
    %c0_41 = arith.constant 0 : index
    %c0_42 = arith.constant 0 : index
    %c0_43 = arith.constant 0 : index
    %108 = vector.load %arg11[%c0_41, %c0_42, %c0_43] : memref<2x256x128xbf16, #tpu.memory_space<vmem>>, vector<1x256x128xbf16>
    %109 = vector.shape_cast %108 : vector<1x256x128xbf16> to vector<256x128xbf16>
    %cst_44 = arith.constant dense<0.000000e+00> : vector<16x128xf32>
    %110 = tpu.matmul %107, %109, %cst_44 {dimension_numbers = #tpu.dot_dimension_numbers<[1], [0], [0], [1], [0, 0, 1, 1], [], []>} : vector<16x256xbf16>, vector<256x128xbf16>, vector<16x128xf32> -> vector<16x128xf32>
    %111 = arith.addf %86, %110 : vector<16x128xf32>
    %c1 = arith.constant 1 : index
    %c0_45 = arith.constant 0 : index
    %c0_46 = arith.constant 0 : index
    %112 = vector.load %arg5[%c1, %c0_45, %c0_46] : memref<2x1x128xf32, #tpu.memory_space<vmem>>, vector<1x1x128xf32>
    %113 = vector.shape_cast %112 : vector<1x1x128xf32> to vector<1x128xf32>
    %114 = arith.mulf %111, %111 : vector<16x128xf32>
    %cst_47 = arith.constant dense<0.000000e+00> : vector<16xf32>
    %115 = vector.multi_reduction <add>, %114, %cst_47 [1] : vector<16x128xf32> to vector<16xf32>
    %116 = vector.shape_cast %115 : vector<16xf32> to vector<16x1xf32>
    %cst_48 = arith.constant 1.280000e+02 : f32
    %117 = vector.broadcast %cst_48 : f32 to vector<16x1xf32>
    %118 = arith.divf %116, %117 : vector<16x1xf32>
    %cst_49 = arith.constant 9.99999997E-7 : f32
    %119 = vector.broadcast %cst_49 : f32 to vector<16x1xf32>
    %120 = arith.addf %118, %119 : vector<16x1xf32>
    %121 = math.rsqrt %120 : vector<16x1xf32>
    %122 = vector.broadcast %121 : vector<16x1xf32> to vector<16x128xf32>
    %123 = arith.mulf %111, %122 : vector<16x128xf32>
    %124 = vector.broadcast %113 : vector<1x128xf32> to vector<16x128xf32>
    %125 = arith.mulf %123, %124 : vector<16x128xf32>
    %126 = arith.truncf %125 : vector<16x128xf32> to vector<16x128xbf16>
    %c1_50 = arith.constant 1 : index
    %c0_51 = arith.constant 0 : index
    %c0_52 = arith.constant 0 : index
    %127 = vector.load %arg6[%c1_50, %c0_51, %c0_52] : memref<2x128x128xbf16, #tpu.memory_space<vmem>>, vector<1x128x128xbf16>
    %128 = vector.shape_cast %127 : vector<1x128x128xbf16> to vector<128x128xbf16>
    %cst_53 = arith.constant dense<0.000000e+00> : vector<16x128xf32>
    %129 = tpu.matmul %126, %128, %cst_53 {dimension_numbers = #tpu.dot_dimension_numbers<[1], [0], [0], [1], [0, 0, 1, 1], [], []>} : vector<16x128xbf16>, vector<128x128xbf16>, vector<16x128xf32> -> vector<16x128xf32>
    %130 = arith.truncf %125 : vector<16x128xf32> to vector<16x128xbf16>
    %c1_54 = arith.constant 1 : index
    %c0_55 = arith.constant 0 : index
    %c0_56 = arith.constant 0 : index
    %131 = vector.load %arg7[%c1_54, %c0_55, %c0_56] : memref<2x128x256xbf16, #tpu.memory_space<vmem>>, vector<1x128x256xbf16>
    %132 = vector.shape_cast %131 : vector<1x128x256xbf16> to vector<128x256xbf16>
    %cst_57 = arith.constant dense<0.000000e+00> : vector<16x256xf32>
    %133 = tpu.matmul %130, %132, %cst_57 {dimension_numbers = #tpu.dot_dimension_numbers<[1], [0], [0], [1], [0, 0, 1, 1], [], []>} : vector<16x128xbf16>, vector<128x256xbf16>, vector<16x256xf32> -> vector<16x256xf32>
    %134 = vector.extract_strided_slice %133 {offsets = [0, 0], sizes = [16, 128], strides = [1, 1]} : vector<16x256xf32> to vector<16x128xf32>
    %135 = vector.extract_strided_slice %133 {offsets = [0, 128], sizes = [16, 128], strides = [1, 1]} : vector<16x256xf32> to vector<16x128xf32>
    %c1_58 = arith.constant 1 : index
    %c0_59 = arith.constant 0 : index
    %c0_60 = arith.constant 0 : index
    %136 = vector.load %arg8[%c1_58, %c0_59, %c0_60] : memref<2x128x128xbf16, #tpu.memory_space<vmem>>, vector<1x128x128xbf16>
    %137 = vector.shape_cast %136 : vector<1x128x128xbf16> to vector<128x128xbf16>
    %138 = vector.extract_strided_slice %129 {offsets = [0, 0], sizes = [16, 32], strides = [1, 1]} : vector<16x128xf32> to vector<16x32xf32>
    %139 = vector.extract_strided_slice %129 {offsets = [0, 32], sizes = [16, 32], strides = [1, 1]} : vector<16x128xf32> to vector<16x32xf32>
    %140 = vector.extract_strided_slice %129 {offsets = [0, 64], sizes = [16, 32], strides = [1, 1]} : vector<16x128xf32> to vector<16x32xf32>
    %141 = vector.extract_strided_slice %129 {offsets = [0, 96], sizes = [16, 32], strides = [1, 1]} : vector<16x128xf32> to vector<16x32xf32>
    %142 = vector.shape_cast %138 : vector<16x32xf32> to vector<1x16x32xf32>
    %143 = vector.shape_cast %139 : vector<16x32xf32> to vector<1x16x32xf32>
    %144 = vector.shape_cast %140 : vector<16x32xf32> to vector<1x16x32xf32>
    %145 = vector.shape_cast %141 : vector<16x32xf32> to vector<1x16x32xf32>
    %146 = tpu.concatenate %142, %143, %144, %145 in 0 : vector<1x16x32xf32>, vector<1x16x32xf32>, vector<1x16x32xf32>, vector<1x16x32xf32> -> vector<4x16x32xf32>
    %147 = arith.truncf %146 : vector<4x16x32xf32> to vector<4x16x32xbf16>
    %148 = vector.extract_strided_slice %134 {offsets = [0, 0], sizes = [16, 32], strides = [1, 1]} : vector<16x128xf32> to vector<16x32xf32>
    %149 = vector.extract_strided_slice %134 {offsets = [0, 32], sizes = [16, 32], strides = [1, 1]} : vector<16x128xf32> to vector<16x32xf32>
    %150 = vector.extract_strided_slice %134 {offsets = [0, 64], sizes = [16, 32], strides = [1, 1]} : vector<16x128xf32> to vector<16x32xf32>
    %151 = vector.extract_strided_slice %134 {offsets = [0, 96], sizes = [16, 32], strides = [1, 1]} : vector<16x128xf32> to vector<16x32xf32>
    %152 = vector.shape_cast %148 : vector<16x32xf32> to vector<1x16x32xf32>
    %153 = vector.shape_cast %149 : vector<16x32xf32> to vector<1x16x32xf32>
    %154 = vector.shape_cast %150 : vector<16x32xf32> to vector<1x16x32xf32>
    %155 = vector.shape_cast %151 : vector<16x32xf32> to vector<1x16x32xf32>
    %156 = tpu.concatenate %152, %153, %154, %155 in 0 : vector<1x16x32xf32>, vector<1x16x32xf32>, vector<1x16x32xf32>, vector<1x16x32xf32> -> vector<4x16x32xf32>
    %157 = arith.truncf %156 : vector<4x16x32xf32> to vector<4x16x32xbf16>
    %158 = vector.extract_strided_slice %135 {offsets = [0, 0], sizes = [16, 32], strides = [1, 1]} : vector<16x128xf32> to vector<16x32xf32>
    %159 = vector.extract_strided_slice %135 {offsets = [0, 32], sizes = [16, 32], strides = [1, 1]} : vector<16x128xf32> to vector<16x32xf32>
    %160 = vector.extract_strided_slice %135 {offsets = [0, 64], sizes = [16, 32], strides = [1, 1]} : vector<16x128xf32> to vector<16x32xf32>
    %161 = vector.extract_strided_slice %135 {offsets = [0, 96], sizes = [16, 32], strides = [1, 1]} : vector<16x128xf32> to vector<16x32xf32>
    %162 = vector.shape_cast %158 : vector<16x32xf32> to vector<1x16x32xf32>
    %163 = vector.shape_cast %159 : vector<16x32xf32> to vector<1x16x32xf32>
    %164 = vector.shape_cast %160 : vector<16x32xf32> to vector<1x16x32xf32>
    %165 = vector.shape_cast %161 : vector<16x32xf32> to vector<1x16x32xf32>
    %166 = tpu.concatenate %162, %163, %164, %165 in 0 : vector<1x16x32xf32>, vector<1x16x32xf32>, vector<1x16x32xf32>, vector<1x16x32xf32> -> vector<4x16x32xf32>
    %167 = arith.truncf %166 : vector<4x16x32xf32> to vector<4x16x32xbf16>
    "tpu.trace_start"() <{level = 10 : i32, message = "hqd,hkd->hqk"}> : () -> ()
    %cst_61 = arith.constant dense<0.000000e+00> : vector<4x16x16xf32>
    %168 = tpu.matmul %147, %157, %cst_61 {dimension_numbers = #tpu.dot_dimension_numbers<[2], [2], [1], [1], [0, 0, 0, 1, 1, 1], [0], [0]>} : vector<4x16x32xbf16>, vector<4x16x32xbf16>, vector<4x16x16xf32> -> vector<4x16x16xf32>
    "tpu.trace_stop"() : () -> ()
    %169 = arith.addf %168, %4 : vector<4x16x16xf32>
    %cst_62 = arith.constant dense<0xFF800000> : vector<4x16xf32>
    %170 = vector.multi_reduction <maximumf>, %169, %cst_62 [2] : vector<4x16x16xf32> to vector<4x16xf32>
    %171 = vector.shape_cast %170 : vector<4x16xf32> to vector<4x16x1xf32>
    %172 = vector.broadcast %171 : vector<4x16x1xf32> to vector<4x16x16xf32>
    %173 = arith.subf %169, %172 : vector<4x16x16xf32>
    %174 = math.exp %173 : vector<4x16x16xf32>
    %cst_63 = arith.constant dense<0.000000e+00> : vector<4x16xf32>
    %175 = vector.multi_reduction <add>, %174, %cst_63 [2] : vector<4x16x16xf32> to vector<4x16xf32>
    %176 = vector.shape_cast %175 : vector<4x16xf32> to vector<4x16x1xf32>
    %177 = tpu.reciprocal %176 : vector<4x16x1xf32> -> vector<4x16x1xf32>
    %178 = vector.broadcast %177 : vector<4x16x1xf32> to vector<4x16x16xf32>
    %179 = arith.mulf %174, %178 : vector<4x16x16xf32>
    %180 = arith.truncf %179 : vector<4x16x16xf32> to vector<4x16x16xbf16>
    "tpu.trace_start"() <{level = 10 : i32, message = "hqk,hkd->hqd"}> : () -> ()
    %cst_64 = arith.constant dense<0.000000e+00> : vector<4x16x32xf32>
    %181 = tpu.matmul %180, %167, %cst_64 {dimension_numbers = #tpu.dot_dimension_numbers<[2], [1], [1], [2], [0, 0, 0, 1, 1, 2], [0], [0]>} : vector<4x16x16xbf16>, vector<4x16x32xbf16>, vector<4x16x32xf32> -> vector<4x16x32xf32>
    "tpu.trace_stop"() : () -> ()
    %182 = vector.extract_strided_slice %181 {offsets = [0, 0, 0], sizes = [1, 16, 32], strides = [1, 1, 1]} : vector<4x16x32xf32> to vector<1x16x32xf32>
    %183 = vector.shape_cast %182 : vector<1x16x32xf32> to vector<16x32xf32>
    %184 = vector.extract_strided_slice %181 {offsets = [1, 0, 0], sizes = [1, 16, 32], strides = [1, 1, 1]} : vector<4x16x32xf32> to vector<1x16x32xf32>
    %185 = vector.shape_cast %184 : vector<1x16x32xf32> to vector<16x32xf32>
    %186 = vector.extract_strided_slice %181 {offsets = [2, 0, 0], sizes = [1, 16, 32], strides = [1, 1, 1]} : vector<4x16x32xf32> to vector<1x16x32xf32>
    %187 = vector.shape_cast %186 : vector<1x16x32xf32> to vector<16x32xf32>
    %188 = vector.extract_strided_slice %181 {offsets = [3, 0, 0], sizes = [1, 16, 32], strides = [1, 1, 1]} : vector<4x16x32xf32> to vector<1x16x32xf32>
    %189 = vector.shape_cast %188 : vector<1x16x32xf32> to vector<16x32xf32>
    %190 = tpu.concatenate %183, %185, %187, %189 in 1 : vector<16x32xf32>, vector<16x32xf32>, vector<16x32xf32>, vector<16x32xf32> -> vector<16x128xf32>
    %191 = arith.truncf %190 : vector<16x128xf32> to vector<16x128xbf16>
    %cst_65 = arith.constant dense<0.000000e+00> : vector<16x128xf32>
    %192 = tpu.matmul %191, %137, %cst_65 {dimension_numbers = #tpu.dot_dimension_numbers<[1], [0], [0], [1], [0, 0, 1, 1], [], []>} : vector<16x128xbf16>, vector<128x128xbf16>, vector<16x128xf32> -> vector<16x128xf32>
    %193 = arith.addf %111, %192 : vector<16x128xf32>
    %c1_66 = arith.constant 1 : index
    %c0_67 = arith.constant 0 : index
    %c0_68 = arith.constant 0 : index
    %194 = vector.load %arg9[%c1_66, %c0_67, %c0_68] : memref<2x1x128xf32, #tpu.memory_space<vmem>>, vector<1x1x128xf32>
    %195 = vector.shape_cast %194 : vector<1x1x128xf32> to vector<1x128xf32>
    %196 = arith.mulf %193, %193 : vector<16x128xf32>
    %cst_69 = arith.constant dense<0.000000e+00> : vector<16xf32>
    %197 = vector.multi_reduction <add>, %196, %cst_69 [1] : vector<16x128xf32> to vector<16xf32>
    %198 = vector.shape_cast %197 : vector<16xf32> to vector<16x1xf32>
    %cst_70 = arith.constant 1.280000e+02 : f32
    %199 = vector.broadcast %cst_70 : f32 to vector<16x1xf32>
    %200 = arith.divf %198, %199 : vector<16x1xf32>
    %cst_71 = arith.constant 9.99999997E-7 : f32
    %201 = vector.broadcast %cst_71 : f32 to vector<16x1xf32>
    %202 = arith.addf %200, %201 : vector<16x1xf32>
    %203 = math.rsqrt %202 : vector<16x1xf32>
    %204 = vector.broadcast %203 : vector<16x1xf32> to vector<16x128xf32>
    %205 = arith.mulf %193, %204 : vector<16x128xf32>
    %206 = vector.broadcast %195 : vector<1x128xf32> to vector<16x128xf32>
    %207 = arith.mulf %205, %206 : vector<16x128xf32>
    %208 = arith.truncf %207 : vector<16x128xf32> to vector<16x128xbf16>
    %c1_72 = arith.constant 1 : index
    %c0_73 = arith.constant 0 : index
    %c0_74 = arith.constant 0 : index
    %209 = vector.load %arg10[%c1_72, %c0_73, %c0_74] : memref<2x128x256xbf16, #tpu.memory_space<vmem>>, vector<1x128x256xbf16>
    %210 = vector.shape_cast %209 : vector<1x128x256xbf16> to vector<128x256xbf16>
    %cst_75 = arith.constant dense<0.000000e+00> : vector<16x256xf32>
    %211 = tpu.matmul %208, %210, %cst_75 {dimension_numbers = #tpu.dot_dimension_numbers<[1], [0], [0], [1], [0, 0, 1, 1], [], []>} : vector<16x128xbf16>, vector<128x256xbf16>, vector<16x256xf32> -> vector<16x256xf32>
    %cst_76 = arith.constant 0.000000e+00 : f32
    %212 = vector.broadcast %cst_76 : f32 to vector<16x256xf32>
    %213 = arith.maximumf %211, %212 : vector<16x256xf32>
    %214 = arith.truncf %213 : vector<16x256xf32> to vector<16x256xbf16>
    %c1_77 = arith.constant 1 : index
    %c0_78 = arith.constant 0 : index
    %c0_79 = arith.constant 0 : index
    %215 = vector.load %arg11[%c1_77, %c0_78, %c0_79] : memref<2x256x128xbf16, #tpu.memory_space<vmem>>, vector<1x256x128xbf16>
    %216 = vector.shape_cast %215 : vector<1x256x128xbf16> to vector<256x128xbf16>
    %cst_80 = arith.constant dense<0.000000e+00> : vector<16x128xf32>
    %217 = tpu.matmul %214, %216, %cst_80 {dimension_numbers = #tpu.dot_dimension_numbers<[1], [0], [0], [1], [0, 0, 1, 1], [], []>} : vector<16x256xbf16>, vector<256x128xbf16>, vector<16x128xf32> -> vector<16x128xf32>
    %218 = arith.addf %193, %217 : vector<16x128xf32>
    %c0_81 = arith.constant 0 : index
    %c0_82 = arith.constant 0 : index
    %219 = vector.load %arg12[%c0_81, %c0_82] : memref<1x128xf32, #tpu.memory_space<vmem>>, vector<1x128xf32>
    %220 = arith.mulf %218, %218 : vector<16x128xf32>
    %cst_83 = arith.constant dense<0.000000e+00> : vector<16xf32>
    %221 = vector.multi_reduction <add>, %220, %cst_83 [1] : vector<16x128xf32> to vector<16xf32>
    %222 = vector.shape_cast %221 : vector<16xf32> to vector<16x1xf32>
    %cst_84 = arith.constant 1.280000e+02 : f32
    %223 = vector.broadcast %cst_84 : f32 to vector<16x1xf32>
    %224 = arith.divf %222, %223 : vector<16x1xf32>
    %cst_85 = arith.constant 9.99999997E-7 : f32
    %225 = vector.broadcast %cst_85 : f32 to vector<16x1xf32>
    %226 = arith.addf %224, %225 : vector<16x1xf32>
    %227 = math.rsqrt %226 : vector<16x1xf32>
    %228 = vector.broadcast %227 : vector<16x1xf32> to vector<16x128xf32>
    %229 = arith.mulf %218, %228 : vector<16x128xf32>
    %230 = vector.broadcast %219 : vector<1x128xf32> to vector<16x128xf32>
    %231 = arith.mulf %229, %230 : vector<16x128xf32>
    %c0_86 = arith.constant 0 : index
    %c0_87 = arith.constant 0 : index
    %c0_88 = arith.constant 0 : index
    %232 = vector.load %arg27[%c0_86, %c0_87, %c0_88] : memref<1x16x128xf32, #tpu.memory_space<vmem>>, vector<1x16x128xf32>
    %233 = vector.shape_cast %232 : vector<1x16x128xf32> to vector<16x128xf32>
    %234 = vector.shape_cast %231 : vector<16x128xf32> to vector<1x16x128xf32>
    tpu.vector_store %arg27[%c0_86, %c0_87, %c0_88], %234 {strides = array<i32>} : memref<1x16x128xf32, #tpu.memory_space<vmem>>, vector<1x16x128xf32>,
    %235 = arith.truncf %231 : vector<16x128xf32> to vector<16x128xbf16>
    %c0_89 = arith.constant 0 : index
    %c0_90 = arith.constant 0 : index
    %c0_91 = arith.constant 0 : index
    %236 = vector.load %arg19[%c0_89, %c0_90, %c0_91] : memref<2x128x256xbf16, #tpu.memory_space<vmem>>, vector<1x128x256xbf16>
    %237 = vector.shape_cast %236 : vector<1x128x256xbf16> to vector<128x256xbf16>
    %cst_92 = arith.constant dense<0.000000e+00> : vector<16x256xf32>
    %238 = tpu.matmul %235, %237, %cst_92 {dimension_numbers = #tpu.dot_dimension_numbers<[1], [0], [0], [1], [0, 0, 1, 1], [], []>} : vector<16x128xbf16>, vector<128x256xbf16>, vector<16x256xf32> -> vector<16x256xf32>
    %c1_93 = arith.constant 1 : index
    %c0_94 = arith.constant 0 : index
    %c0_95 = arith.constant 0 : index
    %239 = vector.load %arg19[%c1_93, %c0_94, %c0_95] : memref<2x128x256xbf16, #tpu.memory_space<vmem>>, vector<1x128x256xbf16>
    %240 = vector.shape_cast %239 : vector<1x128x256xbf16> to vector<128x256xbf16>
    %cst_96 = arith.constant dense<0.000000e+00> : vector<16x256xf32>
    %241 = tpu.matmul %235, %240, %cst_96 {dimension_numbers = #tpu.dot_dimension_numbers<[1], [0], [0], [1], [0, 0, 1, 1], [], []>} : vector<16x128xbf16>, vector<128x256xbf16>, vector<16x256xf32> -> vector<16x256xf32>
    %c0_97 = arith.constant 0 : index
    %c0_98 = arith.constant 0 : index
    %242 = vector.load %arg2[%c0_97, %c0_98] : memref<128x128xbf16, #tpu.memory_space<vmem>>, vector<128x128xbf16>
    %c0_99 = arith.constant 0 : index
    %c0_100 = arith.constant 0 : index
    %243 = vector.load %arg25[%c0_99, %c0_100] : memref<128x128xbf16, #tpu.memory_space<vmem>>, vector<128x128xbf16>
    %244 = tpu.iota {dimensions = array<i32: 1>} : vector<1x128xi32>
    %c0_i32 = arith.constant 0 : i32
    %245 = vector.broadcast %c0_i32 : i32 to vector<1x128xi32>
    %c0_i32_101 = arith.constant 0 : i32
    %false = arith.constant false
    %c0_i32_102 = arith.constant 0 : i32
    %c15_i32 = arith.constant 15 : i32
    %246 = arith.addi %c0_i32_102, %c15_i32 : i32
    %c1_i32 = arith.constant 1 : i32
    %247:3 = scf.for %arg29 = %c0_i32_102 to %246 step %c1_i32 iter_args(%arg30 = %245, %arg31 = %c0_i32_101, %arg32 = %false) -> (vector<1x128xi32>, i32, i1)  : i32 {
      %251 = vector.broadcast %arg31 : i32 to vector<1x128xi32>
      %252 = arith.cmpi eq, %244, %251 : vector<1x128xi32>
      %253 = arith.extui %252 : vector<1x128xi1> to vector<1x128xi32>
      %254 = arith.sitofp %253 : vector<1x128xi32> to vector<1x128xf32>
      %255 = arith.truncf %254 : vector<1x128xf32> to vector<1x128xbf16>
      %cst_107 = arith.constant dense<0.000000e+00> : vector<1x128xf32>
      %256 = tpu.matmul %255, %242, %cst_107 {dimension_numbers = #tpu.dot_dimension_numbers<[1], [0], [0], [1], [0, 0, 1, 1], [], []>} : vector<1x128xbf16>, vector<128x128xbf16>, vector<1x128xf32> -> vector<1x128xf32>
      %c0_108 = arith.constant 0 : index
      %c0_109 = arith.constant 0 : index
      %c0_110 = arith.constant 0 : index
      %257 = vector.load %arg13[%c0_108, %c0_109, %c0_110] : memref<2x1x128xf32, #tpu.memory_space<vmem>>, vector<1x1x128xf32>
      %258 = vector.shape_cast %257 : vector<1x1x128xf32> to vector<1x128xf32>
      %259 = arith.mulf %256, %256 : vector<1x128xf32>
      %cst_111 = arith.constant dense<0.000000e+00> : vector<1xf32>
      %260 = vector.multi_reduction <add>, %259, %cst_111 [1] : vector<1x128xf32> to vector<1xf32>
      %261 = vector.shape_cast %260 : vector<1xf32> to vector<1x1xf32>
      %cst_112 = arith.constant 1.280000e+02 : f32
      %262 = vector.broadcast %cst_112 : f32 to vector<1x1xf32>
      %263 = arith.divf %261, %262 : vector<1x1xf32>
      %cst_113 = arith.constant 9.99999997E-7 : f32
      %264 = vector.broadcast %cst_113 : f32 to vector<1x1xf32>
      %265 = arith.addf %263, %264 : vector<1x1xf32>
      %266 = math.rsqrt %265 : vector<1x1xf32>
      %267 = vector.broadcast %266 : vector<1x1xf32> to vector<1x128xf32>
      %268 = arith.mulf %256, %267 : vector<1x128xf32>
      %269 = arith.mulf %268, %258 : vector<1x128xf32>
      %270 = arith.truncf %269 : vector<1x128xf32> to vector<1x128xbf16>
      %c0_114 = arith.constant 0 : index
      %c0_115 = arith.constant 0 : index
      %c0_116 = arith.constant 0 : index
      %271 = vector.load %arg14[%c0_114, %c0_115, %c0_116] : memref<2x128x128xbf16, #tpu.memory_space<vmem>>, vector<1x128x128xbf16>
      %272 = vector.shape_cast %271 : vector<1x128x128xbf16> to vector<128x128xbf16>
      %cst_117 = arith.constant dense<0.000000e+00> : vector<1x128xf32>
      %273 = tpu.matmul %270, %272, %cst_117 {dimension_numbers = #tpu.dot_dimension_numbers<[1], [0], [0], [1], [0, 0, 1, 1], [], []>} : vector<1x128xbf16>, vector<128x128xbf16>, vector<1x128xf32> -> vector<1x128xf32>
      %274 = arith.truncf %269 : vector<1x128xf32> to vector<1x128xbf16>
      %c0_118 = arith.constant 0 : index
      %c0_119 = arith.constant 0 : index
      %c0_120 = arith.constant 0 : index
      %275 = vector.load %arg15[%c0_118, %c0_119, %c0_120] : memref<2x128x256xbf16, #tpu.memory_space<vmem>>, vector<1x128x256xbf16>
      %276 = vector.shape_cast %275 : vector<1x128x256xbf16> to vector<128x256xbf16>
      %cst_121 = arith.constant dense<0.000000e+00> : vector<1x256xf32>
      %277 = tpu.matmul %274, %276, %cst_121 {dimension_numbers = #tpu.dot_dimension_numbers<[1], [0], [0], [1], [0, 0, 1, 1], [], []>} : vector<1x128xbf16>, vector<128x256xbf16>, vector<1x256xf32> -> vector<1x256xf32>
      %c0_122 = arith.constant 0 : index
      %278 = arith.index_cast %arg29 : i32 to index
      %c0_123 = arith.constant 0 : index
      %279 = vector.load %arg28[%c0_122, %278, %c0_123] : memref<2x16x256xf32, #tpu.memory_space<vmem>>, vector<1x1x256xf32>
      %280 = vector.shape_cast %279 : vector<1x1x256xf32> to vector<1x256xf32>
      %281 = vector.shape_cast %277 : vector<1x256xf32> to vector<1x1x256xf32>
      tpu.vector_store %arg28[%c0_122, %278, %c0_123], %281 {strides = array<i32>} : memref<2x16x256xf32, #tpu.memory_space<vmem>>, vector<1x1x256xf32>,
      %c0_124 = arith.constant 0 : index
      %c0_125 = arith.constant 0 : index
      %c0_126 = arith.constant 0 : index
      %282 = vector.load %arg28[%c0_124, %c0_125, %c0_126] : memref<2x16x256xf32, #tpu.memory_space<vmem>>, vector<1x16x256xf32>
      %283 = vector.shape_cast %282 : vector<1x16x256xf32> to vector<16x256xf32>
      %c0_127 = arith.constant 0 : index
      %284 = arith.index_cast %arg29 : i32 to index
      %c0_128 = arith.constant 0 : index
      %285 = vector.load %arg4[%c0_127, %284, %c0_128] : memref<4x16x16xf32, #tpu.memory_space<vmem>>, vector<4x1x16xf32>
      %286 = vector.extract_strided_slice %283 {offsets = [0, 0], sizes = [16, 128], strides = [1, 1]} : vector<16x256xf32> to vector<16x128xf32>
      %287 = vector.extract_strided_slice %283 {offsets = [0, 128], sizes = [16, 128], strides = [1, 1]} : vector<16x256xf32> to vector<16x128xf32>
      %c0_129 = arith.constant 0 : index
      %c0_130 = arith.constant 0 : index
      %c0_131 = arith.constant 0 : index
      %288 = vector.load %arg16[%c0_129, %c0_130, %c0_131] : memref<2x128x128xbf16, #tpu.memory_space<vmem>>, vector<1x128x128xbf16>
      %289 = vector.shape_cast %288 : vector<1x128x128xbf16> to vector<128x128xbf16>
      %290 = vector.extract_strided_slice %273 {offsets = [0, 0], sizes = [1, 32], strides = [1, 1]} : vector<1x128xf32> to vector<1x32xf32>
      %291 = vector.extract_strided_slice %273 {offsets = [0, 32], sizes = [1, 32], strides = [1, 1]} : vector<1x128xf32> to vector<1x32xf32>
      %292 = vector.extract_strided_slice %273 {offsets = [0, 64], sizes = [1, 32], strides = [1, 1]} : vector<1x128xf32> to vector<1x32xf32>
      %293 = vector.extract_strided_slice %273 {offsets = [0, 96], sizes = [1, 32], strides = [1, 1]} : vector<1x128xf32> to vector<1x32xf32>
      %294 = vector.shape_cast %290 : vector<1x32xf32> to vector<1x1x32xf32>
      %295 = vector.shape_cast %291 : vector<1x32xf32> to vector<1x1x32xf32>
      %296 = vector.shape_cast %292 : vector<1x32xf32> to vector<1x1x32xf32>
      %297 = vector.shape_cast %293 : vector<1x32xf32> to vector<1x1x32xf32>
      %298 = tpu.concatenate %294, %295, %296, %297 in 0 : vector<1x1x32xf32>, vector<1x1x32xf32>, vector<1x1x32xf32>, vector<1x1x32xf32> -> vector<4x1x32xf32>
      %299 = arith.truncf %298 : vector<4x1x32xf32> to vector<4x1x32xbf16>
      %300 = vector.extract_strided_slice %286 {offsets = [0, 0], sizes = [16, 32], strides = [1, 1]} : vector<16x128xf32> to vector<16x32xf32>
      %301 = vector.extract_strided_slice %286 {offsets = [0, 32], sizes = [16, 32], strides = [1, 1]} : vector<16x128xf32> to vector<16x32xf32>
      %302 = vector.extract_strided_slice %286 {offsets = [0, 64], sizes = [16, 32], strides = [1, 1]} : vector<16x128xf32> to vector<16x32xf32>
      %303 = vector.extract_strided_slice %286 {offsets = [0, 96], sizes = [16, 32], strides = [1, 1]} : vector<16x128xf32> to vector<16x32xf32>
      %304 = vector.shape_cast %300 : vector<16x32xf32> to vector<1x16x32xf32>
      %305 = vector.shape_cast %301 : vector<16x32xf32> to vector<1x16x32xf32>
      %306 = vector.shape_cast %302 : vector<16x32xf32> to vector<1x16x32xf32>
      %307 = vector.shape_cast %303 : vector<16x32xf32> to vector<1x16x32xf32>
      %308 = tpu.concatenate %304, %305, %306, %307 in 0 : vector<1x16x32xf32>, vector<1x16x32xf32>, vector<1x16x32xf32>, vector<1x16x32xf32> -> vector<4x16x32xf32>
      %309 = arith.truncf %308 : vector<4x16x32xf32> to vector<4x16x32xbf16>
      %310 = vector.extract_strided_slice %287 {offsets = [0, 0], sizes = [16, 32], strides = [1, 1]} : vector<16x128xf32> to vector<16x32xf32>
      %311 = vector.extract_strided_slice %287 {offsets = [0, 32], sizes = [16, 32], strides = [1, 1]} : vector<16x128xf32> to vector<16x32xf32>
      %312 = vector.extract_strided_slice %287 {offsets = [0, 64], sizes = [16, 32], strides = [1, 1]} : vector<16x128xf32> to vector<16x32xf32>
      %313 = vector.extract_strided_slice %287 {offsets = [0, 96], sizes = [16, 32], strides = [1, 1]} : vector<16x128xf32> to vector<16x32xf32>
      %314 = vector.shape_cast %310 : vector<16x32xf32> to vector<1x16x32xf32>
      %315 = vector.shape_cast %311 : vector<16x32xf32> to vector<1x16x32xf32>
      %316 = vector.shape_cast %312 : vector<16x32xf32> to vector<1x16x32xf32>
      %317 = vector.shape_cast %313 : vector<16x32xf32> to vector<1x16x32xf32>
      %318 = tpu.concatenate %314, %315, %316, %317 in 0 : vector<1x16x32xf32>, vector<1x16x32xf32>, vector<1x16x32xf32>, vector<1x16x32xf32> -> vector<4x16x32xf32>
      %319 = arith.truncf %318 : vector<4x16x32xf32> to vector<4x16x32xbf16>
      "tpu.trace_start"() <{level = 10 : i32, message = "hqd,hkd->hqk"}> : () -> ()
      %cst_132 = arith.constant dense<0.000000e+00> : vector<4x1x16xf32>
      %320 = tpu.matmul %299, %309, %cst_132 {dimension_numbers = #tpu.dot_dimension_numbers<[2], [2], [1], [1], [0, 0, 0, 1, 1, 1], [0], [0]>} : vector<4x1x32xbf16>, vector<4x16x32xbf16>, vector<4x1x16xf32> -> vector<4x1x16xf32>
      "tpu.trace_stop"() : () -> ()
      %321 = arith.addf %320, %285 : vector<4x1x16xf32>
      %cst_133 = arith.constant dense<0xFF800000> : vector<4x1xf32>
      %322 = vector.multi_reduction <maximumf>, %321, %cst_133 [2] : vector<4x1x16xf32> to vector<4x1xf32>
      %323 = vector.shape_cast %322 : vector<4x1xf32> to vector<4x1x1xf32>
      %324 = vector.broadcast %323 : vector<4x1x1xf32> to vector<4x1x16xf32>
      %325 = arith.subf %321, %324 : vector<4x1x16xf32>
      %326 = math.exp %325 : vector<4x1x16xf32>
      %cst_134 = arith.constant dense<0.000000e+00> : vector<4x1xf32>
      %327 = vector.multi_reduction <add>, %326, %cst_134 [2] : vector<4x1x16xf32> to vector<4x1xf32>
      %328 = vector.shape_cast %327 : vector<4x1xf32> to vector<4x1x1xf32>
      %329 = tpu.reciprocal %328 : vector<4x1x1xf32> -> vector<4x1x1xf32>
      %330 = vector.broadcast %329 : vector<4x1x1xf32> to vector<4x1x16xf32>
      %331 = arith.mulf %326, %330 : vector<4x1x16xf32>
      %332 = arith.truncf %331 : vector<4x1x16xf32> to vector<4x1x16xbf16>
      "tpu.trace_start"() <{level = 10 : i32, message = "hqk,hkd->hqd"}> : () -> ()
      %cst_135 = arith.constant dense<0.000000e+00> : vector<4x1x32xf32>
      %333 = tpu.matmul %332, %319, %cst_135 {dimension_numbers = #tpu.dot_dimension_numbers<[2], [1], [1], [2], [0, 0, 0, 1, 1, 2], [0], [0]>} : vector<4x1x16xbf16>, vector<4x16x32xbf16>, vector<4x1x32xf32> -> vector<4x1x32xf32>
      "tpu.trace_stop"() : () -> ()
      %334 = vector.extract_strided_slice %333 {offsets = [0, 0, 0], sizes = [1, 1, 32], strides = [1, 1, 1]} : vector<4x1x32xf32> to vector<1x1x32xf32>
      %335 = vector.shape_cast %334 : vector<1x1x32xf32> to vector<1x32xf32>
      %336 = vector.extract_strided_slice %333 {offsets = [1, 0, 0], sizes = [1, 1, 32], strides = [1, 1, 1]} : vector<4x1x32xf32> to vector<1x1x32xf32>
      %337 = vector.shape_cast %336 : vector<1x1x32xf32> to vector<1x32xf32>
      %338 = vector.extract_strided_slice %333 {offsets = [2, 0, 0], sizes = [1, 1, 32], strides = [1, 1, 1]} : vector<4x1x32xf32> to vector<1x1x32xf32>
      %339 = vector.shape_cast %338 : vector<1x1x32xf32> to vector<1x32xf32>
      %340 = vector.extract_strided_slice %333 {offsets = [3, 0, 0], sizes = [1, 1, 32], strides = [1, 1, 1]} : vector<4x1x32xf32> to vector<1x1x32xf32>
      %341 = vector.shape_cast %340 : vector<1x1x32xf32> to vector<1x32xf32>
      %342 = tpu.concatenate %335, %337, %339, %341 in 1 : vector<1x32xf32>, vector<1x32xf32>, vector<1x32xf32>, vector<1x32xf32> -> vector<1x128xf32>
      %343 = arith.truncf %342 : vector<1x128xf32> to vector<1x128xbf16>
      %cst_136 = arith.constant dense<0.000000e+00> : vector<1x128xf32>
      %344 = tpu.matmul %343, %289, %cst_136 {dimension_numbers = #tpu.dot_dimension_numbers<[1], [0], [0], [1], [0, 0, 1, 1], [], []>} : vector<1x128xbf16>, vector<128x128xbf16>, vector<1x128xf32> -> vector<1x128xf32>
      %345 = arith.addf %256, %344 : vector<1x128xf32>
      %c0_137 = arith.constant 0 : index
      %c0_138 = arith.constant 0 : index
      %c0_139 = arith.constant 0 : index
      %346 = vector.load %arg17[%c0_137, %c0_138, %c0_139] : memref<2x1x128xf32, #tpu.memory_space<vmem>>, vector<1x1x128xf32>
      %347 = vector.shape_cast %346 : vector<1x1x128xf32> to vector<1x128xf32>
      %348 = arith.mulf %345, %345 : vector<1x128xf32>
      %cst_140 = arith.constant dense<0.000000e+00> : vector<1xf32>
      %349 = vector.multi_reduction <add>, %348, %cst_140 [1] : vector<1x128xf32> to vector<1xf32>
      %350 = vector.shape_cast %349 : vector<1xf32> to vector<1x1xf32>
      %cst_141 = arith.constant 1.280000e+02 : f32
      %351 = vector.broadcast %cst_141 : f32 to vector<1x1xf32>
      %352 = arith.divf %350, %351 : vector<1x1xf32>
      %cst_142 = arith.constant 9.99999997E-7 : f32
      %353 = vector.broadcast %cst_142 : f32 to vector<1x1xf32>
      %354 = arith.addf %352, %353 : vector<1x1xf32>
      %355 = math.rsqrt %354 : vector<1x1xf32>
      %356 = vector.broadcast %355 : vector<1x1xf32> to vector<1x128xf32>
      %357 = arith.mulf %345, %356 : vector<1x128xf32>
      %358 = arith.mulf %357, %347 : vector<1x128xf32>
      %359 = arith.truncf %358 : vector<1x128xf32> to vector<1x128xbf16>
      %c0_143 = arith.constant 0 : index
      %c0_144 = arith.constant 0 : index
      %c0_145 = arith.constant 0 : index
      %360 = vector.load %arg18[%c0_143, %c0_144, %c0_145] : memref<2x128x128xbf16, #tpu.memory_space<vmem>>, vector<1x128x128xbf16>
      %361 = vector.shape_cast %360 : vector<1x128x128xbf16> to vector<128x128xbf16>
      %cst_146 = arith.constant dense<0.000000e+00> : vector<1x128xf32>
      %362 = tpu.matmul %359, %361, %cst_146 {dimension_numbers = #tpu.dot_dimension_numbers<[1], [0], [0], [1], [0, 0, 1, 1], [], []>} : vector<1x128xbf16>, vector<128x128xbf16>, vector<1x128xf32> -> vector<1x128xf32>
      %363 = vector.extract_strided_slice %238 {offsets = [0, 0], sizes = [16, 128], strides = [1, 1]} : vector<16x256xf32> to vector<16x128xf32>
      %364 = vector.extract_strided_slice %238 {offsets = [0, 128], sizes = [16, 128], strides = [1, 1]} : vector<16x256xf32> to vector<16x128xf32>
      %c0_147 = arith.constant 0 : index
      %c0_148 = arith.constant 0 : index
      %c0_149 = arith.constant 0 : index
      %365 = vector.load %arg20[%c0_147, %c0_148, %c0_149] : memref<2x128x128xbf16, #tpu.memory_space<vmem>>, vector<1x128x128xbf16>
      %366 = vector.shape_cast %365 : vector<1x128x128xbf16> to vector<128x128xbf16>
      %367 = vector.extract_strided_slice %362 {offsets = [0, 0], sizes = [1, 32], strides = [1, 1]} : vector<1x128xf32> to vector<1x32xf32>
      %368 = vector.extract_strided_slice %362 {offsets = [0, 32], sizes = [1, 32], strides = [1, 1]} : vector<1x128xf32> to vector<1x32xf32>
      %369 = vector.extract_strided_slice %362 {offsets = [0, 64], sizes = [1, 32], strides = [1, 1]} : vector<1x128xf32> to vector<1x32xf32>
      %370 = vector.extract_strided_slice %362 {offsets = [0, 96], sizes = [1, 32], strides = [1, 1]} : vector<1x128xf32> to vector<1x32xf32>
      %371 = vector.shape_cast %367 : vector<1x32xf32> to vector<1x1x32xf32>
      %372 = vector.shape_cast %368 : vector<1x32xf32> to vector<1x1x32xf32>
      %373 = vector.shape_cast %369 : vector<1x32xf32> to vector<1x1x32xf32>
      %374 = vector.shape_cast %370 : vector<1x32xf32> to vector<1x1x32xf32>
      %375 = tpu.concatenate %371, %372, %373, %374 in 0 : vector<1x1x32xf32>, vector<1x1x32xf32>, vector<1x1x32xf32>, vector<1x1x32xf32> -> vector<4x1x32xf32>
      %376 = arith.truncf %375 : vector<4x1x32xf32> to vector<4x1x32xbf16>
      %377 = vector.extract_strided_slice %363 {offsets = [0, 0], sizes = [16, 32], strides = [1, 1]} : vector<16x128xf32> to vector<16x32xf32>
      %378 = vector.extract_strided_slice %363 {offsets = [0, 32], sizes = [16, 32], strides = [1, 1]} : vector<16x128xf32> to vector<16x32xf32>
      %379 = vector.extract_strided_slice %363 {offsets = [0, 64], sizes = [16, 32], strides = [1, 1]} : vector<16x128xf32> to vector<16x32xf32>
      %380 = vector.extract_strided_slice %363 {offsets = [0, 96], sizes = [16, 32], strides = [1, 1]} : vector<16x128xf32> to vector<16x32xf32>
      %381 = vector.shape_cast %377 : vector<16x32xf32> to vector<1x16x32xf32>
      %382 = vector.shape_cast %378 : vector<16x32xf32> to vector<1x16x32xf32>
      %383 = vector.shape_cast %379 : vector<16x32xf32> to vector<1x16x32xf32>
      %384 = vector.shape_cast %380 : vector<16x32xf32> to vector<1x16x32xf32>
      %385 = tpu.concatenate %381, %382, %383, %384 in 0 : vector<1x16x32xf32>, vector<1x16x32xf32>, vector<1x16x32xf32>, vector<1x16x32xf32> -> vector<4x16x32xf32>
      %386 = arith.truncf %385 : vector<4x16x32xf32> to vector<4x16x32xbf16>
      %387 = vector.extract_strided_slice %364 {offsets = [0, 0], sizes = [16, 32], strides = [1, 1]} : vector<16x128xf32> to vector<16x32xf32>
      %388 = vector.extract_strided_slice %364 {offsets = [0, 32], sizes = [16, 32], strides = [1, 1]} : vector<16x128xf32> to vector<16x32xf32>
      %389 = vector.extract_strided_slice %364 {offsets = [0, 64], sizes = [16, 32], strides = [1, 1]} : vector<16x128xf32> to vector<16x32xf32>
      %390 = vector.extract_strided_slice %364 {offsets = [0, 96], sizes = [16, 32], strides = [1, 1]} : vector<16x128xf32> to vector<16x32xf32>
      %391 = vector.shape_cast %387 : vector<16x32xf32> to vector<1x16x32xf32>
      %392 = vector.shape_cast %388 : vector<16x32xf32> to vector<1x16x32xf32>
      %393 = vector.shape_cast %389 : vector<16x32xf32> to vector<1x16x32xf32>
      %394 = vector.shape_cast %390 : vector<16x32xf32> to vector<1x16x32xf32>
      %395 = tpu.concatenate %391, %392, %393, %394 in 0 : vector<1x16x32xf32>, vector<1x16x32xf32>, vector<1x16x32xf32>, vector<1x16x32xf32> -> vector<4x16x32xf32>
      %396 = arith.truncf %395 : vector<4x16x32xf32> to vector<4x16x32xbf16>
      "tpu.trace_start"() <{level = 10 : i32, message = "hqd,hkd->hqk"}> : () -> ()
      %cst_150 = arith.constant dense<0.000000e+00> : vector<4x1x16xf32>
      %397 = tpu.matmul %376, %386, %cst_150 {dimension_numbers = #tpu.dot_dimension_numbers<[2], [2], [1], [1], [0, 0, 0, 1, 1, 1], [0], [0]>} : vector<4x1x32xbf16>, vector<4x16x32xbf16>, vector<4x1x16xf32> -> vector<4x1x16xf32>
      "tpu.trace_stop"() : () -> ()
      %cst_151 = arith.constant dense<0xFF800000> : vector<4x1xf32>
      %398 = vector.multi_reduction <maximumf>, %397, %cst_151 [2] : vector<4x1x16xf32> to vector<4x1xf32>
      %399 = vector.shape_cast %398 : vector<4x1xf32> to vector<4x1x1xf32>
      %400 = vector.broadcast %399 : vector<4x1x1xf32> to vector<4x1x16xf32>
      %401 = arith.subf %397, %400 : vector<4x1x16xf32>
      %402 = math.exp %401 : vector<4x1x16xf32>
      %cst_152 = arith.constant dense<0.000000e+00> : vector<4x1xf32>
      %403 = vector.multi_reduction <add>, %402, %cst_152 [2] : vector<4x1x16xf32> to vector<4x1xf32>
      %404 = vector.shape_cast %403 : vector<4x1xf32> to vector<4x1x1xf32>
      %405 = tpu.reciprocal %404 : vector<4x1x1xf32> -> vector<4x1x1xf32>
      %406 = vector.broadcast %405 : vector<4x1x1xf32> to vector<4x1x16xf32>
      %407 = arith.mulf %402, %406 : vector<4x1x16xf32>
      %408 = arith.truncf %407 : vector<4x1x16xf32> to vector<4x1x16xbf16>
      "tpu.trace_start"() <{level = 10 : i32, message = "hqk,hkd->hqd"}> : () -> ()
      %cst_153 = arith.constant dense<0.000000e+00> : vector<4x1x32xf32>
      %409 = tpu.matmul %408, %396, %cst_153 {dimension_numbers = #tpu.dot_dimension_numbers<[2], [1], [1], [2], [0, 0, 0, 1, 1, 2], [0], [0]>} : vector<4x1x16xbf16>, vector<4x16x32xbf16>, vector<4x1x32xf32> -> vector<4x1x32xf32>
      "tpu.trace_stop"() : () -> ()
      %410 = vector.extract_strided_slice %409 {offsets = [0, 0, 0], sizes = [1, 1, 32], strides = [1, 1, 1]} : vector<4x1x32xf32> to vector<1x1x32xf32>
      %411 = vector.shape_cast %410 : vector<1x1x32xf32> to vector<1x32xf32>
      %412 = vector.extract_strided_slice %409 {offsets = [1, 0, 0], sizes = [1, 1, 32], strides = [1, 1, 1]} : vector<4x1x32xf32> to vector<1x1x32xf32>
      %413 = vector.shape_cast %412 : vector<1x1x32xf32> to vector<1x32xf32>
      %414 = vector.extract_strided_slice %409 {offsets = [2, 0, 0], sizes = [1, 1, 32], strides = [1, 1, 1]} : vector<4x1x32xf32> to vector<1x1x32xf32>
      %415 = vector.shape_cast %414 : vector<1x1x32xf32> to vector<1x32xf32>
      %416 = vector.extract_strided_slice %409 {offsets = [3, 0, 0], sizes = [1, 1, 32], strides = [1, 1, 1]} : vector<4x1x32xf32> to vector<1x1x32xf32>
      %417 = vector.shape_cast %416 : vector<1x1x32xf32> to vector<1x32xf32>
      %418 = tpu.concatenate %411, %413, %415, %417 in 1 : vector<1x32xf32>, vector<1x32xf32>, vector<1x32xf32>, vector<1x32xf32> -> vector<1x128xf32>
      %419 = arith.truncf %418 : vector<1x128xf32> to vector<1x128xbf16>
      %cst_154 = arith.constant dense<0.000000e+00> : vector<1x128xf32>
      %420 = tpu.matmul %419, %366, %cst_154 {dimension_numbers = #tpu.dot_dimension_numbers<[1], [0], [0], [1], [0, 0, 1, 1], [], []>} : vector<1x128xbf16>, vector<128x128xbf16>, vector<1x128xf32> -> vector<1x128xf32>
      %421 = arith.addf %345, %420 : vector<1x128xf32>
      %c0_155 = arith.constant 0 : index
      %c0_156 = arith.constant 0 : index
      %c0_157 = arith.constant 0 : index
      %422 = vector.load %arg21[%c0_155, %c0_156, %c0_157] : memref<2x1x128xf32, #tpu.memory_space<vmem>>, vector<1x1x128xf32>
      %423 = vector.shape_cast %422 : vector<1x1x128xf32> to vector<1x128xf32>
      %424 = arith.mulf %421, %421 : vector<1x128xf32>
      %cst_158 = arith.constant dense<0.000000e+00> : vector<1xf32>
      %425 = vector.multi_reduction <add>, %424, %cst_158 [1] : vector<1x128xf32> to vector<1xf32>
      %426 = vector.shape_cast %425 : vector<1xf32> to vector<1x1xf32>
      %cst_159 = arith.constant 1.280000e+02 : f32
      %427 = vector.broadcast %cst_159 : f32 to vector<1x1xf32>
      %428 = arith.divf %426, %427 : vector<1x1xf32>
      %cst_160 = arith.constant 9.99999997E-7 : f32
      %429 = vector.broadcast %cst_160 : f32 to vector<1x1xf32>
      %430 = arith.addf %428, %429 : vector<1x1xf32>
      %431 = math.rsqrt %430 : vector<1x1xf32>
      %432 = vector.broadcast %431 : vector<1x1xf32> to vector<1x128xf32>
      %433 = arith.mulf %421, %432 : vector<1x128xf32>
      %434 = arith.mulf %433, %423 : vector<1x128xf32>
      %435 = arith.truncf %434 : vector<1x128xf32> to vector<1x128xbf16>
      %c0_161 = arith.constant 0 : index
      %c0_162 = arith.constant 0 : index
      %c0_163 = arith.constant 0 : index
      %436 = vector.load %arg22[%c0_161, %c0_162, %c0_163] : memref<2x128x256xbf16, #tpu.memory_space<vmem>>, vector<1x128x256xbf16>
      %437 = vector.shape_cast %436 : vector<1x128x256xbf16> to vector<128x256xbf16>
      %cst_164 = arith.constant dense<0.000000e+00> : vector<1x256xf32>
      %438 = tpu.matmul %435, %437, %cst_164 {dimension_numbers = #tpu.dot_dimension_numbers<[1], [0], [0], [1], [0, 0, 1, 1], [], []>} : vector<1x128xbf16>, vector<128x256xbf16>, vector<1x256xf32> -> vector<1x256xf32>
      %cst_165 = arith.constant 0.000000e+00 : f32
      %439 = vector.broadcast %cst_165 : f32 to vector<1x256xf32>
      %440 = arith.maximumf %438, %439 : vector<1x256xf32>
      %441 = arith.truncf %440 : vector<1x256xf32> to vector<1x256xbf16>
      %c0_166 = arith.constant 0 : index
      %c0_167 = arith.constant 0 : index
      %c0_168 = arith.constant 0 : index
      %442 = vector.load %arg23[%c0_166, %c0_167, %c0_168] : memref<2x256x128xbf16, #tpu.memory_space<vmem>>, vector<1x256x128xbf16>
      %443 = vector.shape_cast %442 : vector<1x256x128xbf16> to vector<256x128xbf16>
      %cst_169 = arith.constant dense<0.000000e+00> : vector<1x128xf32>
      %444 = tpu.matmul %441, %443, %cst_169 {dimension_numbers = #tpu.dot_dimension_numbers<[1], [0], [0], [1], [0, 0, 1, 1], [], []>} : vector<1x256xbf16>, vector<256x128xbf16>, vector<1x128xf32> -> vector<1x128xf32>
      %445 = arith.addf %421, %444 : vector<1x128xf32>
      %c1_170 = arith.constant 1 : index
      %c0_171 = arith.constant 0 : index
      %c0_172 = arith.constant 0 : index
      %446 = vector.load %arg13[%c1_170, %c0_171, %c0_172] : memref<2x1x128xf32, #tpu.memory_space<vmem>>, vector<1x1x128xf32>
      %447 = vector.shape_cast %446 : vector<1x1x128xf32> to vector<1x128xf32>
      %448 = arith.mulf %445, %445 : vector<1x128xf32>
      %cst_173 = arith.constant dense<0.000000e+00> : vector<1xf32>
      %449 = vector.multi_reduction <add>, %448, %cst_173 [1] : vector<1x128xf32> to vector<1xf32>
      %450 = vector.shape_cast %449 : vector<1xf32> to vector<1x1xf32>
      %cst_174 = arith.constant 1.280000e+02 : f32
      %451 = vector.broadcast %cst_174 : f32 to vector<1x1xf32>
      %452 = arith.divf %450, %451 : vector<1x1xf32>
      %cst_175 = arith.constant 9.99999997E-7 : f32
      %453 = vector.broadcast %cst_175 : f32 to vector<1x1xf32>
      %454 = arith.addf %452, %453 : vector<1x1xf32>
      %455 = math.rsqrt %454 : vector<1x1xf32>
      %456 = vector.broadcast %455 : vector<1x1xf32> to vector<1x128xf32>
      %457 = arith.mulf %445, %456 : vector<1x128xf32>
      %458 = arith.mulf %457, %447 : vector<1x128xf32>
      %459 = arith.truncf %458 : vector<1x128xf32> to vector<1x128xbf16>
      %c1_176 = arith.constant 1 : index
      %c0_177 = arith.constant 0 : index
      %c0_178 = arith.constant 0 : index
      %460 = vector.load %arg14[%c1_176, %c0_177, %c0_178] : memref<2x128x128xbf16, #tpu.memory_space<vmem>>, vector<1x128x128xbf16>
      %461 = vector.shape_cast %460 : vector<1x128x128xbf16> to vector<128x128xbf16>
      %cst_179 = arith.constant dense<0.000000e+00> : vector<1x128xf32>
      %462 = tpu.matmul %459, %461, %cst_179 {dimension_numbers = #tpu.dot_dimension_numbers<[1], [0], [0], [1], [0, 0, 1, 1], [], []>} : vector<1x128xbf16>, vector<128x128xbf16>, vector<1x128xf32> -> vector<1x128xf32>
      %463 = arith.truncf %458 : vector<1x128xf32> to vector<1x128xbf16>
      %c1_180 = arith.constant 1 : index
      %c0_181 = arith.constant 0 : index
      %c0_182 = arith.constant 0 : index
      %464 = vector.load %arg15[%c1_180, %c0_181, %c0_182] : memref<2x128x256xbf16, #tpu.memory_space<vmem>>, vector<1x128x256xbf16>
      %465 = vector.shape_cast %464 : vector<1x128x256xbf16> to vector<128x256xbf16>
      %cst_183 = arith.constant dense<0.000000e+00> : vector<1x256xf32>
      %466 = tpu.matmul %463, %465, %cst_183 {dimension_numbers = #tpu.dot_dimension_numbers<[1], [0], [0], [1], [0, 0, 1, 1], [], []>} : vector<1x128xbf16>, vector<128x256xbf16>, vector<1x256xf32> -> vector<1x256xf32>
      %c1_184 = arith.constant 1 : index
      %467 = arith.index_cast %arg29 : i32 to index
      %c0_185 = arith.constant 0 : index
      %468 = vector.load %arg28[%c1_184, %467, %c0_185] : memref<2x16x256xf32, #tpu.memory_space<vmem>>, vector<1x1x256xf32>
      %469 = vector.shape_cast %468 : vector<1x1x256xf32> to vector<1x256xf32>
      %470 = vector.shape_cast %466 : vector<1x256xf32> to vector<1x1x256xf32>
      tpu.vector_store %arg28[%c1_184, %467, %c0_185], %470 {strides = array<i32>} : memref<2x16x256xf32, #tpu.memory_space<vmem>>, vector<1x1x256xf32>,
      %c1_186 = arith.constant 1 : index
      %c0_187 = arith.constant 0 : index
      %c0_188 = arith.constant 0 : index
      %471 = vector.load %arg28[%c1_186, %c0_187, %c0_188] : memref<2x16x256xf32, #tpu.memory_space<vmem>>, vector<1x16x256xf32>
      %472 = vector.shape_cast %471 : vector<1x16x256xf32> to vector<16x256xf32>
      %c0_189 = arith.constant 0 : index
      %473 = arith.index_cast %arg29 : i32 to index
      %c0_190 = arith.constant 0 : index
      %474 = vector.load %arg4[%c0_189, %473, %c0_190] : memref<4x16x16xf32, #tpu.memory_space<vmem>>, vector<4x1x16xf32>
      %475 = vector.extract_strided_slice %472 {offsets = [0, 0], sizes = [16, 128], strides = [1, 1]} : vector<16x256xf32> to vector<16x128xf32>
      %476 = vector.extract_strided_slice %472 {offsets = [0, 128], sizes = [16, 128], strides = [1, 1]} : vector<16x256xf32> to vector<16x128xf32>
      %c1_191 = arith.constant 1 : index
      %c0_192 = arith.constant 0 : index
      %c0_193 = arith.constant 0 : index
      %477 = vector.load %arg16[%c1_191, %c0_192, %c0_193] : memref<2x128x128xbf16, #tpu.memory_space<vmem>>, vector<1x128x128xbf16>
      %478 = vector.shape_cast %477 : vector<1x128x128xbf16> to vector<128x128xbf16>
      %479 = vector.extract_strided_slice %462 {offsets = [0, 0], sizes = [1, 32], strides = [1, 1]} : vector<1x128xf32> to vector<1x32xf32>
      %480 = vector.extract_strided_slice %462 {offsets = [0, 32], sizes = [1, 32], strides = [1, 1]} : vector<1x128xf32> to vector<1x32xf32>
      %481 = vector.extract_strided_slice %462 {offsets = [0, 64], sizes = [1, 32], strides = [1, 1]} : vector<1x128xf32> to vector<1x32xf32>
      %482 = vector.extract_strided_slice %462 {offsets = [0, 96], sizes = [1, 32], strides = [1, 1]} : vector<1x128xf32> to vector<1x32xf32>
      %483 = vector.shape_cast %479 : vector<1x32xf32> to vector<1x1x32xf32>
      %484 = vector.shape_cast %480 : vector<1x32xf32> to vector<1x1x32xf32>
      %485 = vector.shape_cast %481 : vector<1x32xf32> to vector<1x1x32xf32>
      %486 = vector.shape_cast %482 : vector<1x32xf32> to vector<1x1x32xf32>
      %487 = tpu.concatenate %483, %484, %485, %486 in 0 : vector<1x1x32xf32>, vector<1x1x32xf32>, vector<1x1x32xf32>, vector<1x1x32xf32> -> vector<4x1x32xf32>
      %488 = arith.truncf %487 : vector<4x1x32xf32> to vector<4x1x32xbf16>
      %489 = vector.extract_strided_slice %475 {offsets = [0, 0], sizes = [16, 32], strides = [1, 1]} : vector<16x128xf32> to vector<16x32xf32>
      %490 = vector.extract_strided_slice %475 {offsets = [0, 32], sizes = [16, 32], strides = [1, 1]} : vector<16x128xf32> to vector<16x32xf32>
      %491 = vector.extract_strided_slice %475 {offsets = [0, 64], sizes = [16, 32], strides = [1, 1]} : vector<16x128xf32> to vector<16x32xf32>
      %492 = vector.extract_strided_slice %475 {offsets = [0, 96], sizes = [16, 32], strides = [1, 1]} : vector<16x128xf32> to vector<16x32xf32>
      %493 = vector.shape_cast %489 : vector<16x32xf32> to vector<1x16x32xf32>
      %494 = vector.shape_cast %490 : vector<16x32xf32> to vector<1x16x32xf32>
      %495 = vector.shape_cast %491 : vector<16x32xf32> to vector<1x16x32xf32>
      %496 = vector.shape_cast %492 : vector<16x32xf32> to vector<1x16x32xf32>
      %497 = tpu.concatenate %493, %494, %495, %496 in 0 : vector<1x16x32xf32>, vector<1x16x32xf32>, vector<1x16x32xf32>, vector<1x16x32xf32> -> vector<4x16x32xf32>
      %498 = arith.truncf %497 : vector<4x16x32xf32> to vector<4x16x32xbf16>
      %499 = vector.extract_strided_slice %476 {offsets = [0, 0], sizes = [16, 32], strides = [1, 1]} : vector<16x128xf32> to vector<16x32xf32>
      %500 = vector.extract_strided_slice %476 {offsets = [0, 32], sizes = [16, 32], strides = [1, 1]} : vector<16x128xf32> to vector<16x32xf32>
      %501 = vector.extract_strided_slice %476 {offsets = [0, 64], sizes = [16, 32], strides = [1, 1]} : vector<16x128xf32> to vector<16x32xf32>
      %502 = vector.extract_strided_slice %476 {offsets = [0, 96], sizes = [16, 32], strides = [1, 1]} : vector<16x128xf32> to vector<16x32xf32>
      %503 = vector.shape_cast %499 : vector<16x32xf32> to vector<1x16x32xf32>
      %504 = vector.shape_cast %500 : vector<16x32xf32> to vector<1x16x32xf32>
      %505 = vector.shape_cast %501 : vector<16x32xf32> to vector<1x16x32xf32>
      %506 = vector.shape_cast %502 : vector<16x32xf32> to vector<1x16x32xf32>
      %507 = tpu.concatenate %503, %504, %505, %506 in 0 : vector<1x16x32xf32>, vector<1x16x32xf32>, vector<1x16x32xf32>, vector<1x16x32xf32> -> vector<4x16x32xf32>
      %508 = arith.truncf %507 : vector<4x16x32xf32> to vector<4x16x32xbf16>
      "tpu.trace_start"() <{level = 10 : i32, message = "hqd,hkd->hqk"}> : () -> ()
      %cst_194 = arith.constant dense<0.000000e+00> : vector<4x1x16xf32>
      %509 = tpu.matmul %488, %498, %cst_194 {dimension_numbers = #tpu.dot_dimension_numbers<[2], [2], [1], [1], [0, 0, 0, 1, 1, 1], [0], [0]>} : vector<4x1x32xbf16>, vector<4x16x32xbf16>, vector<4x1x16xf32> -> vector<4x1x16xf32>
      "tpu.trace_stop"() : () -> ()
      %510 = arith.addf %509, %474 : vector<4x1x16xf32>
      %cst_195 = arith.constant dense<0xFF800000> : vector<4x1xf32>
      %511 = vector.multi_reduction <maximumf>, %510, %cst_195 [2] : vector<4x1x16xf32> to vector<4x1xf32>
      %512 = vector.shape_cast %511 : vector<4x1xf32> to vector<4x1x1xf32>
      %513 = vector.broadcast %512 : vector<4x1x1xf32> to vector<4x1x16xf32>
      %514 = arith.subf %510, %513 : vector<4x1x16xf32>
      %515 = math.exp %514 : vector<4x1x16xf32>
      %cst_196 = arith.constant dense<0.000000e+00> : vector<4x1xf32>
      %516 = vector.multi_reduction <add>, %515, %cst_196 [2] : vector<4x1x16xf32> to vector<4x1xf32>
      %517 = vector.shape_cast %516 : vector<4x1xf32> to vector<4x1x1xf32>
      %518 = tpu.reciprocal %517 : vector<4x1x1xf32> -> vector<4x1x1xf32>
      %519 = vector.broadcast %518 : vector<4x1x1xf32> to vector<4x1x16xf32>
      %520 = arith.mulf %515, %519 : vector<4x1x16xf32>
      %521 = arith.truncf %520 : vector<4x1x16xf32> to vector<4x1x16xbf16>
      "tpu.trace_start"() <{level = 10 : i32, message = "hqk,hkd->hqd"}> : () -> ()
      %cst_197 = arith.constant dense<0.000000e+00> : vector<4x1x32xf32>
      %522 = tpu.matmul %521, %508, %cst_197 {dimension_numbers = #tpu.dot_dimension_numbers<[2], [1], [1], [2], [0, 0, 0, 1, 1, 2], [0], [0]>} : vector<4x1x16xbf16>, vector<4x16x32xbf16>, vector<4x1x32xf32> -> vector<4x1x32xf32>
      "tpu.trace_stop"() : () -> ()
      %523 = vector.extract_strided_slice %522 {offsets = [0, 0, 0], sizes = [1, 1, 32], strides = [1, 1, 1]} : vector<4x1x32xf32> to vector<1x1x32xf32>
      %524 = vector.shape_cast %523 : vector<1x1x32xf32> to vector<1x32xf32>
      %525 = vector.extract_strided_slice %522 {offsets = [1, 0, 0], sizes = [1, 1, 32], strides = [1, 1, 1]} : vector<4x1x32xf32> to vector<1x1x32xf32>
      %526 = vector.shape_cast %525 : vector<1x1x32xf32> to vector<1x32xf32>
      %527 = vector.extract_strided_slice %522 {offsets = [2, 0, 0], sizes = [1, 1, 32], strides = [1, 1, 1]} : vector<4x1x32xf32> to vector<1x1x32xf32>
      %528 = vector.shape_cast %527 : vector<1x1x32xf32> to vector<1x32xf32>
      %529 = vector.extract_strided_slice %522 {offsets = [3, 0, 0], sizes = [1, 1, 32], strides = [1, 1, 1]} : vector<4x1x32xf32> to vector<1x1x32xf32>
      %530 = vector.shape_cast %529 : vector<1x1x32xf32> to vector<1x32xf32>
      %531 = tpu.concatenate %524, %526, %528, %530 in 1 : vector<1x32xf32>, vector<1x32xf32>, vector<1x32xf32>, vector<1x32xf32> -> vector<1x128xf32>
      %532 = arith.truncf %531 : vector<1x128xf32> to vector<1x128xbf16>
      %cst_198 = arith.constant dense<0.000000e+00> : vector<1x128xf32>
      %533 = tpu.matmul %532, %478, %cst_198 {dimension_numbers = #tpu.dot_dimension_numbers<[1], [0], [0], [1], [0, 0, 1, 1], [], []>} : vector<1x128xbf16>, vector<128x128xbf16>, vector<1x128xf32> -> vector<1x128xf32>
      %534 = arith.addf %445, %533 : vector<1x128xf32>
      %c1_199 = arith.constant 1 : index
      %c0_200 = arith.constant 0 : index
      %c0_201 = arith.constant 0 : index
      %535 = vector.load %arg17[%c1_199, %c0_200, %c0_201] : memref<2x1x128xf32, #tpu.memory_space<vmem>>, vector<1x1x128xf32>
      %536 = vector.shape_cast %535 : vector<1x1x128xf32> to vector<1x128xf32>
      %537 = arith.mulf %534, %534 : vector<1x128xf32>
      %cst_202 = arith.constant dense<0.000000e+00> : vector<1xf32>
      %538 = vector.multi_reduction <add>, %537, %cst_202 [1] : vector<1x128xf32> to vector<1xf32>
      %539 = vector.shape_cast %538 : vector<1xf32> to vector<1x1xf32>
      %cst_203 = arith.constant 1.280000e+02 : f32
      %540 = vector.broadcast %cst_203 : f32 to vector<1x1xf32>
      %541 = arith.divf %539, %540 : vector<1x1xf32>
      %cst_204 = arith.constant 9.99999997E-7 : f32
      %542 = vector.broadcast %cst_204 : f32 to vector<1x1xf32>
      %543 = arith.addf %541, %542 : vector<1x1xf32>
      %544 = math.rsqrt %543 : vector<1x1xf32>
      %545 = vector.broadcast %544 : vector<1x1xf32> to vector<1x128xf32>
      %546 = arith.mulf %534, %545 : vector<1x128xf32>
      %547 = arith.mulf %546, %536 : vector<1x128xf32>
      %548 = arith.truncf %547 : vector<1x128xf32> to vector<1x128xbf16>
      %c1_205 = arith.constant 1 : index
      %c0_206 = arith.constant 0 : index
      %c0_207 = arith.constant 0 : index
      %549 = vector.load %arg18[%c1_205, %c0_206, %c0_207] : memref<2x128x128xbf16, #tpu.memory_space<vmem>>, vector<1x128x128xbf16>
      %550 = vector.shape_cast %549 : vector<1x128x128xbf16> to vector<128x128xbf16>
      %cst_208 = arith.constant dense<0.000000e+00> : vector<1x128xf32>
      %551 = tpu.matmul %548, %550, %cst_208 {dimension_numbers = #tpu.dot_dimension_numbers<[1], [0], [0], [1], [0, 0, 1, 1], [], []>} : vector<1x128xbf16>, vector<128x128xbf16>, vector<1x128xf32> -> vector<1x128xf32>
      %552 = vector.extract_strided_slice %241 {offsets = [0, 0], sizes = [16, 128], strides = [1, 1]} : vector<16x256xf32> to vector<16x128xf32>
      %553 = vector.extract_strided_slice %241 {offsets = [0, 128], sizes = [16, 128], strides = [1, 1]} : vector<16x256xf32> to vector<16x128xf32>
      %c1_209 = arith.constant 1 : index
      %c0_210 = arith.constant 0 : index
      %c0_211 = arith.constant 0 : index
      %554 = vector.load %arg20[%c1_209, %c0_210, %c0_211] : memref<2x128x128xbf16, #tpu.memory_space<vmem>>, vector<1x128x128xbf16>
      %555 = vector.shape_cast %554 : vector<1x128x128xbf16> to vector<128x128xbf16>
      %556 = vector.extract_strided_slice %551 {offsets = [0, 0], sizes = [1, 32], strides = [1, 1]} : vector<1x128xf32> to vector<1x32xf32>
      %557 = vector.extract_strided_slice %551 {offsets = [0, 32], sizes = [1, 32], strides = [1, 1]} : vector<1x128xf32> to vector<1x32xf32>
      %558 = vector.extract_strided_slice %551 {offsets = [0, 64], sizes = [1, 32], strides = [1, 1]} : vector<1x128xf32> to vector<1x32xf32>
      %559 = vector.extract_strided_slice %551 {offsets = [0, 96], sizes = [1, 32], strides = [1, 1]} : vector<1x128xf32> to vector<1x32xf32>
      %560 = vector.shape_cast %556 : vector<1x32xf32> to vector<1x1x32xf32>
      %561 = vector.shape_cast %557 : vector<1x32xf32> to vector<1x1x32xf32>
      %562 = vector.shape_cast %558 : vector<1x32xf32> to vector<1x1x32xf32>
      %563 = vector.shape_cast %559 : vector<1x32xf32> to vector<1x1x32xf32>
      %564 = tpu.concatenate %560, %561, %562, %563 in 0 : vector<1x1x32xf32>, vector<1x1x32xf32>, vector<1x1x32xf32>, vector<1x1x32xf32> -> vector<4x1x32xf32>
      %565 = arith.truncf %564 : vector<4x1x32xf32> to vector<4x1x32xbf16>
      %566 = vector.extract_strided_slice %552 {offsets = [0, 0], sizes = [16, 32], strides = [1, 1]} : vector<16x128xf32> to vector<16x32xf32>
      %567 = vector.extract_strided_slice %552 {offsets = [0, 32], sizes = [16, 32], strides = [1, 1]} : vector<16x128xf32> to vector<16x32xf32>
      %568 = vector.extract_strided_slice %552 {offsets = [0, 64], sizes = [16, 32], strides = [1, 1]} : vector<16x128xf32> to vector<16x32xf32>
      %569 = vector.extract_strided_slice %552 {offsets = [0, 96], sizes = [16, 32], strides = [1, 1]} : vector<16x128xf32> to vector<16x32xf32>
      %570 = vector.shape_cast %566 : vector<16x32xf32> to vector<1x16x32xf32>
      %571 = vector.shape_cast %567 : vector<16x32xf32> to vector<1x16x32xf32>
      %572 = vector.shape_cast %568 : vector<16x32xf32> to vector<1x16x32xf32>
      %573 = vector.shape_cast %569 : vector<16x32xf32> to vector<1x16x32xf32>
      %574 = tpu.concatenate %570, %571, %572, %573 in 0 : vector<1x16x32xf32>, vector<1x16x32xf32>, vector<1x16x32xf32>, vector<1x16x32xf32> -> vector<4x16x32xf32>
      %575 = arith.truncf %574 : vector<4x16x32xf32> to vector<4x16x32xbf16>
      %576 = vector.extract_strided_slice %553 {offsets = [0, 0], sizes = [16, 32], strides = [1, 1]} : vector<16x128xf32> to vector<16x32xf32>
      %577 = vector.extract_strided_slice %553 {offsets = [0, 32], sizes = [16, 32], strides = [1, 1]} : vector<16x128xf32> to vector<16x32xf32>
      %578 = vector.extract_strided_slice %553 {offsets = [0, 64], sizes = [16, 32], strides = [1, 1]} : vector<16x128xf32> to vector<16x32xf32>
      %579 = vector.extract_strided_slice %553 {offsets = [0, 96], sizes = [16, 32], strides = [1, 1]} : vector<16x128xf32> to vector<16x32xf32>
      %580 = vector.shape_cast %576 : vector<16x32xf32> to vector<1x16x32xf32>
      %581 = vector.shape_cast %577 : vector<16x32xf32> to vector<1x16x32xf32>
      %582 = vector.shape_cast %578 : vector<16x32xf32> to vector<1x16x32xf32>
      %583 = vector.shape_cast %579 : vector<16x32xf32> to vector<1x16x32xf32>
      %584 = tpu.concatenate %580, %581, %582, %583 in 0 : vector<1x16x32xf32>, vector<1x16x32xf32>, vector<1x16x32xf32>, vector<1x16x32xf32> -> vector<4x16x32xf32>
      %585 = arith.truncf %584 : vector<4x16x32xf32> to vector<4x16x32xbf16>
      "tpu.trace_start"() <{level = 10 : i32, message = "hqd,hkd->hqk"}> : () -> ()
      %cst_212 = arith.constant dense<0.000000e+00> : vector<4x1x16xf32>
      %586 = tpu.matmul %565, %575, %cst_212 {dimension_numbers = #tpu.dot_dimension_numbers<[2], [2], [1], [1], [0, 0, 0, 1, 1, 1], [0], [0]>} : vector<4x1x32xbf16>, vector<4x16x32xbf16>, vector<4x1x16xf32> -> vector<4x1x16xf32>
      "tpu.trace_stop"() : () -> ()
      %cst_213 = arith.constant dense<0xFF800000> : vector<4x1xf32>
      %587 = vector.multi_reduction <maximumf>, %586, %cst_213 [2] : vector<4x1x16xf32> to vector<4x1xf32>
      %588 = vector.shape_cast %587 : vector<4x1xf32> to vector<4x1x1xf32>
      %589 = vector.broadcast %588 : vector<4x1x1xf32> to vector<4x1x16xf32>
      %590 = arith.subf %586, %589 : vector<4x1x16xf32>
      %591 = math.exp %590 : vector<4x1x16xf32>
      %cst_214 = arith.constant dense<0.000000e+00> : vector<4x1xf32>
      %592 = vector.multi_reduction <add>, %591, %cst_214 [2] : vector<4x1x16xf32> to vector<4x1xf32>
      %593 = vector.shape_cast %592 : vector<4x1xf32> to vector<4x1x1xf32>
      %594 = tpu.reciprocal %593 : vector<4x1x1xf32> -> vector<4x1x1xf32>
      %595 = vector.broadcast %594 : vector<4x1x1xf32> to vector<4x1x16xf32>
      %596 = arith.mulf %591, %595 : vector<4x1x16xf32>
      %597 = arith.truncf %596 : vector<4x1x16xf32> to vector<4x1x16xbf16>
      "tpu.trace_start"() <{level = 10 : i32, message = "hqk,hkd->hqd"}> : () -> ()
      %cst_215 = arith.constant dense<0.000000e+00> : vector<4x1x32xf32>
      %598 = tpu.matmul %597, %585, %cst_215 {dimension_numbers = #tpu.dot_dimension_numbers<[2], [1], [1], [2], [0, 0, 0, 1, 1, 2], [0], [0]>} : vector<4x1x16xbf16>, vector<4x16x32xbf16>, vector<4x1x32xf32> -> vector<4x1x32xf32>
      "tpu.trace_stop"() : () -> ()
      %599 = vector.extract_strided_slice %598 {offsets = [0, 0, 0], sizes = [1, 1, 32], strides = [1, 1, 1]} : vector<4x1x32xf32> to vector<1x1x32xf32>
      %600 = vector.shape_cast %599 : vector<1x1x32xf32> to vector<1x32xf32>
      %601 = vector.extract_strided_slice %598 {offsets = [1, 0, 0], sizes = [1, 1, 32], strides = [1, 1, 1]} : vector<4x1x32xf32> to vector<1x1x32xf32>
      %602 = vector.shape_cast %601 : vector<1x1x32xf32> to vector<1x32xf32>
      %603 = vector.extract_strided_slice %598 {offsets = [2, 0, 0], sizes = [1, 1, 32], strides = [1, 1, 1]} : vector<4x1x32xf32> to vector<1x1x32xf32>
      %604 = vector.shape_cast %603 : vector<1x1x32xf32> to vector<1x32xf32>
      %605 = vector.extract_strided_slice %598 {offsets = [3, 0, 0], sizes = [1, 1, 32], strides = [1, 1, 1]} : vector<4x1x32xf32> to vector<1x1x32xf32>
      %606 = vector.shape_cast %605 : vector<1x1x32xf32> to vector<1x32xf32>
      %607 = tpu.concatenate %600, %602, %604, %606 in 1 : vector<1x32xf32>, vector<1x32xf32>, vector<1x32xf32>, vector<1x32xf32> -> vector<1x128xf32>
      %608 = arith.truncf %607 : vector<1x128xf32> to vector<1x128xbf16>
      %cst_216 = arith.constant dense<0.000000e+00> : vector<1x128xf32>
      %609 = tpu.matmul %608, %555, %cst_216 {dimension_numbers = #tpu.dot_dimension_numbers<[1], [0], [0], [1], [0, 0, 1, 1], [], []>} : vector<1x128xbf16>, vector<128x128xbf16>, vector<1x128xf32> -> vector<1x128xf32>
      %610 = arith.addf %534, %609 : vector<1x128xf32>
      %c1_217 = arith.constant 1 : index
      %c0_218 = arith.constant 0 : index
      %c0_219 = arith.constant 0 : index
      %611 = vector.load %arg21[%c1_217, %c0_218, %c0_219] : memref<2x1x128xf32, #tpu.memory_space<vmem>>, vector<1x1x128xf32>
      %612 = vector.shape_cast %611 : vector<1x1x128xf32> to vector<1x128xf32>
      %613 = arith.mulf %610, %610 : vector<1x128xf32>
      %cst_220 = arith.constant dense<0.000000e+00> : vector<1xf32>
      %614 = vector.multi_reduction <add>, %613, %cst_220 [1] : vector<1x128xf32> to vector<1xf32>
      %615 = vector.shape_cast %614 : vector<1xf32> to vector<1x1xf32>
      %cst_221 = arith.constant 1.280000e+02 : f32
      %616 = vector.broadcast %cst_221 : f32 to vector<1x1xf32>
      %617 = arith.divf %615, %616 : vector<1x1xf32>
      %cst_222 = arith.constant 9.99999997E-7 : f32
      %618 = vector.broadcast %cst_222 : f32 to vector<1x1xf32>
      %619 = arith.addf %617, %618 : vector<1x1xf32>
      %620 = math.rsqrt %619 : vector<1x1xf32>
      %621 = vector.broadcast %620 : vector<1x1xf32> to vector<1x128xf32>
      %622 = arith.mulf %610, %621 : vector<1x128xf32>
      %623 = arith.mulf %622, %612 : vector<1x128xf32>
      %624 = arith.truncf %623 : vector<1x128xf32> to vector<1x128xbf16>
      %c1_223 = arith.constant 1 : index
      %c0_224 = arith.constant 0 : index
      %c0_225 = arith.constant 0 : index
      %625 = vector.load %arg22[%c1_223, %c0_224, %c0_225] : memref<2x128x256xbf16, #tpu.memory_space<vmem>>, vector<1x128x256xbf16>
      %626 = vector.shape_cast %625 : vector<1x128x256xbf16> to vector<128x256xbf16>
      %cst_226 = arith.constant dense<0.000000e+00> : vector<1x256xf32>
      %627 = tpu.matmul %624, %626, %cst_226 {dimension_numbers = #tpu.dot_dimension_numbers<[1], [0], [0], [1], [0, 0, 1, 1], [], []>} : vector<1x128xbf16>, vector<128x256xbf16>, vector<1x256xf32> -> vector<1x256xf32>
      %cst_227 = arith.constant 0.000000e+00 : f32
      %628 = vector.broadcast %cst_227 : f32 to vector<1x256xf32>
      %629 = arith.maximumf %627, %628 : vector<1x256xf32>
      %630 = arith.truncf %629 : vector<1x256xf32> to vector<1x256xbf16>
      %c1_228 = arith.constant 1 : index
      %c0_229 = arith.constant 0 : index
      %c0_230 = arith.constant 0 : index
      %631 = vector.load %arg23[%c1_228, %c0_229, %c0_230] : memref<2x256x128xbf16, #tpu.memory_space<vmem>>, vector<1x256x128xbf16>
      %632 = vector.shape_cast %631 : vector<1x256x128xbf16> to vector<256x128xbf16>
      %cst_231 = arith.constant dense<0.000000e+00> : vector<1x128xf32>
      %633 = tpu.matmul %630, %632, %cst_231 {dimension_numbers = #tpu.dot_dimension_numbers<[1], [0], [0], [1], [0, 0, 1, 1], [], []>} : vector<1x256xbf16>, vector<256x128xbf16>, vector<1x128xf32> -> vector<1x128xf32>
      %634 = arith.addf %610, %633 : vector<1x128xf32>
      %c0_232 = arith.constant 0 : index
      %c0_233 = arith.constant 0 : index
      %635 = vector.load %arg24[%c0_232, %c0_233] : memref<1x128xf32, #tpu.memory_space<vmem>>, vector<1x128xf32>
      %636 = arith.mulf %634, %634 : vector<1x128xf32>
      %cst_234 = arith.constant dense<0.000000e+00> : vector<1xf32>
      %637 = vector.multi_reduction <add>, %636, %cst_234 [1] : vector<1x128xf32> to vector<1xf32>
      %638 = vector.shape_cast %637 : vector<1xf32> to vector<1x1xf32>
      %cst_235 = arith.constant 1.280000e+02 : f32
      %639 = vector.broadcast %cst_235 : f32 to vector<1x1xf32>
      %640 = arith.divf %638, %639 : vector<1x1xf32>
      %cst_236 = arith.constant 9.99999997E-7 : f32
      %641 = vector.broadcast %cst_236 : f32 to vector<1x1xf32>
      %642 = arith.addf %640, %641 : vector<1x1xf32>
      %643 = math.rsqrt %642 : vector<1x1xf32>
      %644 = vector.broadcast %643 : vector<1x1xf32> to vector<1x128xf32>
      %645 = arith.mulf %634, %644 : vector<1x128xf32>
      %646 = arith.mulf %645, %635 : vector<1x128xf32>
      %cst_237 = arith.constant 0.0883883461 : f32
      %647 = vector.broadcast %cst_237 : f32 to vector<1x128xf32>
      %648 = arith.mulf %646, %647 : vector<1x128xf32>
      %649 = arith.truncf %648 : vector<1x128xf32> to vector<1x128xbf16>
      %cst_238 = arith.constant dense<0.000000e+00> : vector<1x128xf32>
      %650 = tpu.matmul %649, %243, %cst_238 {dimension_numbers = #tpu.dot_dimension_numbers<[1], [0], [0], [1], [0, 0, 1, 1], [], []>} : vector<1x128xbf16>, vector<128x128xbf16>, vector<1x128xf32> -> vector<1x128xf32>
      %cst_239 = arith.constant dense<0xFF800000> : vector<1xf32>
      %651 = vector.multi_reduction <maximumf>, %650, %cst_239 [1] : vector<1x128xf32> to vector<1xf32>
      %652 = vector.shape_cast %651 : vector<1xf32> to vector<1x1xf32>
      %653 = vector.broadcast %652 : vector<1x1xf32> to vector<1x128xf32>
      %654 = arith.cmpf oeq, %650, %653 : vector<1x128xf32>
      %c128_i32 = arith.constant 128 : i32
      %655 = vector.broadcast %c128_i32 : i32 to vector<1x128xi32>
      %656 = arith.select %654, %244, %655 : vector<1x128xi1>, vector<1x128xi32>
      %657 = vector.shape_cast %656 : vector<1x128xi32> to vector<1x1x128xi32>
      %cst_240 = arith.constant dense<2147483647> : vector<1xi32>
      %658 = vector.multi_reduction <minsi>, %657, %cst_240 [1, 2] : vector<1x1x128xi32> to vector<1xi32>
      %659 = vector.shape_cast %658 : vector<1xi32> to vector<1x1x1xi32>
      %660 = vector.extract %659[0, 0, 0] : i32 from vector<1x1x1xi32>
      %c0_i32_241 = arith.constant 0 : i32
      %661 = arith.select %arg32, %c0_i32_241, %660 : i32
      %c1_i32_242 = arith.constant 1 : i32
      %662 = arith.cmpi eq, %661, %c1_i32_242 : i32
      %663 = arith.ori %arg32, %662 : i1
      %c1_i32_243 = arith.constant 1 : i32
      %664 = arith.addi %arg29, %c1_i32_243 : i32
      %665 = vector.broadcast %664 : i32 to vector<1x128xi32>
      %666 = arith.cmpi eq, %244, %665 : vector<1x128xi32>
      %667 = vector.broadcast %661 : i32 to vector<1x128xi32>
      %668 = arith.select %666, %667, %arg30 : vector<1x128xi1>, vector<1x128xi32>
      scf.yield %668, %661, %663 : vector<1x128xi32>, i32, i1
    }
    %c15_i32_103 = arith.constant 15 : i32
    %c0_104 = arith.constant 0 : index
    %c0_105 = arith.constant 0 : index
    %c0_106 = arith.constant 0 : index
    %248 = vector.load %arg26[%c0_104, %c0_105, %c0_106] : memref<1x1x128xi32, #tpu.memory_space<vmem>>, vector<1x1x128xi32>
    %249 = vector.shape_cast %248 : vector<1x1x128xi32> to vector<1x128xi32>
    %250 = vector.shape_cast %247#0 : vector<1x128xi32> to vector<1x1x128xi32>
    tpu.vector_store %arg26[%c0_104, %c0_105, %c0_106], %250 {strides = array<i32>} : memref<1x1x128xi32, #tpu.memory_space<vmem>>, vector<1x1x128xi32>,
    return
  }
  func.func @transform_0(%arg0: i32) -> (i32, i32, i32) {
    %c0_i32 = arith.constant 0 : i32
    %c0_i32_0 = arith.constant 0 : i32
    %c0_i32_1 = arith.constant 0 : i32
    return %arg0, %c0_i32, %c0_i32_0 : i32, i32, i32
  }
  func.func @transform_1(%arg0: i32) -> (i32, i32) {
    %c0_i32 = arith.constant 0 : i32
    %c0_i32_0 = arith.constant 0 : i32
    %c0_i32_1 = arith.constant 0 : i32
    return %c0_i32, %c0_i32_0 : i32, i32
  }
  func.func @transform_2(%arg0: i32) -> (i32, i32, i32) {
    %c0_i32 = arith.constant 0 : i32
    %c0_i32_0 = arith.constant 0 : i32
    %c0_i32_1 = arith.constant 0 : i32
    %c0_i32_2 = arith.constant 0 : i32
    return %c0_i32, %c0_i32_0, %c0_i32_1 : i32, i32, i32
  }
  func.func @transform_3(%arg0: i32) -> (i32, i32, i32) {
    %c0_i32 = arith.constant 0 : i32
    %c0_i32_0 = arith.constant 0 : i32
    %c0_i32_1 = arith.constant 0 : i32
    %c0_i32_2 = arith.constant 0 : i32
    return %c0_i32, %c0_i32_0, %c0_i32_1 : i32, i32, i32
  }
  func.func @transform_4(%arg0: i32) -> (i32, i32, i32) {
    %c0_i32 = arith.constant 0 : i32
    %c0_i32_0 = arith.constant 0 : i32
    %c0_i32_1 = arith.constant 0 : i32
    %c0_i32_2 = arith.constant 0 : i32
    return %c0_i32, %c0_i32_0, %c0_i32_1 : i32, i32, i32
  }
  func.func @transform_5(%arg0: i32) -> (i32, i32, i32) {
    %c0_i32 = arith.constant 0 : i32
    %c0_i32_0 = arith.constant 0 : i32
    %c0_i32_1 = arith.constant 0 : i32
    %c0_i32_2 = arith.constant 0 : i32
    return %c0_i32, %c0_i32_0, %c0_i32_1 : i32, i32, i32
  }
  func.func @transform_6(%arg0: i32) -> (i32, i32, i32) {
    %c0_i32 = arith.constant 0 : i32
    %c0_i32_0 = arith.constant 0 : i32
    %c0_i32_1 = arith.constant 0 : i32
    %c0_i32_2 = arith.constant 0 : i32
    return %c0_i32, %c0_i32_0, %c0_i32_1 : i32, i32, i32
  }
  func.func @transform_7(%arg0: i32) -> (i32, i32, i32) {
    %c0_i32 = arith.constant 0 : i32
    %c0_i32_0 = arith.constant 0 : i32
    %c0_i32_1 = arith.constant 0 : i32
    %c0_i32_2 = arith.constant 0 : i32
    return %c0_i32, %c0_i32_0, %c0_i32_1 : i32, i32, i32
  }
  func.func @transform_8(%arg0: i32) -> (i32, i32, i32) {
    %c0_i32 = arith.constant 0 : i32
    %c0_i32_0 = arith.constant 0 : i32
    %c0_i32_1 = arith.constant 0 : i32
    %c0_i32_2 = arith.constant 0 : i32
    return %c0_i32, %c0_i32_0, %c0_i32_1 : i32, i32, i32
  }
  func.func @transform_9(%arg0: i32) -> (i32, i32, i32) {
    %c0_i32 = arith.constant 0 : i32
    %c0_i32_0 = arith.constant 0 : i32
    %c0_i32_1 = arith.constant 0 : i32
    %c0_i32_2 = arith.constant 0 : i32
    return %c0_i32, %c0_i32_0, %c0_i32_1 : i32, i32, i32
  }
  func.func @transform_10(%arg0: i32) -> (i32, i32, i32) {
    %c0_i32 = arith.constant 0 : i32
    %c0_i32_0 = arith.constant 0 : i32
    %c0_i32_1 = arith.constant 0 : i32
    %c0_i32_2 = arith.constant 0 : i32
    return %c0_i32, %c0_i32_0, %c0_i32_1 : i32, i32, i32
  }
  func.func @transform_11(%arg0: i32) -> (i32, i32) {
    %c0_i32 = arith.constant 0 : i32
    %c0_i32_0 = arith.constant 0 : i32
    %c0_i32_1 = arith.constant 0 : i32
    return %c0_i32, %c0_i32_0 : i32, i32
  }
  func.func @transform_12(%arg0: i32) -> (i32, i32, i32) {
    %c0_i32 = arith.constant 0 : i32
    %c0_i32_0 = arith.constant 0 : i32
    %c0_i32_1 = arith.constant 0 : i32
    %c0_i32_2 = arith.constant 0 : i32
    return %c0_i32, %c0_i32_0, %c0_i32_1 : i32, i32, i32
  }
  func.func @transform_13(%arg0: i32) -> (i32, i32, i32) {
    %c0_i32 = arith.constant 0 : i32
    %c0_i32_0 = arith.constant 0 : i32
    %c0_i32_1 = arith.constant 0 : i32
    %c0_i32_2 = arith.constant 0 : i32
    return %c0_i32, %c0_i32_0, %c0_i32_1 : i32, i32, i32
  }
  func.func @transform_14(%arg0: i32) -> (i32, i32, i32) {
    %c0_i32 = arith.constant 0 : i32
    %c0_i32_0 = arith.constant 0 : i32
    %c0_i32_1 = arith.constant 0 : i32
    %c0_i32_2 = arith.constant 0 : i32
    return %c0_i32, %c0_i32_0, %c0_i32_1 : i32, i32, i32
  }
  func.func @transform_15(%arg0: i32) -> (i32, i32, i32) {
    %c0_i32 = arith.constant 0 : i32
    %c0_i32_0 = arith.constant 0 : i32
    %c0_i32_1 = arith.constant 0 : i32
    %c0_i32_2 = arith.constant 0 : i32
    return %c0_i32, %c0_i32_0, %c0_i32_1 : i32, i32, i32
  }
  func.func @transform_16(%arg0: i32) -> (i32, i32, i32) {
    %c0_i32 = arith.constant 0 : i32
    %c0_i32_0 = arith.constant 0 : i32
    %c0_i32_1 = arith.constant 0 : i32
    %c0_i32_2 = arith.constant 0 : i32
    return %c0_i32, %c0_i32_0, %c0_i32_1 : i32, i32, i32
  }
  func.func @transform_17(%arg0: i32) -> (i32, i32, i32) {
    %c0_i32 = arith.constant 0 : i32
    %c0_i32_0 = arith.constant 0 : i32
    %c0_i32_1 = arith.constant 0 : i32
    %c0_i32_2 = arith.constant 0 : i32
    return %c0_i32, %c0_i32_0, %c0_i32_1 : i32, i32, i32
  }
  func.func @transform_18(%arg0: i32) -> (i32, i32, i32) {
    %c0_i32 = arith.constant 0 : i32
    %c0_i32_0 = arith.constant 0 : i32
    %c0_i32_1 = arith.constant 0 : i32
    %c0_i32_2 = arith.constant 0 : i32
    return %c0_i32, %c0_i32_0, %c0_i32_1 : i32, i32, i32
  }
  func.func @transform_19(%arg0: i32) -> (i32, i32, i32) {
    %c0_i32 = arith.constant 0 : i32
    %c0_i32_0 = arith.constant 0 : i32
    %c0_i32_1 = arith.constant 0 : i32
    %c0_i32_2 = arith.constant 0 : i32
    return %c0_i32, %c0_i32_0, %c0_i32_1 : i32, i32, i32
  }
  func.func @transform_20(%arg0: i32) -> (i32, i32, i32) {
    %c0_i32 = arith.constant 0 : i32
    %c0_i32_0 = arith.constant 0 : i32
    %c0_i32_1 = arith.constant 0 : i32
    %c0_i32_2 = arith.constant 0 : i32
    return %c0_i32, %c0_i32_0, %c0_i32_1 : i32, i32, i32
  }
  func.func @transform_21(%arg0: i32) -> (i32, i32, i32) {
    %c0_i32 = arith.constant 0 : i32
    %c0_i32_0 = arith.constant 0 : i32
    %c0_i32_1 = arith.constant 0 : i32
    %c0_i32_2 = arith.constant 0 : i32
    return %c0_i32, %c0_i32_0, %c0_i32_1 : i32, i32, i32
  }
  func.func @transform_22(%arg0: i32) -> (i32, i32, i32) {
    %c0_i32 = arith.constant 0 : i32
    %c0_i32_0 = arith.constant 0 : i32
    %c0_i32_1 = arith.constant 0 : i32
    %c0_i32_2 = arith.constant 0 : i32
    return %c0_i32, %c0_i32_0, %c0_i32_1 : i32, i32, i32
  }
  func.func @transform_23(%arg0: i32) -> (i32, i32) {
    %c0_i32 = arith.constant 0 : i32
    %c0_i32_0 = arith.constant 0 : i32
    %c0_i32_1 = arith.constant 0 : i32
    return %c0_i32, %c0_i32_0 : i32, i32
  }
  func.func @transform_24(%arg0: i32) -> (i32, i32) {
    %c0_i32 = arith.constant 0 : i32
    %c0_i32_0 = arith.constant 0 : i32
    %c0_i32_1 = arith.constant 0 : i32
    return %c0_i32, %c0_i32_0 : i32, i32
  }
  func.func @transform_25(%arg0: i32) -> (i32, i32, i32) {
    %c0_i32 = arith.constant 0 : i32
    %c0_i32_0 = arith.constant 0 : i32
    %c0_i32_1 = arith.constant 0 : i32
    return %arg0, %c0_i32, %c0_i32_0 : i32, i32, i32
  }
  func.func @transform_26(%arg0: i32) -> (i32, i32, i32) {
    %c0_i32 = arith.constant 0 : i32
    %c0_i32_0 = arith.constant 0 : i32
    %c0_i32_1 = arith.constant 0 : i32
    return %arg0, %c0_i32, %c0_i32_0 : i32, i32, i32
  }
}

</mosaic_0001>

<llo_original>
// kernel: generate_ids.1
$region0: #{generate_ids.1}
  #allocation0 [shape = 'u32[]', space=smem, size = 0x4, offset = 0x4, fixed_abs, tag = 'smem constant byte address 0x4 - core index']
  #allocation1 [shape = 'u32[144,128]{1,0:T(1,128)}', space=vmem, size = 0x12000, scoped, tag = 'internal scratch']
  #allocation2 [shape = 'f32[2,16,256]{2,1,0:T(8,128)}', space=vmem, size = 0x8000, scoped, tag = 'scratch operand']
  %s0 = inlined_call_operand.vmem [shape: f32[2,16,128], index: 0, kind: input, shape index: {}]
  %s1 = inlined_call_operand.hbm [shape: bf16[128,128], index: 1, kind: input, shape index: {}]
  %s2 = inlined_call_operand.hbm [shape: f32[4,16,16], index: 2, kind: input, shape index: {}]
  %s3 = inlined_call_operand.hbm [shape: f32[4,16,16], index: 3, kind: input, shape index: {}]
  %s4 = inlined_call_operand.vmem [shape: f32[2,1,128], index: 4, kind: input, shape index: {}]
  %s5 = inlined_call_operand.hbm [shape: bf16[2,128,128], index: 5, kind: input, shape index: {}]
  %s6 = inlined_call_operand.hbm [shape: bf16[2,128,256], index: 6, kind: input, shape index: {}]
  %s7 = inlined_call_operand.hbm [shape: bf16[2,128,128], index: 7, kind: input, shape index: {}]
  %s8 = inlined_call_operand.vmem [shape: f32[2,1,128], index: 8, kind: input, shape index: {}]
  %s9 = inlined_call_operand.hbm [shape: bf16[2,128,256], index: 9, kind: input, shape index: {}]
  %s10 = inlined_call_operand.hbm [shape: bf16[2,256,128], index: 10, kind: input, shape index: {}]
  %s11 = inlined_call_operand.vmem [shape: f32[1,128], index: 11, kind: input, shape index: {}]
  %s12 = inlined_call_operand.hbm [shape: f32[2,1,128], index: 12, kind: input, shape index: {}]
  %s13 = inlined_call_operand.hbm [shape: bf16[2,128,128], index: 13, kind: input, shape index: {}]
  %s14 = inlined_call_operand.hbm [shape: bf16[2,128,256], index: 14, kind: input, shape index: {}]
  %s15 = inlined_call_operand.hbm [shape: bf16[2,128,128], index: 15, kind: input, shape index: {}]
  %s16 = inlined_call_operand.hbm [shape: f32[2,1,128], index: 16, kind: input, shape index: {}]
  %s17 = inlined_call_operand.hbm [shape: bf16[2,128,128], index: 17, kind: input, shape index: {}]
  %s18 = inlined_call_operand.hbm [shape: bf16[2,128,256], index: 18, kind: input, shape index: {}]
  %s19 = inlined_call_operand.hbm [shape: bf16[2,128,128], index: 19, kind: input, shape index: {}]
  %s20 = inlined_call_operand.vmem [shape: f32[2,1,128], index: 20, kind: input, shape index: {}]
  %s21 = inlined_call_operand.hbm [shape: bf16[2,128,256], index: 21, kind: input, shape index: {}]
  %s22 = inlined_call_operand.hbm [shape: bf16[2,256,128], index: 22, kind: input, shape index: {}]
  %s23 = inlined_call_operand.hbm [shape: f32[1,128], index: 23, kind: input, shape index: {}]
  %s24 = inlined_call_operand.hbm [shape: bf16[128,128], index: 24, kind: input, shape index: {}]
  %s25 = inlined_call_operand.hbm [shape: s32[2,1,128], index: 25, kind: output, shape index: {0}]
  %s26 = inlined_call_operand.hbm [shape: f32[2,16,128], index: 26, kind: output, shape index: {1}]
  %27 = xla_tuple %s25, %s26
  %s28 = sld [smem:[#allocation0]]
  $region228: #{generate_ids.1} parent=0
    _
  %s30 = ssub.s32 1, %s28
  %s31 = scalar_select 0, %s30, %s28
  $region1: #{generate_ids.1} parent=0
    #allocation3 [shape = 'u8[32768]{0}', space=vmem, size = 0x8000, scoped, tag = 'input window, operand 1, single buffered']
    #allocation4 [shape = 's32[2]{0}', space=sflag, size = 0x8, scoped, tag = 'scoped memory for generate_ids.1']
    #allocation5 [shape = 's32[2]{0}', space=sflag, size = 0x8, scoped, tag = 'scoped memory for generate_ids.1']
    #allocation6 [shape = 'u8[32768]{0}', space=vmem, size = 0x8000, scoped, tag = 'input window, operand 2, single buffered']
    #allocation7 [shape = 's32[1]{0}', space=sflag, size = 0x4, scoped, tag = 'scoped memory for generate_ids.1']
    #allocation8 [shape = 'u8[32768]{0}', space=vmem, size = 0x8000, scoped, tag = 'input window, operand 3, single buffered']
    #allocation9 [shape = 'u8[65536]{0}', space=vmem, size = 0x10000, scoped, tag = 'input window, operand 5, single buffered']
    #allocation10 [shape = 's32[1]{0}', space=sflag, size = 0x4, scoped, tag = 'scoped memory for generate_ids.1']
    #allocation11 [shape = 'u8[131072]{0}', space=vmem, size = 0x20000, scoped, tag = 'input window, operand 6, single buffered']
    #allocation12 [shape = 'u8[65536]{0}', space=vmem, size = 0x10000, scoped, tag = 'input window, operand 7, single buffered']
    #allocation13 [shape = 's32[1]{0}', space=sflag, size = 0x4, scoped, tag = 'scoped memory for generate_ids.1']
    #allocation14 [shape = 'u8[131072]{0}', space=vmem, size = 0x20000, scoped, tag = 'input window, operand 9, single buffered']
    #allocation15 [shape = 'u8[131072]{0}', space=vmem, size = 0x20000, scoped, tag = 'input window, operand 10, single buffered']
    #allocation16 [shape = 's32[1]{0}', space=sflag, size = 0x4, scoped, tag = 'scoped memory for generate_ids.1']
    #allocation17 [shape = 'u8[1024]{0}', space=vmem, size = 0x400, scoped, tag = 'input window, operand 12, single buffered']
    #allocation18 [shape = 'u8[65536]{0}', space=vmem, size = 0x10000, scoped, tag = 'input window, operand 13, single buffered']
    #allocation19 [shape = 's32[1]{0}', space=sflag, size = 0x4, scoped, tag = 'scoped memory for generate_ids.1']
    #allocation20 [shape = 'u8[131072]{0}', space=vmem, size = 0x20000, scoped, tag = 'input window, operand 14, single buffered']
    #allocation21 [shape = 'u8[65536]{0}', space=vmem, size = 0x10000, scoped, tag = 'input window, operand 15, single buffered']
    #allocation22 [shape = 's32[1]{0}', space=sflag, size = 0x4, scoped, tag = 'scoped memory for generate_ids.1']
    #allocation23 [shape = 'u8[1024]{0}', space=vmem, size = 0x400, scoped, tag = 'input window, operand 16, single buffered']
    #allocation24 [shape = 'u8[65536]{0}', space=vmem, size = 0x10000, scoped, tag = 'input window, operand 17, single buffered']
    #allocation25 [shape = 's32[1]{0}', space=sflag, size = 0x4, scoped, tag = 'scoped memory for generate_ids.1']
    #allocation26 [shape = 'u8[131072]{0}', space=vmem, size = 0x20000, scoped, tag = 'input window, operand 18, single buffered']
    #allocation27 [shape = 'u8[65536]{0}', space=vmem, size = 0x10000, scoped, tag = 'input window, operand 19, single buffered']
    #allocation28 [shape = 's32[1]{0}', space=sflag, size = 0x4, scoped, tag = 'scoped memory for generate_ids.1']
    #allocation29 [shape = 'u8[131072]{0}', space=vmem, size = 0x20000, scoped, tag = 'input window, operand 21, single buffered']
    #allocation30 [shape = 'u8[131072]{0}', space=vmem, size = 0x20000, scoped, tag = 'input window, operand 22, single buffered']
    #allocation31 [shape = 's32[1]{0}', space=sflag, size = 0x4, scoped, tag = 'scoped memory for generate_ids.1']
    #allocation32 [shape = 'u8[512]{0}', space=vmem, size = 0x400, scoped, tag = 'input window, operand 23, single buffered']
    #allocation33 [shape = 'u8[32768]{0}', space=vmem, size = 0x8000, scoped, tag = 'input window, operand 24, single buffered']
    #allocation34 [shape = 's32[1]{0}', space=sflag, size = 0x4, scoped, tag = 'scoped memory for generate_ids.1']
    #allocation35 [shape = 'u8[1024]{0}', space=vmem, size = 0x400, scoped, tag = 'output window, operand 0']
    #allocation36 [shape = 'u8[16384]{0}', space=vmem, size = 0x4000, scoped, tag = 'output window, operand 1']
    #allocation37 [shape = 's32[2]{0}', space=sflag, size = 0x8, scoped, tag = 'scoped memory for generate_ids.1']
    %32 = vsyncpa [#allocation4], 0
    %33 = vsyncpa [#allocation7], 0
    %34 = vsyncpa [#allocation10], 0
    %35 = vsyncpa [#allocation13], 0
    %36 = vsyncpa [#allocation16], 0
    %37 = vsyncpa [#allocation19], 0
    %38 = vsyncpa [#allocation22], 0
    %39 = vsyncpa [#allocation25], 0
    %40 = vsyncpa [#allocation28], 0
    %41 = vsyncpa [#allocation31], 0
    %42 = vsyncpa [#allocation34], 0
    %43 = vsyncpa [#allocation5], 0
    %s44 = scalar_lea.sflag [#allocation5], 1
    %45 = vsyncpa %s44, 0
    %46 = vsyncpa [#allocation37], 0
    %s47 = scalar_lea.sflag [#allocation37], 1
    %48 = vsyncpa %s47, 0
    loop: start=0, step=1, limit=4
    $region2: #{generate_ids.1} parent=1 // loop_pre_header
      _
    $region3: #{generate_ids.1} parent=1 // loop_header
      %s50 = sphi 0, %s54
      %p51 = scmp.ge.s32.totalorder %s50, 4
      %s60 = sphi 0, %s62
      %s63 = sphi 0, %s60
      %s64 = sphi 0, %s63
      %s80 = sphi 0, %s64
      %s84 = sphi 0, %s84
      %s86 = sphi 0, %s84
      %s87 = sphi 0, %s86
      %s101 = sphi 0, %s87
      %s105 = sphi 0, %s105
      %s107 = sphi 0, %s105
      %s108 = sphi 0, %s107
      %s122 = sphi 0, %s108
      %s126 = sphi 0, %s126
      %s128 = sphi 0, %s126
      %s129 = sphi 0, %s128
      %s143 = sphi 0, %s129
      %s147 = sphi 0, %s147
      %s149 = sphi 0, %s147
      %s150 = sphi 0, %s149
      %s164 = sphi 0, %s150
      %s168 = sphi 0, %s168
      %s170 = sphi 0, %s168
      %s171 = sphi 0, %s170
      %s185 = sphi 0, %s171
      %s189 = sphi 0, %s189
      %s191 = sphi 0, %s189
      %s192 = sphi 0, %s191
      %s206 = sphi 0, %s192
      %s210 = sphi 0, %s210
      %s212 = sphi 0, %s210
      %s213 = sphi 0, %s212
      %s227 = sphi 0, %s213
      %s231 = sphi 0, %s231
      %s233 = sphi 0, %s231
      %s234 = sphi 0, %s233
      %s248 = sphi 0, %s234
      %s252 = sphi 0, %s252
      %s254 = sphi 0, %s252
      %s255 = sphi 0, %s254
      %s269 = sphi 0, %s255
      %s273 = sphi 0, %s273
      %s275 = sphi 0, %s273
      %s276 = sphi 0, %s275
      %s290 = sphi 0, %s276
      %s294 = sphi 0, %s294
      %s296 = sphi 0, %s294
      %s297 = sphi 0, %s296
      %s311 = sphi 0, %s297
      %s315 = sphi 0, %s315
      %s317 = sphi 0, %s315
      %s318 = sphi 0, %s317
      %s332 = sphi 0, %s318
      %s336 = sphi 0, %s336
      %s338 = sphi 0, %s336
      %s339 = sphi 0, %s338
      %s353 = sphi 0, %s339
      %s357 = sphi 0, %s357
      %s359 = sphi 0, %s357
      %s360 = sphi 0, %s359
      %s374 = sphi 0, %s360
      %s378 = sphi 0, %s378
      %s380 = sphi 0, %s378
      %s381 = sphi 0, %s380
      %s395 = sphi 0, %s381
      %s399 = sphi 0, %s399
      %s401 = sphi 0, %s399
      %s402 = sphi 0, %s401
      %s416 = sphi 0, %s402
      %s420 = sphi 0, %s420
      %s422 = sphi 0, %s420
      %s423 = sphi 0, %s422
      %s437 = sphi 0, %s423
      %s441 = sphi 0, %s441
      %s443 = sphi 0, %s441
      %s444 = sphi 0, %s443
      %s458 = sphi 0, %s444
      %s462 = sphi 0, %s462
      %s464 = sphi 0, %s462
      %s465 = sphi 0, %s464
      %s479 = sphi 0, %s465
      %s483 = sphi 0, %s483
      %s485 = sphi 0, %s483
      %s486 = sphi 0, %s485
      %s500 = sphi 0, %s486
      %s504 = sphi 0, %s504
      %s506 = sphi 0, %s504
      %s507 = sphi 0, %s506
      %s521 = sphi 0, %s507
      %s525 = sphi 0, %s525
      %s527 = sphi 0, %s525
      %s528 = sphi 0, %s527
      %s542 = sphi 0, %s528
      %s546 = sphi 0, %s546
      %s548 = sphi 0, %s546
      %s549 = sphi 0, %s548
      %s563 = sphi 0, %s549
      %s567 = sphi 0, %s567
      %s569 = sphi 0, %s567
      %s570 = sphi 0, %s569
      %s584 = sphi 0, %s570
      %s590 = sphi 0, %s592
      %s593 = sphi 0, %s590
      %s594 = sphi 0, %s593
      %s610 = sphi 0, %s594
      %s616 = sphi 0, %s618
      %s619 = sphi 0, %s616
      %s620 = sphi 0, %s619
      %s636 = sphi 0, %s620
    $region4: #{generate_ids.1} parent=1 // loop_header_branch
      %53 = sbr.rel (%p51) target = $region8
    $region5: #{generate_ids.1} parent=1 // loop_body
      %s55 = ssub.s32 %s50, 1
      %s56 = ssub.s32 %s50, 2
      %s57 = sadd.s32 %s50, 1
      %s58 = ssub.s32 %s50, %s57
      %p59 = scmp.eq.s32.totalorder %s58, 0
      %s61 = sadd.s32 %s60, 1
      %s62 = scalar_select %p59, %s60, %s61
      %p65 = pneg %p59
      %p66 = scmp.eq.s32.totalorder %s50, 1
      %p67 = por %p65, %p66
      %p68 = scmp.ne.s32.totalorder %s60, %s63
      %p69 = scmp.eq.s32.totalorder %s50, 0
      %p70 = por %p68, %p69
      %p71 = scmp.ne.s32.totalorder %s60, %s63
      %p72 = scmp.eq.s32.totalorder %s55, 1
      %p73 = por %p71, %p72
      %p74 = scmp.ne.s32.totalorder %s63, %s64
      %p75 = scmp.eq.s32.totalorder %s55, 0
      %p76 = por %p74, %p75
      %p77 = scmp.ne.s32.totalorder %s63, %s64
      %p78 = scmp.eq.s32.totalorder %s56, 1
      %p79 = por %p77, %p78
      %p81 = scmp.ne.s32.totalorder %s64, %s80
      %p82 = scmp.eq.s32.totalorder %s56, 0
      %p83 = por %p81, %p82
      %s85 = sadd.s32 %s84, 1
      %p88 = scmp.eq.s32.totalorder %s50, 1
      %p89 = scmp.ne.s32.totalorder %s84, %s86
      %p90 = scmp.eq.s32.totalorder %s50, 0
      %p91 = por %p89, %p90
      %p92 = scmp.ne.s32.totalorder %s84, %s86
      %p93 = scmp.eq.s32.totalorder %s55, 1
      %p94 = por %p92, %p93
      %p95 = scmp.ne.s32.totalorder %s86, %s87
      %p96 = scmp.eq.s32.totalorder %s55, 0
      %p97 = por %p95, %p96
      %p98 = scmp.ne.s32.totalorder %s86, %s87
      %p99 = scmp.eq.s32.totalorder %s56, 1
      %p100 = por %p98, %p99
      %p102 = scmp.ne.s32.totalorder %s87, %s101
      %p103 = scmp.eq.s32.totalorder %s56, 0
      %p104 = por %p102, %p103
      %s106 = sadd.s32 %s105, 1
      %p109 = scmp.eq.s32.totalorder %s50, 1
      %p110 = scmp.ne.s32.totalorder %s105, %s107
      %p111 = scmp.eq.s32.totalorder %s50, 0
      %p112 = por %p110, %p111
      %p113 = scmp.ne.s32.totalorder %s105, %s107
      %p114 = scmp.eq.s32.totalorder %s55, 1
      %p115 = por %p113, %p114
      %p116 = scmp.ne.s32.totalorder %s107, %s108
      %p117 = scmp.eq.s32.totalorder %s55, 0
      %p118 = por %p116, %p117
      %p119 = scmp.ne.s32.totalorder %s107, %s108
      %p120 = scmp.eq.s32.totalorder %s56, 1
      %p121 = por %p119, %p120
      %p123 = scmp.ne.s32.totalorder %s108, %s122
      %p124 = scmp.eq.s32.totalorder %s56, 0
      %p125 = por %p123, %p124
      %s127 = sadd.s32 %s126, 1
      %p130 = scmp.eq.s32.totalorder %s50, 1
      %p131 = scmp.ne.s32.totalorder %s126, %s128
      %p132 = scmp.eq.s32.totalorder %s50, 0
      %p133 = por %p131, %p132
      %p134 = scmp.ne.s32.totalorder %s126, %s128
      %p135 = scmp.eq.s32.totalorder %s55, 1
      %p136 = por %p134, %p135
      %p137 = scmp.ne.s32.totalorder %s128, %s129
      %p138 = scmp.eq.s32.totalorder %s55, 0
      %p139 = por %p137, %p138
      %p140 = scmp.ne.s32.totalorder %s128, %s129
      %p141 = scmp.eq.s32.totalorder %s56, 1
      %p142 = por %p140, %p141
      %p144 = scmp.ne.s32.totalorder %s129, %s143
      %p145 = scmp.eq.s32.totalorder %s56, 0
      %p146 = por %p144, %p145
      %s148 = sadd.s32 %s147, 1
      %p151 = scmp.eq.s32.totalorder %s50, 1
      %p152 = scmp.ne.s32.totalorder %s147, %s149
      %p153 = scmp.eq.s32.totalorder %s50, 0
      %p154 = por %p152, %p153
      %p155 = scmp.ne.s32.totalorder %s147, %s149
      %p156 = scmp.eq.s32.totalorder %s55, 1
      %p157 = por %p155, %p156
      %p158 = scmp.ne.s32.totalorder %s149, %s150
      %p159 = scmp.eq.s32.totalorder %s55, 0
      %p160 = por %p158, %p159
      %p161 = scmp.ne.s32.totalorder %s149, %s150
      %p162 = scmp.eq.s32.totalorder %s56, 1
      %p163 = por %p161, %p162
      %p165 = scmp.ne.s32.totalorder %s150, %s164
      %p166 = scmp.eq.s32.totalorder %s56, 0
      %p167 = por %p165, %p166
      %s169 = sadd.s32 %s168, 1
      %p172 = scmp.eq.s32.totalorder %s50, 1
      %p173 = scmp.ne.s32.totalorder %s168, %s170
      %p174 = scmp.eq.s32.totalorder %s50, 0
      %p175 = por %p173, %p174
      %p176 = scmp.ne.s32.totalorder %s168, %s170
      %p177 = scmp.eq.s32.totalorder %s55, 1
      %p178 = por %p176, %p177
      %p179 = scmp.ne.s32.totalorder %s170, %s171
      %p180 = scmp.eq.s32.totalorder %s55, 0
      %p181 = por %p179, %p180
      %p182 = scmp.ne.s32.totalorder %s170, %s171
      %p183 = scmp.eq.s32.totalorder %s56, 1
      %p184 = por %p182, %p183
      %p186 = scmp.ne.s32.totalorder %s171, %s185
      %p187 = scmp.eq.s32.totalorder %s56, 0
      %p188 = por %p186, %p187
      %s190 = sadd.s32 %s189, 1
      %p193 = scmp.eq.s32.totalorder %s50, 1
      %p194 = scmp.ne.s32.totalorder %s189, %s191
      %p195 = scmp.eq.s32.totalorder %s50, 0
      %p196 = por %p194, %p195
      %p197 = scmp.ne.s32.totalorder %s189, %s191
      %p198 = scmp.eq.s32.totalorder %s55, 1
      %p199 = por %p197, %p198
      %p200 = scmp.ne.s32.totalorder %s191, %s192
      %p201 = scmp.eq.s32.totalorder %s55, 0
      %p202 = por %p200, %p201
      %p203 = scmp.ne.s32.totalorder %s191, %s192
      %p204 = scmp.eq.s32.totalorder %s56, 1
      %p205 = por %p203, %p204
      %p207 = scmp.ne.s32.totalorder %s192, %s206
      %p208 = scmp.eq.s32.totalorder %s56, 0
      %p209 = por %p207, %p208
      %s211 = sadd.s32 %s210, 1
      %p214 = scmp.eq.s32.totalorder %s50, 1
      %p215 = scmp.ne.s32.totalorder %s210, %s212
      %p216 = scmp.eq.s32.totalorder %s50, 0
      %p217 = por %p215, %p216
      %p218 = scmp.ne.s32.totalorder %s210, %s212
      %p219 = scmp.eq.s32.totalorder %s55, 1
      %p220 = por %p218, %p219
      %p221 = scmp.ne.s32.totalorder %s212, %s213
      %p222 = scmp.eq.s32.totalorder %s55, 0
      %p223 = por %p221, %p222
      %p224 = scmp.ne.s32.totalorder %s212, %s213
      %p225 = scmp.eq.s32.totalorder %s56, 1
      %p226 = por %p224, %p225
      %p228 = scmp.ne.s32.totalorder %s213, %s227
      %p229 = scmp.eq.s32.totalorder %s56, 0
      %p230 = por %p228, %p229
      %s232 = sadd.s32 %s231, 1
      %p235 = scmp.eq.s32.totalorder %s50, 1
      %p236 = scmp.ne.s32.totalorder %s231, %s233
      %p237 = scmp.eq.s32.totalorder %s50, 0
      %p238 = por %p236, %p237
      %p239 = scmp.ne.s32.totalorder %s231, %s233
      %p240 = scmp.eq.s32.totalorder %s55, 1
      %p241 = por %p239, %p240
      %p242 = scmp.ne.s32.totalorder %s233, %s234
      %p243 = scmp.eq.s32.totalorder %s55, 0
      %p244 = por %p242, %p243
      %p245 = scmp.ne.s32.totalorder %s233, %s234
      %p246 = scmp.eq.s32.totalorder %s56, 1
      %p247 = por %p245, %p246
      %p249 = scmp.ne.s32.totalorder %s234, %s248
      %p250 = scmp.eq.s32.totalorder %s56, 0
      %p251 = por %p249, %p250
      %s253 = sadd.s32 %s252, 1
      %p256 = scmp.eq.s32.totalorder %s50, 1
      %p257 = scmp.ne.s32.totalorder %s252, %s254
      %p258 = scmp.eq.s32.totalorder %s50, 0
      %p259 = por %p257, %p258
      %p260 = scmp.ne.s32.totalorder %s252, %s254
      %p261 = scmp.eq.s32.totalorder %s55, 1
      %p262 = por %p260, %p261
      %p263 = scmp.ne.s32.totalorder %s254, %s255
      %p264 = scmp.eq.s32.totalorder %s55, 0
      %p265 = por %p263, %p264
      %p266 = scmp.ne.s32.totalorder %s254, %s255
      %p267 = scmp.eq.s32.totalorder %s56, 1
      %p268 = por %p266, %p267
      %p270 = scmp.ne.s32.totalorder %s255, %s269
      %p271 = scmp.eq.s32.totalorder %s56, 0
      %p272 = por %p270, %p271
      %s274 = sadd.s32 %s273, 1
      %p277 = scmp.eq.s32.totalorder %s50, 1
      %p278 = scmp.ne.s32.totalorder %s273, %s275
      %p279 = scmp.eq.s32.totalorder %s50, 0
      %p280 = por %p278, %p279
      %p281 = scmp.ne.s32.totalorder %s273, %s275
      %p282 = scmp.eq.s32.totalorder %s55, 1
      %p283 = por %p281, %p282
      %p284 = scmp.ne.s32.totalorder %s275, %s276
      %p285 = scmp.eq.s32.totalorder %s55, 0
      %p286 = por %p284, %p285
      %p287 = scmp.ne.s32.totalorder %s275, %s276
      %p288 = scmp.eq.s32.totalorder %s56, 1
      %p289 = por %p287, %p288
      %p291 = scmp.ne.s32.totalorder %s276, %s290
      %p292 = scmp.eq.s32.totalorder %s56, 0
      %p293 = por %p291, %p292
      %s295 = sadd.s32 %s294, 1
      %p298 = scmp.eq.s32.totalorder %s50, 1
      %p299 = scmp.ne.s32.totalorder %s294, %s296
      %p300 = scmp.eq.s32.totalorder %s50, 0
      %p301 = por %p299, %p300
      %p302 = scmp.ne.s32.totalorder %s294, %s296
      %p303 = scmp.eq.s32.totalorder %s55, 1
      %p304 = por %p302, %p303
      %p305 = scmp.ne.s32.totalorder %s296, %s297
      %p306 = scmp.eq.s32.totalorder %s55, 0
      %p307 = por %p305, %p306
      %p308 = scmp.ne.s32.totalorder %s296, %s297
      %p309 = scmp.eq.s32.totalorder %s56, 1
      %p310 = por %p308, %p309
      %p312 = scmp.ne.s32.totalorder %s297, %s311
      %p313 = scmp.eq.s32.totalorder %s56, 0
      %p314 = por %p312, %p313
      %s316 = sadd.s32 %s315, 1
      %p319 = scmp.eq.s32.totalorder %s50, 1
      %p320 = scmp.ne.s32.totalorder %s315, %s317
      %p321 = scmp.eq.s32.totalorder %s50, 0
      %p322 = por %p320, %p321
      %p323 = scmp.ne.s32.totalorder %s315, %s317
      %p324 = scmp.eq.s32.totalorder %s55, 1
      %p325 = por %p323, %p324
      %p326 = scmp.ne.s32.totalorder %s317, %s318
      %p327 = scmp.eq.s32.totalorder %s55, 0
      %p328 = por %p326, %p327
      %p329 = scmp.ne.s32.totalorder %s317, %s318
      %p330 = scmp.eq.s32.totalorder %s56, 1
      %p331 = por %p329, %p330
      %p333 = scmp.ne.s32.totalorder %s318, %s332
      %p334 = scmp.eq.s32.totalorder %s56, 0
      %p335 = por %p333, %p334
      %s337 = sadd.s32 %s336, 1
      %p340 = scmp.eq.s32.totalorder %s50, 1
      %p341 = scmp.ne.s32.totalorder %s336, %s338
      %p342 = scmp.eq.s32.totalorder %s50, 0
      %p343 = por %p341, %p342
      %p344 = scmp.ne.s32.totalorder %s336, %s338
      %p345 = scmp.eq.s32.totalorder %s55, 1
      %p346 = por %p344, %p345
      %p347 = scmp.ne.s32.totalorder %s338, %s339
      %p348 = scmp.eq.s32.totalorder %s55, 0
      %p349 = por %p347, %p348
      %p350 = scmp.ne.s32.totalorder %s338, %s339
      %p351 = scmp.eq.s32.totalorder %s56, 1
      %p352 = por %p350, %p351
      %p354 = scmp.ne.s32.totalorder %s339, %s353
      %p355 = scmp.eq.s32.totalorder %s56, 0
      %p356 = por %p354, %p355
      %s358 = sadd.s32 %s357, 1
      %p361 = scmp.eq.s32.totalorder %s50, 1
      %p362 = scmp.ne.s32.totalorder %s357, %s359
      %p363 = scmp.eq.s32.totalorder %s50, 0
      %p364 = por %p362, %p363
      %p365 = scmp.ne.s32.totalorder %s357, %s359
      %p366 = scmp.eq.s32.totalorder %s55, 1
      %p367 = por %p365, %p366
      %p368 = scmp.ne.s32.totalorder %s359, %s360
      %p369 = scmp.eq.s32.totalorder %s55, 0
      %p370 = por %p368, %p369
      %p371 = scmp.ne.s32.totalorder %s359, %s360
      %p372 = scmp.eq.s32.totalorder %s56, 1
      %p373 = por %p371, %p372
      %p375 = scmp.ne.s32.totalorder %s360, %s374
      %p376 = scmp.eq.s32.totalorder %s56, 0
      %p377 = por %p375, %p376
      %s379 = sadd.s32 %s378, 1
      %p382 = scmp.eq.s32.totalorder %s50, 1
      %p383 = scmp.ne.s32.totalorder %s378, %s380
      %p384 = scmp.eq.s32.totalorder %s50, 0
      %p385 = por %p383, %p384
      %p386 = scmp.ne.s32.totalorder %s378, %s380
      %p387 = scmp.eq.s32.totalorder %s55, 1
      %p388 = por %p386, %p387
      %p389 = scmp.ne.s32.totalorder %s380, %s381
      %p390 = scmp.eq.s32.totalorder %s55, 0
      %p391 = por %p389, %p390
      %p392 = scmp.ne.s32.totalorder %s380, %s381
      %p393 = scmp.eq.s32.totalorder %s56, 1
      %p394 = por %p392, %p393
      %p396 = scmp.ne.s32.totalorder %s381, %s395
      %p397 = scmp.eq.s32.totalorder %s56, 0
      %p398 = por %p396, %p397
      %s400 = sadd.s32 %s399, 1
      %p403 = scmp.eq.s32.totalorder %s50, 1
      %p404 = scmp.ne.s32.totalorder %s399, %s401
      %p405 = scmp.eq.s32.totalorder %s50, 0
      %p406 = por %p404, %p405
      %p407 = scmp.ne.s32.totalorder %s399, %s401
      %p408 = scmp.eq.s32.totalorder %s55, 1
      %p409 = por %p407, %p408
      %p410 = scmp.ne.s32.totalorder %s401, %s402
      %p411 = scmp.eq.s32.totalorder %s55, 0
      %p412 = por %p410, %p411
      %p413 = scmp.ne.s32.totalorder %s401, %s402
      %p414 = scmp.eq.s32.totalorder %s56, 1
      %p415 = por %p413, %p414
      %p417 = scmp.ne.s32.totalorder %s402, %s416
      %p418 = scmp.eq.s32.totalorder %s56, 0
      %p419 = por %p417, %p418
      %s421 = sadd.s32 %s420, 1
      %p424 = scmp.eq.s32.totalorder %s50, 1
      %p425 = scmp.ne.s32.totalorder %s420, %s422
      %p426 = scmp.eq.s32.totalorder %s50, 0
      %p427 = por %p425, %p426
      %p428 = scmp.ne.s32.totalorder %s420, %s422
      %p429 = scmp.eq.s32.totalorder %s55, 1
      %p430 = por %p428, %p429
      %p431 = scmp.ne.s32.totalorder %s422, %s423
      %p432 = scmp.eq.s32.totalorder %s55, 0
      %p433 = por %p431, %p432
      %p434 = scmp.ne.s32.totalorder %s422, %s423
      %p435 = scmp.eq.s32.totalorder %s56, 1
      %p436 = por %p434, %p435
      %p438 = scmp.ne.s32.totalorder %s423, %s437
      %p439 = scmp.eq.s32.totalorder %s56, 0
      %p440 = por %p438, %p439
      %s442 = sadd.s32 %s441, 1
      %p445 = scmp.eq.s32.totalorder %s50, 1
      %p446 = scmp.ne.s32.totalorder %s441, %s443
      %p447 = scmp.eq.s32.totalorder %s50, 0
      %p448 = por %p446, %p447
      %p449 = scmp.ne.s32.totalorder %s441, %s443
      %p450 = scmp.eq.s32.totalorder %s55, 1
      %p451 = por %p449, %p450
      %p452 = scmp.ne.s32.totalorder %s443, %s444
      %p453 = scmp.eq.s32.totalorder %s55, 0
      %p454 = por %p452, %p453
      %p455 = scmp.ne.s32.totalorder %s443, %s444
      %p456 = scmp.eq.s32.totalorder %s56, 1
      %p457 = por %p455, %p456
      %p459 = scmp.ne.s32.totalorder %s444, %s458
      %p460 = scmp.eq.s32.totalorder %s56, 0
      %p461 = por %p459, %p460
      %s463 = sadd.s32 %s462, 1
      %p466 = scmp.eq.s32.totalorder %s50, 1
      %p467 = scmp.ne.s32.totalorder %s462, %s464
      %p468 = scmp.eq.s32.totalorder %s50, 0
      %p469 = por %p467, %p468
      %p470 = scmp.ne.s32.totalorder %s462, %s464
      %p471 = scmp.eq.s32.totalorder %s55, 1
      %p472 = por %p470, %p471
      %p473 = scmp.ne.s32.totalorder %s464, %s465
      %p474 = scmp.eq.s32.totalorder %s55, 0
      %p475 = por %p473, %p474
      %p476 = scmp.ne.s32.totalorder %s464, %s465
      %p477 = scmp.eq.s32.totalorder %s56, 1
      %p478 = por %p476, %p477
      %p480 = scmp.ne.s32.totalorder %s465, %s479
      %p481 = scmp.eq.s32.totalorder %s56, 0
      %p482 = por %p480, %p481
      %s484 = sadd.s32 %s483, 1
      %p487 = scmp.eq.s32.totalorder %s50, 1
      %p488 = scmp.ne.s32.totalorder %s483, %s485
      %p489 = scmp.eq.s32.totalorder %s50, 0
      %p490 = por %p488, %p489
      %p491 = scmp.ne.s32.totalorder %s483, %s485
      %p492 = scmp.eq.s32.totalorder %s55, 1
      %p493 = por %p491, %p492
      %p494 = scmp.ne.s32.totalorder %s485, %s486
      %p495 = scmp.eq.s32.totalorder %s55, 0
      %p496 = por %p494, %p495
      %p497 = scmp.ne.s32.totalorder %s485, %s486
      %p498 = scmp.eq.s32.totalorder %s56, 1
      %p499 = por %p497, %p498
      %p501 = scmp.ne.s32.totalorder %s486, %s500
      %p502 = scmp.eq.s32.totalorder %s56, 0
      %p503 = por %p501, %p502
      %s505 = sadd.s32 %s504, 1
      %p508 = scmp.eq.s32.totalorder %s50, 1
      %p509 = scmp.ne.s32.totalorder %s504, %s506
      %p510 = scmp.eq.s32.totalorder %s50, 0
      %p511 = por %p509, %p510
      %p512 = scmp.ne.s32.totalorder %s504, %s506
      %p513 = scmp.eq.s32.totalorder %s55, 1
      %p514 = por %p512, %p513
      %p515 = scmp.ne.s32.totalorder %s506, %s507
      %p516 = scmp.eq.s32.totalorder %s55, 0
      %p517 = por %p515, %p516
      %p518 = scmp.ne.s32.totalorder %s506, %s507
      %p519 = scmp.eq.s32.totalorder %s56, 1
      %p520 = por %p518, %p519
      %p522 = scmp.ne.s32.totalorder %s507, %s521
      %p523 = scmp.eq.s32.totalorder %s56, 0
      %p524 = por %p522, %p523
      %s526 = sadd.s32 %s525, 1
      %p529 = scmp.eq.s32.totalorder %s50, 1
      %p530 = scmp.ne.s32.totalorder %s525, %s527
      %p531 = scmp.eq.s32.totalorder %s50, 0
      %p532 = por %p530, %p531
      %p533 = scmp.ne.s32.totalorder %s525, %s527
      %p534 = scmp.eq.s32.totalorder %s55, 1
      %p535 = por %p533, %p534
      %p536 = scmp.ne.s32.totalorder %s527, %s528
      %p537 = scmp.eq.s32.totalorder %s55, 0
      %p538 = por %p536, %p537
      %p539 = scmp.ne.s32.totalorder %s527, %s528
      %p540 = scmp.eq.s32.totalorder %s56, 1
      %p541 = por %p539, %p540
      %p543 = scmp.ne.s32.totalorder %s528, %s542
      %p544 = scmp.eq.s32.totalorder %s56, 0
      %p545 = por %p543, %p544
      %s547 = sadd.s32 %s546, 1
      %p550 = scmp.eq.s32.totalorder %s50, 1
      %p551 = scmp.ne.s32.totalorder %s546, %s548
      %p552 = scmp.eq.s32.totalorder %s50, 0
      %p553 = por %p551, %p552
      %p554 = scmp.ne.s32.totalorder %s546, %s548
      %p555 = scmp.eq.s32.totalorder %s55, 1
      %p556 = por %p554, %p555
      %p557 = scmp.ne.s32.totalorder %s548, %s549
      %p558 = scmp.eq.s32.totalorder %s55, 0
      %p559 = por %p557, %p558
      %p560 = scmp.ne.s32.totalorder %s548, %s549
      %p561 = scmp.eq.s32.totalorder %s56, 1
      %p562 = por %p560, %p561
      %p564 = scmp.ne.s32.totalorder %s549, %s563
      %p565 = scmp.eq.s32.totalorder %s56, 0
      %p566 = por %p564, %p565
      %s568 = sadd.s32 %s567, 1
      %p571 = scmp.eq.s32.totalorder %s50, 1
      %p572 = scmp.ne.s32.totalorder %s567, %s569
      %p573 = scmp.eq.s32.totalorder %s50, 0
      %p574 = por %p572, %p573
      %p575 = scmp.ne.s32.totalorder %s567, %s569
      %p576 = scmp.eq.s32.totalorder %s55, 1
      %p577 = por %p575, %p576
      %p578 = scmp.ne.s32.totalorder %s569, %s570
      %p579 = scmp.eq.s32.totalorder %s55, 0
      %p580 = por %p578, %p579
      %p581 = scmp.ne.s32.totalorder %s569, %s570
      %p582 = scmp.eq.s32.totalorder %s56, 1
      %p583 = por %p581, %p582
      %p585 = scmp.ne.s32.totalorder %s570, %s584
      %p586 = scmp.eq.s32.totalorder %s56, 0
      %p587 = por %p585, %p586
      %s588 = ssub.s32 %s50, %s57
      %p589 = scmp.eq.s32.totalorder %s588, 0
      %s591 = sadd.s32 %s590, 1
      %s592 = scalar_select %p589, %s590, %s591
      %p595 = pneg %p589
      %p596 = scmp.eq.s32.totalorder %s50, 1
      %p597 = por %p595, %p596
      %p598 = scmp.ne.s32.totalorder %s590, %s593
      %p599 = scmp.eq.s32.totalorder %s50, 0
      %p600 = por %p598, %p599
      %p601 = scmp.ne.s32.totalorder %s590, %s593
      %p602 = scmp.eq.s32.totalorder %s55, 1
      %p603 = por %p601, %p602
      %p604 = scmp.ne.s32.totalorder %s593, %s594
      %p605 = scmp.eq.s32.totalorder %s55, 0
      %p606 = por %p604, %p605
      %p607 = scmp.ne.s32.totalorder %s593, %s594
      %p608 = scmp.eq.s32.totalorder %s56, 1
      %p609 = por %p607, %p608
      %p611 = scmp.ne.s32.totalorder %s594, %s610
      %p612 = scmp.eq.s32.totalorder %s56, 0
      %p613 = por %p611, %p612
      %s614 = ssub.s32 %s50, %s57
      %p615 = scmp.eq.s32.totalorder %s614, 0
      %s617 = sadd.s32 %s616, 1
      %s618 = scalar_select %p615, %s616, %s617
      %p621 = pneg %p615
      %p622 = scmp.eq.s32.totalorder %s50, 1
      %p623 = por %p621, %p622
      %p624 = scmp.ne.s32.totalorder %s616, %s619
      %p625 = scmp.eq.s32.totalorder %s50, 0
      %p626 = por %p624, %p625
      %p627 = scmp.ne.s32.totalorder %s616, %s619
      %p628 = scmp.eq.s32.totalorder %s55, 1
      %p629 = por %p627, %p628
      %p630 = scmp.ne.s32.totalorder %s619, %s620
      %p631 = scmp.eq.s32.totalorder %s55, 0
      %p632 = por %p630, %p631
      %p633 = scmp.ne.s32.totalorder %s619, %s620
      %p634 = scmp.eq.s32.totalorder %s56, 1
      %p635 = por %p633, %p634
      %p637 = scmp.ne.s32.totalorder %s620, %s636
      %p638 = scmp.eq.s32.totalorder %s56, 0
      %p639 = por %p637, %p638
      %p640 = scmp.le.s32.totalorder 1, %s50
      %p641 = scmp.lt.s32.totalorder %s50, 3
      %p642 = pnand %p640, %p641
      %p643 = pneg %p642
      // Predicated region
      $region9: #{generate_ids.1} parent=5 // pred_check
        _
      $region10: #{generate_ids.1} parent=5 // pred_check_branch
        %645 = sbr.rel (%p642) target = $region12
      $region11: #{generate_ids.1} parent=5 // pred_region
        %s646 = ssub.s32 %s50, 1
        // Predicated region
        $region13: #{generate_ids.1} parent=11 // pred_check
          %p647 = pneg %p97
        $region14: #{generate_ids.1} parent=11 // pred_check_branch
          %649 = sbr.rel (%p647) target = $region16
        $region15: #{generate_ids.1} parent=11 // pred_region
          %s651 = ssub.s32 1024, 1024
          %652 = vsyncadd [#allocation4], %s651
          %s653 = sshll.u32 [#allocation3], 4
          %s654 = int_to_ptr.vmem [resolvable:$true] %s653
          %659 = dma.hbm_to_vmem [thread:$0]  %s1, 1024, %s654, [#allocation4], 64, 64, 4
        $region16: #{generate_ids.1} parent=11 // pred_fallthru
          _
        // Predicated region
        $region17: #{generate_ids.1} parent=11 // pred_check
          %p660 = pneg %p118
        $region18: #{generate_ids.1} parent=11 // pred_check_branch
          %662 = sbr.rel (%p660) target = $region20
        $region19: #{generate_ids.1} parent=11 // pred_region
          %s664 = ssub.s32 1024, 1024
          %665 = vsyncadd [#allocation7], %s664
          %s666 = sshll.u32 [#allocation6], 4
          %s667 = int_to_ptr.vmem [resolvable:$true] %s666
          %672 = dma.hbm_to_vmem [thread:$0]  %s2, 1024, %s667, [#allocation7], 128, 128, 8
        $region20: #{generate_ids.1} parent=11 // pred_fallthru
          _
        // Predicated region
        $region21: #{generate_ids.1} parent=11 // pred_check
          %p673 = pneg %p139
        $region22: #{generate_ids.1} parent=11 // pred_check_branch
          %675 = sbr.rel (%p673) target = $region24
        $region23: #{generate_ids.1} parent=11 // pred_region
          %s677 = ssub.s32 1024, 1024
          %678 = vsyncadd [#allocation7], %s677
          %s679 = sshll.u32 [#allocation8], 4
          %s680 = int_to_ptr.vmem [resolvable:$true] %s679
          %685 = dma.hbm_to_vmem [thread:$0]  %s3, 1024, %s680, [#allocation7], 128, 128, 8
        $region24: #{generate_ids.1} parent=11 // pred_fallthru
          _
        // Predicated region
        $region25: #{generate_ids.1} parent=11 // pred_check
          %p686 = pneg %p160
        $region26: #{generate_ids.1} parent=11 // pred_check_branch
          %688 = sbr.rel (%p686) target = $region28
        $region27: #{generate_ids.1} parent=11 // pred_region
          _
        $region28: #{generate_ids.1} parent=11 // pred_fallthru
          _
        // Predicated region
        $region29: #{generate_ids.1} parent=11 // pred_check
          %p689 = pneg %p181
        $region30: #{generate_ids.1} parent=11 // pred_check_branch
          %691 = sbr.rel (%p689) target = $region32
        $region31: #{generate_ids.1} parent=11 // pred_region
          %s693 = ssub.s32 2048, 2048
          %694 = vsyncadd [#allocation10], %s693
          %s695 = sshll.u32 [#allocation9], 4
          %s696 = int_to_ptr.vmem [resolvable:$true] %s695
          %701 = dma.hbm_to_vmem [thread:$0]  %s5, 2048, %s696, [#allocation10], 64, 64, 4
        $region32: #{generate_ids.1} parent=11 // pred_fallthru
          _
        // Predicated region
        $region33: #{generate_ids.1} parent=11 // pred_check
          %p702 = pneg %p202
        $region34: #{generate_ids.1} parent=11 // pred_check_branch
          %704 = sbr.rel (%p702) target = $region36
        $region35: #{generate_ids.1} parent=11 // pred_region
          %s706 = ssub.s32 4096, 4096
          %707 = vsyncadd [#allocation10], %s706
          %s708 = sshll.u32 [#allocation11], 4
          %s709 = int_to_ptr.vmem [resolvable:$true] %s708
          %714 = dma.hbm_to_vmem [thread:$0]  %s6, 4096, %s709, [#allocation10], 128, 128, 8
        $region36: #{generate_ids.1} parent=11 // pred_fallthru
          _
        // Predicated region
        $region37: #{generate_ids.1} parent=11 // pred_check
          %p715 = pneg %p223
        $region38: #{generate_ids.1} parent=11 // pred_check_branch
          %717 = sbr.rel (%p715) target = $region40
        $region39: #{generate_ids.1} parent=11 // pred_region
          %s719 = ssub.s32 2048, 2048
          %720 = vsyncadd [#allocation13], %s719
          %s721 = sshll.u32 [#allocation12], 4
          %s722 = int_to_ptr.vmem [resolvable:$true] %s721
          %727 = dma.hbm_to_vmem [thread:$0]  %s7, 2048, %s722, [#allocation13], 64, 64, 4
        $region40: #{generate_ids.1} parent=11 // pred_fallthru
          _
        // Predicated region
        $region41: #{generate_ids.1} parent=11 // pred_check
          %p728 = pneg %p244
        $region42: #{generate_ids.1} parent=11 // pred_check_branch
          %730 = sbr.rel (%p728) target = $region44
        $region43: #{generate_ids.1} parent=11 // pred_region
          _
        $region44: #{generate_ids.1} parent=11 // pred_fallthru
          _
        // Predicated region
        $region45: #{generate_ids.1} parent=11 // pred_check
          %p731 = pneg %p265
        $region46: #{generate_ids.1} parent=11 // pred_check_branch
          %733 = sbr.rel (%p731) target = $region48
        $region47: #{generate_ids.1} parent=11 // pred_region
          %s735 = ssub.s32 4096, 4096
          %736 = vsyncadd [#allocation13], %s735
          %s737 = sshll.u32 [#allocation14], 4
          %s738 = int_to_ptr.vmem [resolvable:$true] %s737
          %743 = dma.hbm_to_vmem [thread:$0]  %s9, 4096, %s738, [#allocation13], 128, 128, 8
        $region48: #{generate_ids.1} parent=11 // pred_fallthru
          _
        // Predicated region
        $region49: #{generate_ids.1} parent=11 // pred_check
          %p744 = pneg %p286
        $region50: #{generate_ids.1} parent=11 // pred_check_branch
          %746 = sbr.rel (%p744) target = $region52
        $region51: #{generate_ids.1} parent=11 // pred_region
          %s748 = ssub.s32 4096, 4096
          %749 = vsyncadd [#allocation16], %s748
          %s750 = sshll.u32 [#allocation15], 4
          %s751 = int_to_ptr.vmem [resolvable:$true] %s750
          %756 = dma.hbm_to_vmem [thread:$0]  %s10, 4096, %s751, [#allocation16], 64, 64, 4
        $region52: #{generate_ids.1} parent=11 // pred_fallthru
          _
        // Predicated region
        $region53: #{generate_ids.1} parent=11 // pred_check
          %p757 = pneg %p307
        $region54: #{generate_ids.1} parent=11 // pred_check_branch
          %759 = sbr.rel (%p757) target = $region56
        $region55: #{generate_ids.1} parent=11 // pred_region
          _
        $region56: #{generate_ids.1} parent=11 // pred_fallthru
          _
        // Predicated region
        $region57: #{generate_ids.1} parent=11 // pred_check
          %p760 = pneg %p328
        $region58: #{generate_ids.1} parent=11 // pred_check_branch
          %762 = sbr.rel (%p760) target = $region60
        $region59: #{generate_ids.1} parent=11 // pred_region
          %s764 = ssub.s32 32, 32
          %765 = vsyncadd [#allocation16], %s764
          %s766 = sshll.u32 [#allocation17], 4
          %s767 = int_to_ptr.vmem [resolvable:$true] %s766
          %772 = dma.hbm_to_vmem [thread:$0]  %s12, 32, %s767, [#allocation16], 16, 16, 1
        $region60: #{generate_ids.1} parent=11 // pred_fallthru
          _
        // Predicated region
        $region61: #{generate_ids.1} parent=11 // pred_check
          %p773 = pneg %p349
        $region62: #{generate_ids.1} parent=11 // pred_check_branch
          %775 = sbr.rel (%p773) target = $region64
        $region63: #{generate_ids.1} parent=11 // pred_region
          %s777 = ssub.s32 2048, 2048
          %778 = vsyncadd [#allocation19], %s777
          %s779 = sshll.u32 [#allocation18], 4
          %s780 = int_to_ptr.vmem [resolvable:$true] %s779
          %785 = dma.hbm_to_vmem [thread:$0]  %s13, 2048, %s780, [#allocation19], 64, 64, 4
        $region64: #{generate_ids.1} parent=11 // pred_fallthru
          _
        // Predicated region
        $region65: #{generate_ids.1} parent=11 // pred_check
          %p786 = pneg %p370
        $region66: #{generate_ids.1} parent=11 // pred_check_branch
          %788 = sbr.rel (%p786) target = $region68
        $region67: #{generate_ids.1} parent=11 // pred_region
          %s790 = ssub.s32 4096, 4096
          %791 = vsyncadd [#allocation19], %s790
          %s792 = sshll.u32 [#allocation20], 4
          %s793 = int_to_ptr.vmem [resolvable:$true] %s792
          %798 = dma.hbm_to_vmem [thread:$0]  %s14, 4096, %s793, [#allocation19], 128, 128, 8
        $region68: #{generate_ids.1} parent=11 // pred_fallthru
          _
        // Predicated region
        $region69: #{generate_ids.1} parent=11 // pred_check
          %p799 = pneg %p391
        $region70: #{generate_ids.1} parent=11 // pred_check_branch
          %801 = sbr.rel (%p799) target = $region72
        $region71: #{generate_ids.1} parent=11 // pred_region
          %s803 = ssub.s32 2048, 2048
          %804 = vsyncadd [#allocation22], %s803
          %s805 = sshll.u32 [#allocation21], 4
          %s806 = int_to_ptr.vmem [resolvable:$true] %s805
          %811 = dma.hbm_to_vmem [thread:$0]  %s15, 2048, %s806, [#allocation22], 64, 64, 4
        $region72: #{generate_ids.1} parent=11 // pred_fallthru
          _
        // Predicated region
        $region73: #{generate_ids.1} parent=11 // pred_check
          %p812 = pneg %p412
        $region74: #{generate_ids.1} parent=11 // pred_check_branch
          %814 = sbr.rel (%p812) target = $region76
        $region75: #{generate_ids.1} parent=11 // pred_region
          %s816 = ssub.s32 32, 32
          %817 = vsyncadd [#allocation22], %s816
          %s818 = sshll.u32 [#allocation23], 4
          %s819 = int_to_ptr.vmem [resolvable:$true] %s818
          %824 = dma.hbm_to_vmem [thread:$0]  %s16, 32, %s819, [#allocation22], 16, 16, 1
        $region76: #{generate_ids.1} parent=11 // pred_fallthru
          _
        // Predicated region
        $region77: #{generate_ids.1} parent=11 // pred_check
          %p825 = pneg %p433
        $region78: #{generate_ids.1} parent=11 // pred_check_branch
          %827 = sbr.rel (%p825) target = $region80
        $region79: #{generate_ids.1} parent=11 // pred_region
          %s829 = ssub.s32 2048, 2048
          %830 = vsyncadd [#allocation25], %s829
          %s831 = sshll.u32 [#allocation24], 4
          %s832 = int_to_ptr.vmem [resolvable:$true] %s831
          %837 = dma.hbm_to_vmem [thread:$0]  %s17, 2048, %s832, [#allocation25], 64, 64, 4
        $region80: #{generate_ids.1} parent=11 // pred_fallthru
          _
        // Predicated region
        $region81: #{generate_ids.1} parent=11 // pred_check
          %p838 = pneg %p454
        $region82: #{generate_ids.1} parent=11 // pred_check_branch
          %840 = sbr.rel (%p838) target = $region84
        $region83: #{generate_ids.1} parent=11 // pred_region
          %s842 = ssub.s32 4096, 4096
          %843 = vsyncadd [#allocation25], %s842
          %s844 = sshll.u32 [#allocation26], 4
          %s845 = int_to_ptr.vmem [resolvable:$true] %s844
          %850 = dma.hbm_to_vmem [thread:$0]  %s18, 4096, %s845, [#allocation25], 128, 128, 8
        $region84: #{generate_ids.1} parent=11 // pred_fallthru
          _
        // Predicated region
        $region85: #{generate_ids.1} parent=11 // pred_check
          %p851 = pneg %p475
        $region86: #{generate_ids.1} parent=11 // pred_check_branch
          %853 = sbr.rel (%p851) target = $region88
        $region87: #{generate_ids.1} parent=11 // pred_region
          %s855 = ssub.s32 2048, 2048
          %856 = vsyncadd [#allocation28], %s855
          %s857 = sshll.u32 [#allocation27], 4
          %s858 = int_to_ptr.vmem [resolvable:$true] %s857
          %863 = dma.hbm_to_vmem [thread:$0]  %s19, 2048, %s858, [#allocation28], 64, 64, 4
        $region88: #{generate_ids.1} parent=11 // pred_fallthru
          _
        // Predicated region
        $region89: #{generate_ids.1} parent=11 // pred_check
          %p864 = pneg %p496
        $region90: #{generate_ids.1} parent=11 // pred_check_branch
          %866 = sbr.rel (%p864) target = $region92
        $region91: #{generate_ids.1} parent=11 // pred_region
          _
        $region92: #{generate_ids.1} parent=11 // pred_fallthru
          _
        // Predicated region
        $region93: #{generate_ids.1} parent=11 // pred_check
          %p867 = pneg %p517
        $region94: #{generate_ids.1} parent=11 // pred_check_branch
          %869 = sbr.rel (%p867) target = $region96
        $region95: #{generate_ids.1} parent=11 // pred_region
          %s871 = ssub.s32 4096, 4096
          %872 = vsyncadd [#allocation28], %s871
          %s873 = sshll.u32 [#allocation29], 4
          %s874 = int_to_ptr.vmem [resolvable:$true] %s873
          %879 = dma.hbm_to_vmem [thread:$0]  %s21, 4096, %s874, [#allocation28], 128, 128, 8
        $region96: #{generate_ids.1} parent=11 // pred_fallthru
          _
        // Predicated region
        $region97: #{generate_ids.1} parent=11 // pred_check
          %p880 = pneg %p538
        $region98: #{generate_ids.1} parent=11 // pred_check_branch
          %882 = sbr.rel (%p880) target = $region100
        $region99: #{generate_ids.1} parent=11 // pred_region
          %s884 = ssub.s32 4096, 4096
          %885 = vsyncadd [#allocation31], %s884
          %s886 = sshll.u32 [#allocation30], 4
          %s887 = int_to_ptr.vmem [resolvable:$true] %s886
          %892 = dma.hbm_to_vmem [thread:$0]  %s22, 4096, %s887, [#allocation31], 64, 64, 4
        $region100: #{generate_ids.1} parent=11 // pred_fallthru
          _
        // Predicated region
        $region101: #{generate_ids.1} parent=11 // pred_check
          %p893 = pneg %p559
        $region102: #{generate_ids.1} parent=11 // pred_check_branch
          %895 = sbr.rel (%p893) target = $region104
        $region103: #{generate_ids.1} parent=11 // pred_region
          %s897 = ssub.s32 16, 16
          %898 = vsyncadd [#allocation31], %s897
          %s900 = sshll.u32 [#allocation32], 4
          %s901 = int_to_ptr.vmem [resolvable:$true] %s900
          %903 = dma.hbm_to_vmem [thread:$0]  %s23, 16, %s901, [#allocation31]
        $region104: #{generate_ids.1} parent=11 // pred_fallthru
          _
        // Predicated region
        $region105: #{generate_ids.1} parent=11 // pred_check
          %p904 = pneg %p580
        $region106: #{generate_ids.1} parent=11 // pred_check_branch
          %906 = sbr.rel (%p904) target = $region108
        $region107: #{generate_ids.1} parent=11 // pred_region
          %s908 = ssub.s32 1024, 1024
          %909 = vsyncadd [#allocation34], %s908
          %s910 = sshll.u32 [#allocation33], 4
          %s911 = int_to_ptr.vmem [resolvable:$true] %s910
          %916 = dma.hbm_to_vmem [thread:$0]  %s24, 1024, %s911, [#allocation34], 64, 64, 4
        $region108: #{generate_ids.1} parent=11 // pred_fallthru
          _
      $region12: #{generate_ids.1} parent=5 // pred_fallthru
        _
      %p917 = scmp.lt.s32.totalorder %s50, 2
      // Predicated region
      $region109: #{generate_ids.1} parent=5 // pred_check
        %p918 = pneg %p917
      $region110: #{generate_ids.1} parent=5 // pred_check_branch
        %920 = sbr.rel (%p918) target = $region112
      $region111: #{generate_ids.1} parent=5 // pred_region
        // Predicated region
        $region113: #{generate_ids.1} parent=111 // pred_check
          %p921 = pneg %p70
        $region114: #{generate_ids.1} parent=111 // pred_check_branch
          %923 = sbr.rel (%p921) target = $region116
        $region115: #{generate_ids.1} parent=111 // pred_region
          %p924 = scmp.lt.s32.totalorder %s50, 1
          %s925 = scalar_select %p924, %s50, 1
          %s926 = smul.addr %s925, 2
          %s927 = smul.addr %s926, 8
          %s928 = scalar_lea.vmem %s0, %s927
        $region116: #{generate_ids.1} parent=111 // pred_fallthru
          _
      $region112: #{generate_ids.1} parent=5 // pred_fallthru
        _
      %p929 = scmp.le.s32.totalorder 1, %s50
      %p930 = scmp.lt.s32.totalorder %s50, 3
      %p931 = pnand %p929, %p930
      %p932 = pneg %p931
      // Predicated region
      $region117: #{generate_ids.1} parent=5 // pred_check
        _
      $region118: #{generate_ids.1} parent=5 // pred_check_branch
        %934 = sbr.rel (%p931) target = $region120
      $region119: #{generate_ids.1} parent=5 // pred_region
        %s935 = ssub.s32 %s50, 1
        // Predicated region
        $region121: #{generate_ids.1} parent=119 // pred_check
          %p936 = pneg %p97
        $region122: #{generate_ids.1} parent=119 // pred_check_branch
          %938 = sbr.rel (%p936) target = $region124
        $region123: #{generate_ids.1} parent=119 // pred_region
          %939 = dma.done [#allocation4], 1024
        $region124: #{generate_ids.1} parent=119 // pred_fallthru
          _
        // Predicated region
        $region125: #{generate_ids.1} parent=119 // pred_check
          %p940 = pneg %p118
        $region126: #{generate_ids.1} parent=119 // pred_check_branch
          %942 = sbr.rel (%p940) target = $region128
        $region127: #{generate_ids.1} parent=119 // pred_region
          %943 = dma.done [#allocation7], 1024
        $region128: #{generate_ids.1} parent=119 // pred_fallthru
          _
        // Predicated region
        $region129: #{generate_ids.1} parent=119 // pred_check
          %p944 = pneg %p139
        $region130: #{generate_ids.1} parent=119 // pred_check_branch
          %946 = sbr.rel (%p944) target = $region132
        $region131: #{generate_ids.1} parent=119 // pred_region
          %947 = dma.done [#allocation7], 1024
        $region132: #{generate_ids.1} parent=119 // pred_fallthru
          _
        // Predicated region
        $region133: #{generate_ids.1} parent=119 // pred_check
          %p948 = pneg %p181
        $region134: #{generate_ids.1} parent=119 // pred_check_branch
          %950 = sbr.rel (%p948) target = $region136
        $region135: #{generate_ids.1} parent=119 // pred_region
          %951 = dma.done [#allocation10], 2048
        $region136: #{generate_ids.1} parent=119 // pred_fallthru
          _
        // Predicated region
        $region137: #{generate_ids.1} parent=119 // pred_check
          %p952 = pneg %p202
        $region138: #{generate_ids.1} parent=119 // pred_check_branch
          %954 = sbr.rel (%p952) target = $region140
        $region139: #{generate_ids.1} parent=119 // pred_region
          %955 = dma.done [#allocation10], 4096
        $region140: #{generate_ids.1} parent=119 // pred_fallthru
          _
        // Predicated region
        $region141: #{generate_ids.1} parent=119 // pred_check
          %p956 = pneg %p223
        $region142: #{generate_ids.1} parent=119 // pred_check_branch
          %958 = sbr.rel (%p956) target = $region144
        $region143: #{generate_ids.1} parent=119 // pred_region
          %959 = dma.done [#allocation13], 2048
        $region144: #{generate_ids.1} parent=119 // pred_fallthru
          _
        // Predicated region
        $region145: #{generate_ids.1} parent=119 // pred_check
          %p960 = pneg %p265
        $region146: #{generate_ids.1} parent=119 // pred_check_branch
          %962 = sbr.rel (%p960) target = $region148
        $region147: #{generate_ids.1} parent=119 // pred_region
          %963 = dma.done [#allocation13], 4096
        $region148: #{generate_ids.1} parent=119 // pred_fallthru
          _
        // Predicated region
        $region149: #{generate_ids.1} parent=119 // pred_check
          %p964 = pneg %p286
        $region150: #{generate_ids.1} parent=119 // pred_check_branch
          %966 = sbr.rel (%p964) target = $region152
        $region151: #{generate_ids.1} parent=119 // pred_region
          %967 = dma.done [#allocation16], 4096
        $region152: #{generate_ids.1} parent=119 // pred_fallthru
          _
        // Predicated region
        $region153: #{generate_ids.1} parent=119 // pred_check
          %p968 = pneg %p328
        $region154: #{generate_ids.1} parent=119 // pred_check_branch
          %970 = sbr.rel (%p968) target = $region156
        $region155: #{generate_ids.1} parent=119 // pred_region
          %971 = dma.done [#allocation16], 32
        $region156: #{generate_ids.1} parent=119 // pred_fallthru
          _
        // Predicated region
        $region157: #{generate_ids.1} parent=119 // pred_check
          %p972 = pneg %p349
        $region158: #{generate_ids.1} parent=119 // pred_check_branch
          %974 = sbr.rel (%p972) target = $region160
        $region159: #{generate_ids.1} parent=119 // pred_region
          %975 = dma.done [#allocation19], 2048
        $region160: #{generate_ids.1} parent=119 // pred_fallthru
          _
        // Predicated region
        $region161: #{generate_ids.1} parent=119 // pred_check
          %p976 = pneg %p370
        $region162: #{generate_ids.1} parent=119 // pred_check_branch
          %978 = sbr.rel (%p976) target = $region164
        $region163: #{generate_ids.1} parent=119 // pred_region
          %979 = dma.done [#allocation19], 4096
        $region164: #{generate_ids.1} parent=119 // pred_fallthru
          _
        // Predicated region
        $region165: #{generate_ids.1} parent=119 // pred_check
          %p980 = pneg %p391
        $region166: #{generate_ids.1} parent=119 // pred_check_branch
          %982 = sbr.rel (%p980) target = $region168
        $region167: #{generate_ids.1} parent=119 // pred_region
          %983 = dma.done [#allocation22], 2048
        $region168: #{generate_ids.1} parent=119 // pred_fallthru
          _
        // Predicated region
        $region169: #{generate_ids.1} parent=119 // pred_check
          %p984 = pneg %p412
        $region170: #{generate_ids.1} parent=119 // pred_check_branch
          %986 = sbr.rel (%p984) target = $region172
        $region171: #{generate_ids.1} parent=119 // pred_region
          %987 = dma.done [#allocation22], 32
        $region172: #{generate_ids.1} parent=119 // pred_fallthru
          _
        // Predicated region
        $region173: #{generate_ids.1} parent=119 // pred_check
          %p988 = pneg %p433
        $region174: #{generate_ids.1} parent=119 // pred_check_branch
          %990 = sbr.rel (%p988) target = $region176
        $region175: #{generate_ids.1} parent=119 // pred_region
          %991 = dma.done [#allocation25], 2048
        $region176: #{generate_ids.1} parent=119 // pred_fallthru
          _
        // Predicated region
        $region177: #{generate_ids.1} parent=119 // pred_check
          %p992 = pneg %p454
        $region178: #{generate_ids.1} parent=119 // pred_check_branch
          %994 = sbr.rel (%p992) target = $region180
        $region179: #{generate_ids.1} parent=119 // pred_region
          %995 = dma.done [#allocation25], 4096
        $region180: #{generate_ids.1} parent=119 // pred_fallthru
          _
        // Predicated region
        $region181: #{generate_ids.1} parent=119 // pred_check
          %p996 = pneg %p475
        $region182: #{generate_ids.1} parent=119 // pred_check_branch
          %998 = sbr.rel (%p996) target = $region184
        $region183: #{generate_ids.1} parent=119 // pred_region
          %999 = dma.done [#allocation28], 2048
        $region184: #{generate_ids.1} parent=119 // pred_fallthru
          _
        // Predicated region
        $region185: #{generate_ids.1} parent=119 // pred_check
          %p1000 = pneg %p517
        $region186: #{generate_ids.1} parent=119 // pred_check_branch
          %1002 = sbr.rel (%p1000) target = $region188
        $region187: #{generate_ids.1} parent=119 // pred_region
          %1003 = dma.done [#allocation28], 4096
        $region188: #{generate_ids.1} parent=119 // pred_fallthru
          _
        // Predicated region
        $region189: #{generate_ids.1} parent=119 // pred_check
          %p1004 = pneg %p538
        $region190: #{generate_ids.1} parent=119 // pred_check_branch
          %1006 = sbr.rel (%p1004) target = $region192
        $region191: #{generate_ids.1} parent=119 // pred_region
          %1007 = dma.done [#allocation31], 4096
        $region192: #{generate_ids.1} parent=119 // pred_fallthru
          _
        // Predicated region
        $region193: #{generate_ids.1} parent=119 // pred_check
          %p1008 = pneg %p559
        $region194: #{generate_ids.1} parent=119 // pred_check_branch
          %1010 = sbr.rel (%p1008) target = $region196
        $region195: #{generate_ids.1} parent=119 // pred_region
          %1011 = dma.done [#allocation31], 16
        $region196: #{generate_ids.1} parent=119 // pred_fallthru
          _
        // Predicated region
        $region197: #{generate_ids.1} parent=119 // pred_check
          %p1012 = pneg %p580
        $region198: #{generate_ids.1} parent=119 // pred_check_branch
          %1014 = sbr.rel (%p1012) target = $region200
        $region199: #{generate_ids.1} parent=119 // pred_region
          %1015 = dma.done [#allocation34], 1024
        $region200: #{generate_ids.1} parent=119 // pred_fallthru
          _
        %p1016 = scmp.lt.s32.totalorder %s55, 1
        %s1017 = scalar_select %p1016, %s55, 1
        %s1018 = smul.addr %s1017, 2
        %s1019 = smul.addr %s1018, 8
        %s1020 = scalar_lea.vmem %s0, %s1019
        %p1021 = pneg %p76
        %p1022 = pneg %p73
        %p1023 = pneg %p97
        %p1024 = pneg %p94
        %p1025 = pneg %p118
        %p1026 = pneg %p115
        %p1027 = pneg %p139
        %p1028 = pneg %p136
        %p1029 = pneg %p160
        %p1030 = pneg %p157
        %p1031 = pneg %p181
        %p1032 = pneg %p178
        %p1033 = pneg %p202
        %p1034 = pneg %p199
        %p1035 = pneg %p223
        %p1036 = pneg %p220
        %p1037 = pneg %p244
        %p1038 = pneg %p241
        %p1039 = pneg %p265
        %p1040 = pneg %p262
        %p1041 = pneg %p286
        %p1042 = pneg %p283
        %p1043 = pneg %p307
        %p1044 = pneg %p304
        %p1045 = pneg %p328
        %p1046 = pneg %p325
        %p1047 = pneg %p349
        %p1048 = pneg %p346
        %p1049 = pneg %p370
        %p1050 = pneg %p367
        %p1051 = pneg %p391
        %p1052 = pneg %p388
        %p1053 = pneg %p412
        %p1054 = pneg %p409
        %p1055 = pneg %p433
        %p1056 = pneg %p430
        %p1057 = pneg %p454
        %p1058 = pneg %p451
        %p1059 = pneg %p475
        %p1060 = pneg %p472
        %p1061 = pneg %p496
        %p1062 = pneg %p493
        %p1063 = pneg %p517
        %p1064 = pneg %p514
        %p1065 = pneg %p538
        %p1066 = pneg %p535
        %p1067 = pneg %p559
        %p1068 = pneg %p556
        %p1069 = pneg %p580
        %p1070 = pneg %p577
        %p1071 = pneg %p606
        %p1072 = pneg %p603
        %s1073 = sand.u32 %s593, 1
        %s1074 = scalar_lea.sflag [#allocation5], %s1073
        %s1075 = sand.u32 %s593, 1
        %s1076 = scalar_lea.vmem [#allocation35], %s1075
        %p1077 = pneg %p632
        %p1078 = pneg %p629
        %s1079 = sand.u32 %s619, 1
        %s1080 = scalar_lea.sflag [#allocation37], %s1079
        %s1081 = sand.u32 %s619, 1
        %s1082 = smul.addr %s1081, 16
        %s1083 = scalar_lea.vmem [#allocation36], %s1082
        %p1084 = scmp.lt.s32.totalorder %s55, 1
        %s1085 = scalar_select %p1084, %s55, 1
        %s1086 = smul.addr %s1085, 2
        %s1087 = smul.addr %s1086, 8
        %s1088 = scalar_lea.vmem %s0, %s1087
        %1090 = vst [vmem:[#allocation2] sm:$0xff] 0.0
        %1091 = vst [vmem:[#allocation2 + $0x8] sm:$0xff] 0.0
        %1092 = vst [vmem:[#allocation2 + $0x10] sm:$0xff] 0.0
        %1093 = vst [vmem:[#allocation2 + $0x18] sm:$0xff] 0.0
        %1094 = vst [vmem:[#allocation2 + $0x20] sm:$0xff] 0.0
        %1095 = vst [vmem:[#allocation2 + $0x28] sm:$0xff] 0.0
        %1096 = vst [vmem:[#allocation2 + $0x30] sm:$0xff] 0.0
        %1097 = vst [vmem:[#allocation2 + $0x38] sm:$0xff] 0.0
        %v1098 = vld [vmem:[%s1088] sm:$0xff]
        %v1099 = vld [vmem:[%s1088 + $0x8] sm:$0xff]
        %v1100 = vld [vmem:[#allocation6] sm:$0xff]
        %v1101 = vld [vmem:[#allocation6 + $0x8] sm:$0xff]
        %v1102 = vld [vmem:[#allocation6 + $0x10] sm:$0xff]
        %v1103 = vld [vmem:[#allocation6 + $0x18] sm:$0xff]
        %v1104 = vld [vmem:[#allocation6 + $0x20] sm:$0xff]
        %v1105 = vld [vmem:[#allocation6 + $0x28] sm:$0xff]
        %v1106 = vld [vmem:[#allocation6 + $0x30] sm:$0xff]
        %v1107 = vld [vmem:[#allocation6 + $0x38] sm:$0xff]
        %v1108 = vld [vmem:[%s4] sm:$0x1]
        %v1109 = vmul.f32 %v1098, %v1098
        %v1110 = vmul.f32 %v1099, %v1099
        %1111 = vadd.xlane.f32.xlu0 %v1109
        %v1112 = vpop.xlane.xlu0 %1111
        %1113 = vadd.xlane.f32.xlu0 %v1110
        %v1114 = vpop.xlane.xlu0 %1113
        %v1115 = vrcp.pop 128.0
        %v1116 = vmul.f32 %v1112, %v1115
        %v1117 = vmul.f32 %v1114, %v1115
        %v1118 = vadd.f32 %v1116, 1e-06
        %v1119 = vadd.f32 %v1117, 1e-06
        %v1120 = vrsqrt.pop %v1118
        %v1121 = vrsqrt.pop %v1119
        %v1122 = vmul.f32 %v1098, %v1120
        %v1123 = vmul.f32 %v1099, %v1121
        %v1125 = vlaneseq
        %v1126 = vshrl.u32 %v1125, 7
        %v1127 = vsub.s32 0, %v1126
        %v1128 = vrot.slane %v1108, %v1127
        %v1130 = vmul.f32 %v1122, %v1128
        %v1131 = vmul.f32 %v1123, %v1128
        %v1132 = vpack.c.bf16 %v1131, %v1130
        %v1133 = vld [vmem:[#allocation9] sm:$0xf]
        %v1134 = vld [vmem:[#allocation9 + $0x4] sm:$0xf]
        %v1135 = vld [vmem:[#allocation9 + $0x8] sm:$0xf]
        %v1136 = vld [vmem:[#allocation9 + $0xc] sm:$0xf]
        %v1137 = vld [vmem:[#allocation9 + $0x10] sm:$0xf]
        %v1138 = vld [vmem:[#allocation9 + $0x14] sm:$0xf]
        %v1139 = vld [vmem:[#allocation9 + $0x18] sm:$0xf]
        %v1140 = vld [vmem:[#allocation9 + $0x1c] sm:$0xf]
        %v1141 = vld [vmem:[#allocation9 + $0x20] sm:$0xf]
        %v1142 = vld [vmem:[#allocation9 + $0x24] sm:$0xf]
        %v1143 = vld [vmem:[#allocation9 + $0x28] sm:$0xf]
        %v1144 = vld [vmem:[#allocation9 + $0x2c] sm:$0xf]
        %v1145 = vld [vmem:[#allocation9 + $0x30] sm:$0xf]
        %v1146 = vld [vmem:[#allocation9 + $0x34] sm:$0xf]
        %v1147 = vld [vmem:[#allocation9 + $0x38] sm:$0xf]
        %v1148 = vld [vmem:[#allocation9 + $0x3c] sm:$0xf]
        %v1165 = vunpack.c.l.b16 %v1133
        %v1166 = vunpack.c.l.b16 %v1134
        %v1167 = vunpack.c.l.b16 %v1135
        %v1168 = vunpack.c.l.b16 %v1136
        %v1169 = vunpack.c.l.b16 %v1137
        %v1170 = vunpack.c.l.b16 %v1138
        %v1171 = vunpack.c.l.b16 %v1139
        %v1172 = vunpack.c.l.b16 %v1140
        %v1173 = vunpack.c.l.b16 %v1141
        %v1174 = vunpack.c.l.b16 %v1142
        %v1175 = vunpack.c.l.b16 %v1143
        %v1176 = vunpack.c.l.b16 %v1144
        %v1177 = vunpack.c.l.b16 %v1145
        %v1178 = vunpack.c.l.b16 %v1146
        %v1179 = vunpack.c.l.b16 %v1147
        %v1180 = vunpack.c.l.b16 %v1148
        %v1181 = vpack.c.b16 %v1166, %v1165
        %v1182 = vpack.c.b16 %v1168, %v1167
        %v1183 = vpack.c.b16 %v1170, %v1169
        %v1184 = vpack.c.b16 %v1172, %v1171
        %v1185 = vpack.c.b16 %v1174, %v1173
        %v1186 = vpack.c.b16 %v1176, %v1175
        %v1187 = vpack.c.b16 %v1178, %v1177
        %v1188 = vpack.c.b16 %v1180, %v1179
        %1197 = vmatprep.subr.bf16.mxu0 0
        %1198 = vmatpush1.bf16.msra.mxu0 %v1188
        %1199 = vmatprep.subr.bf16.mxu0 0
        %1200 = vmatpush1.bf16.msra.mxu0 %v1187
        %1201 = vmatprep.subr.bf16.mxu0 0
        %1202 = vmatpush1.bf16.msra.mxu0 %v1186
        %1203 = vmatprep.subr.bf16.mxu0 0
        %1204 = vmatpush1.bf16.msra.mxu0 %v1185
        %1205 = vmatprep.subr.bf16.mxu0 0
        %1206 = vmatpush1.bf16.msra.mxu0 %v1184
        %1207 = vmatprep.subr.bf16.mxu0 0
        %1208 = vmatpush1.bf16.msra.mxu0 %v1183
        %1209 = vmatprep.subr.bf16.mxu0 0
        %1210 = vmatpush1.bf16.msra.mxu0 %v1182
        %1211 = vmatprep.subr.bf16.mxu0 0
        %1212 = vmatpush1.bf16.msra.mxu0 %v1181
        %1213 = vmatprep.subr.bf16.mxu0 0
        %1214 = vmatpush2.bf16.msra.mxu0 0
        %1215 = vmatprep.subr.bf16.mxu0 0
        %1216 = vmatpush2.bf16.msra.mxu0 0
        %1217 = vmatprep.subr.bf16.mxu0 0
        %1218 = vmatpush2.bf16.msra.mxu0 0
        %1219 = vmatprep.subr.bf16.mxu0 0
        %1220 = vmatpush2.bf16.msra.mxu0 0
        %1221 = vmatprep.subr.bf16.mxu0 0
        %1222 = vmatpush2.bf16.msra.mxu0 0
        %1223 = vmatprep.subr.bf16.mxu0 0
        %1224 = vmatpush2.bf16.msra.mxu0 0
        %1225 = vmatprep.subr.bf16.mxu0 0
        %1226 = vmatpush2.bf16.msra.mxu0 0
        %1227 = vmatprep.subr.bf16.mxu0 0
        %1228 = vmatpush2.bf16.msra.mxu0 0
        %1229 = vmatprep.mubr.bf16.mxu0 0
        %1230 = vmatmul.mubr.bf16.gmra.mxu0 %v1132
        %v1231 = vpop.f32.mrf.mxu0
        %v1232 = vadd.f32 0.0, %v1231
        %v1233 = vpop.f32.mrf.mxu0
        %v1234 = vpop.f32.mrf.mxu0
        %v1235 = vadd.f32 0.0, %v1234
        %v1236 = vpop.f32.mrf.mxu0
        %1237 = vdwg.mxu0
        %v1238 = vld [vmem:[#allocation11] sm:$0xff]
        %v1239 = vld [vmem:[#allocation11 + $0x8] sm:$0xff]
        %v1240 = vld [vmem:[#allocation11 + $0x10] sm:$0xff]
        %v1241 = vld [vmem:[#allocation11 + $0x18] sm:$0xff]
        %v1242 = vld [vmem:[#allocation11 + $0x20] sm:$0xff]
        %v1243 = vld [vmem:[#allocation11 + $0x28] sm:$0xff]
        %v1244 = vld [vmem:[#allocation11 + $0x30] sm:$0xff]
        %v1245 = vld [vmem:[#allocation11 + $0x38] sm:$0xff]
        %v1246 = vld [vmem:[#allocation11 + $0x40] sm:$0xff]
        %v1247 = vld [vmem:[#allocation11 + $0x48] sm:$0xff]
        %v1248 = vld [vmem:[#allocation11 + $0x50] sm:$0xff]
        %v1249 = vld [vmem:[#allocation11 + $0x58] sm:$0xff]
        %v1250 = vld [vmem:[#allocation11 + $0x60] sm:$0xff]
        %v1251 = vld [vmem:[#allocation11 + $0x68] sm:$0xff]
        %v1252 = vld [vmem:[#allocation11 + $0x70] sm:$0xff]
        %v1253 = vld [vmem:[#allocation11 + $0x78] sm:$0xff]
        %v1270 = vunpack.c.l.b16 %v1238
        %v1271 = vunpack.c.h.b16 %v1238
        %v1272 = vunpack.c.l.b16 %v1239
        %v1273 = vunpack.c.h.b16 %v1239
        %v1274 = vunpack.c.l.b16 %v1240
        %v1275 = vunpack.c.h.b16 %v1240
        %v1276 = vunpack.c.l.b16 %v1241
        %v1277 = vunpack.c.h.b16 %v1241
        %v1278 = vunpack.c.l.b16 %v1242
        %v1279 = vunpack.c.h.b16 %v1242
        %v1280 = vunpack.c.l.b16 %v1243
        %v1281 = vunpack.c.h.b16 %v1243
        %v1282 = vunpack.c.l.b16 %v1244
        %v1283 = vunpack.c.h.b16 %v1244
        %v1284 = vunpack.c.l.b16 %v1245
        %v1285 = vunpack.c.h.b16 %v1245
        %v1286 = vunpack.c.l.b16 %v1246
        %v1287 = vunpack.c.h.b16 %v1246
        %v1288 = vunpack.c.l.b16 %v1247
        %v1289 = vunpack.c.h.b16 %v1247
        %v1290 = vunpack.c.l.b16 %v1248
        %v1291 = vunpack.c.h.b16 %v1248
        %v1292 = vunpack.c.l.b16 %v1249
        %v1293 = vunpack.c.h.b16 %v1249
        %v1294 = vunpack.c.l.b16 %v1250
        %v1295 = vunpack.c.h.b16 %v1250
        %v1296 = vunpack.c.l.b16 %v1251
        %v1297 = vunpack.c.h.b16 %v1251
        %v1298 = vunpack.c.l.b16 %v1252
        %v1299 = vunpack.c.h.b16 %v1252
        %v1300 = vunpack.c.l.b16 %v1253
        %v1301 = vunpack.c.h.b16 %v1253
        %v1302 = vpack.c.b16 %v1272, %v1270
        %v1303 = vpack.c.b16 %v1273, %v1271
        %v1304 = vpack.c.b16 %v1276, %v1274
        %v1305 = vpack.c.b16 %v1277, %v1275
        %v1306 = vpack.c.b16 %v1280, %v1278
        %v1307 = vpack.c.b16 %v1281, %v1279
        %v1308 = vpack.c.b16 %v1284, %v1282
        %v1309 = vpack.c.b16 %v1285, %v1283
        %v1310 = vpack.c.b16 %v1288, %v1286
        %v1311 = vpack.c.b16 %v1289, %v1287
        %v1312 = vpack.c.b16 %v1292, %v1290
        %v1313 = vpack.c.b16 %v1293, %v1291
        %v1314 = vpack.c.b16 %v1296, %v1294
        %v1315 = vpack.c.b16 %v1297, %v1295
        %v1316 = vpack.c.b16 %v1300, %v1298
        %v1317 = vpack.c.b16 %v1301, %v1299
        %1334 = vmatprep.subr.bf16.mxu0 %v1317
        %1335 = vmatpush1.bf16.msra.mxu0 %v1316
        %1336 = vmatprep.subr.bf16.mxu0 %v1315
        %1337 = vmatpush1.bf16.msra.mxu0 %v1314
        %1338 = vmatprep.subr.bf16.mxu0 %v1313
        %1339 = vmatpush1.bf16.msra.mxu0 %v1312
        %1340 = vmatprep.subr.bf16.mxu0 %v1311
        %1341 = vmatpush1.bf16.msra.mxu0 %v1310
        %1342 = vmatprep.subr.bf16.mxu0 %v1309
        %1343 = vmatpush1.bf16.msra.mxu0 %v1308
        %1344 = vmatprep.subr.bf16.mxu0 %v1307
        %1345 = vmatpush1.bf16.msra.mxu0 %v1306
        %1346 = vmatprep.subr.bf16.mxu0 %v1305
        %1347 = vmatpush1.bf16.msra.mxu0 %v1304
        %1348 = vmatprep.subr.bf16.mxu0 %v1303
        %1349 = vmatpush1.bf16.msra.mxu0 %v1302
        %1350 = vmatprep.subr.bf16.mxu0 0
        %1351 = vmatpush2.bf16.msra.mxu0 0
        %1352 = vmatprep.subr.bf16.mxu0 0
        %1353 = vmatpush2.bf16.msra.mxu0 0
        %1354 = vmatprep.subr.bf16.mxu0 0
        %1355 = vmatpush2.bf16.msra.mxu0 0
        %1356 = vmatprep.subr.bf16.mxu0 0
        %1357 = vmatpush2.bf16.msra.mxu0 0
        %1358 = vmatprep.subr.bf16.mxu0 0
        %1359 = vmatpush2.bf16.msra.mxu0 0
        %1360 = vmatprep.subr.bf16.mxu0 0
        %1361 = vmatpush2.bf16.msra.mxu0 0
        %1362 = vmatprep.subr.bf16.mxu0 0
        %1363 = vmatpush2.bf16.msra.mxu0 0
        %1364 = vmatprep.subr.bf16.mxu0 0
        %1365 = vmatpush2.bf16.msra.mxu0 0
        %1366 = vmatprep.mubr.bf16.mxu0 0
        %1367 = vmatmul.mubr.bf16.gmra.mxu0 %v1132
        %v1368 = vpop.f32.mrf.mxu0
        %v1369 = vadd.f32 0.0, %v1368
        %v1370 = vpop.f32.mrf.mxu0
        %v1371 = vadd.f32 0.0, %v1370
        %v1372 = vpop.f32.mrf.mxu0
        %v1373 = vadd.f32 0.0, %v1372
        %v1374 = vpop.f32.mrf.mxu0
        %v1375 = vadd.f32 0.0, %v1374
        %1376 = vdwg.mxu0
        %v1377 = vld [vmem:[#allocation12] sm:$0xf]
        %v1378 = vld [vmem:[#allocation12 + $0x4] sm:$0xf]
        %v1379 = vld [vmem:[#allocation12 + $0x8] sm:$0xf]
        %v1380 = vld [vmem:[#allocation12 + $0xc] sm:$0xf]
        %v1381 = vld [vmem:[#allocation12 + $0x10] sm:$0xf]
        %v1382 = vld [vmem:[#allocation12 + $0x14] sm:$0xf]
        %v1383 = vld [vmem:[#allocation12 + $0x18] sm:$0xf]
        %v1384 = vld [vmem:[#allocation12 + $0x1c] sm:$0xf]
        %v1385 = vld [vmem:[#allocation12 + $0x20] sm:$0xf]
        %v1386 = vld [vmem:[#allocation12 + $0x24] sm:$0xf]
        %v1387 = vld [vmem:[#allocation12 + $0x28] sm:$0xf]
        %v1388 = vld [vmem:[#allocation12 + $0x2c] sm:$0xf]
        %v1389 = vld [vmem:[#allocation12 + $0x30] sm:$0xf]
        %v1390 = vld [vmem:[#allocation12 + $0x34] sm:$0xf]
        %v1391 = vld [vmem:[#allocation12 + $0x38] sm:$0xf]
        %v1392 = vld [vmem:[#allocation12 + $0x3c] sm:$0xf]
        %1395 = vrot.lane.b32.xlu0 %v1232, 96
        %v1396 = vpop.permute.xlu0 %1395
        %1397 = vrot.lane.b32.xlu0 %v1235, 96
        %v1398 = vpop.permute.xlu0 %1397
        %1401 = vrot.lane.b32.xlu0 %v1232, 64
        %v1402 = vpop.permute.xlu0 %1401
        %1403 = vrot.lane.b32.xlu0 %v1235, 64
        %v1404 = vpop.permute.xlu0 %1403
        %1407 = vrot.lane.b32.xlu0 %v1232, 32
        %v1408 = vpop.permute.xlu0 %1407
        %1409 = vrot.lane.b32.xlu0 %v1235, 32
        %v1410 = vpop.permute.xlu0 %1409
        %v1413 = vpack.c.bf16 %v1235, %v1232
        %v1414 = vpack.c.bf16 %v1398, %v1396
        %v1415 = vpack.c.bf16 %v1404, %v1402
        %v1416 = vpack.c.bf16 %v1410, %v1408
        %1419 = vrot.lane.b32.xlu0 %v1369, 96
        %v1420 = vpop.permute.xlu0 %1419
        %1421 = vrot.lane.b32.xlu0 %v1373, 96
        %v1422 = vpop.permute.xlu0 %1421
        %1425 = vrot.lane.b32.xlu0 %v1369, 64
        %v1426 = vpop.permute.xlu0 %1425
        %1427 = vrot.lane.b32.xlu0 %v1373, 64
        %v1428 = vpop.permute.xlu0 %1427
        %1431 = vrot.lane.b32.xlu0 %v1369, 32
        %v1432 = vpop.permute.xlu0 %1431
        %1433 = vrot.lane.b32.xlu0 %v1373, 32
        %v1434 = vpop.permute.xlu0 %1433
        %v1437 = vpack.c.bf16 %v1373, %v1369
        %v1438 = vpack.c.bf16 %v1422, %v1420
        %v1439 = vpack.c.bf16 %v1428, %v1426
        %v1440 = vpack.c.bf16 %v1434, %v1432
        %1443 = vrot.lane.b32.xlu0 %v1371, 96
        %v1444 = vpop.permute.xlu0 %1443
        %1445 = vrot.lane.b32.xlu0 %v1375, 96
        %v1446 = vpop.permute.xlu0 %1445
        %1449 = vrot.lane.b32.xlu0 %v1371, 64
        %v1450 = vpop.permute.xlu0 %1449
        %1451 = vrot.lane.b32.xlu0 %v1375, 64
        %v1452 = vpop.permute.xlu0 %1451
        %1455 = vrot.lane.b32.xlu0 %v1371, 32
        %v1456 = vpop.permute.xlu0 %1455
        %1457 = vrot.lane.b32.xlu0 %v1375, 32
        %v1458 = vpop.permute.xlu0 %1457
        %v1461 = vpack.c.bf16 %v1375, %v1371
        %v1462 = vpack.c.bf16 %v1446, %v1444
        %v1463 = vpack.c.bf16 %v1452, %v1450
        %v1464 = vpack.c.bf16 %v1458, %v1456
        %vm1465 = vcmask 261120
        %v1467 = vsel %vm1465, %v1413, 0
        %v1470 = vsel %vm1465, %v1437, 0
        %1472 = vmatprep.subr.bf16.mxu0 0
        %1473 = vmatpush1.bf16.xpose.msra.mxu0 0
        %1474 = vmatprep.subr.bf16.mxu0 0
        %1475 = vmatpush1.bf16.xpose.msra.mxu0 0
        %1476 = vmatprep.subr.bf16.mxu0 0
        %1477 = vmatpush1.bf16.xpose.msra.mxu0 0
        %1478 = vmatprep.subr.bf16.mxu0 0
        %1479 = vmatpush1.bf16.xpose.msra.mxu0 0
        %1480 = vmatprep.subr.bf16.mxu0 0
        %1481 = vmatpush1.bf16.xpose.msra.mxu0 0
        %1482 = vmatprep.subr.bf16.mxu0 0
        %1483 = vmatpush1.bf16.xpose.msra.mxu0 0
        %1484 = vmatprep.subr.bf16.mxu0 0
        %1485 = vmatpush1.bf16.xpose.msra.mxu0 0
        %1486 = vmatprep.subr.bf16.mxu0 0
        %1487 = vmatpush1.bf16.xpose.msra.mxu0 %v1470
        %1488 = vmatprep.subr.bf16.mxu0 0
        %1489 = vmatpush2.bf16.xpose.msra.mxu0 0
        %1490 = vmatprep.subr.bf16.mxu0 0
        %1491 = vmatpush2.bf16.xpose.msra.mxu0 0
        %1492 = vmatprep.subr.bf16.mxu0 0
        %1493 = vmatpush2.bf16.xpose.msra.mxu0 0
        %1494 = vmatprep.subr.bf16.mxu0 0
        %1495 = vmatpush2.bf16.xpose.msra.mxu0 0
        %1496 = vmatprep.subr.bf16.mxu0 0
        %1497 = vmatpush2.bf16.xpose.msra.mxu0 0
        %1498 = vmatprep.subr.bf16.mxu0 0
        %1499 = vmatpush2.bf16.xpose.msra.mxu0 0
        %1500 = vmatprep.subr.bf16.mxu0 0
        %1501 = vmatpush2.bf16.xpose.msra.mxu0 0
        %1502 = vmatprep.subr.bf16.mxu0 0
        %1503 = vmatpush2.bf16.xpose.msra.mxu0 0
        %1504 = vmatprep.mubr.bf16.mxu0 0
        %1505 = vmatmul.mubr.bf16.gmra.mxu0 %v1467
        %v1506 = vpop.f32.mrf.mxu0
        %v1507 = vadd.f32 %v1100, %v1506
        %v1508 = vpop.f32.mrf.mxu0
        %v1509 = vpop.f32.mrf.mxu0
        %v1510 = vadd.f32 %v1101, %v1509
        %v1511 = vpop.f32.mrf.mxu0
        %1512 = vdwg.mxu0
        %v1514 = vsel %vm1465, %v1414, 0
        %v1517 = vsel %vm1465, %v1438, 0
        %1519 = vmatprep.subr.bf16.mxu0 0
        %1520 = vmatpush1.bf16.xpose.msra.mxu0 0
        %1521 = vmatprep.subr.bf16.mxu0 0
        %1522 = vmatpush1.bf16.xpose.msra.mxu0 0
        %1523 = vmatprep.subr.bf16.mxu0 0
        %1524 = vmatpush1.bf16.xpose.msra.mxu0 0
        %1525 = vmatprep.subr.bf16.mxu0 0
        %1526 = vmatpush1.bf16.xpose.msra.mxu0 0
        %1527 = vmatprep.subr.bf16.mxu0 0
        %1528 = vmatpush1.bf16.xpose.msra.mxu0 0
        %1529 = vmatprep.subr.bf16.mxu0 0
        %1530 = vmatpush1.bf16.xpose.msra.mxu0 0
        %1531 = vmatprep.subr.bf16.mxu0 0
        %1532 = vmatpush1.bf16.xpose.msra.mxu0 0
        %1533 = vmatprep.subr.bf16.mxu0 0
        %1534 = vmatpush1.bf16.xpose.msra.mxu0 %v1517
        %1535 = vmatprep.subr.bf16.mxu0 0
        %1536 = vmatpush2.bf16.xpose.msra.mxu0 0
        %1537 = vmatprep.subr.bf16.mxu0 0
        %1538 = vmatpush2.bf16.xpose.msra.mxu0 0
        %1539 = vmatprep.subr.bf16.mxu0 0
        %1540 = vmatpush2.bf16.xpose.msra.mxu0 0
        %1541 = vmatprep.subr.bf16.mxu0 0
        %1542 = vmatpush2.bf16.xpose.msra.mxu0 0
        %1543 = vmatprep.subr.bf16.mxu0 0
        %1544 = vmatpush2.bf16.xpose.msra.mxu0 0
        %1545 = vmatprep.subr.bf16.mxu0 0
        %1546 = vmatpush2.bf16.xpose.msra.mxu0 0
        %1547 = vmatprep.subr.bf16.mxu0 0
        %1548 = vmatpush2.bf16.xpose.msra.mxu0 0
        %1549 = vmatprep.subr.bf16.mxu0 0
        %1550 = vmatpush2.bf16.xpose.msra.mxu0 0
        %1551 = vmatprep.mubr.bf16.mxu0 0
        %1552 = vmatmul.mubr.bf16.gmra.mxu0 %v1514
        %v1553 = vpop.f32.mrf.mxu0
        %v1554 = vadd.f32 %v1102, %v1553
        %v1555 = vpop.f32.mrf.mxu0
        %v1556 = vpop.f32.mrf.mxu0
        %v1557 = vadd.f32 %v1103, %v1556
        %v1558 = vpop.f32.mrf.mxu0
        %1559 = vdwg.mxu0
        %v1561 = vsel %vm1465, %v1415, 0
        %v1564 = vsel %vm1465, %v1439, 0
        %1566 = vmatprep.subr.bf16.mxu0 0
        %1567 = vmatpush1.bf16.xpose.msra.mxu0 0
        %1568 = vmatprep.subr.bf16.mxu0 0
        %1569 = vmatpush1.bf16.xpose.msra.mxu0 0
        %1570 = vmatprep.subr.bf16.mxu0 0
        %1571 = vmatpush1.bf16.xpose.msra.mxu0 0
        %1572 = vmatprep.subr.bf16.mxu0 0
        %1573 = vmatpush1.bf16.xpose.msra.mxu0 0
        %1574 = vmatprep.subr.bf16.mxu0 0
        %1575 = vmatpush1.bf16.xpose.msra.mxu0 0
        %1576 = vmatprep.subr.bf16.mxu0 0
        %1577 = vmatpush1.bf16.xpose.msra.mxu0 0
        %1578 = vmatprep.subr.bf16.mxu0 0
        %1579 = vmatpush1.bf16.xpose.msra.mxu0 0
        %1580 = vmatprep.subr.bf16.mxu0 0
        %1581 = vmatpush1.bf16.xpose.msra.mxu0 %v1564
        %1582 = vmatprep.subr.bf16.mxu0 0
        %1583 = vmatpush2.bf16.xpose.msra.mxu0 0
        %1584 = vmatprep.subr.bf16.mxu0 0
        %1585 = vmatpush2.bf16.xpose.msra.mxu0 0
        %1586 = vmatprep.subr.bf16.mxu0 0
        %1587 = vmatpush2.bf16.xpose.msra.mxu0 0
        %1588 = vmatprep.subr.bf16.mxu0 0
        %1589 = vmatpush2.bf16.xpose.msra.mxu0 0
        %1590 = vmatprep.subr.bf16.mxu0 0
        %1591 = vmatpush2.bf16.xpose.msra.mxu0 0
        %1592 = vmatprep.subr.bf16.mxu0 0
        %1593 = vmatpush2.bf16.xpose.msra.mxu0 0
        %1594 = vmatprep.subr.bf16.mxu0 0
        %1595 = vmatpush2.bf16.xpose.msra.mxu0 0
        %1596 = vmatprep.subr.bf16.mxu0 0
        %1597 = vmatpush2.bf16.xpose.msra.mxu0 0
        %1598 = vmatprep.mubr.bf16.mxu0 0
        %1599 = vmatmul.mubr.bf16.gmra.mxu0 %v1561
        %v1600 = vpop.f32.mrf.mxu0
        %v1601 = vadd.f32 %v1104, %v1600
        %v1602 = vpop.f32.mrf.mxu0
        %v1603 = vpop.f32.mrf.mxu0
        %v1604 = vadd.f32 %v1105, %v1603
        %v1605 = vpop.f32.mrf.mxu0
        %1606 = vdwg.mxu0
        %v1608 = vsel %vm1465, %v1416, 0
        %v1611 = vsel %vm1465, %v1440, 0
        %1613 = vmatprep.subr.bf16.mxu0 0
        %1614 = vmatpush1.bf16.xpose.msra.mxu0 0
        %1615 = vmatprep.subr.bf16.mxu0 0
        %1616 = vmatpush1.bf16.xpose.msra.mxu0 0
        %1617 = vmatprep.subr.bf16.mxu0 0
        %1618 = vmatpush1.bf16.xpose.msra.mxu0 0
        %1619 = vmatprep.subr.bf16.mxu0 0
        %1620 = vmatpush1.bf16.xpose.msra.mxu0 0
        %1621 = vmatprep.subr.bf16.mxu0 0
        %1622 = vmatpush1.bf16.xpose.msra.mxu0 0
        %1623 = vmatprep.subr.bf16.mxu0 0
        %1624 = vmatpush1.bf16.xpose.msra.mxu0 0
        %1625 = vmatprep.subr.bf16.mxu0 0
        %1626 = vmatpush1.bf16.xpose.msra.mxu0 0
        %1627 = vmatprep.subr.bf16.mxu0 0
        %1628 = vmatpush1.bf16.xpose.msra.mxu0 %v1611
        %1629 = vmatprep.subr.bf16.mxu0 0
        %1630 = vmatpush2.bf16.xpose.msra.mxu0 0
        %1631 = vmatprep.subr.bf16.mxu0 0
        %1632 = vmatpush2.bf16.xpose.msra.mxu0 0
        %1633 = vmatprep.subr.bf16.mxu0 0
        %1634 = vmatpush2.bf16.xpose.msra.mxu0 0
        %1635 = vmatprep.subr.bf16.mxu0 0
        %1636 = vmatpush2.bf16.xpose.msra.mxu0 0
        %1637 = vmatprep.subr.bf16.mxu0 0
        %1638 = vmatpush2.bf16.xpose.msra.mxu0 0
        %1639 = vmatprep.subr.bf16.mxu0 0
        %1640 = vmatpush2.bf16.xpose.msra.mxu0 0
        %1641 = vmatprep.subr.bf16.mxu0 0
        %1642 = vmatpush2.bf16.xpose.msra.mxu0 0
        %1643 = vmatprep.subr.bf16.mxu0 0
        %1644 = vmatpush2.bf16.xpose.msra.mxu0 0
        %1645 = vmatprep.mubr.bf16.mxu0 0
        %1646 = vmatmul.mubr.bf16.gmra.mxu0 %v1608
        %v1647 = vpop.f32.mrf.mxu0
        %v1648 = vadd.f32 %v1106, %v1647
        %v1649 = vpop.f32.mrf.mxu0
        %v1650 = vpop.f32.mrf.mxu0
        %v1651 = vadd.f32 %v1107, %v1650
        %v1652 = vpop.f32.mrf.mxu0
        %1653 = vdwg.mxu0
        %vm1654 = vcmask 130048
        %v1655 = vsel %vm1654, %v1507, -inf
        %1656 = vmax.xlane.f32.xlu0 %v1655
        %v1657 = vpop.xlane.xlu0 %1656
        %v1658 = vsel %vm1654, %v1510, -inf
        %1659 = vmax.xlane.f32.xlu0 %v1658
        %v1660 = vpop.xlane.xlu0 %1659
        %v1661 = vsel %vm1654, %v1554, -inf
        %1662 = vmax.xlane.f32.xlu0 %v1661
        %v1663 = vpop.xlane.xlu0 %1662
        %v1664 = vsel %vm1654, %v1557, -inf
        %1665 = vmax.xlane.f32.xlu0 %v1664
        %v1666 = vpop.xlane.xlu0 %1665
        %v1667 = vsel %vm1654, %v1601, -inf
        %1668 = vmax.xlane.f32.xlu0 %v1667
        %v1669 = vpop.xlane.xlu0 %1668
        %v1670 = vsel %vm1654, %v1604, -inf
        %1671 = vmax.xlane.f32.xlu0 %v1670
        %v1672 = vpop.xlane.xlu0 %1671
        %v1673 = vsel %vm1654, %v1648, -inf
        %1674 = vmax.xlane.f32.xlu0 %v1673
        %v1675 = vpop.xlane.xlu0 %1674
        %v1676 = vsel %vm1654, %v1651, -inf
        %1677 = vmax.xlane.f32.xlu0 %v1676
        %v1678 = vpop.xlane.xlu0 %1677
        %v1679 = vsub.f32 %v1507, %v1657
        %v1680 = vsub.f32 %v1510, %v1660
        %v1681 = vsub.f32 %v1554, %v1663
        %v1682 = vsub.f32 %v1557, %v1666
        %v1683 = vsub.f32 %v1601, %v1669
        %v1684 = vsub.f32 %v1604, %v1672
        %v1685 = vsub.f32 %v1648, %v1675
        %v1686 = vsub.f32 %v1651, %v1678
        %v1687 = vmul.f32 %v1679, 1.442695
        %v1688 = vpow.pop %v1687
        %v1689 = vmul.f32 %v1680, 1.442695
        %v1690 = vpow.pop %v1689
        %v1691 = vmul.f32 %v1681, 1.442695
        %v1692 = vpow.pop %v1691
        %v1693 = vmul.f32 %v1682, 1.442695
        %v1694 = vpow.pop %v1693
        %v1695 = vmul.f32 %v1683, 1.442695
        %v1696 = vpow.pop %v1695
        %v1697 = vmul.f32 %v1684, 1.442695
        %v1698 = vpow.pop %v1697
        %v1699 = vmul.f32 %v1685, 1.442695
        %v1700 = vpow.pop %v1699
        %v1701 = vmul.f32 %v1686, 1.442695
        %v1702 = vpow.pop %v1701
        %v1703 = vsel %vm1654, %v1688, 0.0
        %1704 = vadd.xlane.f32.xlu0 %v1703
        %v1705 = vpop.xlane.xlu0 %1704
        %v1706 = vsel %vm1654, %v1690, 0.0
        %1707 = vadd.xlane.f32.xlu0 %v1706
        %v1708 = vpop.xlane.xlu0 %1707
        %v1709 = vsel %vm1654, %v1692, 0.0
        %1710 = vadd.xlane.f32.xlu0 %v1709
        %v1711 = vpop.xlane.xlu0 %1710
        %v1712 = vsel %vm1654, %v1694, 0.0
        %1713 = vadd.xlane.f32.xlu0 %v1712
        %v1714 = vpop.xlane.xlu0 %1713
        %v1715 = vsel %vm1654, %v1696, 0.0
        %1716 = vadd.xlane.f32.xlu0 %v1715
        %v1717 = vpop.xlane.xlu0 %1716
        %v1718 = vsel %vm1654, %v1698, 0.0
        %1719 = vadd.xlane.f32.xlu0 %v1718
        %v1720 = vpop.xlane.xlu0 %1719
        %v1721 = vsel %vm1654, %v1700, 0.0
        %1722 = vadd.xlane.f32.xlu0 %v1721
        %v1723 = vpop.xlane.xlu0 %1722
        %v1724 = vsel %vm1654, %v1702, 0.0
        %1725 = vadd.xlane.f32.xlu0 %v1724
        %v1726 = vpop.xlane.xlu0 %1725
        %v1727 = vrcp.pop %v1705
        %v1728 = vrcp.pop %v1708
        %v1729 = vrcp.pop %v1711
        %v1730 = vrcp.pop %v1714
        %v1731 = vrcp.pop %v1717
        %v1732 = vrcp.pop %v1720
        %v1733 = vrcp.pop %v1723
        %v1734 = vrcp.pop %v1726
        %v1735 = vmul.f32 %v1688, %v1727
        %v1736 = vmul.f32 %v1690, %v1728
        %v1737 = vmul.f32 %v1692, %v1729
        %v1738 = vmul.f32 %v1694, %v1730
        %v1739 = vmul.f32 %v1696, %v1731
        %v1740 = vmul.f32 %v1698, %v1732
        %v1741 = vmul.f32 %v1700, %v1733
        %v1742 = vmul.f32 %v1702, %v1734
        %v1743 = vpack.c.bf16 %v1736, %v1735
        %v1744 = vpack.c.bf16 %v1738, %v1737
        %v1745 = vpack.c.bf16 %v1740, %v1739
        %v1746 = vpack.c.bf16 %v1742, %v1741
        %v1748 = vsel %vm1654, %v1743, 0
        %1750 = vmatprep.subr.bf16.mxu0 0
        %1751 = vmatpush1.bf16.msra.mxu0 0
        %1752 = vmatprep.subr.bf16.mxu0 0
        %1753 = vmatpush1.bf16.msra.mxu0 0
        %1754 = vmatprep.subr.bf16.mxu0 0
        %1755 = vmatpush1.bf16.msra.mxu0 0
        %1756 = vmatprep.subr.bf16.mxu0 0
        %1757 = vmatpush1.bf16.msra.mxu0 0
        %1758 = vmatprep.subr.bf16.mxu0 0
        %1759 = vmatpush1.bf16.msra.mxu0 0
        %1760 = vmatprep.subr.bf16.mxu0 0
        %1761 = vmatpush1.bf16.msra.mxu0 0
        %1762 = vmatprep.subr.bf16.mxu0 0
        %1763 = vmatpush1.bf16.msra.mxu0 0
        %1764 = vmatprep.subr.bf16.mxu0 0
        %1765 = vmatpush1.bf16.msra.mxu0 %v1461
        %1766 = vmatprep.subr.bf16.mxu0 0
        %1767 = vmatpush2.bf16.msra.mxu0 0
        %1768 = vmatprep.subr.bf16.mxu0 0
        %1769 = vmatpush2.bf16.msra.mxu0 0
        %1770 = vmatprep.subr.bf16.mxu0 0
        %1771 = vmatpush2.bf16.msra.mxu0 0
        %1772 = vmatprep.subr.bf16.mxu0 0
        %1773 = vmatpush2.bf16.msra.mxu0 0
        %1774 = vmatprep.subr.bf16.mxu0 0
        %1775 = vmatpush2.bf16.msra.mxu0 0
        %1776 = vmatprep.subr.bf16.mxu0 0
        %1777 = vmatpush2.bf16.msra.mxu0 0
        %1778 = vmatprep.subr.bf16.mxu0 0
        %1779 = vmatpush2.bf16.msra.mxu0 0
        %1780 = vmatprep.subr.bf16.mxu0 0
        %1781 = vmatpush2.bf16.msra.mxu0 0
        %1782 = vmatprep.mubr.bf16.mxu0 0
        %1783 = vmatmul.mubr.bf16.gmra.mxu0 %v1748
        %v1784 = vpop.f32.mrf.mxu0
        %v1785 = vadd.f32 0.0, %v1784
        %v1786 = vpop.f32.mrf.mxu0
        %v1787 = vpop.f32.mrf.mxu0
        %v1788 = vadd.f32 0.0, %v1787
        %v1789 = vpop.f32.mrf.mxu0
        %1790 = vdwg.mxu0
        %v1792 = vsel %vm1654, %v1744, 0
        %1794 = vmatprep.subr.bf16.mxu0 0
        %1795 = vmatpush1.bf16.msra.mxu0 0
        %1796 = vmatprep.subr.bf16.mxu0 0
        %1797 = vmatpush1.bf16.msra.mxu0 0
        %1798 = vmatprep.subr.bf16.mxu0 0
        %1799 = vmatpush1.bf16.msra.mxu0 0
        %1800 = vmatprep.subr.bf16.mxu0 0
        %1801 = vmatpush1.bf16.msra.mxu0 0
        %1802 = vmatprep.subr.bf16.mxu0 0
        %1803 = vmatpush1.bf16.msra.mxu0 0
        %1804 = vmatprep.subr.bf16.mxu0 0
        %1805 = vmatpush1.bf16.msra.mxu0 0
        %1806 = vmatprep.subr.bf16.mxu0 0
        %1807 = vmatpush1.bf16.msra.mxu0 0
        %1808 = vmatprep.subr.bf16.mxu0 0
        %1809 = vmatpush1.bf16.msra.mxu0 %v1462
        %1810 = vmatprep.subr.bf16.mxu0 0
        %1811 = vmatpush2.bf16.msra.mxu0 0
        %1812 = vmatprep.subr.bf16.mxu0 0
        %1813 = vmatpush2.bf16.msra.mxu0 0
        %1814 = vmatprep.subr.bf16.mxu0 0
        %1815 = vmatpush2.bf16.msra.mxu0 0
        %1816 = vmatprep.subr.bf16.mxu0 0
        %1817 = vmatpush2.bf16.msra.mxu0 0
        %1818 = vmatprep.subr.bf16.mxu0 0
        %1819 = vmatpush2.bf16.msra.mxu0 0
        %1820 = vmatprep.subr.bf16.mxu0 0
        %1821 = vmatpush2.bf16.msra.mxu0 0
        %1822 = vmatprep.subr.bf16.mxu0 0
        %1823 = vmatpush2.bf16.msra.mxu0 0
        %1824 = vmatprep.subr.bf16.mxu0 0
        %1825 = vmatpush2.bf16.msra.mxu0 0
        %1826 = vmatprep.mubr.bf16.mxu0 0
        %1827 = vmatmul.mubr.bf16.gmra.mxu0 %v1792
        %v1828 = vpop.f32.mrf.mxu0
        %v1829 = vadd.f32 0.0, %v1828
        %v1830 = vpop.f32.mrf.mxu0
        %v1831 = vpop.f32.mrf.mxu0
        %v1832 = vadd.f32 0.0, %v1831
        %v1833 = vpop.f32.mrf.mxu0
        %1834 = vdwg.mxu0
        %v1836 = vsel %vm1654, %v1745, 0
        %1838 = vmatprep.subr.bf16.mxu0 0
        %1839 = vmatpush1.bf16.msra.mxu0 0
        %1840 = vmatprep.subr.bf16.mxu0 0
        %1841 = vmatpush1.bf16.msra.mxu0 0
        %1842 = vmatprep.subr.bf16.mxu0 0
        %1843 = vmatpush1.bf16.msra.mxu0 0
        %1844 = vmatprep.subr.bf16.mxu0 0
        %1845 = vmatpush1.bf16.msra.mxu0 0
        %1846 = vmatprep.subr.bf16.mxu0 0
        %1847 = vmatpush1.bf16.msra.mxu0 0
        %1848 = vmatprep.subr.bf16.mxu0 0
        %1849 = vmatpush1.bf16.msra.mxu0 0
        %1850 = vmatprep.subr.bf16.mxu0 0
        %1851 = vmatpush1.bf16.msra.mxu0 0
        %1852 = vmatprep.subr.bf16.mxu0 0
        %1853 = vmatpush1.bf16.msra.mxu0 %v1463
        %1854 = vmatprep.subr.bf16.mxu0 0
        %1855 = vmatpush2.bf16.msra.mxu0 0
        %1856 = vmatprep.subr.bf16.mxu0 0
        %1857 = vmatpush2.bf16.msra.mxu0 0
        %1858 = vmatprep.subr.bf16.mxu0 0
        %1859 = vmatpush2.bf16.msra.mxu0 0
        %1860 = vmatprep.subr.bf16.mxu0 0
        %1861 = vmatpush2.bf16.msra.mxu0 0
        %1862 = vmatprep.subr.bf16.mxu0 0
        %1863 = vmatpush2.bf16.msra.mxu0 0
        %1864 = vmatprep.subr.bf16.mxu0 0
        %1865 = vmatpush2.bf16.msra.mxu0 0
        %1866 = vmatprep.subr.bf16.mxu0 0
        %1867 = vmatpush2.bf16.msra.mxu0 0
        %1868 = vmatprep.subr.bf16.mxu0 0
        %1869 = vmatpush2.bf16.msra.mxu0 0
        %1870 = vmatprep.mubr.bf16.mxu0 0
        %1871 = vmatmul.mubr.bf16.gmra.mxu0 %v1836
        %v1872 = vpop.f32.mrf.mxu0
        %v1873 = vadd.f32 0.0, %v1872
        %v1874 = vpop.f32.mrf.mxu0
        %v1875 = vpop.f32.mrf.mxu0
        %v1876 = vadd.f32 0.0, %v1875
        %v1877 = vpop.f32.mrf.mxu0
        %1878 = vdwg.mxu0
        %v1880 = vsel %vm1654, %v1746, 0
        %1882 = vmatprep.subr.bf16.mxu0 0
        %1883 = vmatpush1.bf16.msra.mxu0 0
        %1884 = vmatprep.subr.bf16.mxu0 0
        %1885 = vmatpush1.bf16.msra.mxu0 0
        %1886 = vmatprep.subr.bf16.mxu0 0
        %1887 = vmatpush1.bf16.msra.mxu0 0
        %1888 = vmatprep.subr.bf16.mxu0 0
        %1889 = vmatpush1.bf16.msra.mxu0 0
        %1890 = vmatprep.subr.bf16.mxu0 0
        %1891 = vmatpush1.bf16.msra.mxu0 0
        %1892 = vmatprep.subr.bf16.mxu0 0
        %1893 = vmatpush1.bf16.msra.mxu0 0
        %1894 = vmatprep.subr.bf16.mxu0 0
        %1895 = vmatpush1.bf16.msra.mxu0 0
        %1896 = vmatprep.subr.bf16.mxu0 0
        %1897 = vmatpush1.bf16.msra.mxu0 %v1464
        %1898 = vmatprep.subr.bf16.mxu0 0
        %1899 = vmatpush2.bf16.msra.mxu0 0
        %1900 = vmatprep.subr.bf16.mxu0 0
        %1901 = vmatpush2.bf16.msra.mxu0 0
        %1902 = vmatprep.subr.bf16.mxu0 0
        %1903 = vmatpush2.bf16.msra.mxu0 0
        %1904 = vmatprep.subr.bf16.mxu0 0
        %1905 = vmatpush2.bf16.msra.mxu0 0
        %1906 = vmatprep.subr.bf16.mxu0 0
        %1907 = vmatpush2.bf16.msra.mxu0 0
        %1908 = vmatprep.subr.bf16.mxu0 0
        %1909 = vmatpush2.bf16.msra.mxu0 0
        %1910 = vmatprep.subr.bf16.mxu0 0
        %1911 = vmatpush2.bf16.msra.mxu0 0
        %1912 = vmatprep.subr.bf16.mxu0 0
        %1913 = vmatpush2.bf16.msra.mxu0 0
        %1914 = vmatprep.mubr.bf16.mxu0 0
        %1915 = vmatmul.mubr.bf16.gmra.mxu0 %v1880
        %v1916 = vpop.f32.mrf.mxu0
        %v1917 = vadd.f32 0.0, %v1916
        %v1918 = vpop.f32.mrf.mxu0
        %v1919 = vpop.f32.mrf.mxu0
        %v1920 = vadd.f32 0.0, %v1919
        %v1921 = vpop.f32.mrf.mxu0
        %1922 = vdwg.mxu0
        %1925 = vrot.lane.b32.xlu0 %v1829, 32
        %v1926 = vpop.permute.xlu0 %1925
        %1927 = vrot.lane.b32.xlu0 %v1832, 32
        %v1928 = vpop.permute.xlu0 %1927
        %1933 = vrot.lane.b32.xlu0 %v1873, 64
        %v1934 = vpop.permute.xlu0 %1933
        %1935 = vrot.lane.b32.xlu0 %v1876, 64
        %v1936 = vpop.permute.xlu0 %1935
        %1941 = vrot.lane.b32.xlu0 %v1917, 96
        %v1942 = vpop.permute.xlu0 %1941
        %1943 = vrot.lane.b32.xlu0 %v1920, 96
        %v1944 = vpop.permute.xlu0 %1943
        %v1947 = vsel %vm1465, %v1785, %v1926
        %v1948 = vsel %vm1465, %v1788, %v1928
        %vm1949 = vcmask 523264
        %v1950 = vsel %vm1949, %v1947, %v1934
        %v1951 = vsel %vm1949, %v1948, %v1936
        %vm1952 = vcmask 785408
        %v1953 = vsel %vm1952, %v1950, %v1942
        %v1954 = vsel %vm1952, %v1951, %v1944
        %v1955 = vpack.c.bf16 %v1954, %v1953
        %v1972 = vunpack.c.l.b16 %v1377
        %v1973 = vunpack.c.l.b16 %v1378
        %v1974 = vunpack.c.l.b16 %v1379
        %v1975 = vunpack.c.l.b16 %v1380
        %v1976 = vunpack.c.l.b16 %v1381
        %v1977 = vunpack.c.l.b16 %v1382
        %v1978 = vunpack.c.l.b16 %v1383
        %v1979 = vunpack.c.l.b16 %v1384
        %v1980 = vunpack.c.l.b16 %v1385
        %v1981 = vunpack.c.l.b16 %v1386
        %v1982 = vunpack.c.l.b16 %v1387
        %v1983 = vunpack.c.l.b16 %v1388
        %v1984 = vunpack.c.l.b16 %v1389
        %v1985 = vunpack.c.l.b16 %v1390
        %v1986 = vunpack.c.l.b16 %v1391
        %v1987 = vunpack.c.l.b16 %v1392
        %v1988 = vpack.c.b16 %v1973, %v1972
        %v1989 = vpack.c.b16 %v1975, %v1974
        %v1990 = vpack.c.b16 %v1977, %v1976
        %v1991 = vpack.c.b16 %v1979, %v1978
        %v1992 = vpack.c.b16 %v1981, %v1980
        %v1993 = vpack.c.b16 %v1983, %v1982
        %v1994 = vpack.c.b16 %v1985, %v1984
        %v1995 = vpack.c.b16 %v1987, %v1986
        %2004 = vmatprep.subr.bf16.mxu0 0
        %2005 = vmatpush1.bf16.msra.mxu0 %v1995
        %2006 = vmatprep.subr.bf16.mxu0 0
        %2007 = vmatpush1.bf16.msra.mxu0 %v1994
        %2008 = vmatprep.subr.bf16.mxu0 0
        %2009 = vmatpush1.bf16.msra.mxu0 %v1993
        %2010 = vmatprep.subr.bf16.mxu0 0
        %2011 = vmatpush1.bf16.msra.mxu0 %v1992
        %2012 = vmatprep.subr.bf16.mxu0 0
        %2013 = vmatpush1.bf16.msra.mxu0 %v1991
        %2014 = vmatprep.subr.bf16.mxu0 0
        %2015 = vmatpush1.bf16.msra.mxu0 %v1990
        %2016 = vmatprep.subr.bf16.mxu0 0
        %2017 = vmatpush1.bf16.msra.mxu0 %v1989
        %2018 = vmatprep.subr.bf16.mxu0 0
        %2019 = vmatpush1.bf16.msra.mxu0 %v1988
        %2020 = vmatprep.subr.bf16.mxu0 0
        %2021 = vmatpush2.bf16.msra.mxu0 0
        %2022 = vmatprep.subr.bf16.mxu0 0
        %2023 = vmatpush2.bf16.msra.mxu0 0
        %2024 = vmatprep.subr.bf16.mxu0 0
        %2025 = vmatpush2.bf16.msra.mxu0 0
        %2026 = vmatprep.subr.bf16.mxu0 0
        %2027 = vmatpush2.bf16.msra.mxu0 0
        %2028 = vmatprep.subr.bf16.mxu0 0
        %2029 = vmatpush2.bf16.msra.mxu0 0
        %2030 = vmatprep.subr.bf16.mxu0 0
        %2031 = vmatpush2.bf16.msra.mxu0 0
        %2032 = vmatprep.subr.bf16.mxu0 0
        %2033 = vmatpush2.bf16.msra.mxu0 0
        %2034 = vmatprep.subr.bf16.mxu0 0
        %2035 = vmatpush2.bf16.msra.mxu0 0
        %2036 = vmatprep.mubr.bf16.mxu0 0
        %2037 = vmatmul.mubr.bf16.gmra.mxu0 %v1955
        %v2038 = vpop.f32.mrf.mxu0
        %v2039 = vadd.f32 0.0, %v2038
        %v2040 = vpop.f32.mrf.mxu0
        %v2041 = vpop.f32.mrf.mxu0
        %v2042 = vadd.f32 0.0, %v2041
        %v2043 = vpop.f32.mrf.mxu0
        %2044 = vdwg.mxu0
        %v2045 = vadd.f32 %v1098, %v2039
        %v2046 = vadd.f32 %v1099, %v2042
        %v2047 = vld [vmem:[%s8] sm:$0x1]
        %v2048 = vmul.f32 %v2045, %v2045
        %v2049 = vmul.f32 %v2046, %v2046
        %2050 = vadd.xlane.f32.xlu0 %v2048
        %v2051 = vpop.xlane.xlu0 %2050
        %2052 = vadd.xlane.f32.xlu0 %v2049
        %v2053 = vpop.xlane.xlu0 %2052
        %v2054 = vmul.f32 %v2051, %v1115
        %v2055 = vmul.f32 %v2053, %v1115
        %v2056 = vadd.f32 %v2054, 1e-06
        %v2057 = vadd.f32 %v2055, 1e-06
        %v2058 = vrsqrt.pop %v2056
        %v2059 = vrsqrt.pop %v2057
        %v2060 = vmul.f32 %v2045, %v2058
        %v2061 = vmul.f32 %v2046, %v2059
        %v2063 = vlaneseq
        %v2064 = vshrl.u32 %v2063, 7
        %v2065 = vsub.s32 0, %v2064
        %v2066 = vrot.slane %v2047, %v2065
        %v2068 = vmul.f32 %v2060, %v2066
        %v2069 = vmul.f32 %v2061, %v2066
        %v2070 = vpack.c.bf16 %v2069, %v2068
        %v2071 = vld [vmem:[#allocation14] sm:$0xff]
        %v2072 = vld [vmem:[#allocation14 + $0x8] sm:$0xff]
        %v2073 = vld [vmem:[#allocation14 + $0x10] sm:$0xff]
        %v2074 = vld [vmem:[#allocation14 + $0x18] sm:$0xff]
        %v2075 = vld [vmem:[#allocation14 + $0x20] sm:$0xff]
        %v2076 = vld [vmem:[#allocation14 + $0x28] sm:$0xff]
        %v2077 = vld [vmem:[#allocation14 + $0x30] sm:$0xff]
        %v2078 = vld [vmem:[#allocation14 + $0x38] sm:$0xff]
        %v2079 = vld [vmem:[#allocation14 + $0x40] sm:$0xff]
        %v2080 = vld [vmem:[#allocation14 + $0x48] sm:$0xff]
        %v2081 = vld [vmem:[#allocation14 + $0x50] sm:$0xff]
        %v2082 = vld [vmem:[#allocation14 + $0x58] sm:$0xff]
        %v2083 = vld [vmem:[#allocation14 + $0x60] sm:$0xff]
        %v2084 = vld [vmem:[#allocation14 + $0x68] sm:$0xff]
        %v2085 = vld [vmem:[#allocation14 + $0x70] sm:$0xff]
        %v2086 = vld [vmem:[#allocation14 + $0x78] sm:$0xff]
        %v2103 = vunpack.c.l.b16 %v2071
        %v2104 = vunpack.c.h.b16 %v2071
        %v2105 = vunpack.c.l.b16 %v2072
        %v2106 = vunpack.c.h.b16 %v2072
        %v2107 = vunpack.c.l.b16 %v2073
        %v2108 = vunpack.c.h.b16 %v2073
        %v2109 = vunpack.c.l.b16 %v2074
        %v2110 = vunpack.c.h.b16 %v2074
        %v2111 = vunpack.c.l.b16 %v2075
        %v2112 = vunpack.c.h.b16 %v2075
        %v2113 = vunpack.c.l.b16 %v2076
        %v2114 = vunpack.c.h.b16 %v2076
        %v2115 = vunpack.c.l.b16 %v2077
        %v2116 = vunpack.c.h.b16 %v2077
        %v2117 = vunpack.c.l.b16 %v2078
        %v2118 = vunpack.c.h.b16 %v2078
        %v2119 = vunpack.c.l.b16 %v2079
        %v2120 = vunpack.c.h.b16 %v2079
        %v2121 = vunpack.c.l.b16 %v2080
        %v2122 = vunpack.c.h.b16 %v2080
        %v2123 = vunpack.c.l.b16 %v2081
        %v2124 = vunpack.c.h.b16 %v2081
        %v2125 = vunpack.c.l.b16 %v2082
        %v2126 = vunpack.c.h.b16 %v2082
        %v2127 = vunpack.c.l.b16 %v2083
        %v2128 = vunpack.c.h.b16 %v2083
        %v2129 = vunpack.c.l.b16 %v2084
        %v2130 = vunpack.c.h.b16 %v2084
        %v2131 = vunpack.c.l.b16 %v2085
        %v2132 = vunpack.c.h.b16 %v2085
        %v2133 = vunpack.c.l.b16 %v2086
        %v2134 = vunpack.c.h.b16 %v2086
        %v2135 = vpack.c.b16 %v2105, %v2103
        %v2136 = vpack.c.b16 %v2106, %v2104
        %v2137 = vpack.c.b16 %v2109, %v2107
        %v2138 = vpack.c.b16 %v2110, %v2108
        %v2139 = vpack.c.b16 %v2113, %v2111
        %v2140 = vpack.c.b16 %v2114, %v2112
        %v2141 = vpack.c.b16 %v2117, %v2115
        %v2142 = vpack.c.b16 %v2118, %v2116
        %v2143 = vpack.c.b16 %v2121, %v2119
        %v2144 = vpack.c.b16 %v2122, %v2120
        %v2145 = vpack.c.b16 %v2125, %v2123
        %v2146 = vpack.c.b16 %v2126, %v2124
        %v2147 = vpack.c.b16 %v2129, %v2127
        %v2148 = vpack.c.b16 %v2130, %v2128
        %v2149 = vpack.c.b16 %v2133, %v2131
        %v2150 = vpack.c.b16 %v2134, %v2132
        %2167 = vmatprep.subr.bf16.mxu0 %v2150
        %2168 = vmatpush1.bf16.msra.mxu0 %v2149
        %2169 = vmatprep.subr.bf16.mxu0 %v2148
        %2170 = vmatpush1.bf16.msra.mxu0 %v2147
        %2171 = vmatprep.subr.bf16.mxu0 %v2146
        %2172 = vmatpush1.bf16.msra.mxu0 %v2145
        %2173 = vmatprep.subr.bf16.mxu0 %v2144
        %2174 = vmatpush1.bf16.msra.mxu0 %v2143
        %2175 = vmatprep.subr.bf16.mxu0 %v2142
        %2176 = vmatpush1.bf16.msra.mxu0 %v2141
        %2177 = vmatprep.subr.bf16.mxu0 %v2140
        %2178 = vmatpush1.bf16.msra.mxu0 %v2139
        %2179 = vmatprep.subr.bf16.mxu0 %v2138
        %2180 = vmatpush1.bf16.msra.mxu0 %v2137
        %2181 = vmatprep.subr.bf16.mxu0 %v2136
        %2182 = vmatpush1.bf16.msra.mxu0 %v2135
        %2183 = vmatprep.subr.bf16.mxu0 0
        %2184 = vmatpush2.bf16.msra.mxu0 0
        %2185 = vmatprep.subr.bf16.mxu0 0
        %2186 = vmatpush2.bf16.msra.mxu0 0
        %2187 = vmatprep.subr.bf16.mxu0 0
        %2188 = vmatpush2.bf16.msra.mxu0 0
        %2189 = vmatprep.subr.bf16.mxu0 0
        %2190 = vmatpush2.bf16.msra.mxu0 0
        %2191 = vmatprep.subr.bf16.mxu0 0
        %2192 = vmatpush2.bf16.msra.mxu0 0
        %2193 = vmatprep.subr.bf16.mxu0 0
        %2194 = vmatpush2.bf16.msra.mxu0 0
        %2195 = vmatprep.subr.bf16.mxu0 0
        %2196 = vmatpush2.bf16.msra.mxu0 0
        %2197 = vmatprep.subr.bf16.mxu0 0
        %2198 = vmatpush2.bf16.msra.mxu0 0
        %2199 = vmatprep.mubr.bf16.mxu0 0
        %2200 = vmatmul.mubr.bf16.gmra.mxu0 %v2070
        %v2201 = vpop.f32.mrf.mxu0
        %v2202 = vadd.f32 0.0, %v2201
        %v2203 = vpop.f32.mrf.mxu0
        %v2204 = vadd.f32 0.0, %v2203
        %v2205 = vpop.f32.mrf.mxu0
        %v2206 = vadd.f32 0.0, %v2205
        %v2207 = vpop.f32.mrf.mxu0
        %v2208 = vadd.f32 0.0, %v2207
        %2209 = vdwg.mxu0
        %v2210 = vmax.f32 %v2202, 0.0
        %v2211 = vmax.f32 %v2204, 0.0
        %v2212 = vmax.f32 %v2206, 0.0
        %v2213 = vmax.f32 %v2208, 0.0
        %v2214 = vpack.c.bf16 %v2212, %v2210
        %v2215 = vpack.c.bf16 %v2213, %v2211
        %v2216 = vld [vmem:[#allocation15] sm:$0xf]
        %v2217 = vld [vmem:[#allocation15 + $0x4] sm:$0xf]
        %v2218 = vld [vmem:[#allocation15 + $0x8] sm:$0xf]
        %v2219 = vld [vmem:[#allocation15 + $0xc] sm:$0xf]
        %v2220 = vld [vmem:[#allocation15 + $0x10] sm:$0xf]
        %v2221 = vld [vmem:[#allocation15 + $0x14] sm:$0xf]
        %v2222 = vld [vmem:[#allocation15 + $0x18] sm:$0xf]
        %v2223 = vld [vmem:[#allocation15 + $0x1c] sm:$0xf]
        %v2224 = vld [vmem:[#allocation15 + $0x20] sm:$0xf]
        %v2225 = vld [vmem:[#allocation15 + $0x24] sm:$0xf]
        %v2226 = vld [vmem:[#allocation15 + $0x28] sm:$0xf]
        %v2227 = vld [vmem:[#allocation15 + $0x2c] sm:$0xf]
        %v2228 = vld [vmem:[#allocation15 + $0x30] sm:$0xf]
        %v2229 = vld [vmem:[#allocation15 + $0x34] sm:$0xf]
        %v2230 = vld [vmem:[#allocation15 + $0x38] sm:$0xf]
        %v2231 = vld [vmem:[#allocation15 + $0x3c] sm:$0xf]
        %v2232 = vld [vmem:[#allocation15 + $0x40] sm:$0xf]
        %v2233 = vld [vmem:[#allocation15 + $0x44] sm:$0xf]
        %v2234 = vld [vmem:[#allocation15 + $0x48] sm:$0xf]
        %v2235 = vld [vmem:[#allocation15 + $0x4c] sm:$0xf]
        %v2236 = vld [vmem:[#allocation15 + $0x50] sm:$0xf]
        %v2237 = vld [vmem:[#allocation15 + $0x54] sm:$0xf]
        %v2238 = vld [vmem:[#allocation15 + $0x58] sm:$0xf]
        %v2239 = vld [vmem:[#allocation15 + $0x5c] sm:$0xf]
        %v2240 = vld [vmem:[#allocation15 + $0x60] sm:$0xf]
        %v2241 = vld [vmem:[#allocation15 + $0x64] sm:$0xf]
        %v2242 = vld [vmem:[#allocation15 + $0x68] sm:$0xf]
        %v2243 = vld [vmem:[#allocation15 + $0x6c] sm:$0xf]
        %v2244 = vld [vmem:[#allocation15 + $0x70] sm:$0xf]
        %v2245 = vld [vmem:[#allocation15 + $0x74] sm:$0xf]
        %v2246 = vld [vmem:[#allocation15 + $0x78] sm:$0xf]
        %v2247 = vld [vmem:[#allocation15 + $0x7c] sm:$0xf]
        %v2280 = vunpack.c.l.b16 %v2216
        %v2281 = vunpack.c.l.b16 %v2217
        %v2282 = vunpack.c.l.b16 %v2218
        %v2283 = vunpack.c.l.b16 %v2219
        %v2284 = vunpack.c.l.b16 %v2220
        %v2285 = vunpack.c.l.b16 %v2221
        %v2286 = vunpack.c.l.b16 %v2222
        %v2287 = vunpack.c.l.b16 %v2223
        %v2288 = vunpack.c.l.b16 %v2224
        %v2289 = vunpack.c.l.b16 %v2225
        %v2290 = vunpack.c.l.b16 %v2226
        %v2291 = vunpack.c.l.b16 %v2227
        %v2292 = vunpack.c.l.b16 %v2228
        %v2293 = vunpack.c.l.b16 %v2229
        %v2294 = vunpack.c.l.b16 %v2230
        %v2295 = vunpack.c.l.b16 %v2231
        %v2296 = vunpack.c.l.b16 %v2232
        %v2297 = vunpack.c.l.b16 %v2233
        %v2298 = vunpack.c.l.b16 %v2234
        %v2299 = vunpack.c.l.b16 %v2235
        %v2300 = vunpack.c.l.b16 %v2236
        %v2301 = vunpack.c.l.b16 %v2237
        %v2302 = vunpack.c.l.b16 %v2238
        %v2303 = vunpack.c.l.b16 %v2239
        %v2304 = vunpack.c.l.b16 %v2240
        %v2305 = vunpack.c.l.b16 %v2241
        %v2306 = vunpack.c.l.b16 %v2242
        %v2307 = vunpack.c.l.b16 %v2243
        %v2308 = vunpack.c.l.b16 %v2244
        %v2309 = vunpack.c.l.b16 %v2245
        %v2310 = vunpack.c.l.b16 %v2246
        %v2311 = vunpack.c.l.b16 %v2247
        %v2312 = vpack.c.b16 %v2281, %v2280
        %v2313 = vpack.c.b16 %v2283, %v2282
        %v2314 = vpack.c.b16 %v2285, %v2284
        %v2315 = vpack.c.b16 %v2287, %v2286
        %v2316 = vpack.c.b16 %v2289, %v2288
        %v2317 = vpack.c.b16 %v2291, %v2290
        %v2318 = vpack.c.b16 %v2293, %v2292
        %v2319 = vpack.c.b16 %v2295, %v2294
        %v2320 = vpack.c.b16 %v2297, %v2296
        %v2321 = vpack.c.b16 %v2299, %v2298
        %v2322 = vpack.c.b16 %v2301, %v2300
        %v2323 = vpack.c.b16 %v2303, %v2302
        %v2324 = vpack.c.b16 %v2305, %v2304
        %v2325 = vpack.c.b16 %v2307, %v2306
        %v2326 = vpack.c.b16 %v2309, %v2308
        %v2327 = vpack.c.b16 %v2311, %v2310
        %2344 = vmatprep.subr.bf16.mxu0 0
        %2345 = vmatpush1.bf16.msra.mxu0 %v2319
        %2346 = vmatprep.subr.bf16.mxu0 0
        %2347 = vmatpush1.bf16.msra.mxu0 %v2318
        %2348 = vmatprep.subr.bf16.mxu0 0
        %2349 = vmatpush1.bf16.msra.mxu0 %v2317
        %2350 = vmatprep.subr.bf16.mxu0 0
        %2351 = vmatpush1.bf16.msra.mxu0 %v2316
        %2352 = vmatprep.subr.bf16.mxu0 0
        %2353 = vmatpush1.bf16.msra.mxu0 %v2315
        %2354 = vmatprep.subr.bf16.mxu0 0
        %2355 = vmatpush1.bf16.msra.mxu0 %v2314
        %2356 = vmatprep.subr.bf16.mxu0 0
        %2357 = vmatpush1.bf16.msra.mxu0 %v2313
        %2358 = vmatprep.subr.bf16.mxu0 0
        %2359 = vmatpush1.bf16.msra.mxu0 %v2312
        %2360 = vmatprep.subr.bf16.mxu0 0
        %2361 = vmatpush2.bf16.msra.mxu0 %v2327
        %2362 = vmatprep.subr.bf16.mxu0 0
        %2363 = vmatpush2.bf16.msra.mxu0 %v2326
        %2364 = vmatprep.subr.bf16.mxu0 0
        %2365 = vmatpush2.bf16.msra.mxu0 %v2325
        %2366 = vmatprep.subr.bf16.mxu0 0
        %2367 = vmatpush2.bf16.msra.mxu0 %v2324
        %2368 = vmatprep.subr.bf16.mxu0 0
        %2369 = vmatpush2.bf16.msra.mxu0 %v2323
        %2370 = vmatprep.subr.bf16.mxu0 0
        %2371 = vmatpush2.bf16.msra.mxu0 %v2322
        %2372 = vmatprep.subr.bf16.mxu0 0
        %2373 = vmatpush2.bf16.msra.mxu0 %v2321
        %2374 = vmatprep.subr.bf16.mxu0 0
        %2375 = vmatpush2.bf16.msra.mxu0 %v2320
        %2376 = vmatprep.mubr.bf16.mxu0 %v2215
        %2377 = vmatmul.mubr.bf16.gmra.mxu0 %v2214
        %v2378 = vpop.f32.mrf.mxu0
        %v2379 = vadd.f32 0.0, %v2378
        %v2380 = vpop.f32.mrf.mxu0
        %v2381 = vpop.f32.mrf.mxu0
        %v2382 = vadd.f32 0.0, %v2381
        %v2383 = vpop.f32.mrf.mxu0
        %2384 = vdwg.mxu0
        %v2385 = vadd.f32 %v2045, %v2379
        %v2386 = vadd.f32 %v2046, %v2382
        %s2387 = scalar_lea.vmem %s4, 1
        %v2388 = vld [vmem:[%s2387] sm:$0x1]
        %v2389 = vmul.f32 %v2385, %v2385
        %v2390 = vmul.f32 %v2386, %v2386
        %2391 = vadd.xlane.f32.xlu0 %v2389
        %v2392 = vpop.xlane.xlu0 %2391
        %2393 = vadd.xlane.f32.xlu0 %v2390
        %v2394 = vpop.xlane.xlu0 %2393
        %v2395 = vmul.f32 %v2392, %v1115
        %v2396 = vmul.f32 %v2394, %v1115
        %v2397 = vadd.f32 %v2395, 1e-06
        %v2398 = vadd.f32 %v2396, 1e-06
        %v2399 = vrsqrt.pop %v2397
        %v2400 = vrsqrt.pop %v2398
        %v2401 = vmul.f32 %v2385, %v2399
        %v2402 = vmul.f32 %v2386, %v2400
        %v2404 = vlaneseq
        %v2405 = vshrl.u32 %v2404, 7
        %v2406 = vsub.s32 0, %v2405
        %v2407 = vrot.slane %v2388, %v2406
        %v2409 = vmul.f32 %v2401, %v2407
        %v2410 = vmul.f32 %v2402, %v2407
        %v2411 = vpack.c.bf16 %v2410, %v2409
        %s2412 = scalar_lea.vmem [#allocation9], 64
        %v2413 = vld [vmem:[%s2412] sm:$0xf]
        %v2414 = vld [vmem:[%s2412 + $0x4] sm:$0xf]
        %v2415 = vld [vmem:[%s2412 + $0x8] sm:$0xf]
        %v2416 = vld [vmem:[%s2412 + $0xc] sm:$0xf]
        %v2417 = vld [vmem:[%s2412 + $0x10] sm:$0xf]
        %v2418 = vld [vmem:[%s2412 + $0x14] sm:$0xf]
        %v2419 = vld [vmem:[%s2412 + $0x18] sm:$0xf]
        %v2420 = vld [vmem:[%s2412 + $0x1c] sm:$0xf]
        %v2421 = vld [vmem:[%s2412 + $0x20] sm:$0xf]
        %v2422 = vld [vmem:[%s2412 + $0x24] sm:$0xf]
        %v2423 = vld [vmem:[%s2412 + $0x28] sm:$0xf]
        %v2424 = vld [vmem:[%s2412 + $0x2c] sm:$0xf]
        %v2425 = vld [vmem:[%s2412 + $0x30] sm:$0xf]
        %v2426 = vld [vmem:[%s2412 + $0x34] sm:$0xf]
        %v2427 = vld [vmem:[%s2412 + $0x38] sm:$0xf]
        %v2428 = vld [vmem:[%s2412 + $0x3c] sm:$0xf]
        %v2445 = vunpack.c.l.b16 %v2413
        %v2446 = vunpack.c.l.b16 %v2414
        %v2447 = vunpack.c.l.b16 %v2415
        %v2448 = vunpack.c.l.b16 %v2416
        %v2449 = vunpack.c.l.b16 %v2417
        %v2450 = vunpack.c.l.b16 %v2418
        %v2451 = vunpack.c.l.b16 %v2419
        %v2452 = vunpack.c.l.b16 %v2420
        %v2453 = vunpack.c.l.b16 %v2421
        %v2454 = vunpack.c.l.b16 %v2422
        %v2455 = vunpack.c.l.b16 %v2423
        %v2456 = vunpack.c.l.b16 %v2424
        %v2457 = vunpack.c.l.b16 %v2425
        %v2458 = vunpack.c.l.b16 %v2426
        %v2459 = vunpack.c.l.b16 %v2427
        %v2460 = vunpack.c.l.b16 %v2428
        %v2461 = vpack.c.b16 %v2446, %v2445
        %v2462 = vpack.c.b16 %v2448, %v2447
        %v2463 = vpack.c.b16 %v2450, %v2449
        %v2464 = vpack.c.b16 %v2452, %v2451
        %v2465 = vpack.c.b16 %v2454, %v2453
        %v2466 = vpack.c.b16 %v2456, %v2455
        %v2467 = vpack.c.b16 %v2458, %v2457
        %v2468 = vpack.c.b16 %v2460, %v2459
        %2477 = vmatprep.subr.bf16.mxu0 0
        %2478 = vmatpush1.bf16.msra.mxu0 %v2468
        %2479 = vmatprep.subr.bf16.mxu0 0
        %2480 = vmatpush1.bf16.msra.mxu0 %v2467
        %2481 = vmatprep.subr.bf16.mxu0 0
        %2482 = vmatpush1.bf16.msra.mxu0 %v2466
        %2483 = vmatprep.subr.bf16.mxu0 0
        %2484 = vmatpush1.bf16.msra.mxu0 %v2465
        %2485 = vmatprep.subr.bf16.mxu0 0
        %2486 = vmatpush1.bf16.msra.mxu0 %v2464
        %2487 = vmatprep.subr.bf16.mxu0 0
        %2488 = vmatpush1.bf16.msra.mxu0 %v2463
        %2489 = vmatprep.subr.bf16.mxu0 0
        %2490 = vmatpush1.bf16.msra.mxu0 %v2462
        %2491 = vmatprep.subr.bf16.mxu0 0
        %2492 = vmatpush1.bf16.msra.mxu0 %v2461
        %2493 = vmatprep.subr.bf16.mxu0 0
        %2494 = vmatpush2.bf16.msra.mxu0 0
        %2495 = vmatprep.subr.bf16.mxu0 0
        %2496 = vmatpush2.bf16.msra.mxu0 0
        %2497 = vmatprep.subr.bf16.mxu0 0
        %2498 = vmatpush2.bf16.msra.mxu0 0
        %2499 = vmatprep.subr.bf16.mxu0 0
        %2500 = vmatpush2.bf16.msra.mxu0 0
        %2501 = vmatprep.subr.bf16.mxu0 0
        %2502 = vmatpush2.bf16.msra.mxu0 0
        %2503 = vmatprep.subr.bf16.mxu0 0
        %2504 = vmatpush2.bf16.msra.mxu0 0
        %2505 = vmatprep.subr.bf16.mxu0 0
        %2506 = vmatpush2.bf16.msra.mxu0 0
        %2507 = vmatprep.subr.bf16.mxu0 0
        %2508 = vmatpush2.bf16.msra.mxu0 0
        %2509 = vmatprep.mubr.bf16.mxu0 0
        %2510 = vmatmul.mubr.bf16.gmra.mxu0 %v2411
        %v2511 = vpop.f32.mrf.mxu0
        %v2512 = vadd.f32 0.0, %v2511
        %v2513 = vpop.f32.mrf.mxu0
        %v2514 = vpop.f32.mrf.mxu0
        %v2515 = vadd.f32 0.0, %v2514
        %v2516 = vpop.f32.mrf.mxu0
        %2517 = vdwg.mxu0
        %s2518 = scalar_lea.vmem [#allocation11], 128
        %v2519 = vld [vmem:[%s2518] sm:$0xff]
        %v2520 = vld [vmem:[%s2518 + $0x8] sm:$0xff]
        %v2521 = vld [vmem:[%s2518 + $0x10] sm:$0xff]
        %v2522 = vld [vmem:[%s2518 + $0x18] sm:$0xff]
        %v2523 = vld [vmem:[%s2518 + $0x20] sm:$0xff]
        %v2524 = vld [vmem:[%s2518 + $0x28] sm:$0xff]
        %v2525 = vld [vmem:[%s2518 + $0x30] sm:$0xff]
        %v2526 = vld [vmem:[%s2518 + $0x38] sm:$0xff]
        %v2527 = vld [vmem:[%s2518 + $0x40] sm:$0xff]
        %v2528 = vld [vmem:[%s2518 + $0x48] sm:$0xff]
        %v2529 = vld [vmem:[%s2518 + $0x50] sm:$0xff]
        %v2530 = vld [vmem:[%s2518 + $0x58] sm:$0xff]
        %v2531 = vld [vmem:[%s2518 + $0x60] sm:$0xff]
        %v2532 = vld [vmem:[%s2518 + $0x68] sm:$0xff]
        %v2533 = vld [vmem:[%s2518 + $0x70] sm:$0xff]
        %v2534 = vld [vmem:[%s2518 + $0x78] sm:$0xff]
        %v2551 = vunpack.c.l.b16 %v2519
        %v2552 = vunpack.c.h.b16 %v2519
        %v2553 = vunpack.c.l.b16 %v2520
        %v2554 = vunpack.c.h.b16 %v2520
        %v2555 = vunpack.c.l.b16 %v2521
        %v2556 = vunpack.c.h.b16 %v2521
        %v2557 = vunpack.c.l.b16 %v2522
        %v2558 = vunpack.c.h.b16 %v2522
        %v2559 = vunpack.c.l.b16 %v2523
        %v2560 = vunpack.c.h.b16 %v2523
        %v2561 = vunpack.c.l.b16 %v2524
        %v2562 = vunpack.c.h.b16 %v2524
        %v2563 = vunpack.c.l.b16 %v2525
        %v2564 = vunpack.c.h.b16 %v2525
        %v2565 = vunpack.c.l.b16 %v2526
        %v2566 = vunpack.c.h.b16 %v2526
        %v2567 = vunpack.c.l.b16 %v2527
        %v2568 = vunpack.c.h.b16 %v2527
        %v2569 = vunpack.c.l.b16 %v2528
        %v2570 = vunpack.c.h.b16 %v2528
        %v2571 = vunpack.c.l.b16 %v2529
        %v2572 = vunpack.c.h.b16 %v2529
        %v2573 = vunpack.c.l.b16 %v2530
        %v2574 = vunpack.c.h.b16 %v2530
        %v2575 = vunpack.c.l.b16 %v2531
        %v2576 = vunpack.c.h.b16 %v2531
        %v2577 = vunpack.c.l.b16 %v2532
        %v2578 = vunpack.c.h.b16 %v2532
        %v2579 = vunpack.c.l.b16 %v2533
        %v2580 = vunpack.c.h.b16 %v2533
        %v2581 = vunpack.c.l.b16 %v2534
        %v2582 = vunpack.c.h.b16 %v2534
        %v2583 = vpack.c.b16 %v2553, %v2551
        %v2584 = vpack.c.b16 %v2554, %v2552
        %v2585 = vpack.c.b16 %v2557, %v2555
        %v2586 = vpack.c.b16 %v2558, %v2556
        %v2587 = vpack.c.b16 %v2561, %v2559
        %v2588 = vpack.c.b16 %v2562, %v2560
        %v2589 = vpack.c.b16 %v2565, %v2563
        %v2590 = vpack.c.b16 %v2566, %v2564
        %v2591 = vpack.c.b16 %v2569, %v2567
        %v2592 = vpack.c.b16 %v2570, %v2568
        %v2593 = vpack.c.b16 %v2573, %v2571
        %v2594 = vpack.c.b16 %v2574, %v2572
        %v2595 = vpack.c.b16 %v2577, %v2575
        %v2596 = vpack.c.b16 %v2578, %v2576
        %v2597 = vpack.c.b16 %v2581, %v2579
        %v2598 = vpack.c.b16 %v2582, %v2580
        %2615 = vmatprep.subr.bf16.mxu0 %v2598
        %2616 = vmatpush1.bf16.msra.mxu0 %v2597
        %2617 = vmatprep.subr.bf16.mxu0 %v2596
        %2618 = vmatpush1.bf16.msra.mxu0 %v2595
        %2619 = vmatprep.subr.bf16.mxu0 %v2594
        %2620 = vmatpush1.bf16.msra.mxu0 %v2593
        %2621 = vmatprep.subr.bf16.mxu0 %v2592
        %2622 = vmatpush1.bf16.msra.mxu0 %v2591
        %2623 = vmatprep.subr.bf16.mxu0 %v2590
        %2624 = vmatpush1.bf16.msra.mxu0 %v2589
        %2625 = vmatprep.subr.bf16.mxu0 %v2588
        %2626 = vmatpush1.bf16.msra.mxu0 %v2587
        %2627 = vmatprep.subr.bf16.mxu0 %v2586
        %2628 = vmatpush1.bf16.msra.mxu0 %v2585
        %2629 = vmatprep.subr.bf16.mxu0 %v2584
        %2630 = vmatpush1.bf16.msra.mxu0 %v2583
        %2631 = vmatprep.subr.bf16.mxu0 0
        %2632 = vmatpush2.bf16.msra.mxu0 0
        %2633 = vmatprep.subr.bf16.mxu0 0
        %2634 = vmatpush2.bf16.msra.mxu0 0
        %2635 = vmatprep.subr.bf16.mxu0 0
        %2636 = vmatpush2.bf16.msra.mxu0 0
        %2637 = vmatprep.subr.bf16.mxu0 0
        %2638 = vmatpush2.bf16.msra.mxu0 0
        %2639 = vmatprep.subr.bf16.mxu0 0
        %2640 = vmatpush2.bf16.msra.mxu0 0
        %2641 = vmatprep.subr.bf16.mxu0 0
        %2642 = vmatpush2.bf16.msra.mxu0 0
        %2643 = vmatprep.subr.bf16.mxu0 0
        %2644 = vmatpush2.bf16.msra.mxu0 0
        %2645 = vmatprep.subr.bf16.mxu0 0
        %2646 = vmatpush2.bf16.msra.mxu0 0
        %2647 = vmatprep.mubr.bf16.mxu0 0
        %2648 = vmatmul.mubr.bf16.gmra.mxu0 %v2411
        %v2649 = vpop.f32.mrf.mxu0
        %v2650 = vadd.f32 0.0, %v2649
        %v2651 = vpop.f32.mrf.mxu0
        %v2652 = vadd.f32 0.0, %v2651
        %v2653 = vpop.f32.mrf.mxu0
        %v2654 = vadd.f32 0.0, %v2653
        %v2655 = vpop.f32.mrf.mxu0
        %v2656 = vadd.f32 0.0, %v2655
        %2657 = vdwg.mxu0
        %s2658 = scalar_lea.vmem [#allocation12], 64
        %v2659 = vld [vmem:[%s2658] sm:$0xf]
        %v2660 = vld [vmem:[%s2658 + $0x4] sm:$0xf]
        %v2661 = vld [vmem:[%s2658 + $0x8] sm:$0xf]
        %v2662 = vld [vmem:[%s2658 + $0xc] sm:$0xf]
        %v2663 = vld [vmem:[%s2658 + $0x10] sm:$0xf]
        %v2664 = vld [vmem:[%s2658 + $0x14] sm:$0xf]
        %v2665 = vld [vmem:[%s2658 + $0x18] sm:$0xf]
        %v2666 = vld [vmem:[%s2658 + $0x1c] sm:$0xf]
        %v2667 = vld [vmem:[%s2658 + $0x20] sm:$0xf]
        %v2668 = vld [vmem:[%s2658 + $0x24] sm:$0xf]
        %v2669 = vld [vmem:[%s2658 + $0x28] sm:$0xf]
        %v2670 = vld [vmem:[%s2658 + $0x2c] sm:$0xf]
        %v2671 = vld [vmem:[%s2658 + $0x30] sm:$0xf]
        %v2672 = vld [vmem:[%s2658 + $0x34] sm:$0xf]
        %v2673 = vld [vmem:[%s2658 + $0x38] sm:$0xf]
        %v2674 = vld [vmem:[%s2658 + $0x3c] sm:$0xf]
        %2677 = vrot.lane.b32.xlu0 %v2512, 96
        %v2678 = vpop.permute.xlu0 %2677
        %2679 = vrot.lane.b32.xlu0 %v2515, 96
        %v2680 = vpop.permute.xlu0 %2679
        %2683 = vrot.lane.b32.xlu0 %v2512, 64
        %v2684 = vpop.permute.xlu0 %2683
        %2685 = vrot.lane.b32.xlu0 %v2515, 64
        %v2686 = vpop.permute.xlu0 %2685
        %2689 = vrot.lane.b32.xlu0 %v2512, 32
        %v2690 = vpop.permute.xlu0 %2689
        %2691 = vrot.lane.b32.xlu0 %v2515, 32
        %v2692 = vpop.permute.xlu0 %2691
        %v2695 = vpack.c.bf16 %v2515, %v2512
        %v2696 = vpack.c.bf16 %v2680, %v2678
        %v2697 = vpack.c.bf16 %v2686, %v2684
        %v2698 = vpack.c.bf16 %v2692, %v2690
        %2701 = vrot.lane.b32.xlu0 %v2650, 96
        %v2702 = vpop.permute.xlu0 %2701
        %2703 = vrot.lane.b32.xlu0 %v2654, 96
        %v2704 = vpop.permute.xlu0 %2703
        %2707 = vrot.lane.b32.xlu0 %v2650, 64
        %v2708 = vpop.permute.xlu0 %2707
        %2709 = vrot.lane.b32.xlu0 %v2654, 64
        %v2710 = vpop.permute.xlu0 %2709
        %2713 = vrot.lane.b32.xlu0 %v2650, 32
        %v2714 = vpop.permute.xlu0 %2713
        %2715 = vrot.lane.b32.xlu0 %v2654, 32
        %v2716 = vpop.permute.xlu0 %2715
        %v2719 = vpack.c.bf16 %v2654, %v2650
        %v2720 = vpack.c.bf16 %v2704, %v2702
        %v2721 = vpack.c.bf16 %v2710, %v2708
        %v2722 = vpack.c.bf16 %v2716, %v2714
        %2725 = vrot.lane.b32.xlu0 %v2652, 96
        %v2726 = vpop.permute.xlu0 %2725
        %2727 = vrot.lane.b32.xlu0 %v2656, 96
        %v2728 = vpop.permute.xlu0 %2727
        %2731 = vrot.lane.b32.xlu0 %v2652, 64
        %v2732 = vpop.permute.xlu0 %2731
        %2733 = vrot.lane.b32.xlu0 %v2656, 64
        %v2734 = vpop.permute.xlu0 %2733
        %2737 = vrot.lane.b32.xlu0 %v2652, 32
        %v2738 = vpop.permute.xlu0 %2737
        %2739 = vrot.lane.b32.xlu0 %v2656, 32
        %v2740 = vpop.permute.xlu0 %2739
        %v2743 = vpack.c.bf16 %v2656, %v2652
        %v2744 = vpack.c.bf16 %v2728, %v2726
        %v2745 = vpack.c.bf16 %v2734, %v2732
        %v2746 = vpack.c.bf16 %v2740, %v2738
        %v2748 = vsel %vm1465, %v2695, 0
        %v2751 = vsel %vm1465, %v2719, 0
        %2753 = vmatprep.subr.bf16.mxu0 0
        %2754 = vmatpush1.bf16.xpose.msra.mxu0 0
        %2755 = vmatprep.subr.bf16.mxu0 0
        %2756 = vmatpush1.bf16.xpose.msra.mxu0 0
        %2757 = vmatprep.subr.bf16.mxu0 0
        %2758 = vmatpush1.bf16.xpose.msra.mxu0 0
        %2759 = vmatprep.subr.bf16.mxu0 0
        %2760 = vmatpush1.bf16.xpose.msra.mxu0 0
        %2761 = vmatprep.subr.bf16.mxu0 0
        %2762 = vmatpush1.bf16.xpose.msra.mxu0 0
        %2763 = vmatprep.subr.bf16.mxu0 0
        %2764 = vmatpush1.bf16.xpose.msra.mxu0 0
        %2765 = vmatprep.subr.bf16.mxu0 0
        %2766 = vmatpush1.bf16.xpose.msra.mxu0 0
        %2767 = vmatprep.subr.bf16.mxu0 0
        %2768 = vmatpush1.bf16.xpose.msra.mxu0 %v2751
        %2769 = vmatprep.subr.bf16.mxu0 0
        %2770 = vmatpush2.bf16.xpose.msra.mxu0 0
        %2771 = vmatprep.subr.bf16.mxu0 0
        %2772 = vmatpush2.bf16.xpose.msra.mxu0 0
        %2773 = vmatprep.subr.bf16.mxu0 0
        %2774 = vmatpush2.bf16.xpose.msra.mxu0 0
        %2775 = vmatprep.subr.bf16.mxu0 0
        %2776 = vmatpush2.bf16.xpose.msra.mxu0 0
        %2777 = vmatprep.subr.bf16.mxu0 0
        %2778 = vmatpush2.bf16.xpose.msra.mxu0 0
        %2779 = vmatprep.subr.bf16.mxu0 0
        %2780 = vmatpush2.bf16.xpose.msra.mxu0 0
        %2781 = vmatprep.subr.bf16.mxu0 0
        %2782 = vmatpush2.bf16.xpose.msra.mxu0 0
        %2783 = vmatprep.subr.bf16.mxu0 0
        %2784 = vmatpush2.bf16.xpose.msra.mxu0 0
        %2785 = vmatprep.mubr.bf16.mxu0 0
        %2786 = vmatmul.mubr.bf16.gmra.mxu0 %v2748
        %v2787 = vpop.f32.mrf.mxu0
        %v2788 = vadd.f32 %v1100, %v2787
        %v2789 = vpop.f32.mrf.mxu0
        %v2790 = vpop.f32.mrf.mxu0
        %v2791 = vadd.f32 %v1101, %v2790
        %v2792 = vpop.f32.mrf.mxu0
        %2793 = vdwg.mxu0
        %v2795 = vsel %vm1465, %v2696, 0
        %v2798 = vsel %vm1465, %v2720, 0
        %2800 = vmatprep.subr.bf16.mxu0 0
        %2801 = vmatpush1.bf16.xpose.msra.mxu0 0
        %2802 = vmatprep.subr.bf16.mxu0 0
        %2803 = vmatpush1.bf16.xpose.msra.mxu0 0
        %2804 = vmatprep.subr.bf16.mxu0 0
        %2805 = vmatpush1.bf16.xpose.msra.mxu0 0
        %2806 = vmatprep.subr.bf16.mxu0 0
        %2807 = vmatpush1.bf16.xpose.msra.mxu0 0
        %2808 = vmatprep.subr.bf16.mxu0 0
        %2809 = vmatpush1.bf16.xpose.msra.mxu0 0
        %2810 = vmatprep.subr.bf16.mxu0 0
        %2811 = vmatpush1.bf16.xpose.msra.mxu0 0
        %2812 = vmatprep.subr.bf16.mxu0 0
        %2813 = vmatpush1.bf16.xpose.msra.mxu0 0
        %2814 = vmatprep.subr.bf16.mxu0 0
        %2815 = vmatpush1.bf16.xpose.msra.mxu0 %v2798
        %2816 = vmatprep.subr.bf16.mxu0 0
        %2817 = vmatpush2.bf16.xpose.msra.mxu0 0
        %2818 = vmatprep.subr.bf16.mxu0 0
        %2819 = vmatpush2.bf16.xpose.msra.mxu0 0
        %2820 = vmatprep.subr.bf16.mxu0 0
        %2821 = vmatpush2.bf16.xpose.msra.mxu0 0
        %2822 = vmatprep.subr.bf16.mxu0 0
        %2823 = vmatpush2.bf16.xpose.msra.mxu0 0
        %2824 = vmatprep.subr.bf16.mxu0 0
        %2825 = vmatpush2.bf16.xpose.msra.mxu0 0
        %2826 = vmatprep.subr.bf16.mxu0 0
        %2827 = vmatpush2.bf16.xpose.msra.mxu0 0
        %2828 = vmatprep.subr.bf16.mxu0 0
        %2829 = vmatpush2.bf16.xpose.msra.mxu0 0
        %2830 = vmatprep.subr.bf16.mxu0 0
        %2831 = vmatpush2.bf16.xpose.msra.mxu0 0
        %2832 = vmatprep.mubr.bf16.mxu0 0
        %2833 = vmatmul.mubr.bf16.gmra.mxu0 %v2795
        %v2834 = vpop.f32.mrf.mxu0
        %v2835 = vadd.f32 %v1102, %v2834
        %v2836 = vpop.f32.mrf.mxu0
        %v2837 = vpop.f32.mrf.mxu0
        %v2838 = vadd.f32 %v1103, %v2837
        %v2839 = vpop.f32.mrf.mxu0
        %2840 = vdwg.mxu0
        %v2842 = vsel %vm1465, %v2697, 0
        %v2845 = vsel %vm1465, %v2721, 0
        %2847 = vmatprep.subr.bf16.mxu0 0
        %2848 = vmatpush1.bf16.xpose.msra.mxu0 0
        %2849 = vmatprep.subr.bf16.mxu0 0
        %2850 = vmatpush1.bf16.xpose.msra.mxu0 0
        %2851 = vmatprep.subr.bf16.mxu0 0
        %2852 = vmatpush1.bf16.xpose.msra.mxu0 0
        %2853 = vmatprep.subr.bf16.mxu0 0
        %2854 = vmatpush1.bf16.xpose.msra.mxu0 0
        %2855 = vmatprep.subr.bf16.mxu0 0
        %2856 = vmatpush1.bf16.xpose.msra.mxu0 0
        %2857 = vmatprep.subr.bf16.mxu0 0
        %2858 = vmatpush1.bf16.xpose.msra.mxu0 0
        %2859 = vmatprep.subr.bf16.mxu0 0
        %2860 = vmatpush1.bf16.xpose.msra.mxu0 0
        %2861 = vmatprep.subr.bf16.mxu0 0
        %2862 = vmatpush1.bf16.xpose.msra.mxu0 %v2845
        %2863 = vmatprep.subr.bf16.mxu0 0
        %2864 = vmatpush2.bf16.xpose.msra.mxu0 0
        %2865 = vmatprep.subr.bf16.mxu0 0
        %2866 = vmatpush2.bf16.xpose.msra.mxu0 0
        %2867 = vmatprep.subr.bf16.mxu0 0
        %2868 = vmatpush2.bf16.xpose.msra.mxu0 0
        %2869 = vmatprep.subr.bf16.mxu0 0
        %2870 = vmatpush2.bf16.xpose.msra.mxu0 0
        %2871 = vmatprep.subr.bf16.mxu0 0
        %2872 = vmatpush2.bf16.xpose.msra.mxu0 0
        %2873 = vmatprep.subr.bf16.mxu0 0
        %2874 = vmatpush2.bf16.xpose.msra.mxu0 0
        %2875 = vmatprep.subr.bf16.mxu0 0
        %2876 = vmatpush2.bf16.xpose.msra.mxu0 0
        %2877 = vmatprep.subr.bf16.mxu0 0
        %2878 = vmatpush2.bf16.xpose.msra.mxu0 0
        %2879 = vmatprep.mubr.bf16.mxu0 0
        %2880 = vmatmul.mubr.bf16.gmra.mxu0 %v2842
        %v2881 = vpop.f32.mrf.mxu0
        %v2882 = vadd.f32 %v1104, %v2881
        %v2883 = vpop.f32.mrf.mxu0
        %v2884 = vpop.f32.mrf.mxu0
        %v2885 = vadd.f32 %v1105, %v2884
        %v2886 = vpop.f32.mrf.mxu0
        %2887 = vdwg.mxu0
        %v2889 = vsel %vm1465, %v2698, 0
        %v2892 = vsel %vm1465, %v2722, 0
        %2894 = vmatprep.subr.bf16.mxu0 0
        %2895 = vmatpush1.bf16.xpose.msra.mxu0 0
        %2896 = vmatprep.subr.bf16.mxu0 0
        %2897 = vmatpush1.bf16.xpose.msra.mxu0 0
        %2898 = vmatprep.subr.bf16.mxu0 0
        %2899 = vmatpush1.bf16.xpose.msra.mxu0 0
        %2900 = vmatprep.subr.bf16.mxu0 0
        %2901 = vmatpush1.bf16.xpose.msra.mxu0 0
        %2902 = vmatprep.subr.bf16.mxu0 0
        %2903 = vmatpush1.bf16.xpose.msra.mxu0 0
        %2904 = vmatprep.subr.bf16.mxu0 0
        %2905 = vmatpush1.bf16.xpose.msra.mxu0 0
        %2906 = vmatprep.subr.bf16.mxu0 0
        %2907 = vmatpush1.bf16.xpose.msra.mxu0 0
        %2908 = vmatprep.subr.bf16.mxu0 0
        %2909 = vmatpush1.bf16.xpose.msra.mxu0 %v2892
        %2910 = vmatprep.subr.bf16.mxu0 0
        %2911 = vmatpush2.bf16.xpose.msra.mxu0 0
        %2912 = vmatprep.subr.bf16.mxu0 0
        %2913 = vmatpush2.bf16.xpose.msra.mxu0 0
        %2914 = vmatprep.subr.bf16.mxu0 0
        %2915 = vmatpush2.bf16.xpose.msra.mxu0 0
        %2916 = vmatprep.subr.bf16.mxu0 0
        %2917 = vmatpush2.bf16.xpose.msra.mxu0 0
        %2918 = vmatprep.subr.bf16.mxu0 0
        %2919 = vmatpush2.bf16.xpose.msra.mxu0 0
        %2920 = vmatprep.subr.bf16.mxu0 0
        %2921 = vmatpush2.bf16.xpose.msra.mxu0 0
        %2922 = vmatprep.subr.bf16.mxu0 0
        %2923 = vmatpush2.bf16.xpose.msra.mxu0 0
        %2924 = vmatprep.subr.bf16.mxu0 0
        %2925 = vmatpush2.bf16.xpose.msra.mxu0 0
        %2926 = vmatprep.mubr.bf16.mxu0 0
        %2927 = vmatmul.mubr.bf16.gmra.mxu0 %v2889
        %v2928 = vpop.f32.mrf.mxu0
        %v2929 = vadd.f32 %v1106, %v2928
        %v2930 = vpop.f32.mrf.mxu0
        %v2931 = vpop.f32.mrf.mxu0
        %v2932 = vadd.f32 %v1107, %v2931
        %v2933 = vpop.f32.mrf.mxu0
        %2934 = vdwg.mxu0
        %v2935 = vsel %vm1654, %v2788, -inf
        %2936 = vmax.xlane.f32.xlu0 %v2935
        %v2937 = vpop.xlane.xlu0 %2936
        %v2938 = vsel %vm1654, %v2791, -inf
        %2939 = vmax.xlane.f32.xlu0 %v2938
        %v2940 = vpop.xlane.xlu0 %2939
        %v2941 = vsel %vm1654, %v2835, -inf
        %2942 = vmax.xlane.f32.xlu0 %v2941
        %v2943 = vpop.xlane.xlu0 %2942
        %v2944 = vsel %vm1654, %v2838, -inf
        %2945 = vmax.xlane.f32.xlu0 %v2944
        %v2946 = vpop.xlane.xlu0 %2945
        %v2947 = vsel %vm1654, %v2882, -inf
        %2948 = vmax.xlane.f32.xlu0 %v2947
        %v2949 = vpop.xlane.xlu0 %2948
        %v2950 = vsel %vm1654, %v2885, -inf
        %2951 = vmax.xlane.f32.xlu0 %v2950
        %v2952 = vpop.xlane.xlu0 %2951
        %v2953 = vsel %vm1654, %v2929, -inf
        %2954 = vmax.xlane.f32.xlu0 %v2953
        %v2955 = vpop.xlane.xlu0 %2954
        %v2956 = vsel %vm1654, %v2932, -inf
        %2957 = vmax.xlane.f32.xlu0 %v2956
        %v2958 = vpop.xlane.xlu0 %2957
        %v2959 = vsub.f32 %v2788, %v2937
        %v2960 = vsub.f32 %v2791, %v2940
        %v2961 = vsub.f32 %v2835, %v2943
        %v2962 = vsub.f32 %v2838, %v2946
        %v2963 = vsub.f32 %v2882, %v2949
        %v2964 = vsub.f32 %v2885, %v2952
        %v2965 = vsub.f32 %v2929, %v2955
        %v2966 = vsub.f32 %v2932, %v2958
        %v2967 = vmul.f32 %v2959, 1.442695
        %v2968 = vpow.pop %v2967
        %v2969 = vmul.f32 %v2960, 1.442695
        %v2970 = vpow.pop %v2969
        %v2971 = vmul.f32 %v2961, 1.442695
        %v2972 = vpow.pop %v2971
        %v2973 = vmul.f32 %v2962, 1.442695
        %v2974 = vpow.pop %v2973
        %v2975 = vmul.f32 %v2963, 1.442695
        %v2976 = vpow.pop %v2975
        %v2977 = vmul.f32 %v2964, 1.442695
        %v2978 = vpow.pop %v2977
        %v2979 = vmul.f32 %v2965, 1.442695
        %v2980 = vpow.pop %v2979
        %v2981 = vmul.f32 %v2966, 1.442695
        %v2982 = vpow.pop %v2981
        %v2983 = vsel %vm1654, %v2968, 0.0
        %2984 = vadd.xlane.f32.xlu0 %v2983
        %v2985 = vpop.xlane.xlu0 %2984
        %v2986 = vsel %vm1654, %v2970, 0.0
        %2987 = vadd.xlane.f32.xlu0 %v2986
        %v2988 = vpop.xlane.xlu0 %2987
        %v2989 = vsel %vm1654, %v2972, 0.0
        %2990 = vadd.xlane.f32.xlu0 %v2989
        %v2991 = vpop.xlane.xlu0 %2990
        %v2992 = vsel %vm1654, %v2974, 0.0
        %2993 = vadd.xlane.f32.xlu0 %v2992
        %v2994 = vpop.xlane.xlu0 %2993
        %v2995 = vsel %vm1654, %v2976, 0.0
        %2996 = vadd.xlane.f32.xlu0 %v2995
        %v2997 = vpop.xlane.xlu0 %2996
        %v2998 = vsel %vm1654, %v2978, 0.0
        %2999 = vadd.xlane.f32.xlu0 %v2998
        %v3000 = vpop.xlane.xlu0 %2999
        %v3001 = vsel %vm1654, %v2980, 0.0
        %3002 = vadd.xlane.f32.xlu0 %v3001
        %v3003 = vpop.xlane.xlu0 %3002
        %v3004 = vsel %vm1654, %v2982, 0.0
        %3005 = vadd.xlane.f32.xlu0 %v3004
        %v3006 = vpop.xlane.xlu0 %3005
        %v3007 = vrcp.pop %v2985
        %v3008 = vrcp.pop %v2988
        %v3009 = vrcp.pop %v2991
        %v3010 = vrcp.pop %v2994
        %v3011 = vrcp.pop %v2997
        %v3012 = vrcp.pop %v3000
        %v3013 = vrcp.pop %v3003
        %v3014 = vrcp.pop %v3006
        %v3015 = vmul.f32 %v2968, %v3007
        %v3016 = vmul.f32 %v2970, %v3008
        %v3017 = vmul.f32 %v2972, %v3009
        %v3018 = vmul.f32 %v2974, %v3010
        %v3019 = vmul.f32 %v2976, %v3011
        %v3020 = vmul.f32 %v2978, %v3012
        %v3021 = vmul.f32 %v2980, %v3013
        %v3022 = vmul.f32 %v2982, %v3014
        %v3023 = vpack.c.bf16 %v3016, %v3015
        %v3024 = vpack.c.bf16 %v3018, %v3017
        %v3025 = vpack.c.bf16 %v3020, %v3019
        %v3026 = vpack.c.bf16 %v3022, %v3021
        %v3028 = vsel %vm1654, %v3023, 0
        %3030 = vmatprep.subr.bf16.mxu0 0
        %3031 = vmatpush1.bf16.msra.mxu0 0
        %3032 = vmatprep.subr.bf16.mxu0 0
        %3033 = vmatpush1.bf16.msra.mxu0 0
        %3034 = vmatprep.subr.bf16.mxu0 0
        %3035 = vmatpush1.bf16.msra.mxu0 0
        %3036 = vmatprep.subr.bf16.mxu0 0
        %3037 = vmatpush1.bf16.msra.mxu0 0
        %3038 = vmatprep.subr.bf16.mxu0 0
        %3039 = vmatpush1.bf16.msra.mxu0 0
        %3040 = vmatprep.subr.bf16.mxu0 0
        %3041 = vmatpush1.bf16.msra.mxu0 0
        %3042 = vmatprep.subr.bf16.mxu0 0
        %3043 = vmatpush1.bf16.msra.mxu0 0
        %3044 = vmatprep.subr.bf16.mxu0 0
        %3045 = vmatpush1.bf16.msra.mxu0 %v2743
        %3046 = vmatprep.subr.bf16.mxu0 0
        %3047 = vmatpush2.bf16.msra.mxu0 0
        %3048 = vmatprep.subr.bf16.mxu0 0
        %3049 = vmatpush2.bf16.msra.mxu0 0
        %3050 = vmatprep.subr.bf16.mxu0 0
        %3051 = vmatpush2.bf16.msra.mxu0 0
        %3052 = vmatprep.subr.bf16.mxu0 0
        %3053 = vmatpush2.bf16.msra.mxu0 0
        %3054 = vmatprep.subr.bf16.mxu0 0
        %3055 = vmatpush2.bf16.msra.mxu0 0
        %3056 = vmatprep.subr.bf16.mxu0 0
        %3057 = vmatpush2.bf16.msra.mxu0 0
        %3058 = vmatprep.subr.bf16.mxu0 0
        %3059 = vmatpush2.bf16.msra.mxu0 0
        %3060 = vmatprep.subr.bf16.mxu0 0
        %3061 = vmatpush2.bf16.msra.mxu0 0
        %3062 = vmatprep.mubr.bf16.mxu0 0
        %3063 = vmatmul.mubr.bf16.gmra.mxu0 %v3028
        %v3064 = vpop.f32.mrf.mxu0
        %v3065 = vadd.f32 0.0, %v3064
        %v3066 = vpop.f32.mrf.mxu0
        %v3067 = vpop.f32.mrf.mxu0
        %v3068 = vadd.f32 0.0, %v3067
        %v3069 = vpop.f32.mrf.mxu0
        %3070 = vdwg.mxu0
        %v3072 = vsel %vm1654, %v3024, 0
        %3074 = vmatprep.subr.bf16.mxu0 0
        %3075 = vmatpush1.bf16.msra.mxu0 0
        %3076 = vmatprep.subr.bf16.mxu0 0
        %3077 = vmatpush1.bf16.msra.mxu0 0
        %3078 = vmatprep.subr.bf16.mxu0 0
        %3079 = vmatpush1.bf16.msra.mxu0 0
        %3080 = vmatprep.subr.bf16.mxu0 0
        %3081 = vmatpush1.bf16.msra.mxu0 0
        %3082 = vmatprep.subr.bf16.mxu0 0
        %3083 = vmatpush1.bf16.msra.mxu0 0
        %3084 = vmatprep.subr.bf16.mxu0 0
        %3085 = vmatpush1.bf16.msra.mxu0 0
        %3086 = vmatprep.subr.bf16.mxu0 0
        %3087 = vmatpush1.bf16.msra.mxu0 0
        %3088 = vmatprep.subr.bf16.mxu0 0
        %3089 = vmatpush1.bf16.msra.mxu0 %v2744
        %3090 = vmatprep.subr.bf16.mxu0 0
        %3091 = vmatpush2.bf16.msra.mxu0 0
        %3092 = vmatprep.subr.bf16.mxu0 0
        %3093 = vmatpush2.bf16.msra.mxu0 0
        %3094 = vmatprep.subr.bf16.mxu0 0
        %3095 = vmatpush2.bf16.msra.mxu0 0
        %3096 = vmatprep.subr.bf16.mxu0 0
        %3097 = vmatpush2.bf16.msra.mxu0 0
        %3098 = vmatprep.subr.bf16.mxu0 0
        %3099 = vmatpush2.bf16.msra.mxu0 0
        %3100 = vmatprep.subr.bf16.mxu0 0
        %3101 = vmatpush2.bf16.msra.mxu0 0
        %3102 = vmatprep.subr.bf16.mxu0 0
        %3103 = vmatpush2.bf16.msra.mxu0 0
        %3104 = vmatprep.subr.bf16.mxu0 0
        %3105 = vmatpush2.bf16.msra.mxu0 0
        %3106 = vmatprep.mubr.bf16.mxu0 0
        %3107 = vmatmul.mubr.bf16.gmra.mxu0 %v3072
        %v3108 = vpop.f32.mrf.mxu0
        %v3109 = vadd.f32 0.0, %v3108
        %v3110 = vpop.f32.mrf.mxu0
        %v3111 = vpop.f32.mrf.mxu0
        %v3112 = vadd.f32 0.0, %v3111
        %v3113 = vpop.f32.mrf.mxu0
        %3114 = vdwg.mxu0
        %v3116 = vsel %vm1654, %v3025, 0
        %3118 = vmatprep.subr.bf16.mxu0 0
        %3119 = vmatpush1.bf16.msra.mxu0 0
        %3120 = vmatprep.subr.bf16.mxu0 0
        %3121 = vmatpush1.bf16.msra.mxu0 0
        %3122 = vmatprep.subr.bf16.mxu0 0
        %3123 = vmatpush1.bf16.msra.mxu0 0
        %3124 = vmatprep.subr.bf16.mxu0 0
        %3125 = vmatpush1.bf16.msra.mxu0 0
        %3126 = vmatprep.subr.bf16.mxu0 0
        %3127 = vmatpush1.bf16.msra.mxu0 0
        %3128 = vmatprep.subr.bf16.mxu0 0
        %3129 = vmatpush1.bf16.msra.mxu0 0
        %3130 = vmatprep.subr.bf16.mxu0 0
        %3131 = vmatpush1.bf16.msra.mxu0 0
        %3132 = vmatprep.subr.bf16.mxu0 0
        %3133 = vmatpush1.bf16.msra.mxu0 %v2745
        %3134 = vmatprep.subr.bf16.mxu0 0
        %3135 = vmatpush2.bf16.msra.mxu0 0
        %3136 = vmatprep.subr.bf16.mxu0 0
        %3137 = vmatpush2.bf16.msra.mxu0 0
        %3138 = vmatprep.subr.bf16.mxu0 0
        %3139 = vmatpush2.bf16.msra.mxu0 0
        %3140 = vmatprep.subr.bf16.mxu0 0
        %3141 = vmatpush2.bf16.msra.mxu0 0
        %3142 = vmatprep.subr.bf16.mxu0 0
        %3143 = vmatpush2.bf16.msra.mxu0 0
        %3144 = vmatprep.subr.bf16.mxu0 0
        %3145 = vmatpush2.bf16.msra.mxu0 0
        %3146 = vmatprep.subr.bf16.mxu0 0
        %3147 = vmatpush2.bf16.msra.mxu0 0
        %3148 = vmatprep.subr.bf16.mxu0 0
        %3149 = vmatpush2.bf16.msra.mxu0 0
        %3150 = vmatprep.mubr.bf16.mxu0 0
        %3151 = vmatmul.mubr.bf16.gmra.mxu0 %v3116
        %v3152 = vpop.f32.mrf.mxu0
        %v3153 = vadd.f32 0.0, %v3152
        %v3154 = vpop.f32.mrf.mxu0
        %v3155 = vpop.f32.mrf.mxu0
        %v3156 = vadd.f32 0.0, %v3155
        %v3157 = vpop.f32.mrf.mxu0
        %3158 = vdwg.mxu0
        %v3160 = vsel %vm1654, %v3026, 0
        %3162 = vmatprep.subr.bf16.mxu0 0
        %3163 = vmatpush1.bf16.msra.mxu0 0
        %3164 = vmatprep.subr.bf16.mxu0 0
        %3165 = vmatpush1.bf16.msra.mxu0 0
        %3166 = vmatprep.subr.bf16.mxu0 0
        %3167 = vmatpush1.bf16.msra.mxu0 0
        %3168 = vmatprep.subr.bf16.mxu0 0
        %3169 = vmatpush1.bf16.msra.mxu0 0
        %3170 = vmatprep.subr.bf16.mxu0 0
        %3171 = vmatpush1.bf16.msra.mxu0 0
        %3172 = vmatprep.subr.bf16.mxu0 0
        %3173 = vmatpush1.bf16.msra.mxu0 0
        %3174 = vmatprep.subr.bf16.mxu0 0
        %3175 = vmatpush1.bf16.msra.mxu0 0
        %3176 = vmatprep.subr.bf16.mxu0 0
        %3177 = vmatpush1.bf16.msra.mxu0 %v2746
        %3178 = vmatprep.subr.bf16.mxu0 0
        %3179 = vmatpush2.bf16.msra.mxu0 0
        %3180 = vmatprep.subr.bf16.mxu0 0
        %3181 = vmatpush2.bf16.msra.mxu0 0
        %3182 = vmatprep.subr.bf16.mxu0 0
        %3183 = vmatpush2.bf16.msra.mxu0 0
        %3184 = vmatprep.subr.bf16.mxu0 0
        %3185 = vmatpush2.bf16.msra.mxu0 0
        %3186 = vmatprep.subr.bf16.mxu0 0
        %3187 = vmatpush2.bf16.msra.mxu0 0
        %3188 = vmatprep.subr.bf16.mxu0 0
        %3189 = vmatpush2.bf16.msra.mxu0 0
        %3190 = vmatprep.subr.bf16.mxu0 0
        %3191 = vmatpush2.bf16.msra.mxu0 0
        %3192 = vmatprep.subr.bf16.mxu0 0
        %3193 = vmatpush2.bf16.msra.mxu0 0
        %3194 = vmatprep.mubr.bf16.mxu0 0
        %3195 = vmatmul.mubr.bf16.gmra.mxu0 %v3160
        %v3196 = vpop.f32.mrf.mxu0
        %v3197 = vadd.f32 0.0, %v3196
        %v3198 = vpop.f32.mrf.mxu0
        %v3199 = vpop.f32.mrf.mxu0
        %v3200 = vadd.f32 0.0, %v3199
        %v3201 = vpop.f32.mrf.mxu0
        %3202 = vdwg.mxu0
        %3205 = vrot.lane.b32.xlu0 %v3109, 32
        %v3206 = vpop.permute.xlu0 %3205
        %3207 = vrot.lane.b32.xlu0 %v3112, 32
        %v3208 = vpop.permute.xlu0 %3207
        %3213 = vrot.lane.b32.xlu0 %v3153, 64
        %v3214 = vpop.permute.xlu0 %3213
        %3215 = vrot.lane.b32.xlu0 %v3156, 64
        %v3216 = vpop.permute.xlu0 %3215
        %3221 = vrot.lane.b32.xlu0 %v3197, 96
        %v3222 = vpop.permute.xlu0 %3221
        %3223 = vrot.lane.b32.xlu0 %v3200, 96
        %v3224 = vpop.permute.xlu0 %3223
        %v3227 = vsel %vm1465, %v3065, %v3206
        %v3228 = vsel %vm1465, %v3068, %v3208
        %v3229 = vsel %vm1949, %v3227, %v3214
        %v3230 = vsel %vm1949, %v3228, %v3216
        %v3231 = vsel %vm1952, %v3229, %v3222
        %v3232 = vsel %vm1952, %v3230, %v3224
        %v3233 = vpack.c.bf16 %v3232, %v3231
        %v3250 = vunpack.c.l.b16 %v2659
        %v3251 = vunpack.c.l.b16 %v2660
        %v3252 = vunpack.c.l.b16 %v2661
        %v3253 = vunpack.c.l.b16 %v2662
        %v3254 = vunpack.c.l.b16 %v2663
        %v3255 = vunpack.c.l.b16 %v2664
        %v3256 = vunpack.c.l.b16 %v2665
        %v3257 = vunpack.c.l.b16 %v2666
        %v3258 = vunpack.c.l.b16 %v2667
        %v3259 = vunpack.c.l.b16 %v2668
        %v3260 = vunpack.c.l.b16 %v2669
        %v3261 = vunpack.c.l.b16 %v2670
        %v3262 = vunpack.c.l.b16 %v2671
        %v3263 = vunpack.c.l.b16 %v2672
        %v3264 = vunpack.c.l.b16 %v2673
        %v3265 = vunpack.c.l.b16 %v2674
        %v3266 = vpack.c.b16 %v3251, %v3250
        %v3267 = vpack.c.b16 %v3253, %v3252
        %v3268 = vpack.c.b16 %v3255, %v3254
        %v3269 = vpack.c.b16 %v3257, %v3256
        %v3270 = vpack.c.b16 %v3259, %v3258
        %v3271 = vpack.c.b16 %v3261, %v3260
        %v3272 = vpack.c.b16 %v3263, %v3262
        %v3273 = vpack.c.b16 %v3265, %v3264
        %3282 = vmatprep.subr.bf16.mxu0 0
        %3283 = vmatpush1.bf16.msra.mxu0 %v3273
        %3284 = vmatprep.subr.bf16.mxu0 0
        %3285 = vmatpush1.bf16.msra.mxu0 %v3272
        %3286 = vmatprep.subr.bf16.mxu0 0
        %3287 = vmatpush1.bf16.msra.mxu0 %v3271
        %3288 = vmatprep.subr.bf16.mxu0 0
        %3289 = vmatpush1.bf16.msra.mxu0 %v3270
        %3290 = vmatprep.subr.bf16.mxu0 0
        %3291 = vmatpush1.bf16.msra.mxu0 %v3269
        %3292 = vmatprep.subr.bf16.mxu0 0
        %3293 = vmatpush1.bf16.msra.mxu0 %v3268
        %3294 = vmatprep.subr.bf16.mxu0 0
        %3295 = vmatpush1.bf16.msra.mxu0 %v3267
        %3296 = vmatprep.subr.bf16.mxu0 0
        %3297 = vmatpush1.bf16.msra.mxu0 %v3266
        %3298 = vmatprep.subr.bf16.mxu0 0
        %3299 = vmatpush2.bf16.msra.mxu0 0
        %3300 = vmatprep.subr.bf16.mxu0 0
        %3301 = vmatpush2.bf16.msra.mxu0 0
        %3302 = vmatprep.subr.bf16.mxu0 0
        %3303 = vmatpush2.bf16.msra.mxu0 0
        %3304 = vmatprep.subr.bf16.mxu0 0
        %3305 = vmatpush2.bf16.msra.mxu0 0
        %3306 = vmatprep.subr.bf16.mxu0 0
        %3307 = vmatpush2.bf16.msra.mxu0 0
        %3308 = vmatprep.subr.bf16.mxu0 0
        %3309 = vmatpush2.bf16.msra.mxu0 0
        %3310 = vmatprep.subr.bf16.mxu0 0
        %3311 = vmatpush2.bf16.msra.mxu0 0
        %3312 = vmatprep.subr.bf16.mxu0 0
        %3313 = vmatpush2.bf16.msra.mxu0 0
        %3314 = vmatprep.mubr.bf16.mxu0 0
        %3315 = vmatmul.mubr.bf16.gmra.mxu0 %v3233
        %v3316 = vpop.f32.mrf.mxu0
        %v3317 = vadd.f32 0.0, %v3316
        %v3318 = vpop.f32.mrf.mxu0
        %v3319 = vpop.f32.mrf.mxu0
        %v3320 = vadd.f32 0.0, %v3319
        %v3321 = vpop.f32.mrf.mxu0
        %3322 = vdwg.mxu0
        %v3323 = vadd.f32 %v2385, %v3317
        %v3324 = vadd.f32 %v2386, %v3320
        %s3325 = scalar_lea.vmem %s8, 1
        %v3326 = vld [vmem:[%s3325] sm:$0x1]
        %v3327 = vmul.f32 %v3323, %v3323
        %v3328 = vmul.f32 %v3324, %v3324
        %3329 = vadd.xlane.f32.xlu0 %v3327
        %v3330 = vpop.xlane.xlu0 %3329
        %3331 = vadd.xlane.f32.xlu0 %v3328
        %v3332 = vpop.xlane.xlu0 %3331
        %v3333 = vmul.f32 %v3330, %v1115
        %v3334 = vmul.f32 %v3332, %v1115
        %v3335 = vadd.f32 %v3333, 1e-06
        %v3336 = vadd.f32 %v3334, 1e-06
        %v3337 = vrsqrt.pop %v3335
        %v3338 = vrsqrt.pop %v3336
        %v3339 = vmul.f32 %v3323, %v3337
        %v3340 = vmul.f32 %v3324, %v3338
        %v3342 = vlaneseq
        %v3343 = vshrl.u32 %v3342, 7
        %v3344 = vsub.s32 0, %v3343
        %v3345 = vrot.slane %v3326, %v3344
        %v3347 = vmul.f32 %v3339, %v3345
        %v3348 = vmul.f32 %v3340, %v3345
        %v3349 = vpack.c.bf16 %v3348, %v3347
        %s3350 = scalar_lea.vmem [#allocation14], 128
        %v3351 = vld [vmem:[%s3350] sm:$0xff]
        %v3352 = vld [vmem:[%s3350 + $0x8] sm:$0xff]
        %v3353 = vld [vmem:[%s3350 + $0x10] sm:$0xff]
        %v3354 = vld [vmem:[%s3350 + $0x18] sm:$0xff]
        %v3355 = vld [vmem:[%s3350 + $0x20] sm:$0xff]
        %v3356 = vld [vmem:[%s3350 + $0x28] sm:$0xff]
        %v3357 = vld [vmem:[%s3350 + $0x30] sm:$0xff]
        %v3358 = vld [vmem:[%s3350 + $0x38] sm:$0xff]
        %v3359 = vld [vmem:[%s3350 + $0x40] sm:$0xff]
        %v3360 = vld [vmem:[%s3350 + $0x48] sm:$0xff]
        %v3361 = vld [vmem:[%s3350 + $0x50] sm:$0xff]
        %v3362 = vld [vmem:[%s3350 + $0x58] sm:$0xff]
        %v3363 = vld [vmem:[%s3350 + $0x60] sm:$0xff]
        %v3364 = vld [vmem:[%s3350 + $0x68] sm:$0xff]
        %v3365 = vld [vmem:[%s3350 + $0x70] sm:$0xff]
        %v3366 = vld [vmem:[%s3350 + $0x78] sm:$0xff]
        %v3383 = vunpack.c.l.b16 %v3351
        %v3384 = vunpack.c.h.b16 %v3351
        %v3385 = vunpack.c.l.b16 %v3352
        %v3386 = vunpack.c.h.b16 %v3352
        %v3387 = vunpack.c.l.b16 %v3353
        %v3388 = vunpack.c.h.b16 %v3353
        %v3389 = vunpack.c.l.b16 %v3354
        %v3390 = vunpack.c.h.b16 %v3354
        %v3391 = vunpack.c.l.b16 %v3355
        %v3392 = vunpack.c.h.b16 %v3355
        %v3393 = vunpack.c.l.b16 %v3356
        %v3394 = vunpack.c.h.b16 %v3356
        %v3395 = vunpack.c.l.b16 %v3357
        %v3396 = vunpack.c.h.b16 %v3357
        %v3397 = vunpack.c.l.b16 %v3358
        %v3398 = vunpack.c.h.b16 %v3358
        %v3399 = vunpack.c.l.b16 %v3359
        %v3400 = vunpack.c.h.b16 %v3359
        %v3401 = vunpack.c.l.b16 %v3360
        %v3402 = vunpack.c.h.b16 %v3360
        %v3403 = vunpack.c.l.b16 %v3361
        %v3404 = vunpack.c.h.b16 %v3361
        %v3405 = vunpack.c.l.b16 %v3362
        %v3406 = vunpack.c.h.b16 %v3362
        %v3407 = vunpack.c.l.b16 %v3363
        %v3408 = vunpack.c.h.b16 %v3363
        %v3409 = vunpack.c.l.b16 %v3364
        %v3410 = vunpack.c.h.b16 %v3364
        %v3411 = vunpack.c.l.b16 %v3365
        %v3412 = vunpack.c.h.b16 %v3365
        %v3413 = vunpack.c.l.b16 %v3366
        %v3414 = vunpack.c.h.b16 %v3366
        %v3415 = vpack.c.b16 %v3385, %v3383
        %v3416 = vpack.c.b16 %v3386, %v3384
        %v3417 = vpack.c.b16 %v3389, %v3387
        %v3418 = vpack.c.b16 %v3390, %v3388
        %v3419 = vpack.c.b16 %v3393, %v3391
        %v3420 = vpack.c.b16 %v3394, %v3392
        %v3421 = vpack.c.b16 %v3397, %v3395
        %v3422 = vpack.c.b16 %v3398, %v3396
        %v3423 = vpack.c.b16 %v3401, %v3399
        %v3424 = vpack.c.b16 %v3402, %v3400
        %v3425 = vpack.c.b16 %v3405, %v3403
        %v3426 = vpack.c.b16 %v3406, %v3404
        %v3427 = vpack.c.b16 %v3409, %v3407
        %v3428 = vpack.c.b16 %v3410, %v3408
        %v3429 = vpack.c.b16 %v3413, %v3411
        %v3430 = vpack.c.b16 %v3414, %v3412
        %3447 = vmatprep.subr.bf16.mxu0 %v3430
        %3448 = vmatpush1.bf16.msra.mxu0 %v3429
        %3449 = vmatprep.subr.bf16.mxu0 %v3428
        %3450 = vmatpush1.bf16.msra.mxu0 %v3427
        %3451 = vmatprep.subr.bf16.mxu0 %v3426
        %3452 = vmatpush1.bf16.msra.mxu0 %v3425
        %3453 = vmatprep.subr.bf16.mxu0 %v3424
        %3454 = vmatpush1.bf16.msra.mxu0 %v3423
        %3455 = vmatprep.subr.bf16.mxu0 %v3422
        %3456 = vmatpush1.bf16.msra.mxu0 %v3421
        %3457 = vmatprep.subr.bf16.mxu0 %v3420
        %3458 = vmatpush1.bf16.msra.mxu0 %v3419
        %3459 = vmatprep.subr.bf16.mxu0 %v3418
        %3460 = vmatpush1.bf16.msra.mxu0 %v3417
        %3461 = vmatprep.subr.bf16.mxu0 %v3416
        %3462 = vmatpush1.bf16.msra.mxu0 %v3415
        %3463 = vmatprep.subr.bf16.mxu0 0
        %3464 = vmatpush2.bf16.msra.mxu0 0
        %3465 = vmatprep.subr.bf16.mxu0 0
        %3466 = vmatpush2.bf16.msra.mxu0 0
        %3467 = vmatprep.subr.bf16.mxu0 0
        %3468 = vmatpush2.bf16.msra.mxu0 0
        %3469 = vmatprep.subr.bf16.mxu0 0
        %3470 = vmatpush2.bf16.msra.mxu0 0
        %3471 = vmatprep.subr.bf16.mxu0 0
        %3472 = vmatpush2.bf16.msra.mxu0 0
        %3473 = vmatprep.subr.bf16.mxu0 0
        %3474 = vmatpush2.bf16.msra.mxu0 0
        %3475 = vmatprep.subr.bf16.mxu0 0
        %3476 = vmatpush2.bf16.msra.mxu0 0
        %3477 = vmatprep.subr.bf16.mxu0 0
        %3478 = vmatpush2.bf16.msra.mxu0 0
        %3479 = vmatprep.mubr.bf16.mxu0 0
        %3480 = vmatmul.mubr.bf16.gmra.mxu0 %v3349
        %v3481 = vpop.f32.mrf.mxu0
        %v3482 = vadd.f32 0.0, %v3481
        %v3483 = vpop.f32.mrf.mxu0
        %v3484 = vadd.f32 0.0, %v3483
        %v3485 = vpop.f32.mrf.mxu0
        %v3486 = vadd.f32 0.0, %v3485
        %v3487 = vpop.f32.mrf.mxu0
        %v3488 = vadd.f32 0.0, %v3487
        %3489 = vdwg.mxu0
        %v3490 = vmax.f32 %v3482, 0.0
        %v3491 = vmax.f32 %v3484, 0.0
        %v3492 = vmax.f32 %v3486, 0.0
        %v3493 = vmax.f32 %v3488, 0.0
        %v3494 = vpack.c.bf16 %v3492, %v3490
        %v3495 = vpack.c.bf16 %v3493, %v3491
        %s3496 = scalar_lea.vmem [#allocation15], 128
        %v3497 = vld [vmem:[%s3496] sm:$0xf]
        %v3498 = vld [vmem:[%s3496 + $0x4] sm:$0xf]
        %v3499 = vld [vmem:[%s3496 + $0x8] sm:$0xf]
        %v3500 = vld [vmem:[%s3496 + $0xc] sm:$0xf]
        %v3501 = vld [vmem:[%s3496 + $0x10] sm:$0xf]
        %v3502 = vld [vmem:[%s3496 + $0x14] sm:$0xf]
        %v3503 = vld [vmem:[%s3496 + $0x18] sm:$0xf]
        %v3504 = vld [vmem:[%s3496 + $0x1c] sm:$0xf]
        %v3505 = vld [vmem:[%s3496 + $0x20] sm:$0xf]
        %v3506 = vld [vmem:[%s3496 + $0x24] sm:$0xf]
        %v3507 = vld [vmem:[%s3496 + $0x28] sm:$0xf]
        %v3508 = vld [vmem:[%s3496 + $0x2c] sm:$0xf]
        %v3509 = vld [vmem:[%s3496 + $0x30] sm:$0xf]
        %v3510 = vld [vmem:[%s3496 + $0x34] sm:$0xf]
        %v3511 = vld [vmem:[%s3496 + $0x38] sm:$0xf]
        %v3512 = vld [vmem:[%s3496 + $0x3c] sm:$0xf]
        %v3513 = vld [vmem:[%s3496 + $0x40] sm:$0xf]
        %v3514 = vld [vmem:[%s3496 + $0x44] sm:$0xf]
        %v3515 = vld [vmem:[%s3496 + $0x48] sm:$0xf]
        %v3516 = vld [vmem:[%s3496 + $0x4c] sm:$0xf]
        %v3517 = vld [vmem:[%s3496 + $0x50] sm:$0xf]
        %v3518 = vld [vmem:[%s3496 + $0x54] sm:$0xf]
        %v3519 = vld [vmem:[%s3496 + $0x58] sm:$0xf]
        %v3520 = vld [vmem:[%s3496 + $0x5c] sm:$0xf]
        %v3521 = vld [vmem:[%s3496 + $0x60] sm:$0xf]
        %v3522 = vld [vmem:[%s3496 + $0x64] sm:$0xf]
        %v3523 = vld [vmem:[%s3496 + $0x68] sm:$0xf]
        %v3524 = vld [vmem:[%s3496 + $0x6c] sm:$0xf]
        %v3525 = vld [vmem:[%s3496 + $0x70] sm:$0xf]
        %v3526 = vld [vmem:[%s3496 + $0x74] sm:$0xf]
        %v3527 = vld [vmem:[%s3496 + $0x78] sm:$0xf]
        %v3528 = vld [vmem:[%s3496 + $0x7c] sm:$0xf]
        %v3561 = vunpack.c.l.b16 %v3497
        %v3562 = vunpack.c.l.b16 %v3498
        %v3563 = vunpack.c.l.b16 %v3499
        %v3564 = vunpack.c.l.b16 %v3500
        %v3565 = vunpack.c.l.b16 %v3501
        %v3566 = vunpack.c.l.b16 %v3502
        %v3567 = vunpack.c.l.b16 %v3503
        %v3568 = vunpack.c.l.b16 %v3504
        %v3569 = vunpack.c.l.b16 %v3505
        %v3570 = vunpack.c.l.b16 %v3506
        %v3571 = vunpack.c.l.b16 %v3507
        %v3572 = vunpack.c.l.b16 %v3508
        %v3573 = vunpack.c.l.b16 %v3509
        %v3574 = vunpack.c.l.b16 %v3510
        %v3575 = vunpack.c.l.b16 %v3511
        %v3576 = vunpack.c.l.b16 %v3512
        %v3577 = vunpack.c.l.b16 %v3513
        %v3578 = vunpack.c.l.b16 %v3514
        %v3579 = vunpack.c.l.b16 %v3515
        %v3580 = vunpack.c.l.b16 %v3516
        %v3581 = vunpack.c.l.b16 %v3517
        %v3582 = vunpack.c.l.b16 %v3518
        %v3583 = vunpack.c.l.b16 %v3519
        %v3584 = vunpack.c.l.b16 %v3520
        %v3585 = vunpack.c.l.b16 %v3521
        %v3586 = vunpack.c.l.b16 %v3522
        %v3587 = vunpack.c.l.b16 %v3523
        %v3588 = vunpack.c.l.b16 %v3524
        %v3589 = vunpack.c.l.b16 %v3525
        %v3590 = vunpack.c.l.b16 %v3526
        %v3591 = vunpack.c.l.b16 %v3527
        %v3592 = vunpack.c.l.b16 %v3528
        %v3593 = vpack.c.b16 %v3562, %v3561
        %v3594 = vpack.c.b16 %v3564, %v3563
        %v3595 = vpack.c.b16 %v3566, %v3565
        %v3596 = vpack.c.b16 %v3568, %v3567
        %v3597 = vpack.c.b16 %v3570, %v3569
        %v3598 = vpack.c.b16 %v3572, %v3571
        %v3599 = vpack.c.b16 %v3574, %v3573
        %v3600 = vpack.c.b16 %v3576, %v3575
        %v3601 = vpack.c.b16 %v3578, %v3577
        %v3602 = vpack.c.b16 %v3580, %v3579
        %v3603 = vpack.c.b16 %v3582, %v3581
        %v3604 = vpack.c.b16 %v3584, %v3583
        %v3605 = vpack.c.b16 %v3586, %v3585
        %v3606 = vpack.c.b16 %v3588, %v3587
        %v3607 = vpack.c.b16 %v3590, %v3589
        %v3608 = vpack.c.b16 %v3592, %v3591
        %3625 = vmatprep.subr.bf16.mxu0 0
        %3626 = vmatpush1.bf16.msra.mxu0 %v3600
        %3627 = vmatprep.subr.bf16.mxu0 0
        %3628 = vmatpush1.bf16.msra.mxu0 %v3599
        %3629 = vmatprep.subr.bf16.mxu0 0
        %3630 = vmatpush1.bf16.msra.mxu0 %v3598
        %3631 = vmatprep.subr.bf16.mxu0 0
        %3632 = vmatpush1.bf16.msra.mxu0 %v3597
        %3633 = vmatprep.subr.bf16.mxu0 0
        %3634 = vmatpush1.bf16.msra.mxu0 %v3596
        %3635 = vmatprep.subr.bf16.mxu0 0
        %3636 = vmatpush1.bf16.msra.mxu0 %v3595
        %3637 = vmatprep.subr.bf16.mxu0 0
        %3638 = vmatpush1.bf16.msra.mxu0 %v3594
        %3639 = vmatprep.subr.bf16.mxu0 0
        %3640 = vmatpush1.bf16.msra.mxu0 %v3593
        %3641 = vmatprep.subr.bf16.mxu0 0
        %3642 = vmatpush2.bf16.msra.mxu0 %v3608
        %3643 = vmatprep.subr.bf16.mxu0 0
        %3644 = vmatpush2.bf16.msra.mxu0 %v3607
        %3645 = vmatprep.subr.bf16.mxu0 0
        %3646 = vmatpush2.bf16.msra.mxu0 %v3606
        %3647 = vmatprep.subr.bf16.mxu0 0
        %3648 = vmatpush2.bf16.msra.mxu0 %v3605
        %3649 = vmatprep.subr.bf16.mxu0 0
        %3650 = vmatpush2.bf16.msra.mxu0 %v3604
        %3651 = vmatprep.subr.bf16.mxu0 0
        %3652 = vmatpush2.bf16.msra.mxu0 %v3603
        %3653 = vmatprep.subr.bf16.mxu0 0
        %3654 = vmatpush2.bf16.msra.mxu0 %v3602
        %3655 = vmatprep.subr.bf16.mxu0 0
        %3656 = vmatpush2.bf16.msra.mxu0 %v3601
        %3657 = vmatprep.mubr.bf16.mxu0 %v3495
        %3658 = vmatmul.mubr.bf16.gmra.mxu0 %v3494
        %v3659 = vpop.f32.mrf.mxu0
        %v3660 = vadd.f32 0.0, %v3659
        %v3661 = vpop.f32.mrf.mxu0
        %v3662 = vpop.f32.mrf.mxu0
        %v3663 = vadd.f32 0.0, %v3662
        %v3664 = vpop.f32.mrf.mxu0
        %3665 = vdwg.mxu0
        %v3666 = vadd.f32 %v3323, %v3660
        %v3667 = vadd.f32 %v3324, %v3663
        %v3668 = vld [vmem:[%s11] sm:$0x1]
        %v3669 = vmul.f32 %v3666, %v3666
        %v3670 = vmul.f32 %v3667, %v3667
        %3671 = vadd.xlane.f32.xlu0 %v3669
        %v3672 = vpop.xlane.xlu0 %3671
        %3673 = vadd.xlane.f32.xlu0 %v3670
        %v3674 = vpop.xlane.xlu0 %3673
        %v3675 = vmul.f32 %v3672, %v1115
        %v3676 = vmul.f32 %v3674, %v1115
        %v3677 = vadd.f32 %v3675, 1e-06
        %v3678 = vadd.f32 %v3676, 1e-06
        %v3679 = vrsqrt.pop %v3677
        %v3680 = vrsqrt.pop %v3678
        %v3681 = vmul.f32 %v3666, %v3679
        %v3682 = vmul.f32 %v3667, %v3680
        %v3684 = vlaneseq
        %v3685 = vshrl.u32 %v3684, 7
        %v3686 = vsub.s32 0, %v3685
        %v3687 = vrot.slane %v3668, %v3686
        %v3689 = vmul.f32 %v3681, %v3687
        %v3690 = vmul.f32 %v3682, %v3687
        %3691 = vst [vmem:[%s1083] sm:$0xff] %v3689
        %3692 = vst [vmem:[%s1083 + $0x8] sm:$0xff] %v3690
        %v3693 = vpack.c.bf16 %v3690, %v3689
        %v3694 = vld [vmem:[#allocation26] sm:$0xff]
        %v3695 = vld [vmem:[#allocation26 + $0x8] sm:$0xff]
        %v3696 = vld [vmem:[#allocation26 + $0x10] sm:$0xff]
        %v3697 = vld [vmem:[#allocation26 + $0x18] sm:$0xff]
        %v3698 = vld [vmem:[#allocation26 + $0x20] sm:$0xff]
        %v3699 = vld [vmem:[#allocation26 + $0x28] sm:$0xff]
        %v3700 = vld [vmem:[#allocation26 + $0x30] sm:$0xff]
        %v3701 = vld [vmem:[#allocation26 + $0x38] sm:$0xff]
        %v3702 = vld [vmem:[#allocation26 + $0x40] sm:$0xff]
        %v3703 = vld [vmem:[#allocation26 + $0x48] sm:$0xff]
        %v3704 = vld [vmem:[#allocation26 + $0x50] sm:$0xff]
        %v3705 = vld [vmem:[#allocation26 + $0x58] sm:$0xff]
        %v3706 = vld [vmem:[#allocation26 + $0x60] sm:$0xff]
        %v3707 = vld [vmem:[#allocation26 + $0x68] sm:$0xff]
        %v3708 = vld [vmem:[#allocation26 + $0x70] sm:$0xff]
        %v3709 = vld [vmem:[#allocation26 + $0x78] sm:$0xff]
        %v3726 = vunpack.c.l.b16 %v3694
        %v3727 = vunpack.c.h.b16 %v3694
        %v3728 = vunpack.c.l.b16 %v3695
        %v3729 = vunpack.c.h.b16 %v3695
        %v3730 = vunpack.c.l.b16 %v3696
        %v3731 = vunpack.c.h.b16 %v3696
        %v3732 = vunpack.c.l.b16 %v3697
        %v3733 = vunpack.c.h.b16 %v3697
        %v3734 = vunpack.c.l.b16 %v3698
        %v3735 = vunpack.c.h.b16 %v3698
        %v3736 = vunpack.c.l.b16 %v3699
        %v3737 = vunpack.c.h.b16 %v3699
        %v3738 = vunpack.c.l.b16 %v3700
        %v3739 = vunpack.c.h.b16 %v3700
        %v3740 = vunpack.c.l.b16 %v3701
        %v3741 = vunpack.c.h.b16 %v3701
        %v3742 = vunpack.c.l.b16 %v3702
        %v3743 = vunpack.c.h.b16 %v3702
        %v3744 = vunpack.c.l.b16 %v3703
        %v3745 = vunpack.c.h.b16 %v3703
        %v3746 = vunpack.c.l.b16 %v3704
        %v3747 = vunpack.c.h.b16 %v3704
        %v3748 = vunpack.c.l.b16 %v3705
        %v3749 = vunpack.c.h.b16 %v3705
        %v3750 = vunpack.c.l.b16 %v3706
        %v3751 = vunpack.c.h.b16 %v3706
        %v3752 = vunpack.c.l.b16 %v3707
        %v3753 = vunpack.c.h.b16 %v3707
        %v3754 = vunpack.c.l.b16 %v3708
        %v3755 = vunpack.c.h.b16 %v3708
        %v3756 = vunpack.c.l.b16 %v3709
        %v3757 = vunpack.c.h.b16 %v3709
        %v3758 = vpack.c.b16 %v3728, %v3726
        %v3759 = vpack.c.b16 %v3729, %v3727
        %v3760 = vpack.c.b16 %v3732, %v3730
        %v3761 = vpack.c.b16 %v3733, %v3731
        %v3762 = vpack.c.b16 %v3736, %v3734
        %v3763 = vpack.c.b16 %v3737, %v3735
        %v3764 = vpack.c.b16 %v3740, %v3738
        %v3765 = vpack.c.b16 %v3741, %v3739
        %v3766 = vpack.c.b16 %v3744, %v3742
        %v3767 = vpack.c.b16 %v3745, %v3743
        %v3768 = vpack.c.b16 %v3748, %v3746
        %v3769 = vpack.c.b16 %v3749, %v3747
        %v3770 = vpack.c.b16 %v3752, %v3750
        %v3771 = vpack.c.b16 %v3753, %v3751
        %v3772 = vpack.c.b16 %v3756, %v3754
        %v3773 = vpack.c.b16 %v3757, %v3755
        %3790 = vmatprep.subr.bf16.mxu0 %v3773
        %3791 = vmatpush1.bf16.msra.mxu0 %v3772
        %3792 = vmatprep.subr.bf16.mxu0 %v3771
        %3793 = vmatpush1.bf16.msra.mxu0 %v3770
        %3794 = vmatprep.subr.bf16.mxu0 %v3769
        %3795 = vmatpush1.bf16.msra.mxu0 %v3768
        %3796 = vmatprep.subr.bf16.mxu0 %v3767
        %3797 = vmatpush1.bf16.msra.mxu0 %v3766
        %3798 = vmatprep.subr.bf16.mxu0 %v3765
        %3799 = vmatpush1.bf16.msra.mxu0 %v3764
        %3800 = vmatprep.subr.bf16.mxu0 %v3763
        %3801 = vmatpush1.bf16.msra.mxu0 %v3762
        %3802 = vmatprep.subr.bf16.mxu0 %v3761
        %3803 = vmatpush1.bf16.msra.mxu0 %v3760
        %3804 = vmatprep.subr.bf16.mxu0 %v3759
        %3805 = vmatpush1.bf16.msra.mxu0 %v3758
        %3806 = vmatprep.subr.bf16.mxu0 0
        %3807 = vmatpush2.bf16.msra.mxu0 0
        %3808 = vmatprep.subr.bf16.mxu0 0
        %3809 = vmatpush2.bf16.msra.mxu0 0
        %3810 = vmatprep.subr.bf16.mxu0 0
        %3811 = vmatpush2.bf16.msra.mxu0 0
        %3812 = vmatprep.subr.bf16.mxu0 0
        %3813 = vmatpush2.bf16.msra.mxu0 0
        %3814 = vmatprep.subr.bf16.mxu0 0
        %3815 = vmatpush2.bf16.msra.mxu0 0
        %3816 = vmatprep.subr.bf16.mxu0 0
        %3817 = vmatpush2.bf16.msra.mxu0 0
        %3818 = vmatprep.subr.bf16.mxu0 0
        %3819 = vmatpush2.bf16.msra.mxu0 0
        %3820 = vmatprep.subr.bf16.mxu0 0
        %3821 = vmatpush2.bf16.msra.mxu0 0
        %3822 = vmatprep.mubr.bf16.mxu0 0
        %3823 = vmatmul.mubr.bf16.gmra.mxu0 %v3693
        %v3824 = vpop.f32.mrf.mxu0
        %v3825 = vadd.f32 0.0, %v3824
        %v3826 = vpop.f32.mrf.mxu0
        %v3827 = vadd.f32 0.0, %v3826
        %v3828 = vpop.f32.mrf.mxu0
        %v3829 = vadd.f32 0.0, %v3828
        %v3830 = vpop.f32.mrf.mxu0
        %v3831 = vadd.f32 0.0, %v3830
        %3832 = vdwg.mxu0
        %s3833 = scalar_lea.vmem [#allocation26], 128
        %v3834 = vld [vmem:[%s3833] sm:$0xff]
        %v3835 = vld [vmem:[%s3833 + $0x8] sm:$0xff]
        %v3836 = vld [vmem:[%s3833 + $0x10] sm:$0xff]
        %v3837 = vld [vmem:[%s3833 + $0x18] sm:$0xff]
        %v3838 = vld [vmem:[%s3833 + $0x20] sm:$0xff]
        %v3839 = vld [vmem:[%s3833 + $0x28] sm:$0xff]
        %v3840 = vld [vmem:[%s3833 + $0x30] sm:$0xff]
        %v3841 = vld [vmem:[%s3833 + $0x38] sm:$0xff]
        %v3842 = vld [vmem:[%s3833 + $0x40] sm:$0xff]
        %v3843 = vld [vmem:[%s3833 + $0x48] sm:$0xff]
        %v3844 = vld [vmem:[%s3833 + $0x50] sm:$0xff]
        %v3845 = vld [vmem:[%s3833 + $0x58] sm:$0xff]
        %v3846 = vld [vmem:[%s3833 + $0x60] sm:$0xff]
        %v3847 = vld [vmem:[%s3833 + $0x68] sm:$0xff]
        %v3848 = vld [vmem:[%s3833 + $0x70] sm:$0xff]
        %v3849 = vld [vmem:[%s3833 + $0x78] sm:$0xff]
        %v3866 = vunpack.c.l.b16 %v3834
        %v3867 = vunpack.c.h.b16 %v3834
        %v3868 = vunpack.c.l.b16 %v3835
        %v3869 = vunpack.c.h.b16 %v3835
        %v3870 = vunpack.c.l.b16 %v3836
        %v3871 = vunpack.c.h.b16 %v3836
        %v3872 = vunpack.c.l.b16 %v3837
        %v3873 = vunpack.c.h.b16 %v3837
        %v3874 = vunpack.c.l.b16 %v3838
        %v3875 = vunpack.c.h.b16 %v3838
        %v3876 = vunpack.c.l.b16 %v3839
        %v3877 = vunpack.c.h.b16 %v3839
        %v3878 = vunpack.c.l.b16 %v3840
        %v3879 = vunpack.c.h.b16 %v3840
        %v3880 = vunpack.c.l.b16 %v3841
        %v3881 = vunpack.c.h.b16 %v3841
        %v3882 = vunpack.c.l.b16 %v3842
        %v3883 = vunpack.c.h.b16 %v3842
        %v3884 = vunpack.c.l.b16 %v3843
        %v3885 = vunpack.c.h.b16 %v3843
        %v3886 = vunpack.c.l.b16 %v3844
        %v3887 = vunpack.c.h.b16 %v3844
        %v3888 = vunpack.c.l.b16 %v3845
        %v3889 = vunpack.c.h.b16 %v3845
        %v3890 = vunpack.c.l.b16 %v3846
        %v3891 = vunpack.c.h.b16 %v3846
        %v3892 = vunpack.c.l.b16 %v3847
        %v3893 = vunpack.c.h.b16 %v3847
        %v3894 = vunpack.c.l.b16 %v3848
        %v3895 = vunpack.c.h.b16 %v3848
        %v3896 = vunpack.c.l.b16 %v3849
        %v3897 = vunpack.c.h.b16 %v3849
        %v3898 = vpack.c.b16 %v3868, %v3866
        %v3899 = vpack.c.b16 %v3869, %v3867
        %v3900 = vpack.c.b16 %v3872, %v3870
        %v3901 = vpack.c.b16 %v3873, %v3871
        %v3902 = vpack.c.b16 %v3876, %v3874
        %v3903 = vpack.c.b16 %v3877, %v3875
        %v3904 = vpack.c.b16 %v3880, %v3878
        %v3905 = vpack.c.b16 %v3881, %v3879
        %v3906 = vpack.c.b16 %v3884, %v3882
        %v3907 = vpack.c.b16 %v3885, %v3883
        %v3908 = vpack.c.b16 %v3888, %v3886
        %v3909 = vpack.c.b16 %v3889, %v3887
        %v3910 = vpack.c.b16 %v3892, %v3890
        %v3911 = vpack.c.b16 %v3893, %v3891
        %v3912 = vpack.c.b16 %v3896, %v3894
        %v3913 = vpack.c.b16 %v3897, %v3895
        %3930 = vmatprep.subr.bf16.mxu0 %v3913
        %3931 = vmatpush1.bf16.msra.mxu0 %v3912
        %3932 = vmatprep.subr.bf16.mxu0 %v3911
        %3933 = vmatpush1.bf16.msra.mxu0 %v3910
        %3934 = vmatprep.subr.bf16.mxu0 %v3909
        %3935 = vmatpush1.bf16.msra.mxu0 %v3908
        %3936 = vmatprep.subr.bf16.mxu0 %v3907
        %3937 = vmatpush1.bf16.msra.mxu0 %v3906
        %3938 = vmatprep.subr.bf16.mxu0 %v3905
        %3939 = vmatpush1.bf16.msra.mxu0 %v3904
        %3940 = vmatprep.subr.bf16.mxu0 %v3903
        %3941 = vmatpush1.bf16.msra.mxu0 %v3902
        %3942 = vmatprep.subr.bf16.mxu0 %v3901
        %3943 = vmatpush1.bf16.msra.mxu0 %v3900
        %3944 = vmatprep.subr.bf16.mxu0 %v3899
        %3945 = vmatpush1.bf16.msra.mxu0 %v3898
        %3946 = vmatprep.subr.bf16.mxu0 0
        %3947 = vmatpush2.bf16.msra.mxu0 0
        %3948 = vmatprep.subr.bf16.mxu0 0
        %3949 = vmatpush2.bf16.msra.mxu0 0
        %3950 = vmatprep.subr.bf16.mxu0 0
        %3951 = vmatpush2.bf16.msra.mxu0 0
        %3952 = vmatprep.subr.bf16.mxu0 0
        %3953 = vmatpush2.bf16.msra.mxu0 0
        %3954 = vmatprep.subr.bf16.mxu0 0
        %3955 = vmatpush2.bf16.msra.mxu0 0
        %3956 = vmatprep.subr.bf16.mxu0 0
        %3957 = vmatpush2.bf16.msra.mxu0 0
        %3958 = vmatprep.subr.bf16.mxu0 0
        %3959 = vmatpush2.bf16.msra.mxu0 0
        %3960 = vmatprep.subr.bf16.mxu0 0
        %3961 = vmatpush2.bf16.msra.mxu0 0
        %3962 = vmatprep.mubr.bf16.mxu0 0
        %3963 = vmatmul.mubr.bf16.gmra.mxu0 %v3693
        %v3964 = vpop.f32.mrf.mxu0
        %v3965 = vadd.f32 0.0, %v3964
        %v3966 = vpop.f32.mrf.mxu0
        %v3967 = vadd.f32 0.0, %v3966
        %v3968 = vpop.f32.mrf.mxu0
        %v3969 = vadd.f32 0.0, %v3968
        %v3970 = vpop.f32.mrf.mxu0
        %v3971 = vadd.f32 0.0, %v3970
        %3972 = vdwg.mxu0
        %v3973 = vld [vmem:[#allocation3] sm:$0xf]
        %v3974 = vld [vmem:[#allocation3 + $0x4] sm:$0xf]
        %v3975 = vld [vmem:[#allocation3 + $0x8] sm:$0xf]
        %v3976 = vld [vmem:[#allocation3 + $0xc] sm:$0xf]
        %v3977 = vld [vmem:[#allocation3 + $0x10] sm:$0xf]
        %v3978 = vld [vmem:[#allocation3 + $0x14] sm:$0xf]
        %v3979 = vld [vmem:[#allocation3 + $0x18] sm:$0xf]
        %v3980 = vld [vmem:[#allocation3 + $0x1c] sm:$0xf]
        %v3981 = vld [vmem:[#allocation3 + $0x20] sm:$0xf]
        %v3982 = vld [vmem:[#allocation3 + $0x24] sm:$0xf]
        %v3983 = vld [vmem:[#allocation3 + $0x28] sm:$0xf]
        %v3984 = vld [vmem:[#allocation3 + $0x2c] sm:$0xf]
        %v3985 = vld [vmem:[#allocation3 + $0x30] sm:$0xf]
        %v3986 = vld [vmem:[#allocation3 + $0x34] sm:$0xf]
        %v3987 = vld [vmem:[#allocation3 + $0x38] sm:$0xf]
        %v3988 = vld [vmem:[#allocation3 + $0x3c] sm:$0xf]
        %v3989 = vld [vmem:[#allocation33] sm:$0xf]
        %v3990 = vld [vmem:[#allocation33 + $0x4] sm:$0xf]
        %v3991 = vld [vmem:[#allocation33 + $0x8] sm:$0xf]
        %v3992 = vld [vmem:[#allocation33 + $0xc] sm:$0xf]
        %v3993 = vld [vmem:[#allocation33 + $0x10] sm:$0xf]
        %v3994 = vld [vmem:[#allocation33 + $0x14] sm:$0xf]
        %v3995 = vld [vmem:[#allocation33 + $0x18] sm:$0xf]
        %v3996 = vld [vmem:[#allocation33 + $0x1c] sm:$0xf]
        %v3997 = vld [vmem:[#allocation33 + $0x20] sm:$0xf]
        %v3998 = vld [vmem:[#allocation33 + $0x24] sm:$0xf]
        %v3999 = vld [vmem:[#allocation33 + $0x28] sm:$0xf]
        %v4000 = vld [vmem:[#allocation33 + $0x2c] sm:$0xf]
        %v4001 = vld [vmem:[#allocation33 + $0x30] sm:$0xf]
        %v4002 = vld [vmem:[#allocation33 + $0x34] sm:$0xf]
        %v4003 = vld [vmem:[#allocation33 + $0x38] sm:$0xf]
        %v4004 = vld [vmem:[#allocation33 + $0x3c] sm:$0xf]
        %v4005 = vlaneseq
        %v4006 = vand.u32 %v4005, 127
        loop: start=0, step=1, limit=15
        $region201: #{generate_ids.1} parent=119 // loop_pre_header
          _
        $region202: #{generate_ids.1} parent=119 // loop_header
          %s4008 = sphi 0, %s4012
          %p4009 = scmp.ge.s32.totalorder %s4008, 15
          %v4013 = vphi 0, %v8054
          %s4014 = sphi 0, %s8047
          %p4015 = pphi 0, %p8049
        $region203: #{generate_ids.1} parent=119 // loop_header_branch
          %4011 = sbr.rel (%p4009) target = $region207
        $region204: #{generate_ids.1} parent=119 // loop_body
          %v4016 = vstv %s4014
          %vm4017 = vcmp.eq.s32.totalorder %v4006, %v4016
          %v4018 = vsel %vm4017, 1, 0
          %v4019 = vcvt.s32.f32 %v4018
          %v4020 = vpack.c.bf16 %v4019, %v4019
          %v4037 = vunpack.c.l.b16 %v3973
          %v4038 = vunpack.c.l.b16 %v3974
          %v4039 = vunpack.c.l.b16 %v3975
          %v4040 = vunpack.c.l.b16 %v3976
          %v4041 = vunpack.c.l.b16 %v3977
          %v4042 = vunpack.c.l.b16 %v3978
          %v4043 = vunpack.c.l.b16 %v3979
          %v4044 = vunpack.c.l.b16 %v3980
          %v4045 = vunpack.c.l.b16 %v3981
          %v4046 = vunpack.c.l.b16 %v3982
          %v4047 = vunpack.c.l.b16 %v3983
          %v4048 = vunpack.c.l.b16 %v3984
          %v4049 = vunpack.c.l.b16 %v3985
          %v4050 = vunpack.c.l.b16 %v3986
          %v4051 = vunpack.c.l.b16 %v3987
          %v4052 = vunpack.c.l.b16 %v3988
          %v4053 = vpack.c.b16 %v4038, %v4037
          %v4054 = vpack.c.b16 %v4040, %v4039
          %v4055 = vpack.c.b16 %v4042, %v4041
          %v4056 = vpack.c.b16 %v4044, %v4043
          %v4057 = vpack.c.b16 %v4046, %v4045
          %v4058 = vpack.c.b16 %v4048, %v4047
          %v4059 = vpack.c.b16 %v4050, %v4049
          %v4060 = vpack.c.b16 %v4052, %v4051
          %4069 = vmatprep.subr.bf16.mxu0 0
          %4070 = vmatpush1.bf16.msra.mxu0 %v4060
          %4071 = vmatprep.subr.bf16.mxu0 0
          %4072 = vmatpush1.bf16.msra.mxu0 %v4059
          %4073 = vmatprep.subr.bf16.mxu0 0
          %4074 = vmatpush1.bf16.msra.mxu0 %v4058
          %4075 = vmatprep.subr.bf16.mxu0 0
          %4076 = vmatpush1.bf16.msra.mxu0 %v4057
          %4077 = vmatprep.subr.bf16.mxu0 0
          %4078 = vmatpush1.bf16.msra.mxu0 %v4056
          %4079 = vmatprep.subr.bf16.mxu0 0
          %4080 = vmatpush1.bf16.msra.mxu0 %v4055
          %4081 = vmatprep.subr.bf16.mxu0 0
          %4082 = vmatpush1.bf16.msra.mxu0 %v4054
          %4083 = vmatprep.subr.bf16.mxu0 0
          %4084 = vmatpush1.bf16.msra.mxu0 %v4053
          %4085 = vmatprep.subr.bf16.mxu0 0
          %4086 = vmatpush2.bf16.msra.mxu0 0
          %4087 = vmatprep.subr.bf16.mxu0 0
          %4088 = vmatpush2.bf16.msra.mxu0 0
          %4089 = vmatprep.subr.bf16.mxu0 0
          %4090 = vmatpush2.bf16.msra.mxu0 0
          %4091 = vmatprep.subr.bf16.mxu0 0
          %4092 = vmatpush2.bf16.msra.mxu0 0
          %4093 = vmatprep.subr.bf16.mxu0 0
          %4094 = vmatpush2.bf16.msra.mxu0 0
          %4095 = vmatprep.subr.bf16.mxu0 0
          %4096 = vmatpush2.bf16.msra.mxu0 0
          %4097 = vmatprep.subr.bf16.mxu0 0
          %4098 = vmatpush2.bf16.msra.mxu0 0
          %4099 = vmatprep.subr.bf16.mxu0 0
          %4100 = vmatpush2.bf16.msra.mxu0 0
          %4101 = vmatprep.mubr.bf16.mxu0 0
          %4102 = vmatmul.mubr.bf16.gmra.mxu0 %v4020
          %v4103 = vpop.f32.mrf.mxu0
          %v4104 = vadd.f32 0.0, %v4103
          %v4105 = vpop.f32.mrf.mxu0
          %v4106 = vpop.f32.mrf.mxu0
          %v4107 = vpop.f32.mrf.mxu0
          %4108 = vdwg.mxu0
          %v4109 = vld [vmem:[#allocation17] sm:$0x1]
          %v4110 = vmul.f32 %v4104, %v4104
          %vm4111 = vcmask 1040384
          %v4112 = vsel %vm4111, %v4110, 0.0
          %4113 = vadd.xlane.f32.xlu0 %v4112
          %v4114 = vpop.xlane.xlu0 %4113
          %v4115 = vmul.f32 %v4114, %v1115
          %v4116 = vadd.f32 %v4115, 1e-06
          %v4117 = vrsqrt.pop %v4116
          %v4118 = vmul.f32 %v4104, %v4117
          %v4119 = vmul.f32 %v4118, %v4109
          %v4120 = vpack.c.bf16 %v4119, %v4119
          %v4121 = vld [vmem:[#allocation18] sm:$0xf]
          %v4122 = vld [vmem:[#allocation18 + $0x4] sm:$0xf]
          %v4123 = vld [vmem:[#allocation18 + $0x8] sm:$0xf]
          %v4124 = vld [vmem:[#allocation18 + $0xc] sm:$0xf]
          %v4125 = vld [vmem:[#allocation18 + $0x10] sm:$0xf]
          %v4126 = vld [vmem:[#allocation18 + $0x14] sm:$0xf]
          %v4127 = vld [vmem:[#allocation18 + $0x18] sm:$0xf]
          %v4128 = vld [vmem:[#allocation18 + $0x1c] sm:$0xf]
          %v4129 = vld [vmem:[#allocation18 + $0x20] sm:$0xf]
          %v4130 = vld [vmem:[#allocation18 + $0x24] sm:$0xf]
          %v4131 = vld [vmem:[#allocation18 + $0x28] sm:$0xf]
          %v4132 = vld [vmem:[#allocation18 + $0x2c] sm:$0xf]
          %v4133 = vld [vmem:[#allocation18 + $0x30] sm:$0xf]
          %v4134 = vld [vmem:[#allocation18 + $0x34] sm:$0xf]
          %v4135 = vld [vmem:[#allocation18 + $0x38] sm:$0xf]
          %v4136 = vld [vmem:[#allocation18 + $0x3c] sm:$0xf]
          %v4153 = vunpack.c.l.b16 %v4121
          %v4154 = vunpack.c.l.b16 %v4122
          %v4155 = vunpack.c.l.b16 %v4123
          %v4156 = vunpack.c.l.b16 %v4124
          %v4157 = vunpack.c.l.b16 %v4125
          %v4158 = vunpack.c.l.b16 %v4126
          %v4159 = vunpack.c.l.b16 %v4127
          %v4160 = vunpack.c.l.b16 %v4128
          %v4161 = vunpack.c.l.b16 %v4129
          %v4162 = vunpack.c.l.b16 %v4130
          %v4163 = vunpack.c.l.b16 %v4131
          %v4164 = vunpack.c.l.b16 %v4132
          %v4165 = vunpack.c.l.b16 %v4133
          %v4166 = vunpack.c.l.b16 %v4134
          %v4167 = vunpack.c.l.b16 %v4135
          %v4168 = vunpack.c.l.b16 %v4136
          %v4169 = vpack.c.b16 %v4154, %v4153
          %v4170 = vpack.c.b16 %v4156, %v4155
          %v4171 = vpack.c.b16 %v4158, %v4157
          %v4172 = vpack.c.b16 %v4160, %v4159
          %v4173 = vpack.c.b16 %v4162, %v4161
          %v4174 = vpack.c.b16 %v4164, %v4163
          %v4175 = vpack.c.b16 %v4166, %v4165
          %v4176 = vpack.c.b16 %v4168, %v4167
          %4185 = vmatprep.subr.bf16.mxu0 0
          %4186 = vmatpush1.bf16.msra.mxu0 %v4176
          %4187 = vmatprep.subr.bf16.mxu0 0
          %4188 = vmatpush1.bf16.msra.mxu0 %v4175
          %4189 = vmatprep.subr.bf16.mxu0 0
          %4190 = vmatpush1.bf16.msra.mxu0 %v4174
          %4191 = vmatprep.subr.bf16.mxu0 0
          %4192 = vmatpush1.bf16.msra.mxu0 %v4173
          %4193 = vmatprep.subr.bf16.mxu0 0
          %4194 = vmatpush1.bf16.msra.mxu0 %v4172
          %4195 = vmatprep.subr.bf16.mxu0 0
          %4196 = vmatpush1.bf16.msra.mxu0 %v4171
          %4197 = vmatprep.subr.bf16.mxu0 0
          %4198 = vmatpush1.bf16.msra.mxu0 %v4170
          %4199 = vmatprep.subr.bf16.mxu0 0
          %4200 = vmatpush1.bf16.msra.mxu0 %v4169
          %4201 = vmatprep.subr.bf16.mxu0 0
          %4202 = vmatpush2.bf16.msra.mxu0 0
          %4203 = vmatprep.subr.bf16.mxu0 0
          %4204 = vmatpush2.bf16.msra.mxu0 0
          %4205 = vmatprep.subr.bf16.mxu0 0
          %4206 = vmatpush2.bf16.msra.mxu0 0
          %4207 = vmatprep.subr.bf16.mxu0 0
          %4208 = vmatpush2.bf16.msra.mxu0 0
          %4209 = vmatprep.subr.bf16.mxu0 0
          %4210 = vmatpush2.bf16.msra.mxu0 0
          %4211 = vmatprep.subr.bf16.mxu0 0
          %4212 = vmatpush2.bf16.msra.mxu0 0
          %4213 = vmatprep.subr.bf16.mxu0 0
          %4214 = vmatpush2.bf16.msra.mxu0 0
          %4215 = vmatprep.subr.bf16.mxu0 0
          %4216 = vmatpush2.bf16.msra.mxu0 0
          %4217 = vmatprep.mubr.bf16.mxu0 0
          %4218 = vmatmul.mubr.bf16.gmra.mxu0 %v4120
          %v4219 = vpop.f32.mrf.mxu0
          %v4220 = vadd.f32 0.0, %v4219
          %v4221 = vpop.f32.mrf.mxu0
          %v4222 = vpop.f32.mrf.mxu0
          %v4223 = vpop.f32.mrf.mxu0
          %4224 = vdwg.mxu0
          %v4225 = vld [vmem:[#allocation20] sm:$0xff]
          %v4226 = vld [vmem:[#allocation20 + $0x8] sm:$0xff]
          %v4227 = vld [vmem:[#allocation20 + $0x10] sm:$0xff]
          %v4228 = vld [vmem:[#allocation20 + $0x18] sm:$0xff]
          %v4229 = vld [vmem:[#allocation20 + $0x20] sm:$0xff]
          %v4230 = vld [vmem:[#allocation20 + $0x28] sm:$0xff]
          %v4231 = vld [vmem:[#allocation20 + $0x30] sm:$0xff]
          %v4232 = vld [vmem:[#allocation20 + $0x38] sm:$0xff]
          %v4233 = vld [vmem:[#allocation20 + $0x40] sm:$0xff]
          %v4234 = vld [vmem:[#allocation20 + $0x48] sm:$0xff]
          %v4235 = vld [vmem:[#allocation20 + $0x50] sm:$0xff]
          %v4236 = vld [vmem:[#allocation20 + $0x58] sm:$0xff]
          %v4237 = vld [vmem:[#allocation20 + $0x60] sm:$0xff]
          %v4238 = vld [vmem:[#allocation20 + $0x68] sm:$0xff]
          %v4239 = vld [vmem:[#allocation20 + $0x70] sm:$0xff]
          %v4240 = vld [vmem:[#allocation20 + $0x78] sm:$0xff]
          %v4257 = vunpack.c.l.b16 %v4225
          %v4258 = vunpack.c.h.b16 %v4225
          %v4259 = vunpack.c.l.b16 %v4226
          %v4260 = vunpack.c.h.b16 %v4226
          %v4261 = vunpack.c.l.b16 %v4227
          %v4262 = vunpack.c.h.b16 %v4227
          %v4263 = vunpack.c.l.b16 %v4228
          %v4264 = vunpack.c.h.b16 %v4228
          %v4265 = vunpack.c.l.b16 %v4229
          %v4266 = vunpack.c.h.b16 %v4229
          %v4267 = vunpack.c.l.b16 %v4230
          %v4268 = vunpack.c.h.b16 %v4230
          %v4269 = vunpack.c.l.b16 %v4231
          %v4270 = vunpack.c.h.b16 %v4231
          %v4271 = vunpack.c.l.b16 %v4232
          %v4272 = vunpack.c.h.b16 %v4232
          %v4273 = vunpack.c.l.b16 %v4233
          %v4274 = vunpack.c.h.b16 %v4233
          %v4275 = vunpack.c.l.b16 %v4234
          %v4276 = vunpack.c.h.b16 %v4234
          %v4277 = vunpack.c.l.b16 %v4235
          %v4278 = vunpack.c.h.b16 %v4235
          %v4279 = vunpack.c.l.b16 %v4236
          %v4280 = vunpack.c.h.b16 %v4236
          %v4281 = vunpack.c.l.b16 %v4237
          %v4282 = vunpack.c.h.b16 %v4237
          %v4283 = vunpack.c.l.b16 %v4238
          %v4284 = vunpack.c.h.b16 %v4238
          %v4285 = vunpack.c.l.b16 %v4239
          %v4286 = vunpack.c.h.b16 %v4239
          %v4287 = vunpack.c.l.b16 %v4240
          %v4288 = vunpack.c.h.b16 %v4240
          %v4289 = vpack.c.b16 %v4259, %v4257
          %v4290 = vpack.c.b16 %v4260, %v4258
          %v4291 = vpack.c.b16 %v4263, %v4261
          %v4292 = vpack.c.b16 %v4264, %v4262
          %v4293 = vpack.c.b16 %v4267, %v4265
          %v4294 = vpack.c.b16 %v4268, %v4266
          %v4295 = vpack.c.b16 %v4271, %v4269
          %v4296 = vpack.c.b16 %v4272, %v4270
          %v4297 = vpack.c.b16 %v4275, %v4273
          %v4298 = vpack.c.b16 %v4276, %v4274
          %v4299 = vpack.c.b16 %v4279, %v4277
          %v4300 = vpack.c.b16 %v4280, %v4278
          %v4301 = vpack.c.b16 %v4283, %v4281
          %v4302 = vpack.c.b16 %v4284, %v4282
          %v4303 = vpack.c.b16 %v4287, %v4285
          %v4304 = vpack.c.b16 %v4288, %v4286
          %4321 = vmatprep.subr.bf16.mxu0 %v4304
          %4322 = vmatpush1.bf16.msra.mxu0 %v4303
          %4323 = vmatprep.subr.bf16.mxu0 %v4302
          %4324 = vmatpush1.bf16.msra.mxu0 %v4301
          %4325 = vmatprep.subr.bf16.mxu0 %v4300
          %4326 = vmatpush1.bf16.msra.mxu0 %v4299
          %4327 = vmatprep.subr.bf16.mxu0 %v4298
          %4328 = vmatpush1.bf16.msra.mxu0 %v4297
          %4329 = vmatprep.subr.bf16.mxu0 %v4296
          %4330 = vmatpush1.bf16.msra.mxu0 %v4295
          %4331 = vmatprep.subr.bf16.mxu0 %v4294
          %4332 = vmatpush1.bf16.msra.mxu0 %v4293
          %4333 = vmatprep.subr.bf16.mxu0 %v4292
          %4334 = vmatpush1.bf16.msra.mxu0 %v4291
          %4335 = vmatprep.subr.bf16.mxu0 %v4290
          %4336 = vmatpush1.bf16.msra.mxu0 %v4289
          %4337 = vmatprep.subr.bf16.mxu0 0
          %4338 = vmatpush2.bf16.msra.mxu0 0
          %4339 = vmatprep.subr.bf16.mxu0 0
          %4340 = vmatpush2.bf16.msra.mxu0 0
          %4341 = vmatprep.subr.bf16.mxu0 0
          %4342 = vmatpush2.bf16.msra.mxu0 0
          %4343 = vmatprep.subr.bf16.mxu0 0
          %4344 = vmatpush2.bf16.msra.mxu0 0
          %4345 = vmatprep.subr.bf16.mxu0 0
          %4346 = vmatpush2.bf16.msra.mxu0 0
          %4347 = vmatprep.subr.bf16.mxu0 0
          %4348 = vmatpush2.bf16.msra.mxu0 0
          %4349 = vmatprep.subr.bf16.mxu0 0
          %4350 = vmatpush2.bf16.msra.mxu0 0
          %4351 = vmatprep.subr.bf16.mxu0 0
          %4352 = vmatpush2.bf16.msra.mxu0 0
          %4353 = vmatprep.mubr.bf16.mxu0 0
          %4354 = vmatmul.mubr.bf16.gmra.mxu0 %v4120
          %v4355 = vpop.f32.mrf.mxu0
          %v4356 = vadd.f32 0.0, %v4355
          %v4357 = vpop.f32.mrf.mxu0
          %v4358 = vadd.f32 0.0, %v4357
          %v4359 = vpop.f32.mrf.mxu0
          %v4360 = vpop.f32.mrf.mxu0
          %4361 = vdwg.mxu0
          %v4364 = vcombine.low %v4356, %v4358
          %v4366 = vunpack.c.l.s4 1966171168
          %v4367 = vunpack.c.0.s8 %v4366
          %v4368 = vlaneseq
          %v4369 = vshrl.u32 %v4368, 7
          %v4370 = vsub.s32 %v4367, %v4369
          %v4371 = vrot.slane %v4364, %v4370
          %v4373 = vunpack.c.l.s4 1966171168
          %v4374 = vunpack.c.0.s8 %v4373
          %v4375 = vlaneseq
          %v4376 = vshrl.u32 %v4375, 7
          %v4377 = vsub.s32 %v4374, %v4376
          %v4378 = vrot.slane %v4371, %v4377
          %v4380 = vlaneseq
          %vm4381 = vcmp.ge.s32.totalorder %v4380, 0
          %vm4382 = vcmp.lt.s32.totalorder %v4380, 256
          %vm4383 = vmand %vm4381, %vm4382
          %s4384 = sshra.s32 %s4008, 3
          %s4385 = sand.u32 %s4008, 7
          %s4386 = sshra.s32 %s4008, 3
          %s4387 = sand.u32 %s4008, 7
          %s4388 = smul.u32 %s4384, 2
          %s4389 = smul.u32 %s4388, 8
          %s4390 = sadd.s32 %s4389, %s4387
          %s4391 = scalar_lea.vmem [#allocation2], %s4390
          %4392 = vst.msk [vmem:[%s4391] ss:$8 sm:$0x3] %vm4383, %v4378
          %4393 = vst.msk [vmem:[%s4391] ss:$8 sm:$0x0] %vm4383, %v4378
          %v4394 = vld [vmem:[#allocation2] sm:$0xff]
          %v4395 = vld [vmem:[#allocation2 + $0x8] sm:$0xff]
          %v4396 = vld [vmem:[#allocation2 + $0x10] sm:$0xff]
          %v4397 = vld [vmem:[#allocation2 + $0x18] sm:$0xff]
          %s4398 = scalar_lea.vmem [#allocation8], %s4008
          %v4399 = vld [vmem:[%s4398] sm:$0x1]
          %v4400 = vld [vmem:[%s4398 + $0x10] sm:$0x1]
          %v4401 = vld [vmem:[%s4398 + $0x20] sm:$0x1]
          %v4402 = vld [vmem:[%s4398 + $0x30] sm:$0x1]
          %v4403 = vld [vmem:[#allocation21] sm:$0xf]
          %v4404 = vld [vmem:[#allocation21 + $0x4] sm:$0xf]
          %v4405 = vld [vmem:[#allocation21 + $0x8] sm:$0xf]
          %v4406 = vld [vmem:[#allocation21 + $0xc] sm:$0xf]
          %v4407 = vld [vmem:[#allocation21 + $0x10] sm:$0xf]
          %v4408 = vld [vmem:[#allocation21 + $0x14] sm:$0xf]
          %v4409 = vld [vmem:[#allocation21 + $0x18] sm:$0xf]
          %v4410 = vld [vmem:[#allocation21 + $0x1c] sm:$0xf]
          %v4411 = vld [vmem:[#allocation21 + $0x20] sm:$0xf]
          %v4412 = vld [vmem:[#allocation21 + $0x24] sm:$0xf]
          %v4413 = vld [vmem:[#allocation21 + $0x28] sm:$0xf]
          %v4414 = vld [vmem:[#allocation21 + $0x2c] sm:$0xf]
          %v4415 = vld [vmem:[#allocation21 + $0x30] sm:$0xf]
          %v4416 = vld [vmem:[#allocation21 + $0x34] sm:$0xf]
          %v4417 = vld [vmem:[#allocation21 + $0x38] sm:$0xf]
          %v4418 = vld [vmem:[#allocation21 + $0x3c] sm:$0xf]
          %4420 = vrot.lane.b32.xlu0 %v4220, 96
          %v4421 = vpop.permute.xlu0 %4420
          %4423 = vrot.lane.b32.xlu0 %v4220, 64
          %v4424 = vpop.permute.xlu0 %4423
          %4426 = vrot.lane.b32.xlu0 %v4220, 32
          %v4427 = vpop.permute.xlu0 %4426
          %v4429 = vpack.c.bf16 %v4220, %v4220
          %v4430 = vpack.c.bf16 %v4421, %v4421
          %v4431 = vpack.c.bf16 %v4424, %v4424
          %v4432 = vpack.c.bf16 %v4427, %v4427
          %4435 = vrot.lane.b32.xlu0 %v4394, 96
          %v4436 = vpop.permute.xlu0 %4435
          %4437 = vrot.lane.b32.xlu0 %v4396, 96
          %v4438 = vpop.permute.xlu0 %4437
          %4441 = vrot.lane.b32.xlu0 %v4394, 64
          %v4442 = vpop.permute.xlu0 %4441
          %4443 = vrot.lane.b32.xlu0 %v4396, 64
          %v4444 = vpop.permute.xlu0 %4443
          %4447 = vrot.lane.b32.xlu0 %v4394, 32
          %v4448 = vpop.permute.xlu0 %4447
          %4449 = vrot.lane.b32.xlu0 %v4396, 32
          %v4450 = vpop.permute.xlu0 %4449
          %v4453 = vpack.c.bf16 %v4396, %v4394
          %v4454 = vpack.c.bf16 %v4438, %v4436
          %v4455 = vpack.c.bf16 %v4444, %v4442
          %v4456 = vpack.c.bf16 %v4450, %v4448
          %4459 = vrot.lane.b32.xlu0 %v4395, 96
          %v4460 = vpop.permute.xlu0 %4459
          %4461 = vrot.lane.b32.xlu0 %v4397, 96
          %v4462 = vpop.permute.xlu0 %4461
          %4465 = vrot.lane.b32.xlu0 %v4395, 64
          %v4466 = vpop.permute.xlu0 %4465
          %4467 = vrot.lane.b32.xlu0 %v4397, 64
          %v4468 = vpop.permute.xlu0 %4467
          %4471 = vrot.lane.b32.xlu0 %v4395, 32
          %v4472 = vpop.permute.xlu0 %4471
          %4473 = vrot.lane.b32.xlu0 %v4397, 32
          %v4474 = vpop.permute.xlu0 %4473
          %v4477 = vpack.c.bf16 %v4397, %v4395
          %v4478 = vpack.c.bf16 %v4462, %v4460
          %v4479 = vpack.c.bf16 %v4468, %v4466
          %v4480 = vpack.c.bf16 %v4474, %v4472
          %v4482 = vsel %vm1465, %v4429, 0
          %v4485 = vsel %vm1465, %v4453, 0
          %4487 = vmatprep.subr.bf16.mxu0 0
          %4488 = vmatpush1.bf16.xpose.msra.mxu0 0
          %4489 = vmatprep.subr.bf16.mxu0 0
          %4490 = vmatpush1.bf16.xpose.msra.mxu0 0
          %4491 = vmatprep.subr.bf16.mxu0 0
          %4492 = vmatpush1.bf16.xpose.msra.mxu0 0
          %4493 = vmatprep.subr.bf16.mxu0 0
          %4494 = vmatpush1.bf16.xpose.msra.mxu0 0
          %4495 = vmatprep.subr.bf16.mxu0 0
          %4496 = vmatpush1.bf16.xpose.msra.mxu0 0
          %4497 = vmatprep.subr.bf16.mxu0 0
          %4498 = vmatpush1.bf16.xpose.msra.mxu0 0
          %4499 = vmatprep.subr.bf16.mxu0 0
          %4500 = vmatpush1.bf16.xpose.msra.mxu0 0
          %4501 = vmatprep.subr.bf16.mxu0 0
          %4502 = vmatpush1.bf16.xpose.msra.mxu0 %v4485
          %4503 = vmatprep.subr.bf16.mxu0 0
          %4504 = vmatpush2.bf16.xpose.msra.mxu0 0
          %4505 = vmatprep.subr.bf16.mxu0 0
          %4506 = vmatpush2.bf16.xpose.msra.mxu0 0
          %4507 = vmatprep.subr.bf16.mxu0 0
          %4508 = vmatpush2.bf16.xpose.msra.mxu0 0
          %4509 = vmatprep.subr.bf16.mxu0 0
          %4510 = vmatpush2.bf16.xpose.msra.mxu0 0
          %4511 = vmatprep.subr.bf16.mxu0 0
          %4512 = vmatpush2.bf16.xpose.msra.mxu0 0
          %4513 = vmatprep.subr.bf16.mxu0 0
          %4514 = vmatpush2.bf16.xpose.msra.mxu0 0
          %4515 = vmatprep.subr.bf16.mxu0 0
          %4516 = vmatpush2.bf16.xpose.msra.mxu0 0
          %4517 = vmatprep.subr.bf16.mxu0 0
          %4518 = vmatpush2.bf16.xpose.msra.mxu0 0
          %4519 = vmatprep.mubr.bf16.mxu0 0
          %4520 = vmatmul.mubr.bf16.gmra.mxu0 %v4482
          %v4521 = vpop.f32.mrf.mxu0
          %v4522 = vadd.f32 %v4399, %v4521
          %v4523 = vpop.f32.mrf.mxu0
          %v4524 = vpop.f32.mrf.mxu0
          %v4525 = vpop.f32.mrf.mxu0
          %4526 = vdwg.mxu0
          %v4528 = vsel %vm1465, %v4430, 0
          %v4531 = vsel %vm1465, %v4454, 0
          %4533 = vmatprep.subr.bf16.mxu0 0
          %4534 = vmatpush1.bf16.xpose.msra.mxu0 0
          %4535 = vmatprep.subr.bf16.mxu0 0
          %4536 = vmatpush1.bf16.xpose.msra.mxu0 0
          %4537 = vmatprep.subr.bf16.mxu0 0
          %4538 = vmatpush1.bf16.xpose.msra.mxu0 0
          %4539 = vmatprep.subr.bf16.mxu0 0
          %4540 = vmatpush1.bf16.xpose.msra.mxu0 0
          %4541 = vmatprep.subr.bf16.mxu0 0
          %4542 = vmatpush1.bf16.xpose.msra.mxu0 0
          %4543 = vmatprep.subr.bf16.mxu0 0
          %4544 = vmatpush1.bf16.xpose.msra.mxu0 0
          %4545 = vmatprep.subr.bf16.mxu0 0
          %4546 = vmatpush1.bf16.xpose.msra.mxu0 0
          %4547 = vmatprep.subr.bf16.mxu0 0
          %4548 = vmatpush1.bf16.xpose.msra.mxu0 %v4531
          %4549 = vmatprep.subr.bf16.mxu0 0
          %4550 = vmatpush2.bf16.xpose.msra.mxu0 0
          %4551 = vmatprep.subr.bf16.mxu0 0
          %4552 = vmatpush2.bf16.xpose.msra.mxu0 0
          %4553 = vmatprep.subr.bf16.mxu0 0
          %4554 = vmatpush2.bf16.xpose.msra.mxu0 0
          %4555 = vmatprep.subr.bf16.mxu0 0
          %4556 = vmatpush2.bf16.xpose.msra.mxu0 0
          %4557 = vmatprep.subr.bf16.mxu0 0
          %4558 = vmatpush2.bf16.xpose.msra.mxu0 0
          %4559 = vmatprep.subr.bf16.mxu0 0
          %4560 = vmatpush2.bf16.xpose.msra.mxu0 0
          %4561 = vmatprep.subr.bf16.mxu0 0
          %4562 = vmatpush2.bf16.xpose.msra.mxu0 0
          %4563 = vmatprep.subr.bf16.mxu0 0
          %4564 = vmatpush2.bf16.xpose.msra.mxu0 0
          %4565 = vmatprep.mubr.bf16.mxu0 0
          %4566 = vmatmul.mubr.bf16.gmra.mxu0 %v4528
          %v4567 = vpop.f32.mrf.mxu0
          %v4568 = vadd.f32 %v4400, %v4567
          %v4569 = vpop.f32.mrf.mxu0
          %v4570 = vpop.f32.mrf.mxu0
          %v4571 = vpop.f32.mrf.mxu0
          %4572 = vdwg.mxu0
          %v4574 = vsel %vm1465, %v4431, 0
          %v4577 = vsel %vm1465, %v4455, 0
          %4579 = vmatprep.subr.bf16.mxu0 0
          %4580 = vmatpush1.bf16.xpose.msra.mxu0 0
          %4581 = vmatprep.subr.bf16.mxu0 0
          %4582 = vmatpush1.bf16.xpose.msra.mxu0 0
          %4583 = vmatprep.subr.bf16.mxu0 0
          %4584 = vmatpush1.bf16.xpose.msra.mxu0 0
          %4585 = vmatprep.subr.bf16.mxu0 0
          %4586 = vmatpush1.bf16.xpose.msra.mxu0 0
          %4587 = vmatprep.subr.bf16.mxu0 0
          %4588 = vmatpush1.bf16.xpose.msra.mxu0 0
          %4589 = vmatprep.subr.bf16.mxu0 0
          %4590 = vmatpush1.bf16.xpose.msra.mxu0 0
          %4591 = vmatprep.subr.bf16.mxu0 0
          %4592 = vmatpush1.bf16.xpose.msra.mxu0 0
          %4593 = vmatprep.subr.bf16.mxu0 0
          %4594 = vmatpush1.bf16.xpose.msra.mxu0 %v4577
          %4595 = vmatprep.subr.bf16.mxu0 0
          %4596 = vmatpush2.bf16.xpose.msra.mxu0 0
          %4597 = vmatprep.subr.bf16.mxu0 0
          %4598 = vmatpush2.bf16.xpose.msra.mxu0 0
          %4599 = vmatprep.subr.bf16.mxu0 0
          %4600 = vmatpush2.bf16.xpose.msra.mxu0 0
          %4601 = vmatprep.subr.bf16.mxu0 0
          %4602 = vmatpush2.bf16.xpose.msra.mxu0 0
          %4603 = vmatprep.subr.bf16.mxu0 0
          %4604 = vmatpush2.bf16.xpose.msra.mxu0 0
          %4605 = vmatprep.subr.bf16.mxu0 0
          %4606 = vmatpush2.bf16.xpose.msra.mxu0 0
          %4607 = vmatprep.subr.bf16.mxu0 0
          %4608 = vmatpush2.bf16.xpose.msra.mxu0 0
          %4609 = vmatprep.subr.bf16.mxu0 0
          %4610 = vmatpush2.bf16.xpose.msra.mxu0 0
          %4611 = vmatprep.mubr.bf16.mxu0 0
          %4612 = vmatmul.mubr.bf16.gmra.mxu0 %v4574
          %v4613 = vpop.f32.mrf.mxu0
          %v4614 = vadd.f32 %v4401, %v4613
          %v4615 = vpop.f32.mrf.mxu0
          %v4616 = vpop.f32.mrf.mxu0
          %v4617 = vpop.f32.mrf.mxu0
          %4618 = vdwg.mxu0
          %v4620 = vsel %vm1465, %v4432, 0
          %v4623 = vsel %vm1465, %v4456, 0
          %4625 = vmatprep.subr.bf16.mxu0 0
          %4626 = vmatpush1.bf16.xpose.msra.mxu0 0
          %4627 = vmatprep.subr.bf16.mxu0 0
          %4628 = vmatpush1.bf16.xpose.msra.mxu0 0
          %4629 = vmatprep.subr.bf16.mxu0 0
          %4630 = vmatpush1.bf16.xpose.msra.mxu0 0
          %4631 = vmatprep.subr.bf16.mxu0 0
          %4632 = vmatpush1.bf16.xpose.msra.mxu0 0
          %4633 = vmatprep.subr.bf16.mxu0 0
          %4634 = vmatpush1.bf16.xpose.msra.mxu0 0
          %4635 = vmatprep.subr.bf16.mxu0 0
          %4636 = vmatpush1.bf16.xpose.msra.mxu0 0
          %4637 = vmatprep.subr.bf16.mxu0 0
          %4638 = vmatpush1.bf16.xpose.msra.mxu0 0
          %4639 = vmatprep.subr.bf16.mxu0 0
          %4640 = vmatpush1.bf16.xpose.msra.mxu0 %v4623
          %4641 = vmatprep.subr.bf16.mxu0 0
          %4642 = vmatpush2.bf16.xpose.msra.mxu0 0
          %4643 = vmatprep.subr.bf16.mxu0 0
          %4644 = vmatpush2.bf16.xpose.msra.mxu0 0
          %4645 = vmatprep.subr.bf16.mxu0 0
          %4646 = vmatpush2.bf16.xpose.msra.mxu0 0
          %4647 = vmatprep.subr.bf16.mxu0 0
          %4648 = vmatpush2.bf16.xpose.msra.mxu0 0
          %4649 = vmatprep.subr.bf16.mxu0 0
          %4650 = vmatpush2.bf16.xpose.msra.mxu0 0
          %4651 = vmatprep.subr.bf16.mxu0 0
          %4652 = vmatpush2.bf16.xpose.msra.mxu0 0
          %4653 = vmatprep.subr.bf16.mxu0 0
          %4654 = vmatpush2.bf16.xpose.msra.mxu0 0
          %4655 = vmatprep.subr.bf16.mxu0 0
          %4656 = vmatpush2.bf16.xpose.msra.mxu0 0
          %4657 = vmatprep.mubr.bf16.mxu0 0
          %4658 = vmatmul.mubr.bf16.gmra.mxu0 %v4620
          %v4659 = vpop.f32.mrf.mxu0
          %v4660 = vadd.f32 %v4402, %v4659
          %v4661 = vpop.f32.mrf.mxu0
          %v4662 = vpop.f32.mrf.mxu0
          %v4663 = vpop.f32.mrf.mxu0
          %4664 = vdwg.mxu0
          %vm4665 = vcmask 122880
          %v4666 = vsel %vm4665, %v4522, -inf
          %4667 = vmax.xlane.f32.xlu0 %v4666
          %v4668 = vpop.xlane.xlu0 %4667
          %v4669 = vsel %vm4665, %v4568, -inf
          %4670 = vmax.xlane.f32.xlu0 %v4669
          %v4671 = vpop.xlane.xlu0 %4670
          %v4672 = vsel %vm4665, %v4614, -inf
          %4673 = vmax.xlane.f32.xlu0 %v4672
          %v4674 = vpop.xlane.xlu0 %4673
          %v4675 = vsel %vm4665, %v4660, -inf
          %4676 = vmax.xlane.f32.xlu0 %v4675
          %v4677 = vpop.xlane.xlu0 %4676
          %v4678 = vsub.f32 %v4522, %v4668
          %v4679 = vsub.f32 %v4568, %v4671
          %v4680 = vsub.f32 %v4614, %v4674
          %v4681 = vsub.f32 %v4660, %v4677
          %v4682 = vmul.f32 %v4678, 1.442695
          %v4683 = vpow.pop %v4682
          %v4684 = vmul.f32 %v4679, 1.442695
          %v4685 = vpow.pop %v4684
          %v4686 = vmul.f32 %v4680, 1.442695
          %v4687 = vpow.pop %v4686
          %v4688 = vmul.f32 %v4681, 1.442695
          %v4689 = vpow.pop %v4688
          %v4690 = vsel %vm4665, %v4683, 0.0
          %4691 = vadd.xlane.f32.xlu0 %v4690
          %v4692 = vpop.xlane.xlu0 %4691
          %v4693 = vsel %vm4665, %v4685, 0.0
          %4694 = vadd.xlane.f32.xlu0 %v4693
          %v4695 = vpop.xlane.xlu0 %4694
          %v4696 = vsel %vm4665, %v4687, 0.0
          %4697 = vadd.xlane.f32.xlu0 %v4696
          %v4698 = vpop.xlane.xlu0 %4697
          %v4699 = vsel %vm4665, %v4689, 0.0
          %4700 = vadd.xlane.f32.xlu0 %v4699
          %v4701 = vpop.xlane.xlu0 %4700
          %v4702 = vrcp.pop %v4692
          %v4703 = vrcp.pop %v4695
          %v4704 = vrcp.pop %v4698
          %v4705 = vrcp.pop %v4701
          %v4706 = vmul.f32 %v4683, %v4702
          %v4707 = vmul.f32 %v4685, %v4703
          %v4708 = vmul.f32 %v4687, %v4704
          %v4709 = vmul.f32 %v4689, %v4705
          %v4710 = vpack.c.bf16 %v4706, %v4706
          %v4711 = vpack.c.bf16 %v4707, %v4707
          %v4712 = vpack.c.bf16 %v4708, %v4708
          %v4713 = vpack.c.bf16 %v4709, %v4709
          %v4715 = vsel %vm1654, %v4710, 0
          %4717 = vmatprep.subr.bf16.mxu0 0
          %4718 = vmatpush1.bf16.msra.mxu0 0
          %4719 = vmatprep.subr.bf16.mxu0 0
          %4720 = vmatpush1.bf16.msra.mxu0 0
          %4721 = vmatprep.subr.bf16.mxu0 0
          %4722 = vmatpush1.bf16.msra.mxu0 0
          %4723 = vmatprep.subr.bf16.mxu0 0
          %4724 = vmatpush1.bf16.msra.mxu0 0
          %4725 = vmatprep.subr.bf16.mxu0 0
          %4726 = vmatpush1.bf16.msra.mxu0 0
          %4727 = vmatprep.subr.bf16.mxu0 0
          %4728 = vmatpush1.bf16.msra.mxu0 0
          %4729 = vmatprep.subr.bf16.mxu0 0
          %4730 = vmatpush1.bf16.msra.mxu0 0
          %4731 = vmatprep.subr.bf16.mxu0 0
          %4732 = vmatpush1.bf16.msra.mxu0 %v4477
          %4733 = vmatprep.subr.bf16.mxu0 0
          %4734 = vmatpush2.bf16.msra.mxu0 0
          %4735 = vmatprep.subr.bf16.mxu0 0
          %4736 = vmatpush2.bf16.msra.mxu0 0
          %4737 = vmatprep.subr.bf16.mxu0 0
          %4738 = vmatpush2.bf16.msra.mxu0 0
          %4739 = vmatprep.subr.bf16.mxu0 0
          %4740 = vmatpush2.bf16.msra.mxu0 0
          %4741 = vmatprep.subr.bf16.mxu0 0
          %4742 = vmatpush2.bf16.msra.mxu0 0
          %4743 = vmatprep.subr.bf16.mxu0 0
          %4744 = vmatpush2.bf16.msra.mxu0 0
          %4745 = vmatprep.subr.bf16.mxu0 0
          %4746 = vmatpush2.bf16.msra.mxu0 0
          %4747 = vmatprep.subr.bf16.mxu0 0
          %4748 = vmatpush2.bf16.msra.mxu0 0
          %4749 = vmatprep.mubr.bf16.mxu0 0
          %4750 = vmatmul.mubr.bf16.gmra.mxu0 %v4715
          %v4751 = vpop.f32.mrf.mxu0
          %v4752 = vadd.f32 0.0, %v4751
          %v4753 = vpop.f32.mrf.mxu0
          %v4754 = vpop.f32.mrf.mxu0
          %v4755 = vpop.f32.mrf.mxu0
          %4756 = vdwg.mxu0
          %v4758 = vsel %vm1654, %v4711, 0
          %4760 = vmatprep.subr.bf16.mxu0 0
          %4761 = vmatpush1.bf16.msra.mxu0 0
          %4762 = vmatprep.subr.bf16.mxu0 0
          %4763 = vmatpush1.bf16.msra.mxu0 0
          %4764 = vmatprep.subr.bf16.mxu0 0
          %4765 = vmatpush1.bf16.msra.mxu0 0
          %4766 = vmatprep.subr.bf16.mxu0 0
          %4767 = vmatpush1.bf16.msra.mxu0 0
          %4768 = vmatprep.subr.bf16.mxu0 0
          %4769 = vmatpush1.bf16.msra.mxu0 0
          %4770 = vmatprep.subr.bf16.mxu0 0
          %4771 = vmatpush1.bf16.msra.mxu0 0
          %4772 = vmatprep.subr.bf16.mxu0 0
          %4773 = vmatpush1.bf16.msra.mxu0 0
          %4774 = vmatprep.subr.bf16.mxu0 0
          %4775 = vmatpush1.bf16.msra.mxu0 %v4478
          %4776 = vmatprep.subr.bf16.mxu0 0
          %4777 = vmatpush2.bf16.msra.mxu0 0
          %4778 = vmatprep.subr.bf16.mxu0 0
          %4779 = vmatpush2.bf16.msra.mxu0 0
          %4780 = vmatprep.subr.bf16.mxu0 0
          %4781 = vmatpush2.bf16.msra.mxu0 0
          %4782 = vmatprep.subr.bf16.mxu0 0
          %4783 = vmatpush2.bf16.msra.mxu0 0
          %4784 = vmatprep.subr.bf16.mxu0 0
          %4785 = vmatpush2.bf16.msra.mxu0 0
          %4786 = vmatprep.subr.bf16.mxu0 0
          %4787 = vmatpush2.bf16.msra.mxu0 0
          %4788 = vmatprep.subr.bf16.mxu0 0
          %4789 = vmatpush2.bf16.msra.mxu0 0
          %4790 = vmatprep.subr.bf16.mxu0 0
          %4791 = vmatpush2.bf16.msra.mxu0 0
          %4792 = vmatprep.mubr.bf16.mxu0 0
          %4793 = vmatmul.mubr.bf16.gmra.mxu0 %v4758
          %v4794 = vpop.f32.mrf.mxu0
          %v4795 = vadd.f32 0.0, %v4794
          %v4796 = vpop.f32.mrf.mxu0
          %v4797 = vpop.f32.mrf.mxu0
          %v4798 = vpop.f32.mrf.mxu0
          %4799 = vdwg.mxu0
          %v4801 = vsel %vm1654, %v4712, 0
          %4803 = vmatprep.subr.bf16.mxu0 0
          %4804 = vmatpush1.bf16.msra.mxu0 0
          %4805 = vmatprep.subr.bf16.mxu0 0
          %4806 = vmatpush1.bf16.msra.mxu0 0
          %4807 = vmatprep.subr.bf16.mxu0 0
          %4808 = vmatpush1.bf16.msra.mxu0 0
          %4809 = vmatprep.subr.bf16.mxu0 0
          %4810 = vmatpush1.bf16.msra.mxu0 0
          %4811 = vmatprep.subr.bf16.mxu0 0
          %4812 = vmatpush1.bf16.msra.mxu0 0
          %4813 = vmatprep.subr.bf16.mxu0 0
          %4814 = vmatpush1.bf16.msra.mxu0 0
          %4815 = vmatprep.subr.bf16.mxu0 0
          %4816 = vmatpush1.bf16.msra.mxu0 0
          %4817 = vmatprep.subr.bf16.mxu0 0
          %4818 = vmatpush1.bf16.msra.mxu0 %v4479
          %4819 = vmatprep.subr.bf16.mxu0 0
          %4820 = vmatpush2.bf16.msra.mxu0 0
          %4821 = vmatprep.subr.bf16.mxu0 0
          %4822 = vmatpush2.bf16.msra.mxu0 0
          %4823 = vmatprep.subr.bf16.mxu0 0
          %4824 = vmatpush2.bf16.msra.mxu0 0
          %4825 = vmatprep.subr.bf16.mxu0 0
          %4826 = vmatpush2.bf16.msra.mxu0 0
          %4827 = vmatprep.subr.bf16.mxu0 0
          %4828 = vmatpush2.bf16.msra.mxu0 0
          %4829 = vmatprep.subr.bf16.mxu0 0
          %4830 = vmatpush2.bf16.msra.mxu0 0
          %4831 = vmatprep.subr.bf16.mxu0 0
          %4832 = vmatpush2.bf16.msra.mxu0 0
          %4833 = vmatprep.subr.bf16.mxu0 0
          %4834 = vmatpush2.bf16.msra.mxu0 0
          %4835 = vmatprep.mubr.bf16.mxu0 0
          %4836 = vmatmul.mubr.bf16.gmra.mxu0 %v4801
          %v4837 = vpop.f32.mrf.mxu0
          %v4838 = vadd.f32 0.0, %v4837
          %v4839 = vpop.f32.mrf.mxu0
          %v4840 = vpop.f32.mrf.mxu0
          %v4841 = vpop.f32.mrf.mxu0
          %4842 = vdwg.mxu0
          %v4844 = vsel %vm1654, %v4713, 0
          %4846 = vmatprep.subr.bf16.mxu0 0
          %4847 = vmatpush1.bf16.msra.mxu0 0
          %4848 = vmatprep.subr.bf16.mxu0 0
          %4849 = vmatpush1.bf16.msra.mxu0 0
          %4850 = vmatprep.subr.bf16.mxu0 0
          %4851 = vmatpush1.bf16.msra.mxu0 0
          %4852 = vmatprep.subr.bf16.mxu0 0
          %4853 = vmatpush1.bf16.msra.mxu0 0
          %4854 = vmatprep.subr.bf16.mxu0 0
          %4855 = vmatpush1.bf16.msra.mxu0 0
          %4856 = vmatprep.subr.bf16.mxu0 0
          %4857 = vmatpush1.bf16.msra.mxu0 0
          %4858 = vmatprep.subr.bf16.mxu0 0
          %4859 = vmatpush1.bf16.msra.mxu0 0
          %4860 = vmatprep.subr.bf16.mxu0 0
          %4861 = vmatpush1.bf16.msra.mxu0 %v4480
          %4862 = vmatprep.subr.bf16.mxu0 0
          %4863 = vmatpush2.bf16.msra.mxu0 0
          %4864 = vmatprep.subr.bf16.mxu0 0
          %4865 = vmatpush2.bf16.msra.mxu0 0
          %4866 = vmatprep.subr.bf16.mxu0 0
          %4867 = vmatpush2.bf16.msra.mxu0 0
          %4868 = vmatprep.subr.bf16.mxu0 0
          %4869 = vmatpush2.bf16.msra.mxu0 0
          %4870 = vmatprep.subr.bf16.mxu0 0
          %4871 = vmatpush2.bf16.msra.mxu0 0
          %4872 = vmatprep.subr.bf16.mxu0 0
          %4873 = vmatpush2.bf16.msra.mxu0 0
          %4874 = vmatprep.subr.bf16.mxu0 0
          %4875 = vmatpush2.bf16.msra.mxu0 0
          %4876 = vmatprep.subr.bf16.mxu0 0
          %4877 = vmatpush2.bf16.msra.mxu0 0
          %4878 = vmatprep.mubr.bf16.mxu0 0
          %4879 = vmatmul.mubr.bf16.gmra.mxu0 %v4844
          %v4880 = vpop.f32.mrf.mxu0
          %v4881 = vadd.f32 0.0, %v4880
          %v4882 = vpop.f32.mrf.mxu0
          %v4883 = vpop.f32.mrf.mxu0
          %v4884 = vpop.f32.mrf.mxu0
          %4885 = vdwg.mxu0
          %4887 = vrot.lane.b32.xlu0 %v4795, 32
          %v4888 = vpop.permute.xlu0 %4887
          %4891 = vrot.lane.b32.xlu0 %v4838, 64
          %v4892 = vpop.permute.xlu0 %4891
          %4895 = vrot.lane.b32.xlu0 %v4881, 96
          %v4896 = vpop.permute.xlu0 %4895
          %v4898 = vsel %vm1465, %v4752, %v4888
          %v4899 = vsel %vm1949, %v4898, %v4892
          %v4900 = vsel %vm1952, %v4899, %v4896
          %v4901 = vpack.c.bf16 %v4900, %v4900
          %v4918 = vunpack.c.l.b16 %v4403
          %v4919 = vunpack.c.l.b16 %v4404
          %v4920 = vunpack.c.l.b16 %v4405
          %v4921 = vunpack.c.l.b16 %v4406
          %v4922 = vunpack.c.l.b16 %v4407
          %v4923 = vunpack.c.l.b16 %v4408
          %v4924 = vunpack.c.l.b16 %v4409
          %v4925 = vunpack.c.l.b16 %v4410
          %v4926 = vunpack.c.l.b16 %v4411
          %v4927 = vunpack.c.l.b16 %v4412
          %v4928 = vunpack.c.l.b16 %v4413
          %v4929 = vunpack.c.l.b16 %v4414
          %v4930 = vunpack.c.l.b16 %v4415
          %v4931 = vunpack.c.l.b16 %v4416
          %v4932 = vunpack.c.l.b16 %v4417
          %v4933 = vunpack.c.l.b16 %v4418
          %v4934 = vpack.c.b16 %v4919, %v4918
          %v4935 = vpack.c.b16 %v4921, %v4920
          %v4936 = vpack.c.b16 %v4923, %v4922
          %v4937 = vpack.c.b16 %v4925, %v4924
          %v4938 = vpack.c.b16 %v4927, %v4926
          %v4939 = vpack.c.b16 %v4929, %v4928
          %v4940 = vpack.c.b16 %v4931, %v4930
          %v4941 = vpack.c.b16 %v4933, %v4932
          %4950 = vmatprep.subr.bf16.mxu0 0
          %4951 = vmatpush1.bf16.msra.mxu0 %v4941
          %4952 = vmatprep.subr.bf16.mxu0 0
          %4953 = vmatpush1.bf16.msra.mxu0 %v4940
          %4954 = vmatprep.subr.bf16.mxu0 0
          %4955 = vmatpush1.bf16.msra.mxu0 %v4939
          %4956 = vmatprep.subr.bf16.mxu0 0
          %4957 = vmatpush1.bf16.msra.mxu0 %v4938
          %4958 = vmatprep.subr.bf16.mxu0 0
          %4959 = vmatpush1.bf16.msra.mxu0 %v4937
          %4960 = vmatprep.subr.bf16.mxu0 0
          %4961 = vmatpush1.bf16.msra.mxu0 %v4936
          %4962 = vmatprep.subr.bf16.mxu0 0
          %4963 = vmatpush1.bf16.msra.mxu0 %v4935
          %4964 = vmatprep.subr.bf16.mxu0 0
          %4965 = vmatpush1.bf16.msra.mxu0 %v4934
          %4966 = vmatprep.subr.bf16.mxu0 0
          %4967 = vmatpush2.bf16.msra.mxu0 0
          %4968 = vmatprep.subr.bf16.mxu0 0
          %4969 = vmatpush2.bf16.msra.mxu0 0
          %4970 = vmatprep.subr.bf16.mxu0 0
          %4971 = vmatpush2.bf16.msra.mxu0 0
          %4972 = vmatprep.subr.bf16.mxu0 0
          %4973 = vmatpush2.bf16.msra.mxu0 0
          %4974 = vmatprep.subr.bf16.mxu0 0
          %4975 = vmatpush2.bf16.msra.mxu0 0
          %4976 = vmatprep.subr.bf16.mxu0 0
          %4977 = vmatpush2.bf16.msra.mxu0 0
          %4978 = vmatprep.subr.bf16.mxu0 0
          %4979 = vmatpush2.bf16.msra.mxu0 0
          %4980 = vmatprep.subr.bf16.mxu0 0
          %4981 = vmatpush2.bf16.msra.mxu0 0
          %4982 = vmatprep.mubr.bf16.mxu0 0
          %4983 = vmatmul.mubr.bf16.gmra.mxu0 %v4901
          %v4984 = vpop.f32.mrf.mxu0
          %v4985 = vadd.f32 0.0, %v4984
          %v4986 = vpop.f32.mrf.mxu0
          %v4987 = vpop.f32.mrf.mxu0
          %v4988 = vpop.f32.mrf.mxu0
          %4989 = vdwg.mxu0
          %v4990 = vadd.f32 %v4104, %v4985
          %v4991 = vld [vmem:[#allocation23] sm:$0x1]
          %v4992 = vmul.f32 %v4990, %v4990
          %v4993 = vsel %vm4111, %v4992, 0.0
          %4994 = vadd.xlane.f32.xlu0 %v4993
          %v4995 = vpop.xlane.xlu0 %4994
          %v4996 = vmul.f32 %v4995, %v1115
          %v4997 = vadd.f32 %v4996, 1e-06
          %v4998 = vrsqrt.pop %v4997
          %v4999 = vmul.f32 %v4990, %v4998
          %v5000 = vmul.f32 %v4999, %v4991
          %v5001 = vpack.c.bf16 %v5000, %v5000
          %v5002 = vld [vmem:[#allocation24] sm:$0xf]
          %v5003 = vld [vmem:[#allocation24 + $0x4] sm:$0xf]
          %v5004 = vld [vmem:[#allocation24 + $0x8] sm:$0xf]
          %v5005 = vld [vmem:[#allocation24 + $0xc] sm:$0xf]
          %v5006 = vld [vmem:[#allocation24 + $0x10] sm:$0xf]
          %v5007 = vld [vmem:[#allocation24 + $0x14] sm:$0xf]
          %v5008 = vld [vmem:[#allocation24 + $0x18] sm:$0xf]
          %v5009 = vld [vmem:[#allocation24 + $0x1c] sm:$0xf]
          %v5010 = vld [vmem:[#allocation24 + $0x20] sm:$0xf]
          %v5011 = vld [vmem:[#allocation24 + $0x24] sm:$0xf]
          %v5012 = vld [vmem:[#allocation24 + $0x28] sm:$0xf]
          %v5013 = vld [vmem:[#allocation24 + $0x2c] sm:$0xf]
          %v5014 = vld [vmem:[#allocation24 + $0x30] sm:$0xf]
          %v5015 = vld [vmem:[#allocation24 + $0x34] sm:$0xf]
          %v5016 = vld [vmem:[#allocation24 + $0x38] sm:$0xf]
          %v5017 = vld [vmem:[#allocation24 + $0x3c] sm:$0xf]
          %v5034 = vunpack.c.l.b16 %v5002
          %v5035 = vunpack.c.l.b16 %v5003
          %v5036 = vunpack.c.l.b16 %v5004
          %v5037 = vunpack.c.l.b16 %v5005
          %v5038 = vunpack.c.l.b16 %v5006
          %v5039 = vunpack.c.l.b16 %v5007
          %v5040 = vunpack.c.l.b16 %v5008
          %v5041 = vunpack.c.l.b16 %v5009
          %v5042 = vunpack.c.l.b16 %v5010
          %v5043 = vunpack.c.l.b16 %v5011
          %v5044 = vunpack.c.l.b16 %v5012
          %v5045 = vunpack.c.l.b16 %v5013
          %v5046 = vunpack.c.l.b16 %v5014
          %v5047 = vunpack.c.l.b16 %v5015
          %v5048 = vunpack.c.l.b16 %v5016
          %v5049 = vunpack.c.l.b16 %v5017
          %v5050 = vpack.c.b16 %v5035, %v5034
          %v5051 = vpack.c.b16 %v5037, %v5036
          %v5052 = vpack.c.b16 %v5039, %v5038
          %v5053 = vpack.c.b16 %v5041, %v5040
          %v5054 = vpack.c.b16 %v5043, %v5042
          %v5055 = vpack.c.b16 %v5045, %v5044
          %v5056 = vpack.c.b16 %v5047, %v5046
          %v5057 = vpack.c.b16 %v5049, %v5048
          %5066 = vmatprep.subr.bf16.mxu0 0
          %5067 = vmatpush1.bf16.msra.mxu0 %v5057
          %5068 = vmatprep.subr.bf16.mxu0 0
          %5069 = vmatpush1.bf16.msra.mxu0 %v5056
          %5070 = vmatprep.subr.bf16.mxu0 0
          %5071 = vmatpush1.bf16.msra.mxu0 %v5055
          %5072 = vmatprep.subr.bf16.mxu0 0
          %5073 = vmatpush1.bf16.msra.mxu0 %v5054
          %5074 = vmatprep.subr.bf16.mxu0 0
          %5075 = vmatpush1.bf16.msra.mxu0 %v5053
          %5076 = vmatprep.subr.bf16.mxu0 0
          %5077 = vmatpush1.bf16.msra.mxu0 %v5052
          %5078 = vmatprep.subr.bf16.mxu0 0
          %5079 = vmatpush1.bf16.msra.mxu0 %v5051
          %5080 = vmatprep.subr.bf16.mxu0 0
          %5081 = vmatpush1.bf16.msra.mxu0 %v5050
          %5082 = vmatprep.subr.bf16.mxu0 0
          %5083 = vmatpush2.bf16.msra.mxu0 0
          %5084 = vmatprep.subr.bf16.mxu0 0
          %5085 = vmatpush2.bf16.msra.mxu0 0
          %5086 = vmatprep.subr.bf16.mxu0 0
          %5087 = vmatpush2.bf16.msra.mxu0 0
          %5088 = vmatprep.subr.bf16.mxu0 0
          %5089 = vmatpush2.bf16.msra.mxu0 0
          %5090 = vmatprep.subr.bf16.mxu0 0
          %5091 = vmatpush2.bf16.msra.mxu0 0
          %5092 = vmatprep.subr.bf16.mxu0 0
          %5093 = vmatpush2.bf16.msra.mxu0 0
          %5094 = vmatprep.subr.bf16.mxu0 0
          %5095 = vmatpush2.bf16.msra.mxu0 0
          %5096 = vmatprep.subr.bf16.mxu0 0
          %5097 = vmatpush2.bf16.msra.mxu0 0
          %5098 = vmatprep.mubr.bf16.mxu0 0
          %5099 = vmatmul.mubr.bf16.gmra.mxu0 %v5001
          %v5100 = vpop.f32.mrf.mxu0
          %v5101 = vadd.f32 0.0, %v5100
          %v5102 = vpop.f32.mrf.mxu0
          %v5103 = vpop.f32.mrf.mxu0
          %v5104 = vpop.f32.mrf.mxu0
          %5105 = vdwg.mxu0
          %v5106 = vld [vmem:[#allocation27] sm:$0xf]
          %v5107 = vld [vmem:[#allocation27 + $0x4] sm:$0xf]
          %v5108 = vld [vmem:[#allocation27 + $0x8] sm:$0xf]
          %v5109 = vld [vmem:[#allocation27 + $0xc] sm:$0xf]
          %v5110 = vld [vmem:[#allocation27 + $0x10] sm:$0xf]
          %v5111 = vld [vmem:[#allocation27 + $0x14] sm:$0xf]
          %v5112 = vld [vmem:[#allocation27 + $0x18] sm:$0xf]
          %v5113 = vld [vmem:[#allocation27 + $0x1c] sm:$0xf]
          %v5114 = vld [vmem:[#allocation27 + $0x20] sm:$0xf]
          %v5115 = vld [vmem:[#allocation27 + $0x24] sm:$0xf]
          %v5116 = vld [vmem:[#allocation27 + $0x28] sm:$0xf]
          %v5117 = vld [vmem:[#allocation27 + $0x2c] sm:$0xf]
          %v5118 = vld [vmem:[#allocation27 + $0x30] sm:$0xf]
          %v5119 = vld [vmem:[#allocation27 + $0x34] sm:$0xf]
          %v5120 = vld [vmem:[#allocation27 + $0x38] sm:$0xf]
          %v5121 = vld [vmem:[#allocation27 + $0x3c] sm:$0xf]
          %5123 = vrot.lane.b32.xlu0 %v5101, 96
          %v5124 = vpop.permute.xlu0 %5123
          %5126 = vrot.lane.b32.xlu0 %v5101, 64
          %v5127 = vpop.permute.xlu0 %5126
          %5129 = vrot.lane.b32.xlu0 %v5101, 32
          %v5130 = vpop.permute.xlu0 %5129
          %v5132 = vpack.c.bf16 %v5101, %v5101
          %v5133 = vpack.c.bf16 %v5124, %v5124
          %v5134 = vpack.c.bf16 %v5127, %v5127
          %v5135 = vpack.c.bf16 %v5130, %v5130
          %5138 = vrot.lane.b32.xlu0 %v3825, 96
          %v5139 = vpop.permute.xlu0 %5138
          %5140 = vrot.lane.b32.xlu0 %v3829, 96
          %v5141 = vpop.permute.xlu0 %5140
          %5144 = vrot.lane.b32.xlu0 %v3825, 64
          %v5145 = vpop.permute.xlu0 %5144
          %5146 = vrot.lane.b32.xlu0 %v3829, 64
          %v5147 = vpop.permute.xlu0 %5146
          %5150 = vrot.lane.b32.xlu0 %v3825, 32
          %v5151 = vpop.permute.xlu0 %5150
          %5152 = vrot.lane.b32.xlu0 %v3829, 32
          %v5153 = vpop.permute.xlu0 %5152
          %v5156 = vpack.c.bf16 %v3829, %v3825
          %v5157 = vpack.c.bf16 %v5141, %v5139
          %v5158 = vpack.c.bf16 %v5147, %v5145
          %v5159 = vpack.c.bf16 %v5153, %v5151
          %5162 = vrot.lane.b32.xlu0 %v3827, 96
          %v5163 = vpop.permute.xlu0 %5162
          %5164 = vrot.lane.b32.xlu0 %v3831, 96
          %v5165 = vpop.permute.xlu0 %5164
          %5168 = vrot.lane.b32.xlu0 %v3827, 64
          %v5169 = vpop.permute.xlu0 %5168
          %5170 = vrot.lane.b32.xlu0 %v3831, 64
          %v5171 = vpop.permute.xlu0 %5170
          %5174 = vrot.lane.b32.xlu0 %v3827, 32
          %v5175 = vpop.permute.xlu0 %5174
          %5176 = vrot.lane.b32.xlu0 %v3831, 32
          %v5177 = vpop.permute.xlu0 %5176
          %v5180 = vpack.c.bf16 %v3831, %v3827
          %v5181 = vpack.c.bf16 %v5165, %v5163
          %v5182 = vpack.c.bf16 %v5171, %v5169
          %v5183 = vpack.c.bf16 %v5177, %v5175
          %v5185 = vsel %vm1465, %v5132, 0
          %v5188 = vsel %vm1465, %v5156, 0
          %5190 = vmatprep.subr.bf16.mxu0 0
          %5191 = vmatpush1.bf16.xpose.msra.mxu0 0
          %5192 = vmatprep.subr.bf16.mxu0 0
          %5193 = vmatpush1.bf16.xpose.msra.mxu0 0
          %5194 = vmatprep.subr.bf16.mxu0 0
          %5195 = vmatpush1.bf16.xpose.msra.mxu0 0
          %5196 = vmatprep.subr.bf16.mxu0 0
          %5197 = vmatpush1.bf16.xpose.msra.mxu0 0
          %5198 = vmatprep.subr.bf16.mxu0 0
          %5199 = vmatpush1.bf16.xpose.msra.mxu0 0
          %5200 = vmatprep.subr.bf16.mxu0 0
          %5201 = vmatpush1.bf16.xpose.msra.mxu0 0
          %5202 = vmatprep.subr.bf16.mxu0 0
          %5203 = vmatpush1.bf16.xpose.msra.mxu0 0
          %5204 = vmatprep.subr.bf16.mxu0 0
          %5205 = vmatpush1.bf16.xpose.msra.mxu0 %v5188
          %5206 = vmatprep.subr.bf16.mxu0 0
          %5207 = vmatpush2.bf16.xpose.msra.mxu0 0
          %5208 = vmatprep.subr.bf16.mxu0 0
          %5209 = vmatpush2.bf16.xpose.msra.mxu0 0
          %5210 = vmatprep.subr.bf16.mxu0 0
          %5211 = vmatpush2.bf16.xpose.msra.mxu0 0
          %5212 = vmatprep.subr.bf16.mxu0 0
          %5213 = vmatpush2.bf16.xpose.msra.mxu0 0
          %5214 = vmatprep.subr.bf16.mxu0 0
          %5215 = vmatpush2.bf16.xpose.msra.mxu0 0
          %5216 = vmatprep.subr.bf16.mxu0 0
          %5217 = vmatpush2.bf16.xpose.msra.mxu0 0
          %5218 = vmatprep.subr.bf16.mxu0 0
          %5219 = vmatpush2.bf16.xpose.msra.mxu0 0
          %5220 = vmatprep.subr.bf16.mxu0 0
          %5221 = vmatpush2.bf16.xpose.msra.mxu0 0
          %5222 = vmatprep.mubr.bf16.mxu0 0
          %5223 = vmatmul.mubr.bf16.gmra.mxu0 %v5185
          %v5224 = vpop.f32.mrf.mxu0
          %v5225 = vadd.f32 0.0, %v5224
          %v5226 = vpop.f32.mrf.mxu0
          %v5227 = vpop.f32.mrf.mxu0
          %v5228 = vpop.f32.mrf.mxu0
          %5229 = vdwg.mxu0
          %v5231 = vsel %vm1465, %v5133, 0
          %v5234 = vsel %vm1465, %v5157, 0
          %5236 = vmatprep.subr.bf16.mxu0 0
          %5237 = vmatpush1.bf16.xpose.msra.mxu0 0
          %5238 = vmatprep.subr.bf16.mxu0 0
          %5239 = vmatpush1.bf16.xpose.msra.mxu0 0
          %5240 = vmatprep.subr.bf16.mxu0 0
          %5241 = vmatpush1.bf16.xpose.msra.mxu0 0
          %5242 = vmatprep.subr.bf16.mxu0 0
          %5243 = vmatpush1.bf16.xpose.msra.mxu0 0
          %5244 = vmatprep.subr.bf16.mxu0 0
          %5245 = vmatpush1.bf16.xpose.msra.mxu0 0
          %5246 = vmatprep.subr.bf16.mxu0 0
          %5247 = vmatpush1.bf16.xpose.msra.mxu0 0
          %5248 = vmatprep.subr.bf16.mxu0 0
          %5249 = vmatpush1.bf16.xpose.msra.mxu0 0
          %5250 = vmatprep.subr.bf16.mxu0 0
          %5251 = vmatpush1.bf16.xpose.msra.mxu0 %v5234
          %5252 = vmatprep.subr.bf16.mxu0 0
          %5253 = vmatpush2.bf16.xpose.msra.mxu0 0
          %5254 = vmatprep.subr.bf16.mxu0 0
          %5255 = vmatpush2.bf16.xpose.msra.mxu0 0
          %5256 = vmatprep.subr.bf16.mxu0 0
          %5257 = vmatpush2.bf16.xpose.msra.mxu0 0
          %5258 = vmatprep.subr.bf16.mxu0 0
          %5259 = vmatpush2.bf16.xpose.msra.mxu0 0
          %5260 = vmatprep.subr.bf16.mxu0 0
          %5261 = vmatpush2.bf16.xpose.msra.mxu0 0
          %5262 = vmatprep.subr.bf16.mxu0 0
          %5263 = vmatpush2.bf16.xpose.msra.mxu0 0
          %5264 = vmatprep.subr.bf16.mxu0 0
          %5265 = vmatpush2.bf16.xpose.msra.mxu0 0
          %5266 = vmatprep.subr.bf16.mxu0 0
          %5267 = vmatpush2.bf16.xpose.msra.mxu0 0
          %5268 = vmatprep.mubr.bf16.mxu0 0
          %5269 = vmatmul.mubr.bf16.gmra.mxu0 %v5231
          %v5270 = vpop.f32.mrf.mxu0
          %v5271 = vadd.f32 0.0, %v5270
          %v5272 = vpop.f32.mrf.mxu0
          %v5273 = vpop.f32.mrf.mxu0
          %v5274 = vpop.f32.mrf.mxu0
          %5275 = vdwg.mxu0
          %v5277 = vsel %vm1465, %v5134, 0
          %v5280 = vsel %vm1465, %v5158, 0
          %5282 = vmatprep.subr.bf16.mxu0 0
          %5283 = vmatpush1.bf16.xpose.msra.mxu0 0
          %5284 = vmatprep.subr.bf16.mxu0 0
          %5285 = vmatpush1.bf16.xpose.msra.mxu0 0
          %5286 = vmatprep.subr.bf16.mxu0 0
          %5287 = vmatpush1.bf16.xpose.msra.mxu0 0
          %5288 = vmatprep.subr.bf16.mxu0 0
          %5289 = vmatpush1.bf16.xpose.msra.mxu0 0
          %5290 = vmatprep.subr.bf16.mxu0 0
          %5291 = vmatpush1.bf16.xpose.msra.mxu0 0
          %5292 = vmatprep.subr.bf16.mxu0 0
          %5293 = vmatpush1.bf16.xpose.msra.mxu0 0
          %5294 = vmatprep.subr.bf16.mxu0 0
          %5295 = vmatpush1.bf16.xpose.msra.mxu0 0
          %5296 = vmatprep.subr.bf16.mxu0 0
          %5297 = vmatpush1.bf16.xpose.msra.mxu0 %v5280
          %5298 = vmatprep.subr.bf16.mxu0 0
          %5299 = vmatpush2.bf16.xpose.msra.mxu0 0
          %5300 = vmatprep.subr.bf16.mxu0 0
          %5301 = vmatpush2.bf16.xpose.msra.mxu0 0
          %5302 = vmatprep.subr.bf16.mxu0 0
          %5303 = vmatpush2.bf16.xpose.msra.mxu0 0
          %5304 = vmatprep.subr.bf16.mxu0 0
          %5305 = vmatpush2.bf16.xpose.msra.mxu0 0
          %5306 = vmatprep.subr.bf16.mxu0 0
          %5307 = vmatpush2.bf16.xpose.msra.mxu0 0
          %5308 = vmatprep.subr.bf16.mxu0 0
          %5309 = vmatpush2.bf16.xpose.msra.mxu0 0
          %5310 = vmatprep.subr.bf16.mxu0 0
          %5311 = vmatpush2.bf16.xpose.msra.mxu0 0
          %5312 = vmatprep.subr.bf16.mxu0 0
          %5313 = vmatpush2.bf16.xpose.msra.mxu0 0
          %5314 = vmatprep.mubr.bf16.mxu0 0
          %5315 = vmatmul.mubr.bf16.gmra.mxu0 %v5277
          %v5316 = vpop.f32.mrf.mxu0
          %v5317 = vadd.f32 0.0, %v5316
          %v5318 = vpop.f32.mrf.mxu0
          %v5319 = vpop.f32.mrf.mxu0
          %v5320 = vpop.f32.mrf.mxu0
          %5321 = vdwg.mxu0
          %v5323 = vsel %vm1465, %v5135, 0
          %v5326 = vsel %vm1465, %v5159, 0
          %5328 = vmatprep.subr.bf16.mxu0 0
          %5329 = vmatpush1.bf16.xpose.msra.mxu0 0
          %5330 = vmatprep.subr.bf16.mxu0 0
          %5331 = vmatpush1.bf16.xpose.msra.mxu0 0
          %5332 = vmatprep.subr.bf16.mxu0 0
          %5333 = vmatpush1.bf16.xpose.msra.mxu0 0
          %5334 = vmatprep.subr.bf16.mxu0 0
          %5335 = vmatpush1.bf16.xpose.msra.mxu0 0
          %5336 = vmatprep.subr.bf16.mxu0 0
          %5337 = vmatpush1.bf16.xpose.msra.mxu0 0
          %5338 = vmatprep.subr.bf16.mxu0 0
          %5339 = vmatpush1.bf16.xpose.msra.mxu0 0
          %5340 = vmatprep.subr.bf16.mxu0 0
          %5341 = vmatpush1.bf16.xpose.msra.mxu0 0
          %5342 = vmatprep.subr.bf16.mxu0 0
          %5343 = vmatpush1.bf16.xpose.msra.mxu0 %v5326
          %5344 = vmatprep.subr.bf16.mxu0 0
          %5345 = vmatpush2.bf16.xpose.msra.mxu0 0
          %5346 = vmatprep.subr.bf16.mxu0 0
          %5347 = vmatpush2.bf16.xpose.msra.mxu0 0
          %5348 = vmatprep.subr.bf16.mxu0 0
          %5349 = vmatpush2.bf16.xpose.msra.mxu0 0
          %5350 = vmatprep.subr.bf16.mxu0 0
          %5351 = vmatpush2.bf16.xpose.msra.mxu0 0
          %5352 = vmatprep.subr.bf16.mxu0 0
          %5353 = vmatpush2.bf16.xpose.msra.mxu0 0
          %5354 = vmatprep.subr.bf16.mxu0 0
          %5355 = vmatpush2.bf16.xpose.msra.mxu0 0
          %5356 = vmatprep.subr.bf16.mxu0 0
          %5357 = vmatpush2.bf16.xpose.msra.mxu0 0
          %5358 = vmatprep.subr.bf16.mxu0 0
          %5359 = vmatpush2.bf16.xpose.msra.mxu0 0
          %5360 = vmatprep.mubr.bf16.mxu0 0
          %5361 = vmatmul.mubr.bf16.gmra.mxu0 %v5323
          %v5362 = vpop.f32.mrf.mxu0
          %v5363 = vadd.f32 0.0, %v5362
          %v5364 = vpop.f32.mrf.mxu0
          %v5365 = vpop.f32.mrf.mxu0
          %v5366 = vpop.f32.mrf.mxu0
          %5367 = vdwg.mxu0
          %v5368 = vsel %vm4665, %v5225, -inf
          %5369 = vmax.xlane.f32.xlu0 %v5368
          %v5370 = vpop.xlane.xlu0 %5369
          %v5371 = vsel %vm4665, %v5271, -inf
          %5372 = vmax.xlane.f32.xlu0 %v5371
          %v5373 = vpop.xlane.xlu0 %5372
          %v5374 = vsel %vm4665, %v5317, -inf
          %5375 = vmax.xlane.f32.xlu0 %v5374
          %v5376 = vpop.xlane.xlu0 %5375
          %v5377 = vsel %vm4665, %v5363, -inf
          %5378 = vmax.xlane.f32.xlu0 %v5377
          %v5379 = vpop.xlane.xlu0 %5378
          %v5380 = vsub.f32 %v5225, %v5370
          %v5381 = vsub.f32 %v5271, %v5373
          %v5382 = vsub.f32 %v5317, %v5376
          %v5383 = vsub.f32 %v5363, %v5379
          %v5384 = vmul.f32 %v5380, 1.442695
          %v5385 = vpow.pop %v5384
          %v5386 = vmul.f32 %v5381, 1.442695
          %v5387 = vpow.pop %v5386
          %v5388 = vmul.f32 %v5382, 1.442695
          %v5389 = vpow.pop %v5388
          %v5390 = vmul.f32 %v5383, 1.442695
          %v5391 = vpow.pop %v5390
          %v5392 = vsel %vm4665, %v5385, 0.0
          %5393 = vadd.xlane.f32.xlu0 %v5392
          %v5394 = vpop.xlane.xlu0 %5393
          %v5395 = vsel %vm4665, %v5387, 0.0
          %5396 = vadd.xlane.f32.xlu0 %v5395
          %v5397 = vpop.xlane.xlu0 %5396
          %v5398 = vsel %vm4665, %v5389, 0.0
          %5399 = vadd.xlane.f32.xlu0 %v5398
          %v5400 = vpop.xlane.xlu0 %5399
          %v5401 = vsel %vm4665, %v5391, 0.0
          %5402 = vadd.xlane.f32.xlu0 %v5401
          %v5403 = vpop.xlane.xlu0 %5402
          %v5404 = vrcp.pop %v5394
          %v5405 = vrcp.pop %v5397
          %v5406 = vrcp.pop %v5400
          %v5407 = vrcp.pop %v5403
          %v5408 = vmul.f32 %v5385, %v5404
          %v5409 = vmul.f32 %v5387, %v5405
          %v5410 = vmul.f32 %v5389, %v5406
          %v5411 = vmul.f32 %v5391, %v5407
          %v5412 = vpack.c.bf16 %v5408, %v5408
          %v5413 = vpack.c.bf16 %v5409, %v5409
          %v5414 = vpack.c.bf16 %v5410, %v5410
          %v5415 = vpack.c.bf16 %v5411, %v5411
          %v5417 = vsel %vm1654, %v5412, 0
          %5419 = vmatprep.subr.bf16.mxu0 0
          %5420 = vmatpush1.bf16.msra.mxu0 0
          %5421 = vmatprep.subr.bf16.mxu0 0
          %5422 = vmatpush1.bf16.msra.mxu0 0
          %5423 = vmatprep.subr.bf16.mxu0 0
          %5424 = vmatpush1.bf16.msra.mxu0 0
          %5425 = vmatprep.subr.bf16.mxu0 0
          %5426 = vmatpush1.bf16.msra.mxu0 0
          %5427 = vmatprep.subr.bf16.mxu0 0
          %5428 = vmatpush1.bf16.msra.mxu0 0
          %5429 = vmatprep.subr.bf16.mxu0 0
          %5430 = vmatpush1.bf16.msra.mxu0 0
          %5431 = vmatprep.subr.bf16.mxu0 0
          %5432 = vmatpush1.bf16.msra.mxu0 0
          %5433 = vmatprep.subr.bf16.mxu0 0
          %5434 = vmatpush1.bf16.msra.mxu0 %v5180
          %5435 = vmatprep.subr.bf16.mxu0 0
          %5436 = vmatpush2.bf16.msra.mxu0 0
          %5437 = vmatprep.subr.bf16.mxu0 0
          %5438 = vmatpush2.bf16.msra.mxu0 0
          %5439 = vmatprep.subr.bf16.mxu0 0
          %5440 = vmatpush2.bf16.msra.mxu0 0
          %5441 = vmatprep.subr.bf16.mxu0 0
          %5442 = vmatpush2.bf16.msra.mxu0 0
          %5443 = vmatprep.subr.bf16.mxu0 0
          %5444 = vmatpush2.bf16.msra.mxu0 0
          %5445 = vmatprep.subr.bf16.mxu0 0
          %5446 = vmatpush2.bf16.msra.mxu0 0
          %5447 = vmatprep.subr.bf16.mxu0 0
          %5448 = vmatpush2.bf16.msra.mxu0 0
          %5449 = vmatprep.subr.bf16.mxu0 0
          %5450 = vmatpush2.bf16.msra.mxu0 0
          %5451 = vmatprep.mubr.bf16.mxu0 0
          %5452 = vmatmul.mubr.bf16.gmra.mxu0 %v5417
          %v5453 = vpop.f32.mrf.mxu0
          %v5454 = vadd.f32 0.0, %v5453
          %v5455 = vpop.f32.mrf.mxu0
          %v5456 = vpop.f32.mrf.mxu0
          %v5457 = vpop.f32.mrf.mxu0
          %5458 = vdwg.mxu0
          %v5460 = vsel %vm1654, %v5413, 0
          %5462 = vmatprep.subr.bf16.mxu0 0
          %5463 = vmatpush1.bf16.msra.mxu0 0
          %5464 = vmatprep.subr.bf16.mxu0 0
          %5465 = vmatpush1.bf16.msra.mxu0 0
          %5466 = vmatprep.subr.bf16.mxu0 0
          %5467 = vmatpush1.bf16.msra.mxu0 0
          %5468 = vmatprep.subr.bf16.mxu0 0
          %5469 = vmatpush1.bf16.msra.mxu0 0
          %5470 = vmatprep.subr.bf16.mxu0 0
          %5471 = vmatpush1.bf16.msra.mxu0 0
          %5472 = vmatprep.subr.bf16.mxu0 0
          %5473 = vmatpush1.bf16.msra.mxu0 0
          %5474 = vmatprep.subr.bf16.mxu0 0
          %5475 = vmatpush1.bf16.msra.mxu0 0
          %5476 = vmatprep.subr.bf16.mxu0 0
          %5477 = vmatpush1.bf16.msra.mxu0 %v5181
          %5478 = vmatprep.subr.bf16.mxu0 0
          %5479 = vmatpush2.bf16.msra.mxu0 0
          %5480 = vmatprep.subr.bf16.mxu0 0
          %5481 = vmatpush2.bf16.msra.mxu0 0
          %5482 = vmatprep.subr.bf16.mxu0 0
          %5483 = vmatpush2.bf16.msra.mxu0 0
          %5484 = vmatprep.subr.bf16.mxu0 0
          %5485 = vmatpush2.bf16.msra.mxu0 0
          %5486 = vmatprep.subr.bf16.mxu0 0
          %5487 = vmatpush2.bf16.msra.mxu0 0
          %5488 = vmatprep.subr.bf16.mxu0 0
          %5489 = vmatpush2.bf16.msra.mxu0 0
          %5490 = vmatprep.subr.bf16.mxu0 0
          %5491 = vmatpush2.bf16.msra.mxu0 0
          %5492 = vmatprep.subr.bf16.mxu0 0
          %5493 = vmatpush2.bf16.msra.mxu0 0
          %5494 = vmatprep.mubr.bf16.mxu0 0
          %5495 = vmatmul.mubr.bf16.gmra.mxu0 %v5460
          %v5496 = vpop.f32.mrf.mxu0
          %v5497 = vadd.f32 0.0, %v5496
          %v5498 = vpop.f32.mrf.mxu0
          %v5499 = vpop.f32.mrf.mxu0
          %v5500 = vpop.f32.mrf.mxu0
          %5501 = vdwg.mxu0
          %v5503 = vsel %vm1654, %v5414, 0
          %5505 = vmatprep.subr.bf16.mxu0 0
          %5506 = vmatpush1.bf16.msra.mxu0 0
          %5507 = vmatprep.subr.bf16.mxu0 0
          %5508 = vmatpush1.bf16.msra.mxu0 0
          %5509 = vmatprep.subr.bf16.mxu0 0
          %5510 = vmatpush1.bf16.msra.mxu0 0
          %5511 = vmatprep.subr.bf16.mxu0 0
          %5512 = vmatpush1.bf16.msra.mxu0 0
          %5513 = vmatprep.subr.bf16.mxu0 0
          %5514 = vmatpush1.bf16.msra.mxu0 0
          %5515 = vmatprep.subr.bf16.mxu0 0
          %5516 = vmatpush1.bf16.msra.mxu0 0
          %5517 = vmatprep.subr.bf16.mxu0 0
          %5518 = vmatpush1.bf16.msra.mxu0 0
          %5519 = vmatprep.subr.bf16.mxu0 0
          %5520 = vmatpush1.bf16.msra.mxu0 %v5182
          %5521 = vmatprep.subr.bf16.mxu0 0
          %5522 = vmatpush2.bf16.msra.mxu0 0
          %5523 = vmatprep.subr.bf16.mxu0 0
          %5524 = vmatpush2.bf16.msra.mxu0 0
          %5525 = vmatprep.subr.bf16.mxu0 0
          %5526 = vmatpush2.bf16.msra.mxu0 0
          %5527 = vmatprep.subr.bf16.mxu0 0
          %5528 = vmatpush2.bf16.msra.mxu0 0
          %5529 = vmatprep.subr.bf16.mxu0 0
          %5530 = vmatpush2.bf16.msra.mxu0 0
          %5531 = vmatprep.subr.bf16.mxu0 0
          %5532 = vmatpush2.bf16.msra.mxu0 0
          %5533 = vmatprep.subr.bf16.mxu0 0
          %5534 = vmatpush2.bf16.msra.mxu0 0
          %5535 = vmatprep.subr.bf16.mxu0 0
          %5536 = vmatpush2.bf16.msra.mxu0 0
          %5537 = vmatprep.mubr.bf16.mxu0 0
          %5538 = vmatmul.mubr.bf16.gmra.mxu0 %v5503
          %v5539 = vpop.f32.mrf.mxu0
          %v5540 = vadd.f32 0.0, %v5539
          %v5541 = vpop.f32.mrf.mxu0
          %v5542 = vpop.f32.mrf.mxu0
          %v5543 = vpop.f32.mrf.mxu0
          %5544 = vdwg.mxu0
          %v5546 = vsel %vm1654, %v5415, 0
          %5548 = vmatprep.subr.bf16.mxu0 0
          %5549 = vmatpush1.bf16.msra.mxu0 0
          %5550 = vmatprep.subr.bf16.mxu0 0
          %5551 = vmatpush1.bf16.msra.mxu0 0
          %5552 = vmatprep.subr.bf16.mxu0 0
          %5553 = vmatpush1.bf16.msra.mxu0 0
          %5554 = vmatprep.subr.bf16.mxu0 0
          %5555 = vmatpush1.bf16.msra.mxu0 0
          %5556 = vmatprep.subr.bf16.mxu0 0
          %5557 = vmatpush1.bf16.msra.mxu0 0
          %5558 = vmatprep.subr.bf16.mxu0 0
          %5559 = vmatpush1.bf16.msra.mxu0 0
          %5560 = vmatprep.subr.bf16.mxu0 0
          %5561 = vmatpush1.bf16.msra.mxu0 0
          %5562 = vmatprep.subr.bf16.mxu0 0
          %5563 = vmatpush1.bf16.msra.mxu0 %v5183
          %5564 = vmatprep.subr.bf16.mxu0 0
          %5565 = vmatpush2.bf16.msra.mxu0 0
          %5566 = vmatprep.subr.bf16.mxu0 0
          %5567 = vmatpush2.bf16.msra.mxu0 0
          %5568 = vmatprep.subr.bf16.mxu0 0
          %5569 = vmatpush2.bf16.msra.mxu0 0
          %5570 = vmatprep.subr.bf16.mxu0 0
          %5571 = vmatpush2.bf16.msra.mxu0 0
          %5572 = vmatprep.subr.bf16.mxu0 0
          %5573 = vmatpush2.bf16.msra.mxu0 0
          %5574 = vmatprep.subr.bf16.mxu0 0
          %5575 = vmatpush2.bf16.msra.mxu0 0
          %5576 = vmatprep.subr.bf16.mxu0 0
          %5577 = vmatpush2.bf16.msra.mxu0 0
          %5578 = vmatprep.subr.bf16.mxu0 0
          %5579 = vmatpush2.bf16.msra.mxu0 0
          %5580 = vmatprep.mubr.bf16.mxu0 0
          %5581 = vmatmul.mubr.bf16.gmra.mxu0 %v5546
          %v5582 = vpop.f32.mrf.mxu0
          %v5583 = vadd.f32 0.0, %v5582
          %v5584 = vpop.f32.mrf.mxu0
          %v5585 = vpop.f32.mrf.mxu0
          %v5586 = vpop.f32.mrf.mxu0
          %5587 = vdwg.mxu0
          %5589 = vrot.lane.b32.xlu0 %v5497, 32
          %v5590 = vpop.permute.xlu0 %5589
          %5593 = vrot.lane.b32.xlu0 %v5540, 64
          %v5594 = vpop.permute.xlu0 %5593
          %5597 = vrot.lane.b32.xlu0 %v5583, 96
          %v5598 = vpop.permute.xlu0 %5597
          %v5600 = vsel %vm1465, %v5454, %v5590
          %v5601 = vsel %vm1949, %v5600, %v5594
          %v5602 = vsel %vm1952, %v5601, %v5598
          %v5603 = vpack.c.bf16 %v5602, %v5602
          %v5620 = vunpack.c.l.b16 %v5106
          %v5621 = vunpack.c.l.b16 %v5107
          %v5622 = vunpack.c.l.b16 %v5108
          %v5623 = vunpack.c.l.b16 %v5109
          %v5624 = vunpack.c.l.b16 %v5110
          %v5625 = vunpack.c.l.b16 %v5111
          %v5626 = vunpack.c.l.b16 %v5112
          %v5627 = vunpack.c.l.b16 %v5113
          %v5628 = vunpack.c.l.b16 %v5114
          %v5629 = vunpack.c.l.b16 %v5115
          %v5630 = vunpack.c.l.b16 %v5116
          %v5631 = vunpack.c.l.b16 %v5117
          %v5632 = vunpack.c.l.b16 %v5118
          %v5633 = vunpack.c.l.b16 %v5119
          %v5634 = vunpack.c.l.b16 %v5120
          %v5635 = vunpack.c.l.b16 %v5121
          %v5636 = vpack.c.b16 %v5621, %v5620
          %v5637 = vpack.c.b16 %v5623, %v5622
          %v5638 = vpack.c.b16 %v5625, %v5624
          %v5639 = vpack.c.b16 %v5627, %v5626
          %v5640 = vpack.c.b16 %v5629, %v5628
          %v5641 = vpack.c.b16 %v5631, %v5630
          %v5642 = vpack.c.b16 %v5633, %v5632
          %v5643 = vpack.c.b16 %v5635, %v5634
          %5652 = vmatprep.subr.bf16.mxu0 0
          %5653 = vmatpush1.bf16.msra.mxu0 %v5643
          %5654 = vmatprep.subr.bf16.mxu0 0
          %5655 = vmatpush1.bf16.msra.mxu0 %v5642
          %5656 = vmatprep.subr.bf16.mxu0 0
          %5657 = vmatpush1.bf16.msra.mxu0 %v5641
          %5658 = vmatprep.subr.bf16.mxu0 0
          %5659 = vmatpush1.bf16.msra.mxu0 %v5640
          %5660 = vmatprep.subr.bf16.mxu0 0
          %5661 = vmatpush1.bf16.msra.mxu0 %v5639
          %5662 = vmatprep.subr.bf16.mxu0 0
          %5663 = vmatpush1.bf16.msra.mxu0 %v5638
          %5664 = vmatprep.subr.bf16.mxu0 0
          %5665 = vmatpush1.bf16.msra.mxu0 %v5637
          %5666 = vmatprep.subr.bf16.mxu0 0
          %5667 = vmatpush1.bf16.msra.mxu0 %v5636
          %5668 = vmatprep.subr.bf16.mxu0 0
          %5669 = vmatpush2.bf16.msra.mxu0 0
          %5670 = vmatprep.subr.bf16.mxu0 0
          %5671 = vmatpush2.bf16.msra.mxu0 0
          %5672 = vmatprep.subr.bf16.mxu0 0
          %5673 = vmatpush2.bf16.msra.mxu0 0
          %5674 = vmatprep.subr.bf16.mxu0 0
          %5675 = vmatpush2.bf16.msra.mxu0 0
          %5676 = vmatprep.subr.bf16.mxu0 0
          %5677 = vmatpush2.bf16.msra.mxu0 0
          %5678 = vmatprep.subr.bf16.mxu0 0
          %5679 = vmatpush2.bf16.msra.mxu0 0
          %5680 = vmatprep.subr.bf16.mxu0 0
          %5681 = vmatpush2.bf16.msra.mxu0 0
          %5682 = vmatprep.subr.bf16.mxu0 0
          %5683 = vmatpush2.bf16.msra.mxu0 0
          %5684 = vmatprep.mubr.bf16.mxu0 0
          %5685 = vmatmul.mubr.bf16.gmra.mxu0 %v5603
          %v5686 = vpop.f32.mrf.mxu0
          %v5687 = vadd.f32 0.0, %v5686
          %v5688 = vpop.f32.mrf.mxu0
          %v5689 = vpop.f32.mrf.mxu0
          %v5690 = vpop.f32.mrf.mxu0
          %5691 = vdwg.mxu0
          %v5692 = vadd.f32 %v4990, %v5687
          %v5693 = vld [vmem:[%s20] sm:$0x1]
          %v5694 = vmul.f32 %v5692, %v5692
          %v5695 = vsel %vm4111, %v5694, 0.0
          %5696 = vadd.xlane.f32.xlu0 %v5695
          %v5697 = vpop.xlane.xlu0 %5696
          %v5698 = vmul.f32 %v5697, %v1115
          %v5699 = vadd.f32 %v5698, 1e-06
          %v5700 = vrsqrt.pop %v5699
          %v5701 = vmul.f32 %v5692, %v5700
          %v5702 = vmul.f32 %v5701, %v5693
          %v5703 = vpack.c.bf16 %v5702, %v5702
          %v5704 = vld [vmem:[#allocation29] sm:$0xff]
          %v5705 = vld [vmem:[#allocation29 + $0x8] sm:$0xff]
          %v5706 = vld [vmem:[#allocation29 + $0x10] sm:$0xff]
          %v5707 = vld [vmem:[#allocation29 + $0x18] sm:$0xff]
          %v5708 = vld [vmem:[#allocation29 + $0x20] sm:$0xff]
          %v5709 = vld [vmem:[#allocation29 + $0x28] sm:$0xff]
          %v5710 = vld [vmem:[#allocation29 + $0x30] sm:$0xff]
          %v5711 = vld [vmem:[#allocation29 + $0x38] sm:$0xff]
          %v5712 = vld [vmem:[#allocation29 + $0x40] sm:$0xff]
          %v5713 = vld [vmem:[#allocation29 + $0x48] sm:$0xff]
          %v5714 = vld [vmem:[#allocation29 + $0x50] sm:$0xff]
          %v5715 = vld [vmem:[#allocation29 + $0x58] sm:$0xff]
          %v5716 = vld [vmem:[#allocation29 + $0x60] sm:$0xff]
          %v5717 = vld [vmem:[#allocation29 + $0x68] sm:$0xff]
          %v5718 = vld [vmem:[#allocation29 + $0x70] sm:$0xff]
          %v5719 = vld [vmem:[#allocation29 + $0x78] sm:$0xff]
          %v5736 = vunpack.c.l.b16 %v5704
          %v5737 = vunpack.c.h.b16 %v5704
          %v5738 = vunpack.c.l.b16 %v5705
          %v5739 = vunpack.c.h.b16 %v5705
          %v5740 = vunpack.c.l.b16 %v5706
          %v5741 = vunpack.c.h.b16 %v5706
          %v5742 = vunpack.c.l.b16 %v5707
          %v5743 = vunpack.c.h.b16 %v5707
          %v5744 = vunpack.c.l.b16 %v5708
          %v5745 = vunpack.c.h.b16 %v5708
          %v5746 = vunpack.c.l.b16 %v5709
          %v5747 = vunpack.c.h.b16 %v5709
          %v5748 = vunpack.c.l.b16 %v5710
          %v5749 = vunpack.c.h.b16 %v5710
          %v5750 = vunpack.c.l.b16 %v5711
          %v5751 = vunpack.c.h.b16 %v5711
          %v5752 = vunpack.c.l.b16 %v5712
          %v5753 = vunpack.c.h.b16 %v5712
          %v5754 = vunpack.c.l.b16 %v5713
          %v5755 = vunpack.c.h.b16 %v5713
          %v5756 = vunpack.c.l.b16 %v5714
          %v5757 = vunpack.c.h.b16 %v5714
          %v5758 = vunpack.c.l.b16 %v5715
          %v5759 = vunpack.c.h.b16 %v5715
          %v5760 = vunpack.c.l.b16 %v5716
          %v5761 = vunpack.c.h.b16 %v5716
          %v5762 = vunpack.c.l.b16 %v5717
          %v5763 = vunpack.c.h.b16 %v5717
          %v5764 = vunpack.c.l.b16 %v5718
          %v5765 = vunpack.c.h.b16 %v5718
          %v5766 = vunpack.c.l.b16 %v5719
          %v5767 = vunpack.c.h.b16 %v5719
          %v5768 = vpack.c.b16 %v5738, %v5736
          %v5769 = vpack.c.b16 %v5739, %v5737
          %v5770 = vpack.c.b16 %v5742, %v5740
          %v5771 = vpack.c.b16 %v5743, %v5741
          %v5772 = vpack.c.b16 %v5746, %v5744
          %v5773 = vpack.c.b16 %v5747, %v5745
          %v5774 = vpack.c.b16 %v5750, %v5748
          %v5775 = vpack.c.b16 %v5751, %v5749
          %v5776 = vpack.c.b16 %v5754, %v5752
          %v5777 = vpack.c.b16 %v5755, %v5753
          %v5778 = vpack.c.b16 %v5758, %v5756
          %v5779 = vpack.c.b16 %v5759, %v5757
          %v5780 = vpack.c.b16 %v5762, %v5760
          %v5781 = vpack.c.b16 %v5763, %v5761
          %v5782 = vpack.c.b16 %v5766, %v5764
          %v5783 = vpack.c.b16 %v5767, %v5765
          %5800 = vmatprep.subr.bf16.mxu0 %v5783
          %5801 = vmatpush1.bf16.msra.mxu0 %v5782
          %5802 = vmatprep.subr.bf16.mxu0 %v5781
          %5803 = vmatpush1.bf16.msra.mxu0 %v5780
          %5804 = vmatprep.subr.bf16.mxu0 %v5779
          %5805 = vmatpush1.bf16.msra.mxu0 %v5778
          %5806 = vmatprep.subr.bf16.mxu0 %v5777
          %5807 = vmatpush1.bf16.msra.mxu0 %v5776
          %5808 = vmatprep.subr.bf16.mxu0 %v5775
          %5809 = vmatpush1.bf16.msra.mxu0 %v5774
          %5810 = vmatprep.subr.bf16.mxu0 %v5773
          %5811 = vmatpush1.bf16.msra.mxu0 %v5772
          %5812 = vmatprep.subr.bf16.mxu0 %v5771
          %5813 = vmatpush1.bf16.msra.mxu0 %v5770
          %5814 = vmatprep.subr.bf16.mxu0 %v5769
          %5815 = vmatpush1.bf16.msra.mxu0 %v5768
          %5816 = vmatprep.subr.bf16.mxu0 0
          %5817 = vmatpush2.bf16.msra.mxu0 0
          %5818 = vmatprep.subr.bf16.mxu0 0
          %5819 = vmatpush2.bf16.msra.mxu0 0
          %5820 = vmatprep.subr.bf16.mxu0 0
          %5821 = vmatpush2.bf16.msra.mxu0 0
          %5822 = vmatprep.subr.bf16.mxu0 0
          %5823 = vmatpush2.bf16.msra.mxu0 0
          %5824 = vmatprep.subr.bf16.mxu0 0
          %5825 = vmatpush2.bf16.msra.mxu0 0
          %5826 = vmatprep.subr.bf16.mxu0 0
          %5827 = vmatpush2.bf16.msra.mxu0 0
          %5828 = vmatprep.subr.bf16.mxu0 0
          %5829 = vmatpush2.bf16.msra.mxu0 0
          %5830 = vmatprep.subr.bf16.mxu0 0
          %5831 = vmatpush2.bf16.msra.mxu0 0
          %5832 = vmatprep.mubr.bf16.mxu0 0
          %5833 = vmatmul.mubr.bf16.gmra.mxu0 %v5703
          %v5834 = vpop.f32.mrf.mxu0
          %v5835 = vadd.f32 0.0, %v5834
          %v5836 = vpop.f32.mrf.mxu0
          %v5837 = vadd.f32 0.0, %v5836
          %v5838 = vpop.f32.mrf.mxu0
          %v5839 = vpop.f32.mrf.mxu0
          %5840 = vdwg.mxu0
          %v5841 = vmax.f32 %v5835, 0.0
          %v5842 = vmax.f32 %v5837, 0.0
          %v5843 = vpack.c.bf16 %v5841, %v5841
          %v5844 = vpack.c.bf16 %v5842, %v5842
          %v5845 = vld [vmem:[#allocation30] sm:$0xf]
          %v5846 = vld [vmem:[#allocation30 + $0x4] sm:$0xf]
          %v5847 = vld [vmem:[#allocation30 + $0x8] sm:$0xf]
          %v5848 = vld [vmem:[#allocation30 + $0xc] sm:$0xf]
          %v5849 = vld [vmem:[#allocation30 + $0x10] sm:$0xf]
          %v5850 = vld [vmem:[#allocation30 + $0x14] sm:$0xf]
          %v5851 = vld [vmem:[#allocation30 + $0x18] sm:$0xf]
          %v5852 = vld [vmem:[#allocation30 + $0x1c] sm:$0xf]
          %v5853 = vld [vmem:[#allocation30 + $0x20] sm:$0xf]
          %v5854 = vld [vmem:[#allocation30 + $0x24] sm:$0xf]
          %v5855 = vld [vmem:[#allocation30 + $0x28] sm:$0xf]
          %v5856 = vld [vmem:[#allocation30 + $0x2c] sm:$0xf]
          %v5857 = vld [vmem:[#allocation30 + $0x30] sm:$0xf]
          %v5858 = vld [vmem:[#allocation30 + $0x34] sm:$0xf]
          %v5859 = vld [vmem:[#allocation30 + $0x38] sm:$0xf]
          %v5860 = vld [vmem:[#allocation30 + $0x3c] sm:$0xf]
          %v5861 = vld [vmem:[#allocation30 + $0x40] sm:$0xf]
          %v5862 = vld [vmem:[#allocation30 + $0x44] sm:$0xf]
          %v5863 = vld [vmem:[#allocation30 + $0x48] sm:$0xf]
          %v5864 = vld [vmem:[#allocation30 + $0x4c] sm:$0xf]
          %v5865 = vld [vmem:[#allocation30 + $0x50] sm:$0xf]
          %v5866 = vld [vmem:[#allocation30 + $0x54] sm:$0xf]
          %v5867 = vld [vmem:[#allocation30 + $0x58] sm:$0xf]
          %v5868 = vld [vmem:[#allocation30 + $0x5c] sm:$0xf]
          %v5869 = vld [vmem:[#allocation30 + $0x60] sm:$0xf]
          %v5870 = vld [vmem:[#allocation30 + $0x64] sm:$0xf]
          %v5871 = vld [vmem:[#allocation30 + $0x68] sm:$0xf]
          %v5872 = vld [vmem:[#allocation30 + $0x6c] sm:$0xf]
          %v5873 = vld [vmem:[#allocation30 + $0x70] sm:$0xf]
          %v5874 = vld [vmem:[#allocation30 + $0x74] sm:$0xf]
          %v5875 = vld [vmem:[#allocation30 + $0x78] sm:$0xf]
          %v5876 = vld [vmem:[#allocation30 + $0x7c] sm:$0xf]
          %v5909 = vunpack.c.l.b16 %v5845
          %v5910 = vunpack.c.l.b16 %v5846
          %v5911 = vunpack.c.l.b16 %v5847
          %v5912 = vunpack.c.l.b16 %v5848
          %v5913 = vunpack.c.l.b16 %v5849
          %v5914 = vunpack.c.l.b16 %v5850
          %v5915 = vunpack.c.l.b16 %v5851
          %v5916 = vunpack.c.l.b16 %v5852
          %v5917 = vunpack.c.l.b16 %v5853
          %v5918 = vunpack.c.l.b16 %v5854
          %v5919 = vunpack.c.l.b16 %v5855
          %v5920 = vunpack.c.l.b16 %v5856
          %v5921 = vunpack.c.l.b16 %v5857
          %v5922 = vunpack.c.l.b16 %v5858
          %v5923 = vunpack.c.l.b16 %v5859
          %v5924 = vunpack.c.l.b16 %v5860
          %v5925 = vunpack.c.l.b16 %v5861
          %v5926 = vunpack.c.l.b16 %v5862
          %v5927 = vunpack.c.l.b16 %v5863
          %v5928 = vunpack.c.l.b16 %v5864
          %v5929 = vunpack.c.l.b16 %v5865
          %v5930 = vunpack.c.l.b16 %v5866
          %v5931 = vunpack.c.l.b16 %v5867
          %v5932 = vunpack.c.l.b16 %v5868
          %v5933 = vunpack.c.l.b16 %v5869
          %v5934 = vunpack.c.l.b16 %v5870
          %v5935 = vunpack.c.l.b16 %v5871
          %v5936 = vunpack.c.l.b16 %v5872
          %v5937 = vunpack.c.l.b16 %v5873
          %v5938 = vunpack.c.l.b16 %v5874
          %v5939 = vunpack.c.l.b16 %v5875
          %v5940 = vunpack.c.l.b16 %v5876
          %v5941 = vpack.c.b16 %v5910, %v5909
          %v5942 = vpack.c.b16 %v5912, %v5911
          %v5943 = vpack.c.b16 %v5914, %v5913
          %v5944 = vpack.c.b16 %v5916, %v5915
          %v5945 = vpack.c.b16 %v5918, %v5917
          %v5946 = vpack.c.b16 %v5920, %v5919
          %v5947 = vpack.c.b16 %v5922, %v5921
          %v5948 = vpack.c.b16 %v5924, %v5923
          %v5949 = vpack.c.b16 %v5926, %v5925
          %v5950 = vpack.c.b16 %v5928, %v5927
          %v5951 = vpack.c.b16 %v5930, %v5929
          %v5952 = vpack.c.b16 %v5932, %v5931
          %v5953 = vpack.c.b16 %v5934, %v5933
          %v5954 = vpack.c.b16 %v5936, %v5935
          %v5955 = vpack.c.b16 %v5938, %v5937
          %v5956 = vpack.c.b16 %v5940, %v5939
          %5973 = vmatprep.subr.bf16.mxu0 0
          %5974 = vmatpush1.bf16.msra.mxu0 %v5948
          %5975 = vmatprep.subr.bf16.mxu0 0
          %5976 = vmatpush1.bf16.msra.mxu0 %v5947
          %5977 = vmatprep.subr.bf16.mxu0 0
          %5978 = vmatpush1.bf16.msra.mxu0 %v5946
          %5979 = vmatprep.subr.bf16.mxu0 0
          %5980 = vmatpush1.bf16.msra.mxu0 %v5945
          %5981 = vmatprep.subr.bf16.mxu0 0
          %5982 = vmatpush1.bf16.msra.mxu0 %v5944
          %5983 = vmatprep.subr.bf16.mxu0 0
          %5984 = vmatpush1.bf16.msra.mxu0 %v5943
          %5985 = vmatprep.subr.bf16.mxu0 0
          %5986 = vmatpush1.bf16.msra.mxu0 %v5942
          %5987 = vmatprep.subr.bf16.mxu0 0
          %5988 = vmatpush1.bf16.msra.mxu0 %v5941
          %5989 = vmatprep.subr.bf16.mxu0 0
          %5990 = vmatpush2.bf16.msra.mxu0 %v5956
          %5991 = vmatprep.subr.bf16.mxu0 0
          %5992 = vmatpush2.bf16.msra.mxu0 %v5955
          %5993 = vmatprep.subr.bf16.mxu0 0
          %5994 = vmatpush2.bf16.msra.mxu0 %v5954
          %5995 = vmatprep.subr.bf16.mxu0 0
          %5996 = vmatpush2.bf16.msra.mxu0 %v5953
          %5997 = vmatprep.subr.bf16.mxu0 0
          %5998 = vmatpush2.bf16.msra.mxu0 %v5952
          %5999 = vmatprep.subr.bf16.mxu0 0
          %6000 = vmatpush2.bf16.msra.mxu0 %v5951
          %6001 = vmatprep.subr.bf16.mxu0 0
          %6002 = vmatpush2.bf16.msra.mxu0 %v5950
          %6003 = vmatprep.subr.bf16.mxu0 0
          %6004 = vmatpush2.bf16.msra.mxu0 %v5949
          %6005 = vmatprep.mubr.bf16.mxu0 %v5844
          %6006 = vmatmul.mubr.bf16.gmra.mxu0 %v5843
          %v6007 = vpop.f32.mrf.mxu0
          %v6008 = vadd.f32 0.0, %v6007
          %v6009 = vpop.f32.mrf.mxu0
          %v6010 = vpop.f32.mrf.mxu0
          %v6011 = vpop.f32.mrf.mxu0
          %6012 = vdwg.mxu0
          %v6013 = vadd.f32 %v5692, %v6008
          %s6014 = scalar_lea.vmem [#allocation17], 1
          %v6015 = vld [vmem:[%s6014] sm:$0x1]
          %v6016 = vmul.f32 %v6013, %v6013
          %v6017 = vsel %vm4111, %v6016, 0.0
          %6018 = vadd.xlane.f32.xlu0 %v6017
          %v6019 = vpop.xlane.xlu0 %6018
          %v6020 = vmul.f32 %v6019, %v1115
          %v6021 = vadd.f32 %v6020, 1e-06
          %v6022 = vrsqrt.pop %v6021
          %v6023 = vmul.f32 %v6013, %v6022
          %v6024 = vmul.f32 %v6023, %v6015
          %v6025 = vpack.c.bf16 %v6024, %v6024
          %s6026 = scalar_lea.vmem [#allocation18], 64
          %v6027 = vld [vmem:[%s6026] sm:$0xf]
          %v6028 = vld [vmem:[%s6026 + $0x4] sm:$0xf]
          %v6029 = vld [vmem:[%s6026 + $0x8] sm:$0xf]
          %v6030 = vld [vmem:[%s6026 + $0xc] sm:$0xf]
          %v6031 = vld [vmem:[%s6026 + $0x10] sm:$0xf]
          %v6032 = vld [vmem:[%s6026 + $0x14] sm:$0xf]
          %v6033 = vld [vmem:[%s6026 + $0x18] sm:$0xf]
          %v6034 = vld [vmem:[%s6026 + $0x1c] sm:$0xf]
          %v6035 = vld [vmem:[%s6026 + $0x20] sm:$0xf]
          %v6036 = vld [vmem:[%s6026 + $0x24] sm:$0xf]
          %v6037 = vld [vmem:[%s6026 + $0x28] sm:$0xf]
          %v6038 = vld [vmem:[%s6026 + $0x2c] sm:$0xf]
          %v6039 = vld [vmem:[%s6026 + $0x30] sm:$0xf]
          %v6040 = vld [vmem:[%s6026 + $0x34] sm:$0xf]
          %v6041 = vld [vmem:[%s6026 + $0x38] sm:$0xf]
          %v6042 = vld [vmem:[%s6026 + $0x3c] sm:$0xf]
          %v6059 = vunpack.c.l.b16 %v6027
          %v6060 = vunpack.c.l.b16 %v6028
          %v6061 = vunpack.c.l.b16 %v6029
          %v6062 = vunpack.c.l.b16 %v6030
          %v6063 = vunpack.c.l.b16 %v6031
          %v6064 = vunpack.c.l.b16 %v6032
          %v6065 = vunpack.c.l.b16 %v6033
          %v6066 = vunpack.c.l.b16 %v6034
          %v6067 = vunpack.c.l.b16 %v6035
          %v6068 = vunpack.c.l.b16 %v6036
          %v6069 = vunpack.c.l.b16 %v6037
          %v6070 = vunpack.c.l.b16 %v6038
          %v6071 = vunpack.c.l.b16 %v6039
          %v6072 = vunpack.c.l.b16 %v6040
          %v6073 = vunpack.c.l.b16 %v6041
          %v6074 = vunpack.c.l.b16 %v6042
          %v6075 = vpack.c.b16 %v6060, %v6059
          %v6076 = vpack.c.b16 %v6062, %v6061
          %v6077 = vpack.c.b16 %v6064, %v6063
          %v6078 = vpack.c.b16 %v6066, %v6065
          %v6079 = vpack.c.b16 %v6068, %v6067
          %v6080 = vpack.c.b16 %v6070, %v6069
          %v6081 = vpack.c.b16 %v6072, %v6071
          %v6082 = vpack.c.b16 %v6074, %v6073
          %6091 = vmatprep.subr.bf16.mxu0 0
          %6092 = vmatpush1.bf16.msra.mxu0 %v6082
          %6093 = vmatprep.subr.bf16.mxu0 0
          %6094 = vmatpush1.bf16.msra.mxu0 %v6081
          %6095 = vmatprep.subr.bf16.mxu0 0
          %6096 = vmatpush1.bf16.msra.mxu0 %v6080
          %6097 = vmatprep.subr.bf16.mxu0 0
          %6098 = vmatpush1.bf16.msra.mxu0 %v6079
          %6099 = vmatprep.subr.bf16.mxu0 0
          %6100 = vmatpush1.bf16.msra.mxu0 %v6078
          %6101 = vmatprep.subr.bf16.mxu0 0
          %6102 = vmatpush1.bf16.msra.mxu0 %v6077
          %6103 = vmatprep.subr.bf16.mxu0 0
          %6104 = vmatpush1.bf16.msra.mxu0 %v6076
          %6105 = vmatprep.subr.bf16.mxu0 0
          %6106 = vmatpush1.bf16.msra.mxu0 %v6075
          %6107 = vmatprep.subr.bf16.mxu0 0
          %6108 = vmatpush2.bf16.msra.mxu0 0
          %6109 = vmatprep.subr.bf16.mxu0 0
          %6110 = vmatpush2.bf16.msra.mxu0 0
          %6111 = vmatprep.subr.bf16.mxu0 0
          %6112 = vmatpush2.bf16.msra.mxu0 0
          %6113 = vmatprep.subr.bf16.mxu0 0
          %6114 = vmatpush2.bf16.msra.mxu0 0
          %6115 = vmatprep.subr.bf16.mxu0 0
          %6116 = vmatpush2.bf16.msra.mxu0 0
          %6117 = vmatprep.subr.bf16.mxu0 0
          %6118 = vmatpush2.bf16.msra.mxu0 0
          %6119 = vmatprep.subr.bf16.mxu0 0
          %6120 = vmatpush2.bf16.msra.mxu0 0
          %6121 = vmatprep.subr.bf16.mxu0 0
          %6122 = vmatpush2.bf16.msra.mxu0 0
          %6123 = vmatprep.mubr.bf16.mxu0 0
          %6124 = vmatmul.mubr.bf16.gmra.mxu0 %v6025
          %v6125 = vpop.f32.mrf.mxu0
          %v6126 = vadd.f32 0.0, %v6125
          %v6127 = vpop.f32.mrf.mxu0
          %v6128 = vpop.f32.mrf.mxu0
          %v6129 = vpop.f32.mrf.mxu0
          %6130 = vdwg.mxu0
          %s6131 = scalar_lea.vmem [#allocation20], 128
          %v6132 = vld [vmem:[%s6131] sm:$0xff]
          %v6133 = vld [vmem:[%s6131 + $0x8] sm:$0xff]
          %v6134 = vld [vmem:[%s6131 + $0x10] sm:$0xff]
          %v6135 = vld [vmem:[%s6131 + $0x18] sm:$0xff]
          %v6136 = vld [vmem:[%s6131 + $0x20] sm:$0xff]
          %v6137 = vld [vmem:[%s6131 + $0x28] sm:$0xff]
          %v6138 = vld [vmem:[%s6131 + $0x30] sm:$0xff]
          %v6139 = vld [vmem:[%s6131 + $0x38] sm:$0xff]
          %v6140 = vld [vmem:[%s6131 + $0x40] sm:$0xff]
          %v6141 = vld [vmem:[%s6131 + $0x48] sm:$0xff]
          %v6142 = vld [vmem:[%s6131 + $0x50] sm:$0xff]
          %v6143 = vld [vmem:[%s6131 + $0x58] sm:$0xff]
          %v6144 = vld [vmem:[%s6131 + $0x60] sm:$0xff]
          %v6145 = vld [vmem:[%s6131 + $0x68] sm:$0xff]
          %v6146 = vld [vmem:[%s6131 + $0x70] sm:$0xff]
          %v6147 = vld [vmem:[%s6131 + $0x78] sm:$0xff]
          %v6164 = vunpack.c.l.b16 %v6132
          %v6165 = vunpack.c.h.b16 %v6132
          %v6166 = vunpack.c.l.b16 %v6133
          %v6167 = vunpack.c.h.b16 %v6133
          %v6168 = vunpack.c.l.b16 %v6134
          %v6169 = vunpack.c.h.b16 %v6134
          %v6170 = vunpack.c.l.b16 %v6135
          %v6171 = vunpack.c.h.b16 %v6135
          %v6172 = vunpack.c.l.b16 %v6136
          %v6173 = vunpack.c.h.b16 %v6136
          %v6174 = vunpack.c.l.b16 %v6137
          %v6175 = vunpack.c.h.b16 %v6137
          %v6176 = vunpack.c.l.b16 %v6138
          %v6177 = vunpack.c.h.b16 %v6138
          %v6178 = vunpack.c.l.b16 %v6139
          %v6179 = vunpack.c.h.b16 %v6139
          %v6180 = vunpack.c.l.b16 %v6140
          %v6181 = vunpack.c.h.b16 %v6140
          %v6182 = vunpack.c.l.b16 %v6141
          %v6183 = vunpack.c.h.b16 %v6141
          %v6184 = vunpack.c.l.b16 %v6142
          %v6185 = vunpack.c.h.b16 %v6142
          %v6186 = vunpack.c.l.b16 %v6143
          %v6187 = vunpack.c.h.b16 %v6143
          %v6188 = vunpack.c.l.b16 %v6144
          %v6189 = vunpack.c.h.b16 %v6144
          %v6190 = vunpack.c.l.b16 %v6145
          %v6191 = vunpack.c.h.b16 %v6145
          %v6192 = vunpack.c.l.b16 %v6146
          %v6193 = vunpack.c.h.b16 %v6146
          %v6194 = vunpack.c.l.b16 %v6147
          %v6195 = vunpack.c.h.b16 %v6147
          %v6196 = vpack.c.b16 %v6166, %v6164
          %v6197 = vpack.c.b16 %v6167, %v6165
          %v6198 = vpack.c.b16 %v6170, %v6168
          %v6199 = vpack.c.b16 %v6171, %v6169
          %v6200 = vpack.c.b16 %v6174, %v6172
          %v6201 = vpack.c.b16 %v6175, %v6173
          %v6202 = vpack.c.b16 %v6178, %v6176
          %v6203 = vpack.c.b16 %v6179, %v6177
          %v6204 = vpack.c.b16 %v6182, %v6180
          %v6205 = vpack.c.b16 %v6183, %v6181
          %v6206 = vpack.c.b16 %v6186, %v6184
          %v6207 = vpack.c.b16 %v6187, %v6185
          %v6208 = vpack.c.b16 %v6190, %v6188
          %v6209 = vpack.c.b16 %v6191, %v6189
          %v6210 = vpack.c.b16 %v6194, %v6192
          %v6211 = vpack.c.b16 %v6195, %v6193
          %6228 = vmatprep.subr.bf16.mxu0 %v6211
          %6229 = vmatpush1.bf16.msra.mxu0 %v6210
          %6230 = vmatprep.subr.bf16.mxu0 %v6209
          %6231 = vmatpush1.bf16.msra.mxu0 %v6208
          %6232 = vmatprep.subr.bf16.mxu0 %v6207
          %6233 = vmatpush1.bf16.msra.mxu0 %v6206
          %6234 = vmatprep.subr.bf16.mxu0 %v6205
          %6235 = vmatpush1.bf16.msra.mxu0 %v6204
          %6236 = vmatprep.subr.bf16.mxu0 %v6203
          %6237 = vmatpush1.bf16.msra.mxu0 %v6202
          %6238 = vmatprep.subr.bf16.mxu0 %v6201
          %6239 = vmatpush1.bf16.msra.mxu0 %v6200
          %6240 = vmatprep.subr.bf16.mxu0 %v6199
          %6241 = vmatpush1.bf16.msra.mxu0 %v6198
          %6242 = vmatprep.subr.bf16.mxu0 %v6197
          %6243 = vmatpush1.bf16.msra.mxu0 %v6196
          %6244 = vmatprep.subr.bf16.mxu0 0
          %6245 = vmatpush2.bf16.msra.mxu0 0
          %6246 = vmatprep.subr.bf16.mxu0 0
          %6247 = vmatpush2.bf16.msra.mxu0 0
          %6248 = vmatprep.subr.bf16.mxu0 0
          %6249 = vmatpush2.bf16.msra.mxu0 0
          %6250 = vmatprep.subr.bf16.mxu0 0
          %6251 = vmatpush2.bf16.msra.mxu0 0
          %6252 = vmatprep.subr.bf16.mxu0 0
          %6253 = vmatpush2.bf16.msra.mxu0 0
          %6254 = vmatprep.subr.bf16.mxu0 0
          %6255 = vmatpush2.bf16.msra.mxu0 0
          %6256 = vmatprep.subr.bf16.mxu0 0
          %6257 = vmatpush2.bf16.msra.mxu0 0
          %6258 = vmatprep.subr.bf16.mxu0 0
          %6259 = vmatpush2.bf16.msra.mxu0 0
          %6260 = vmatprep.mubr.bf16.mxu0 0
          %6261 = vmatmul.mubr.bf16.gmra.mxu0 %v6025
          %v6262 = vpop.f32.mrf.mxu0
          %v6263 = vadd.f32 0.0, %v6262
          %v6264 = vpop.f32.mrf.mxu0
          %v6265 = vadd.f32 0.0, %v6264
          %v6266 = vpop.f32.mrf.mxu0
          %v6267 = vpop.f32.mrf.mxu0
          %6268 = vdwg.mxu0
          %v6271 = vcombine.low %v6263, %v6265
          %v6273 = vunpack.c.l.s4 1966171168
          %v6274 = vunpack.c.0.s8 %v6273
          %v6275 = vlaneseq
          %v6276 = vshrl.u32 %v6275, 7
          %v6277 = vsub.s32 %v6274, %v6276
          %v6278 = vrot.slane %v6271, %v6277
          %v6280 = vunpack.c.l.s4 1966171168
          %v6281 = vunpack.c.0.s8 %v6280
          %v6282 = vlaneseq
          %v6283 = vshrl.u32 %v6282, 7
          %v6284 = vsub.s32 %v6281, %v6283
          %v6285 = vrot.slane %v6278, %v6284
          %s6287 = sadd.s32 32, %s4390
          %s6288 = scalar_lea.vmem [#allocation2], %s6287
          %6289 = vst.msk [vmem:[%s6288] ss:$8 sm:$0x3] %vm4383, %v6285
          %6290 = vst.msk [vmem:[%s6288] ss:$8 sm:$0x0] %vm4383, %v6285
          %s6291 = scalar_lea.vmem [#allocation2], 32
          %v6292 = vld [vmem:[%s6291] sm:$0xff]
          %v6293 = vld [vmem:[%s6291 + $0x8] sm:$0xff]
          %v6294 = vld [vmem:[%s6291 + $0x10] sm:$0xff]
          %v6295 = vld [vmem:[%s6291 + $0x18] sm:$0xff]
          %v6296 = vld [vmem:[%s4398] sm:$0x1]
          %v6297 = vld [vmem:[%s4398 + $0x10] sm:$0x1]
          %v6298 = vld [vmem:[%s4398 + $0x20] sm:$0x1]
          %v6299 = vld [vmem:[%s4398 + $0x30] sm:$0x1]
          %s6300 = scalar_lea.vmem [#allocation21], 64
          %v6301 = vld [vmem:[%s6300] sm:$0xf]
          %v6302 = vld [vmem:[%s6300 + $0x4] sm:$0xf]
          %v6303 = vld [vmem:[%s6300 + $0x8] sm:$0xf]
          %v6304 = vld [vmem:[%s6300 + $0xc] sm:$0xf]
          %v6305 = vld [vmem:[%s6300 + $0x10] sm:$0xf]
          %v6306 = vld [vmem:[%s6300 + $0x14] sm:$0xf]
          %v6307 = vld [vmem:[%s6300 + $0x18] sm:$0xf]
          %v6308 = vld [vmem:[%s6300 + $0x1c] sm:$0xf]
          %v6309 = vld [vmem:[%s6300 + $0x20] sm:$0xf]
          %v6310 = vld [vmem:[%s6300 + $0x24] sm:$0xf]
          %v6311 = vld [vmem:[%s6300 + $0x28] sm:$0xf]
          %v6312 = vld [vmem:[%s6300 + $0x2c] sm:$0xf]
          %v6313 = vld [vmem:[%s6300 + $0x30] sm:$0xf]
          %v6314 = vld [vmem:[%s6300 + $0x34] sm:$0xf]
          %v6315 = vld [vmem:[%s6300 + $0x38] sm:$0xf]
          %v6316 = vld [vmem:[%s6300 + $0x3c] sm:$0xf]
          %6318 = vrot.lane.b32.xlu0 %v6126, 96
          %v6319 = vpop.permute.xlu0 %6318
          %6321 = vrot.lane.b32.xlu0 %v6126, 64
          %v6322 = vpop.permute.xlu0 %6321
          %6324 = vrot.lane.b32.xlu0 %v6126, 32
          %v6325 = vpop.permute.xlu0 %6324
          %v6327 = vpack.c.bf16 %v6126, %v6126
          %v6328 = vpack.c.bf16 %v6319, %v6319
          %v6329 = vpack.c.bf16 %v6322, %v6322
          %v6330 = vpack.c.bf16 %v6325, %v6325
          %6333 = vrot.lane.b32.xlu0 %v6292, 96
          %v6334 = vpop.permute.xlu0 %6333
          %6335 = vrot.lane.b32.xlu0 %v6294, 96
          %v6336 = vpop.permute.xlu0 %6335
          %6339 = vrot.lane.b32.xlu0 %v6292, 64
          %v6340 = vpop.permute.xlu0 %6339
          %6341 = vrot.lane.b32.xlu0 %v6294, 64
          %v6342 = vpop.permute.xlu0 %6341
          %6345 = vrot.lane.b32.xlu0 %v6292, 32
          %v6346 = vpop.permute.xlu0 %6345
          %6347 = vrot.lane.b32.xlu0 %v6294, 32
          %v6348 = vpop.permute.xlu0 %6347
          %v6351 = vpack.c.bf16 %v6294, %v6292
          %v6352 = vpack.c.bf16 %v6336, %v6334
          %v6353 = vpack.c.bf16 %v6342, %v6340
          %v6354 = vpack.c.bf16 %v6348, %v6346
          %6357 = vrot.lane.b32.xlu0 %v6293, 96
          %v6358 = vpop.permute.xlu0 %6357
          %6359 = vrot.lane.b32.xlu0 %v6295, 96
          %v6360 = vpop.permute.xlu0 %6359
          %6363 = vrot.lane.b32.xlu0 %v6293, 64
          %v6364 = vpop.permute.xlu0 %6363
          %6365 = vrot.lane.b32.xlu0 %v6295, 64
          %v6366 = vpop.permute.xlu0 %6365
          %6369 = vrot.lane.b32.xlu0 %v6293, 32
          %v6370 = vpop.permute.xlu0 %6369
          %6371 = vrot.lane.b32.xlu0 %v6295, 32
          %v6372 = vpop.permute.xlu0 %6371
          %v6375 = vpack.c.bf16 %v6295, %v6293
          %v6376 = vpack.c.bf16 %v6360, %v6358
          %v6377 = vpack.c.bf16 %v6366, %v6364
          %v6378 = vpack.c.bf16 %v6372, %v6370
          %v6380 = vsel %vm1465, %v6327, 0
          %v6383 = vsel %vm1465, %v6351, 0
          %6385 = vmatprep.subr.bf16.mxu0 0
          %6386 = vmatpush1.bf16.xpose.msra.mxu0 0
          %6387 = vmatprep.subr.bf16.mxu0 0
          %6388 = vmatpush1.bf16.xpose.msra.mxu0 0
          %6389 = vmatprep.subr.bf16.mxu0 0
          %6390 = vmatpush1.bf16.xpose.msra.mxu0 0
          %6391 = vmatprep.subr.bf16.mxu0 0
          %6392 = vmatpush1.bf16.xpose.msra.mxu0 0
          %6393 = vmatprep.subr.bf16.mxu0 0
          %6394 = vmatpush1.bf16.xpose.msra.mxu0 0
          %6395 = vmatprep.subr.bf16.mxu0 0
          %6396 = vmatpush1.bf16.xpose.msra.mxu0 0
          %6397 = vmatprep.subr.bf16.mxu0 0
          %6398 = vmatpush1.bf16.xpose.msra.mxu0 0
          %6399 = vmatprep.subr.bf16.mxu0 0
          %6400 = vmatpush1.bf16.xpose.msra.mxu0 %v6383
          %6401 = vmatprep.subr.bf16.mxu0 0
          %6402 = vmatpush2.bf16.xpose.msra.mxu0 0
          %6403 = vmatprep.subr.bf16.mxu0 0
          %6404 = vmatpush2.bf16.xpose.msra.mxu0 0
          %6405 = vmatprep.subr.bf16.mxu0 0
          %6406 = vmatpush2.bf16.xpose.msra.mxu0 0
          %6407 = vmatprep.subr.bf16.mxu0 0
          %6408 = vmatpush2.bf16.xpose.msra.mxu0 0
          %6409 = vmatprep.subr.bf16.mxu0 0
          %6410 = vmatpush2.bf16.xpose.msra.mxu0 0
          %6411 = vmatprep.subr.bf16.mxu0 0
          %6412 = vmatpush2.bf16.xpose.msra.mxu0 0
          %6413 = vmatprep.subr.bf16.mxu0 0
          %6414 = vmatpush2.bf16.xpose.msra.mxu0 0
          %6415 = vmatprep.subr.bf16.mxu0 0
          %6416 = vmatpush2.bf16.xpose.msra.mxu0 0
          %6417 = vmatprep.mubr.bf16.mxu0 0
          %6418 = vmatmul.mubr.bf16.gmra.mxu0 %v6380
          %v6419 = vpop.f32.mrf.mxu0
          %v6420 = vadd.f32 %v6296, %v6419
          %v6421 = vpop.f32.mrf.mxu0
          %v6422 = vpop.f32.mrf.mxu0
          %v6423 = vpop.f32.mrf.mxu0
          %6424 = vdwg.mxu0
          %v6426 = vsel %vm1465, %v6328, 0
          %v6429 = vsel %vm1465, %v6352, 0
          %6431 = vmatprep.subr.bf16.mxu0 0
          %6432 = vmatpush1.bf16.xpose.msra.mxu0 0
          %6433 = vmatprep.subr.bf16.mxu0 0
          %6434 = vmatpush1.bf16.xpose.msra.mxu0 0
          %6435 = vmatprep.subr.bf16.mxu0 0
          %6436 = vmatpush1.bf16.xpose.msra.mxu0 0
          %6437 = vmatprep.subr.bf16.mxu0 0
          %6438 = vmatpush1.bf16.xpose.msra.mxu0 0
          %6439 = vmatprep.subr.bf16.mxu0 0
          %6440 = vmatpush1.bf16.xpose.msra.mxu0 0
          %6441 = vmatprep.subr.bf16.mxu0 0
          %6442 = vmatpush1.bf16.xpose.msra.mxu0 0
          %6443 = vmatprep.subr.bf16.mxu0 0
          %6444 = vmatpush1.bf16.xpose.msra.mxu0 0
          %6445 = vmatprep.subr.bf16.mxu0 0
          %6446 = vmatpush1.bf16.xpose.msra.mxu0 %v6429
          %6447 = vmatprep.subr.bf16.mxu0 0
          %6448 = vmatpush2.bf16.xpose.msra.mxu0 0
          %6449 = vmatprep.subr.bf16.mxu0 0
          %6450 = vmatpush2.bf16.xpose.msra.mxu0 0
          %6451 = vmatprep.subr.bf16.mxu0 0
          %6452 = vmatpush2.bf16.xpose.msra.mxu0 0
          %6453 = vmatprep.subr.bf16.mxu0 0
          %6454 = vmatpush2.bf16.xpose.msra.mxu0 0
          %6455 = vmatprep.subr.bf16.mxu0 0
          %6456 = vmatpush2.bf16.xpose.msra.mxu0 0
          %6457 = vmatprep.subr.bf16.mxu0 0
          %6458 = vmatpush2.bf16.xpose.msra.mxu0 0
          %6459 = vmatprep.subr.bf16.mxu0 0
          %6460 = vmatpush2.bf16.xpose.msra.mxu0 0
          %6461 = vmatprep.subr.bf16.mxu0 0
          %6462 = vmatpush2.bf16.xpose.msra.mxu0 0
          %6463 = vmatprep.mubr.bf16.mxu0 0
          %6464 = vmatmul.mubr.bf16.gmra.mxu0 %v6426
          %v6465 = vpop.f32.mrf.mxu0
          %v6466 = vadd.f32 %v6297, %v6465
          %v6467 = vpop.f32.mrf.mxu0
          %v6468 = vpop.f32.mrf.mxu0
          %v6469 = vpop.f32.mrf.mxu0
          %6470 = vdwg.mxu0
          %v6472 = vsel %vm1465, %v6329, 0
          %v6475 = vsel %vm1465, %v6353, 0
          %6477 = vmatprep.subr.bf16.mxu0 0
          %6478 = vmatpush1.bf16.xpose.msra.mxu0 0
          %6479 = vmatprep.subr.bf16.mxu0 0
          %6480 = vmatpush1.bf16.xpose.msra.mxu0 0
          %6481 = vmatprep.subr.bf16.mxu0 0
          %6482 = vmatpush1.bf16.xpose.msra.mxu0 0
          %6483 = vmatprep.subr.bf16.mxu0 0
          %6484 = vmatpush1.bf16.xpose.msra.mxu0 0
          %6485 = vmatprep.subr.bf16.mxu0 0
          %6486 = vmatpush1.bf16.xpose.msra.mxu0 0
          %6487 = vmatprep.subr.bf16.mxu0 0
          %6488 = vmatpush1.bf16.xpose.msra.mxu0 0
          %6489 = vmatprep.subr.bf16.mxu0 0
          %6490 = vmatpush1.bf16.xpose.msra.mxu0 0
          %6491 = vmatprep.subr.bf16.mxu0 0
          %6492 = vmatpush1.bf16.xpose.msra.mxu0 %v6475
          %6493 = vmatprep.subr.bf16.mxu0 0
          %6494 = vmatpush2.bf16.xpose.msra.mxu0 0
          %6495 = vmatprep.subr.bf16.mxu0 0
          %6496 = vmatpush2.bf16.xpose.msra.mxu0 0
          %6497 = vmatprep.subr.bf16.mxu0 0
          %6498 = vmatpush2.bf16.xpose.msra.mxu0 0
          %6499 = vmatprep.subr.bf16.mxu0 0
          %6500 = vmatpush2.bf16.xpose.msra.mxu0 0
          %6501 = vmatprep.subr.bf16.mxu0 0
          %6502 = vmatpush2.bf16.xpose.msra.mxu0 0
          %6503 = vmatprep.subr.bf16.mxu0 0
          %6504 = vmatpush2.bf16.xpose.msra.mxu0 0
          %6505 = vmatprep.subr.bf16.mxu0 0
          %6506 = vmatpush2.bf16.xpose.msra.mxu0 0
          %6507 = vmatprep.subr.bf16.mxu0 0
          %6508 = vmatpush2.bf16.xpose.msra.mxu0 0
          %6509 = vmatprep.mubr.bf16.mxu0 0
          %6510 = vmatmul.mubr.bf16.gmra.mxu0 %v6472
          %v6511 = vpop.f32.mrf.mxu0
          %v6512 = vadd.f32 %v6298, %v6511
          %v6513 = vpop.f32.mrf.mxu0
          %v6514 = vpop.f32.mrf.mxu0
          %v6515 = vpop.f32.mrf.mxu0
          %6516 = vdwg.mxu0
          %v6518 = vsel %vm1465, %v6330, 0
          %v6521 = vsel %vm1465, %v6354, 0
          %6523 = vmatprep.subr.bf16.mxu0 0
          %6524 = vmatpush1.bf16.xpose.msra.mxu0 0
          %6525 = vmatprep.subr.bf16.mxu0 0
          %6526 = vmatpush1.bf16.xpose.msra.mxu0 0
          %6527 = vmatprep.subr.bf16.mxu0 0
          %6528 = vmatpush1.bf16.xpose.msra.mxu0 0
          %6529 = vmatprep.subr.bf16.mxu0 0
          %6530 = vmatpush1.bf16.xpose.msra.mxu0 0
          %6531 = vmatprep.subr.bf16.mxu0 0
          %6532 = vmatpush1.bf16.xpose.msra.mxu0 0
          %6533 = vmatprep.subr.bf16.mxu0 0
          %6534 = vmatpush1.bf16.xpose.msra.mxu0 0
          %6535 = vmatprep.subr.bf16.mxu0 0
          %6536 = vmatpush1.bf16.xpose.msra.mxu0 0
          %6537 = vmatprep.subr.bf16.mxu0 0
          %6538 = vmatpush1.bf16.xpose.msra.mxu0 %v6521
          %6539 = vmatprep.subr.bf16.mxu0 0
          %6540 = vmatpush2.bf16.xpose.msra.mxu0 0
          %6541 = vmatprep.subr.bf16.mxu0 0
          %6542 = vmatpush2.bf16.xpose.msra.mxu0 0
          %6543 = vmatprep.subr.bf16.mxu0 0
          %6544 = vmatpush2.bf16.xpose.msra.mxu0 0
          %6545 = vmatprep.subr.bf16.mxu0 0
          %6546 = vmatpush2.bf16.xpose.msra.mxu0 0
          %6547 = vmatprep.subr.bf16.mxu0 0
          %6548 = vmatpush2.bf16.xpose.msra.mxu0 0
          %6549 = vmatprep.subr.bf16.mxu0 0
          %6550 = vmatpush2.bf16.xpose.msra.mxu0 0
          %6551 = vmatprep.subr.bf16.mxu0 0
          %6552 = vmatpush2.bf16.xpose.msra.mxu0 0
          %6553 = vmatprep.subr.bf16.mxu0 0
          %6554 = vmatpush2.bf16.xpose.msra.mxu0 0
          %6555 = vmatprep.mubr.bf16.mxu0 0
          %6556 = vmatmul.mubr.bf16.gmra.mxu0 %v6518
          %v6557 = vpop.f32.mrf.mxu0
          %v6558 = vadd.f32 %v6299, %v6557
          %v6559 = vpop.f32.mrf.mxu0
          %v6560 = vpop.f32.mrf.mxu0
          %v6561 = vpop.f32.mrf.mxu0
          %6562 = vdwg.mxu0
          %v6563 = vsel %vm4665, %v6420, -inf
          %6564 = vmax.xlane.f32.xlu0 %v6563
          %v6565 = vpop.xlane.xlu0 %6564
          %v6566 = vsel %vm4665, %v6466, -inf
          %6567 = vmax.xlane.f32.xlu0 %v6566
          %v6568 = vpop.xlane.xlu0 %6567
          %v6569 = vsel %vm4665, %v6512, -inf
          %6570 = vmax.xlane.f32.xlu0 %v6569
          %v6571 = vpop.xlane.xlu0 %6570
          %v6572 = vsel %vm4665, %v6558, -inf
          %6573 = vmax.xlane.f32.xlu0 %v6572
          %v6574 = vpop.xlane.xlu0 %6573
          %v6575 = vsub.f32 %v6420, %v6565
          %v6576 = vsub.f32 %v6466, %v6568
          %v6577 = vsub.f32 %v6512, %v6571
          %v6578 = vsub.f32 %v6558, %v6574
          %v6579 = vmul.f32 %v6575, 1.442695
          %v6580 = vpow.pop %v6579
          %v6581 = vmul.f32 %v6576, 1.442695
          %v6582 = vpow.pop %v6581
          %v6583 = vmul.f32 %v6577, 1.442695
          %v6584 = vpow.pop %v6583
          %v6585 = vmul.f32 %v6578, 1.442695
          %v6586 = vpow.pop %v6585
          %v6587 = vsel %vm4665, %v6580, 0.0
          %6588 = vadd.xlane.f32.xlu0 %v6587
          %v6589 = vpop.xlane.xlu0 %6588
          %v6590 = vsel %vm4665, %v6582, 0.0
          %6591 = vadd.xlane.f32.xlu0 %v6590
          %v6592 = vpop.xlane.xlu0 %6591
          %v6593 = vsel %vm4665, %v6584, 0.0
          %6594 = vadd.xlane.f32.xlu0 %v6593
          %v6595 = vpop.xlane.xlu0 %6594
          %v6596 = vsel %vm4665, %v6586, 0.0
          %6597 = vadd.xlane.f32.xlu0 %v6596
          %v6598 = vpop.xlane.xlu0 %6597
          %v6599 = vrcp.pop %v6589
          %v6600 = vrcp.pop %v6592
          %v6601 = vrcp.pop %v6595
          %v6602 = vrcp.pop %v6598
          %v6603 = vmul.f32 %v6580, %v6599
          %v6604 = vmul.f32 %v6582, %v6600
          %v6605 = vmul.f32 %v6584, %v6601
          %v6606 = vmul.f32 %v6586, %v6602
          %v6607 = vpack.c.bf16 %v6603, %v6603
          %v6608 = vpack.c.bf16 %v6604, %v6604
          %v6609 = vpack.c.bf16 %v6605, %v6605
          %v6610 = vpack.c.bf16 %v6606, %v6606
          %v6612 = vsel %vm1654, %v6607, 0
          %6614 = vmatprep.subr.bf16.mxu0 0
          %6615 = vmatpush1.bf16.msra.mxu0 0
          %6616 = vmatprep.subr.bf16.mxu0 0
          %6617 = vmatpush1.bf16.msra.mxu0 0
          %6618 = vmatprep.subr.bf16.mxu0 0
          %6619 = vmatpush1.bf16.msra.mxu0 0
          %6620 = vmatprep.subr.bf16.mxu0 0
          %6621 = vmatpush1.bf16.msra.mxu0 0
          %6622 = vmatprep.subr.bf16.mxu0 0
          %6623 = vmatpush1.bf16.msra.mxu0 0
          %6624 = vmatprep.subr.bf16.mxu0 0
          %6625 = vmatpush1.bf16.msra.mxu0 0
          %6626 = vmatprep.subr.bf16.mxu0 0
          %6627 = vmatpush1.bf16.msra.mxu0 0
          %6628 = vmatprep.subr.bf16.mxu0 0
          %6629 = vmatpush1.bf16.msra.mxu0 %v6375
          %6630 = vmatprep.subr.bf16.mxu0 0
          %6631 = vmatpush2.bf16.msra.mxu0 0
          %6632 = vmatprep.subr.bf16.mxu0 0
          %6633 = vmatpush2.bf16.msra.mxu0 0
          %6634 = vmatprep.subr.bf16.mxu0 0
          %6635 = vmatpush2.bf16.msra.mxu0 0
          %6636 = vmatprep.subr.bf16.mxu0 0
          %6637 = vmatpush2.bf16.msra.mxu0 0
          %6638 = vmatprep.subr.bf16.mxu0 0
          %6639 = vmatpush2.bf16.msra.mxu0 0
          %6640 = vmatprep.subr.bf16.mxu0 0
          %6641 = vmatpush2.bf16.msra.mxu0 0
          %6642 = vmatprep.subr.bf16.mxu0 0
          %6643 = vmatpush2.bf16.msra.mxu0 0
          %6644 = vmatprep.subr.bf16.mxu0 0
          %6645 = vmatpush2.bf16.msra.mxu0 0
          %6646 = vmatprep.mubr.bf16.mxu0 0
          %6647 = vmatmul.mubr.bf16.gmra.mxu0 %v6612
          %v6648 = vpop.f32.mrf.mxu0
          %v6649 = vadd.f32 0.0, %v6648
          %v6650 = vpop.f32.mrf.mxu0
          %v6651 = vpop.f32.mrf.mxu0
          %v6652 = vpop.f32.mrf.mxu0
          %6653 = vdwg.mxu0
          %v6655 = vsel %vm1654, %v6608, 0
          %6657 = vmatprep.subr.bf16.mxu0 0
          %6658 = vmatpush1.bf16.msra.mxu0 0
          %6659 = vmatprep.subr.bf16.mxu0 0
          %6660 = vmatpush1.bf16.msra.mxu0 0
          %6661 = vmatprep.subr.bf16.mxu0 0
          %6662 = vmatpush1.bf16.msra.mxu0 0
          %6663 = vmatprep.subr.bf16.mxu0 0
          %6664 = vmatpush1.bf16.msra.mxu0 0
          %6665 = vmatprep.subr.bf16.mxu0 0
          %6666 = vmatpush1.bf16.msra.mxu0 0
          %6667 = vmatprep.subr.bf16.mxu0 0
          %6668 = vmatpush1.bf16.msra.mxu0 0
          %6669 = vmatprep.subr.bf16.mxu0 0
          %6670 = vmatpush1.bf16.msra.mxu0 0
          %6671 = vmatprep.subr.bf16.mxu0 0
          %6672 = vmatpush1.bf16.msra.mxu0 %v6376
          %6673 = vmatprep.subr.bf16.mxu0 0
          %6674 = vmatpush2.bf16.msra.mxu0 0
          %6675 = vmatprep.subr.bf16.mxu0 0
          %6676 = vmatpush2.bf16.msra.mxu0 0
          %6677 = vmatprep.subr.bf16.mxu0 0
          %6678 = vmatpush2.bf16.msra.mxu0 0
          %6679 = vmatprep.subr.bf16.mxu0 0
          %6680 = vmatpush2.bf16.msra.mxu0 0
          %6681 = vmatprep.subr.bf16.mxu0 0
          %6682 = vmatpush2.bf16.msra.mxu0 0
          %6683 = vmatprep.subr.bf16.mxu0 0
          %6684 = vmatpush2.bf16.msra.mxu0 0
          %6685 = vmatprep.subr.bf16.mxu0 0
          %6686 = vmatpush2.bf16.msra.mxu0 0
          %6687 = vmatprep.subr.bf16.mxu0 0
          %6688 = vmatpush2.bf16.msra.mxu0 0
          %6689 = vmatprep.mubr.bf16.mxu0 0
          %6690 = vmatmul.mubr.bf16.gmra.mxu0 %v6655
          %v6691 = vpop.f32.mrf.mxu0
          %v6692 = vadd.f32 0.0, %v6691
          %v6693 = vpop.f32.mrf.mxu0
          %v6694 = vpop.f32.mrf.mxu0
          %v6695 = vpop.f32.mrf.mxu0
          %6696 = vdwg.mxu0
          %v6698 = vsel %vm1654, %v6609, 0
          %6700 = vmatprep.subr.bf16.mxu0 0
          %6701 = vmatpush1.bf16.msra.mxu0 0
          %6702 = vmatprep.subr.bf16.mxu0 0
          %6703 = vmatpush1.bf16.msra.mxu0 0
          %6704 = vmatprep.subr.bf16.mxu0 0
          %6705 = vmatpush1.bf16.msra.mxu0 0
          %6706 = vmatprep.subr.bf16.mxu0 0
          %6707 = vmatpush1.bf16.msra.mxu0 0
          %6708 = vmatprep.subr.bf16.mxu0 0
          %6709 = vmatpush1.bf16.msra.mxu0 0
          %6710 = vmatprep.subr.bf16.mxu0 0
          %6711 = vmatpush1.bf16.msra.mxu0 0
          %6712 = vmatprep.subr.bf16.mxu0 0
          %6713 = vmatpush1.bf16.msra.mxu0 0
          %6714 = vmatprep.subr.bf16.mxu0 0
          %6715 = vmatpush1.bf16.msra.mxu0 %v6377
          %6716 = vmatprep.subr.bf16.mxu0 0
          %6717 = vmatpush2.bf16.msra.mxu0 0
          %6718 = vmatprep.subr.bf16.mxu0 0
          %6719 = vmatpush2.bf16.msra.mxu0 0
          %6720 = vmatprep.subr.bf16.mxu0 0
          %6721 = vmatpush2.bf16.msra.mxu0 0
          %6722 = vmatprep.subr.bf16.mxu0 0
          %6723 = vmatpush2.bf16.msra.mxu0 0
          %6724 = vmatprep.subr.bf16.mxu0 0
          %6725 = vmatpush2.bf16.msra.mxu0 0
          %6726 = vmatprep.subr.bf16.mxu0 0
          %6727 = vmatpush2.bf16.msra.mxu0 0
          %6728 = vmatprep.subr.bf16.mxu0 0
          %6729 = vmatpush2.bf16.msra.mxu0 0
          %6730 = vmatprep.subr.bf16.mxu0 0
          %6731 = vmatpush2.bf16.msra.mxu0 0
          %6732 = vmatprep.mubr.bf16.mxu0 0
          %6733 = vmatmul.mubr.bf16.gmra.mxu0 %v6698
          %v6734 = vpop.f32.mrf.mxu0
          %v6735 = vadd.f32 0.0, %v6734
          %v6736 = vpop.f32.mrf.mxu0
          %v6737 = vpop.f32.mrf.mxu0
          %v6738 = vpop.f32.mrf.mxu0
          %6739 = vdwg.mxu0
          %v6741 = vsel %vm1654, %v6610, 0
          %6743 = vmatprep.subr.bf16.mxu0 0
          %6744 = vmatpush1.bf16.msra.mxu0 0
          %6745 = vmatprep.subr.bf16.mxu0 0
          %6746 = vmatpush1.bf16.msra.mxu0 0
          %6747 = vmatprep.subr.bf16.mxu0 0
          %6748 = vmatpush1.bf16.msra.mxu0 0
          %6749 = vmatprep.subr.bf16.mxu0 0
          %6750 = vmatpush1.bf16.msra.mxu0 0
          %6751 = vmatprep.subr.bf16.mxu0 0
          %6752 = vmatpush1.bf16.msra.mxu0 0
          %6753 = vmatprep.subr.bf16.mxu0 0
          %6754 = vmatpush1.bf16.msra.mxu0 0
          %6755 = vmatprep.subr.bf16.mxu0 0
          %6756 = vmatpush1.bf16.msra.mxu0 0
          %6757 = vmatprep.subr.bf16.mxu0 0
          %6758 = vmatpush1.bf16.msra.mxu0 %v6378
          %6759 = vmatprep.subr.bf16.mxu0 0
          %6760 = vmatpush2.bf16.msra.mxu0 0
          %6761 = vmatprep.subr.bf16.mxu0 0
          %6762 = vmatpush2.bf16.msra.mxu0 0
          %6763 = vmatprep.subr.bf16.mxu0 0
          %6764 = vmatpush2.bf16.msra.mxu0 0
          %6765 = vmatprep.subr.bf16.mxu0 0
          %6766 = vmatpush2.bf16.msra.mxu0 0
          %6767 = vmatprep.subr.bf16.mxu0 0
          %6768 = vmatpush2.bf16.msra.mxu0 0
          %6769 = vmatprep.subr.bf16.mxu0 0
          %6770 = vmatpush2.bf16.msra.mxu0 0
          %6771 = vmatprep.subr.bf16.mxu0 0
          %6772 = vmatpush2.bf16.msra.mxu0 0
          %6773 = vmatprep.subr.bf16.mxu0 0
          %6774 = vmatpush2.bf16.msra.mxu0 0
          %6775 = vmatprep.mubr.bf16.mxu0 0
          %6776 = vmatmul.mubr.bf16.gmra.mxu0 %v6741
          %v6777 = vpop.f32.mrf.mxu0
          %v6778 = vadd.f32 0.0, %v6777
          %v6779 = vpop.f32.mrf.mxu0
          %v6780 = vpop.f32.mrf.mxu0
          %v6781 = vpop.f32.mrf.mxu0
          %6782 = vdwg.mxu0
          %6784 = vrot.lane.b32.xlu0 %v6692, 32
          %v6785 = vpop.permute.xlu0 %6784
          %6788 = vrot.lane.b32.xlu0 %v6735, 64
          %v6789 = vpop.permute.xlu0 %6788
          %6792 = vrot.lane.b32.xlu0 %v6778, 96
          %v6793 = vpop.permute.xlu0 %6792
          %v6795 = vsel %vm1465, %v6649, %v6785
          %v6796 = vsel %vm1949, %v6795, %v6789
          %v6797 = vsel %vm1952, %v6796, %v6793
          %v6798 = vpack.c.bf16 %v6797, %v6797
          %v6815 = vunpack.c.l.b16 %v6301
          %v6816 = vunpack.c.l.b16 %v6302
          %v6817 = vunpack.c.l.b16 %v6303
          %v6818 = vunpack.c.l.b16 %v6304
          %v6819 = vunpack.c.l.b16 %v6305
          %v6820 = vunpack.c.l.b16 %v6306
          %v6821 = vunpack.c.l.b16 %v6307
          %v6822 = vunpack.c.l.b16 %v6308
          %v6823 = vunpack.c.l.b16 %v6309
          %v6824 = vunpack.c.l.b16 %v6310
          %v6825 = vunpack.c.l.b16 %v6311
          %v6826 = vunpack.c.l.b16 %v6312
          %v6827 = vunpack.c.l.b16 %v6313
          %v6828 = vunpack.c.l.b16 %v6314
          %v6829 = vunpack.c.l.b16 %v6315
          %v6830 = vunpack.c.l.b16 %v6316
          %v6831 = vpack.c.b16 %v6816, %v6815
          %v6832 = vpack.c.b16 %v6818, %v6817
          %v6833 = vpack.c.b16 %v6820, %v6819
          %v6834 = vpack.c.b16 %v6822, %v6821
          %v6835 = vpack.c.b16 %v6824, %v6823
          %v6836 = vpack.c.b16 %v6826, %v6825
          %v6837 = vpack.c.b16 %v6828, %v6827
          %v6838 = vpack.c.b16 %v6830, %v6829
          %6847 = vmatprep.subr.bf16.mxu0 0
          %6848 = vmatpush1.bf16.msra.mxu0 %v6838
          %6849 = vmatprep.subr.bf16.mxu0 0
          %6850 = vmatpush1.bf16.msra.mxu0 %v6837
          %6851 = vmatprep.subr.bf16.mxu0 0
          %6852 = vmatpush1.bf16.msra.mxu0 %v6836
          %6853 = vmatprep.subr.bf16.mxu0 0
          %6854 = vmatpush1.bf16.msra.mxu0 %v6835
          %6855 = vmatprep.subr.bf16.mxu0 0
          %6856 = vmatpush1.bf16.msra.mxu0 %v6834
          %6857 = vmatprep.subr.bf16.mxu0 0
          %6858 = vmatpush1.bf16.msra.mxu0 %v6833
          %6859 = vmatprep.subr.bf16.mxu0 0
          %6860 = vmatpush1.bf16.msra.mxu0 %v6832
          %6861 = vmatprep.subr.bf16.mxu0 0
          %6862 = vmatpush1.bf16.msra.mxu0 %v6831
          %6863 = vmatprep.subr.bf16.mxu0 0
          %6864 = vmatpush2.bf16.msra.mxu0 0
          %6865 = vmatprep.subr.bf16.mxu0 0
          %6866 = vmatpush2.bf16.msra.mxu0 0
          %6867 = vmatprep.subr.bf16.mxu0 0
          %6868 = vmatpush2.bf16.msra.mxu0 0
          %6869 = vmatprep.subr.bf16.mxu0 0
          %6870 = vmatpush2.bf16.msra.mxu0 0
          %6871 = vmatprep.subr.bf16.mxu0 0
          %6872 = vmatpush2.bf16.msra.mxu0 0
          %6873 = vmatprep.subr.bf16.mxu0 0
          %6874 = vmatpush2.bf16.msra.mxu0 0
          %6875 = vmatprep.subr.bf16.mxu0 0
          %6876 = vmatpush2.bf16.msra.mxu0 0
          %6877 = vmatprep.subr.bf16.mxu0 0
          %6878 = vmatpush2.bf16.msra.mxu0 0
          %6879 = vmatprep.mubr.bf16.mxu0 0
          %6880 = vmatmul.mubr.bf16.gmra.mxu0 %v6798
          %v6881 = vpop.f32.mrf.mxu0
          %v6882 = vadd.f32 0.0, %v6881
          %v6883 = vpop.f32.mrf.mxu0
          %v6884 = vpop.f32.mrf.mxu0
          %v6885 = vpop.f32.mrf.mxu0
          %6886 = vdwg.mxu0
          %v6887 = vadd.f32 %v6013, %v6882
          %s6888 = scalar_lea.vmem [#allocation23], 1
          %v6889 = vld [vmem:[%s6888] sm:$0x1]
          %v6890 = vmul.f32 %v6887, %v6887
          %v6891 = vsel %vm4111, %v6890, 0.0
          %6892 = vadd.xlane.f32.xlu0 %v6891
          %v6893 = vpop.xlane.xlu0 %6892
          %v6894 = vmul.f32 %v6893, %v1115
          %v6895 = vadd.f32 %v6894, 1e-06
          %v6896 = vrsqrt.pop %v6895
          %v6897 = vmul.f32 %v6887, %v6896
          %v6898 = vmul.f32 %v6897, %v6889
          %v6899 = vpack.c.bf16 %v6898, %v6898
          %s6900 = scalar_lea.vmem [#allocation24], 64
          %v6901 = vld [vmem:[%s6900] sm:$0xf]
          %v6902 = vld [vmem:[%s6900 + $0x4] sm:$0xf]
          %v6903 = vld [vmem:[%s6900 + $0x8] sm:$0xf]
          %v6904 = vld [vmem:[%s6900 + $0xc] sm:$0xf]
          %v6905 = vld [vmem:[%s6900 + $0x10] sm:$0xf]
          %v6906 = vld [vmem:[%s6900 + $0x14] sm:$0xf]
          %v6907 = vld [vmem:[%s6900 + $0x18] sm:$0xf]
          %v6908 = vld [vmem:[%s6900 + $0x1c] sm:$0xf]
          %v6909 = vld [vmem:[%s6900 + $0x20] sm:$0xf]
          %v6910 = vld [vmem:[%s6900 + $0x24] sm:$0xf]
          %v6911 = vld [vmem:[%s6900 + $0x28] sm:$0xf]
          %v6912 = vld [vmem:[%s6900 + $0x2c] sm:$0xf]
          %v6913 = vld [vmem:[%s6900 + $0x30] sm:$0xf]
          %v6914 = vld [vmem:[%s6900 + $0x34] sm:$0xf]
          %v6915 = vld [vmem:[%s6900 + $0x38] sm:$0xf]
          %v6916 = vld [vmem:[%s6900 + $0x3c] sm:$0xf]
          %v6933 = vunpack.c.l.b16 %v6901
          %v6934 = vunpack.c.l.b16 %v6902
          %v6935 = vunpack.c.l.b16 %v6903
          %v6936 = vunpack.c.l.b16 %v6904
          %v6937 = vunpack.c.l.b16 %v6905
          %v6938 = vunpack.c.l.b16 %v6906
          %v6939 = vunpack.c.l.b16 %v6907
          %v6940 = vunpack.c.l.b16 %v6908
          %v6941 = vunpack.c.l.b16 %v6909
          %v6942 = vunpack.c.l.b16 %v6910
          %v6943 = vunpack.c.l.b16 %v6911
          %v6944 = vunpack.c.l.b16 %v6912
          %v6945 = vunpack.c.l.b16 %v6913
          %v6946 = vunpack.c.l.b16 %v6914
          %v6947 = vunpack.c.l.b16 %v6915
          %v6948 = vunpack.c.l.b16 %v6916
          %v6949 = vpack.c.b16 %v6934, %v6933
          %v6950 = vpack.c.b16 %v6936, %v6935
          %v6951 = vpack.c.b16 %v6938, %v6937
          %v6952 = vpack.c.b16 %v6940, %v6939
          %v6953 = vpack.c.b16 %v6942, %v6941
          %v6954 = vpack.c.b16 %v6944, %v6943
          %v6955 = vpack.c.b16 %v6946, %v6945
          %v6956 = vpack.c.b16 %v6948, %v6947
          %6965 = vmatprep.subr.bf16.mxu0 0
          %6966 = vmatpush1.bf16.msra.mxu0 %v6956
          %6967 = vmatprep.subr.bf16.mxu0 0
          %6968 = vmatpush1.bf16.msra.mxu0 %v6955
          %6969 = vmatprep.subr.bf16.mxu0 0
          %6970 = vmatpush1.bf16.msra.mxu0 %v6954
          %6971 = vmatprep.subr.bf16.mxu0 0
          %6972 = vmatpush1.bf16.msra.mxu0 %v6953
          %6973 = vmatprep.subr.bf16.mxu0 0
          %6974 = vmatpush1.bf16.msra.mxu0 %v6952
          %6975 = vmatprep.subr.bf16.mxu0 0
          %6976 = vmatpush1.bf16.msra.mxu0 %v6951
          %6977 = vmatprep.subr.bf16.mxu0 0
          %6978 = vmatpush1.bf16.msra.mxu0 %v6950
          %6979 = vmatprep.subr.bf16.mxu0 0
          %6980 = vmatpush1.bf16.msra.mxu0 %v6949
          %6981 = vmatprep.subr.bf16.mxu0 0
          %6982 = vmatpush2.bf16.msra.mxu0 0
          %6983 = vmatprep.subr.bf16.mxu0 0
          %6984 = vmatpush2.bf16.msra.mxu0 0
          %6985 = vmatprep.subr.bf16.mxu0 0
          %6986 = vmatpush2.bf16.msra.mxu0 0
          %6987 = vmatprep.subr.bf16.mxu0 0
          %6988 = vmatpush2.bf16.msra.mxu0 0
          %6989 = vmatprep.subr.bf16.mxu0 0
          %6990 = vmatpush2.bf16.msra.mxu0 0
          %6991 = vmatprep.subr.bf16.mxu0 0
          %6992 = vmatpush2.bf16.msra.mxu0 0
          %6993 = vmatprep.subr.bf16.mxu0 0
          %6994 = vmatpush2.bf16.msra.mxu0 0
          %6995 = vmatprep.subr.bf16.mxu0 0
          %6996 = vmatpush2.bf16.msra.mxu0 0
          %6997 = vmatprep.mubr.bf16.mxu0 0
          %6998 = vmatmul.mubr.bf16.gmra.mxu0 %v6899
          %v6999 = vpop.f32.mrf.mxu0
          %v7000 = vadd.f32 0.0, %v6999
          %v7001 = vpop.f32.mrf.mxu0
          %v7002 = vpop.f32.mrf.mxu0
          %v7003 = vpop.f32.mrf.mxu0
          %7004 = vdwg.mxu0
          %s7005 = scalar_lea.vmem [#allocation27], 64
          %v7006 = vld [vmem:[%s7005] sm:$0xf]
          %v7007 = vld [vmem:[%s7005 + $0x4] sm:$0xf]
          %v7008 = vld [vmem:[%s7005 + $0x8] sm:$0xf]
          %v7009 = vld [vmem:[%s7005 + $0xc] sm:$0xf]
          %v7010 = vld [vmem:[%s7005 + $0x10] sm:$0xf]
          %v7011 = vld [vmem:[%s7005 + $0x14] sm:$0xf]
          %v7012 = vld [vmem:[%s7005 + $0x18] sm:$0xf]
          %v7013 = vld [vmem:[%s7005 + $0x1c] sm:$0xf]
          %v7014 = vld [vmem:[%s7005 + $0x20] sm:$0xf]
          %v7015 = vld [vmem:[%s7005 + $0x24] sm:$0xf]
          %v7016 = vld [vmem:[%s7005 + $0x28] sm:$0xf]
          %v7017 = vld [vmem:[%s7005 + $0x2c] sm:$0xf]
          %v7018 = vld [vmem:[%s7005 + $0x30] sm:$0xf]
          %v7019 = vld [vmem:[%s7005 + $0x34] sm:$0xf]
          %v7020 = vld [vmem:[%s7005 + $0x38] sm:$0xf]
          %v7021 = vld [vmem:[%s7005 + $0x3c] sm:$0xf]
          %7023 = vrot.lane.b32.xlu0 %v7000, 96
          %v7024 = vpop.permute.xlu0 %7023
          %7026 = vrot.lane.b32.xlu0 %v7000, 64
          %v7027 = vpop.permute.xlu0 %7026
          %7029 = vrot.lane.b32.xlu0 %v7000, 32
          %v7030 = vpop.permute.xlu0 %7029
          %v7032 = vpack.c.bf16 %v7000, %v7000
          %v7033 = vpack.c.bf16 %v7024, %v7024
          %v7034 = vpack.c.bf16 %v7027, %v7027
          %v7035 = vpack.c.bf16 %v7030, %v7030
          %7038 = vrot.lane.b32.xlu0 %v3965, 96
          %v7039 = vpop.permute.xlu0 %7038
          %7040 = vrot.lane.b32.xlu0 %v3969, 96
          %v7041 = vpop.permute.xlu0 %7040
          %7044 = vrot.lane.b32.xlu0 %v3965, 64
          %v7045 = vpop.permute.xlu0 %7044
          %7046 = vrot.lane.b32.xlu0 %v3969, 64
          %v7047 = vpop.permute.xlu0 %7046
          %7050 = vrot.lane.b32.xlu0 %v3965, 32
          %v7051 = vpop.permute.xlu0 %7050
          %7052 = vrot.lane.b32.xlu0 %v3969, 32
          %v7053 = vpop.permute.xlu0 %7052
          %v7056 = vpack.c.bf16 %v3969, %v3965
          %v7057 = vpack.c.bf16 %v7041, %v7039
          %v7058 = vpack.c.bf16 %v7047, %v7045
          %v7059 = vpack.c.bf16 %v7053, %v7051
          %7062 = vrot.lane.b32.xlu0 %v3967, 96
          %v7063 = vpop.permute.xlu0 %7062
          %7064 = vrot.lane.b32.xlu0 %v3971, 96
          %v7065 = vpop.permute.xlu0 %7064
          %7068 = vrot.lane.b32.xlu0 %v3967, 64
          %v7069 = vpop.permute.xlu0 %7068
          %7070 = vrot.lane.b32.xlu0 %v3971, 64
          %v7071 = vpop.permute.xlu0 %7070
          %7074 = vrot.lane.b32.xlu0 %v3967, 32
          %v7075 = vpop.permute.xlu0 %7074
          %7076 = vrot.lane.b32.xlu0 %v3971, 32
          %v7077 = vpop.permute.xlu0 %7076
          %v7080 = vpack.c.bf16 %v3971, %v3967
          %v7081 = vpack.c.bf16 %v7065, %v7063
          %v7082 = vpack.c.bf16 %v7071, %v7069
          %v7083 = vpack.c.bf16 %v7077, %v7075
          %v7085 = vsel %vm1465, %v7032, 0
          %v7088 = vsel %vm1465, %v7056, 0
          %7090 = vmatprep.subr.bf16.mxu0 0
          %7091 = vmatpush1.bf16.xpose.msra.mxu0 0
          %7092 = vmatprep.subr.bf16.mxu0 0
          %7093 = vmatpush1.bf16.xpose.msra.mxu0 0
          %7094 = vmatprep.subr.bf16.mxu0 0
          %7095 = vmatpush1.bf16.xpose.msra.mxu0 0
          %7096 = vmatprep.subr.bf16.mxu0 0
          %7097 = vmatpush1.bf16.xpose.msra.mxu0 0
          %7098 = vmatprep.subr.bf16.mxu0 0
          %7099 = vmatpush1.bf16.xpose.msra.mxu0 0
          %7100 = vmatprep.subr.bf16.mxu0 0
          %7101 = vmatpush1.bf16.xpose.msra.mxu0 0
          %7102 = vmatprep.subr.bf16.mxu0 0
          %7103 = vmatpush1.bf16.xpose.msra.mxu0 0
          %7104 = vmatprep.subr.bf16.mxu0 0
          %7105 = vmatpush1.bf16.xpose.msra.mxu0 %v7088
          %7106 = vmatprep.subr.bf16.mxu0 0
          %7107 = vmatpush2.bf16.xpose.msra.mxu0 0
          %7108 = vmatprep.subr.bf16.mxu0 0
          %7109 = vmatpush2.bf16.xpose.msra.mxu0 0
          %7110 = vmatprep.subr.bf16.mxu0 0
          %7111 = vmatpush2.bf16.xpose.msra.mxu0 0
          %7112 = vmatprep.subr.bf16.mxu0 0
          %7113 = vmatpush2.bf16.xpose.msra.mxu0 0
          %7114 = vmatprep.subr.bf16.mxu0 0
          %7115 = vmatpush2.bf16.xpose.msra.mxu0 0
          %7116 = vmatprep.subr.bf16.mxu0 0
          %7117 = vmatpush2.bf16.xpose.msra.mxu0 0
          %7118 = vmatprep.subr.bf16.mxu0 0
          %7119 = vmatpush2.bf16.xpose.msra.mxu0 0
          %7120 = vmatprep.subr.bf16.mxu0 0
          %7121 = vmatpush2.bf16.xpose.msra.mxu0 0
          %7122 = vmatprep.mubr.bf16.mxu0 0
          %7123 = vmatmul.mubr.bf16.gmra.mxu0 %v7085
          %v7124 = vpop.f32.mrf.mxu0
          %v7125 = vadd.f32 0.0, %v7124
          %v7126 = vpop.f32.mrf.mxu0
          %v7127 = vpop.f32.mrf.mxu0
          %v7128 = vpop.f32.mrf.mxu0
          %7129 = vdwg.mxu0
          %v7131 = vsel %vm1465, %v7033, 0
          %v7134 = vsel %vm1465, %v7057, 0
          %7136 = vmatprep.subr.bf16.mxu0 0
          %7137 = vmatpush1.bf16.xpose.msra.mxu0 0
          %7138 = vmatprep.subr.bf16.mxu0 0
          %7139 = vmatpush1.bf16.xpose.msra.mxu0 0
          %7140 = vmatprep.subr.bf16.mxu0 0
          %7141 = vmatpush1.bf16.xpose.msra.mxu0 0
          %7142 = vmatprep.subr.bf16.mxu0 0
          %7143 = vmatpush1.bf16.xpose.msra.mxu0 0
          %7144 = vmatprep.subr.bf16.mxu0 0
          %7145 = vmatpush1.bf16.xpose.msra.mxu0 0
          %7146 = vmatprep.subr.bf16.mxu0 0
          %7147 = vmatpush1.bf16.xpose.msra.mxu0 0
          %7148 = vmatprep.subr.bf16.mxu0 0
          %7149 = vmatpush1.bf16.xpose.msra.mxu0 0
          %7150 = vmatprep.subr.bf16.mxu0 0
          %7151 = vmatpush1.bf16.xpose.msra.mxu0 %v7134
          %7152 = vmatprep.subr.bf16.mxu0 0
          %7153 = vmatpush2.bf16.xpose.msra.mxu0 0
          %7154 = vmatprep.subr.bf16.mxu0 0
          %7155 = vmatpush2.bf16.xpose.msra.mxu0 0
          %7156 = vmatprep.subr.bf16.mxu0 0
          %7157 = vmatpush2.bf16.xpose.msra.mxu0 0
          %7158 = vmatprep.subr.bf16.mxu0 0
          %7159 = vmatpush2.bf16.xpose.msra.mxu0 0
          %7160 = vmatprep.subr.bf16.mxu0 0
          %7161 = vmatpush2.bf16.xpose.msra.mxu0 0
          %7162 = vmatprep.subr.bf16.mxu0 0
          %7163 = vmatpush2.bf16.xpose.msra.mxu0 0
          %7164 = vmatprep.subr.bf16.mxu0 0
          %7165 = vmatpush2.bf16.xpose.msra.mxu0 0
          %7166 = vmatprep.subr.bf16.mxu0 0
          %7167 = vmatpush2.bf16.xpose.msra.mxu0 0
          %7168 = vmatprep.mubr.bf16.mxu0 0
          %7169 = vmatmul.mubr.bf16.gmra.mxu0 %v7131
          %v7170 = vpop.f32.mrf.mxu0
          %v7171 = vadd.f32 0.0, %v7170
          %v7172 = vpop.f32.mrf.mxu0
          %v7173 = vpop.f32.mrf.mxu0
          %v7174 = vpop.f32.mrf.mxu0
          %7175 = vdwg.mxu0
          %v7177 = vsel %vm1465, %v7034, 0
          %v7180 = vsel %vm1465, %v7058, 0
          %7182 = vmatprep.subr.bf16.mxu0 0
          %7183 = vmatpush1.bf16.xpose.msra.mxu0 0
          %7184 = vmatprep.subr.bf16.mxu0 0
          %7185 = vmatpush1.bf16.xpose.msra.mxu0 0
          %7186 = vmatprep.subr.bf16.mxu0 0
          %7187 = vmatpush1.bf16.xpose.msra.mxu0 0
          %7188 = vmatprep.subr.bf16.mxu0 0
          %7189 = vmatpush1.bf16.xpose.msra.mxu0 0
          %7190 = vmatprep.subr.bf16.mxu0 0
          %7191 = vmatpush1.bf16.xpose.msra.mxu0 0
          %7192 = vmatprep.subr.bf16.mxu0 0
          %7193 = vmatpush1.bf16.xpose.msra.mxu0 0
          %7194 = vmatprep.subr.bf16.mxu0 0
          %7195 = vmatpush1.bf16.xpose.msra.mxu0 0
          %7196 = vmatprep.subr.bf16.mxu0 0
          %7197 = vmatpush1.bf16.xpose.msra.mxu0 %v7180
          %7198 = vmatprep.subr.bf16.mxu0 0
          %7199 = vmatpush2.bf16.xpose.msra.mxu0 0
          %7200 = vmatprep.subr.bf16.mxu0 0
          %7201 = vmatpush2.bf16.xpose.msra.mxu0 0
          %7202 = vmatprep.subr.bf16.mxu0 0
          %7203 = vmatpush2.bf16.xpose.msra.mxu0 0
          %7204 = vmatprep.subr.bf16.mxu0 0
          %7205 = vmatpush2.bf16.xpose.msra.mxu0 0
          %7206 = vmatprep.subr.bf16.mxu0 0
          %7207 = vmatpush2.bf16.xpose.msra.mxu0 0
          %7208 = vmatprep.subr.bf16.mxu0 0
          %7209 = vmatpush2.bf16.xpose.msra.mxu0 0
          %7210 = vmatprep.subr.bf16.mxu0 0
          %7211 = vmatpush2.bf16.xpose.msra.mxu0 0
          %7212 = vmatprep.subr.bf16.mxu0 0
          %7213 = vmatpush2.bf16.xpose.msra.mxu0 0
          %7214 = vmatprep.mubr.bf16.mxu0 0
          %7215 = vmatmul.mubr.bf16.gmra.mxu0 %v7177
          %v7216 = vpop.f32.mrf.mxu0
          %v7217 = vadd.f32 0.0, %v7216
          %v7218 = vpop.f32.mrf.mxu0
          %v7219 = vpop.f32.mrf.mxu0
          %v7220 = vpop.f32.mrf.mxu0
          %7221 = vdwg.mxu0
          %v7223 = vsel %vm1465, %v7035, 0
          %v7226 = vsel %vm1465, %v7059, 0
          %7228 = vmatprep.subr.bf16.mxu0 0
          %7229 = vmatpush1.bf16.xpose.msra.mxu0 0
          %7230 = vmatprep.subr.bf16.mxu0 0
          %7231 = vmatpush1.bf16.xpose.msra.mxu0 0
          %7232 = vmatprep.subr.bf16.mxu0 0
          %7233 = vmatpush1.bf16.xpose.msra.mxu0 0
          %7234 = vmatprep.subr.bf16.mxu0 0
          %7235 = vmatpush1.bf16.xpose.msra.mxu0 0
          %7236 = vmatprep.subr.bf16.mxu0 0
          %7237 = vmatpush1.bf16.xpose.msra.mxu0 0
          %7238 = vmatprep.subr.bf16.mxu0 0
          %7239 = vmatpush1.bf16.xpose.msra.mxu0 0
          %7240 = vmatprep.subr.bf16.mxu0 0
          %7241 = vmatpush1.bf16.xpose.msra.mxu0 0
          %7242 = vmatprep.subr.bf16.mxu0 0
          %7243 = vmatpush1.bf16.xpose.msra.mxu0 %v7226
          %7244 = vmatprep.subr.bf16.mxu0 0
          %7245 = vmatpush2.bf16.xpose.msra.mxu0 0
          %7246 = vmatprep.subr.bf16.mxu0 0
          %7247 = vmatpush2.bf16.xpose.msra.mxu0 0
          %7248 = vmatprep.subr.bf16.mxu0 0
          %7249 = vmatpush2.bf16.xpose.msra.mxu0 0
          %7250 = vmatprep.subr.bf16.mxu0 0
          %7251 = vmatpush2.bf16.xpose.msra.mxu0 0
          %7252 = vmatprep.subr.bf16.mxu0 0
          %7253 = vmatpush2.bf16.xpose.msra.mxu0 0
          %7254 = vmatprep.subr.bf16.mxu0 0
          %7255 = vmatpush2.bf16.xpose.msra.mxu0 0
          %7256 = vmatprep.subr.bf16.mxu0 0
          %7257 = vmatpush2.bf16.xpose.msra.mxu0 0
          %7258 = vmatprep.subr.bf16.mxu0 0
          %7259 = vmatpush2.bf16.xpose.msra.mxu0 0
          %7260 = vmatprep.mubr.bf16.mxu0 0
          %7261 = vmatmul.mubr.bf16.gmra.mxu0 %v7223
          %v7262 = vpop.f32.mrf.mxu0
          %v7263 = vadd.f32 0.0, %v7262
          %v7264 = vpop.f32.mrf.mxu0
          %v7265 = vpop.f32.mrf.mxu0
          %v7266 = vpop.f32.mrf.mxu0
          %7267 = vdwg.mxu0
          %v7268 = vsel %vm4665, %v7125, -inf
          %7269 = vmax.xlane.f32.xlu0 %v7268
          %v7270 = vpop.xlane.xlu0 %7269
          %v7271 = vsel %vm4665, %v7171, -inf
          %7272 = vmax.xlane.f32.xlu0 %v7271
          %v7273 = vpop.xlane.xlu0 %7272
          %v7274 = vsel %vm4665, %v7217, -inf
          %7275 = vmax.xlane.f32.xlu0 %v7274
          %v7276 = vpop.xlane.xlu0 %7275
          %v7277 = vsel %vm4665, %v7263, -inf
          %7278 = vmax.xlane.f32.xlu0 %v7277
          %v7279 = vpop.xlane.xlu0 %7278
          %v7280 = vsub.f32 %v7125, %v7270
          %v7281 = vsub.f32 %v7171, %v7273
          %v7282 = vsub.f32 %v7217, %v7276
          %v7283 = vsub.f32 %v7263, %v7279
          %v7284 = vmul.f32 %v7280, 1.442695
          %v7285 = vpow.pop %v7284
          %v7286 = vmul.f32 %v7281, 1.442695
          %v7287 = vpow.pop %v7286
          %v7288 = vmul.f32 %v7282, 1.442695
          %v7289 = vpow.pop %v7288
          %v7290 = vmul.f32 %v7283, 1.442695
          %v7291 = vpow.pop %v7290
          %v7292 = vsel %vm4665, %v7285, 0.0
          %7293 = vadd.xlane.f32.xlu0 %v7292
          %v7294 = vpop.xlane.xlu0 %7293
          %v7295 = vsel %vm4665, %v7287, 0.0
          %7296 = vadd.xlane.f32.xlu0 %v7295
          %v7297 = vpop.xlane.xlu0 %7296
          %v7298 = vsel %vm4665, %v7289, 0.0
          %7299 = vadd.xlane.f32.xlu0 %v7298
          %v7300 = vpop.xlane.xlu0 %7299
          %v7301 = vsel %vm4665, %v7291, 0.0
          %7302 = vadd.xlane.f32.xlu0 %v7301
          %v7303 = vpop.xlane.xlu0 %7302
          %v7304 = vrcp.pop %v7294
          %v7305 = vrcp.pop %v7297
          %v7306 = vrcp.pop %v7300
          %v7307 = vrcp.pop %v7303
          %v7308 = vmul.f32 %v7285, %v7304
          %v7309 = vmul.f32 %v7287, %v7305
          %v7310 = vmul.f32 %v7289, %v7306
          %v7311 = vmul.f32 %v7291, %v7307
          %v7312 = vpack.c.bf16 %v7308, %v7308
          %v7313 = vpack.c.bf16 %v7309, %v7309
          %v7314 = vpack.c.bf16 %v7310, %v7310
          %v7315 = vpack.c.bf16 %v7311, %v7311
          %v7317 = vsel %vm1654, %v7312, 0
          %7319 = vmatprep.subr.bf16.mxu0 0
          %7320 = vmatpush1.bf16.msra.mxu0 0
          %7321 = vmatprep.subr.bf16.mxu0 0
          %7322 = vmatpush1.bf16.msra.mxu0 0
          %7323 = vmatprep.subr.bf16.mxu0 0
          %7324 = vmatpush1.bf16.msra.mxu0 0
          %7325 = vmatprep.subr.bf16.mxu0 0
          %7326 = vmatpush1.bf16.msra.mxu0 0
          %7327 = vmatprep.subr.bf16.mxu0 0
          %7328 = vmatpush1.bf16.msra.mxu0 0
          %7329 = vmatprep.subr.bf16.mxu0 0
          %7330 = vmatpush1.bf16.msra.mxu0 0
          %7331 = vmatprep.subr.bf16.mxu0 0
          %7332 = vmatpush1.bf16.msra.mxu0 0
          %7333 = vmatprep.subr.bf16.mxu0 0
          %7334 = vmatpush1.bf16.msra.mxu0 %v7080
          %7335 = vmatprep.subr.bf16.mxu0 0
          %7336 = vmatpush2.bf16.msra.mxu0 0
          %7337 = vmatprep.subr.bf16.mxu0 0
          %7338 = vmatpush2.bf16.msra.mxu0 0
          %7339 = vmatprep.subr.bf16.mxu0 0
          %7340 = vmatpush2.bf16.msra.mxu0 0
          %7341 = vmatprep.subr.bf16.mxu0 0
          %7342 = vmatpush2.bf16.msra.mxu0 0
          %7343 = vmatprep.subr.bf16.mxu0 0
          %7344 = vmatpush2.bf16.msra.mxu0 0
          %7345 = vmatprep.subr.bf16.mxu0 0
          %7346 = vmatpush2.bf16.msra.mxu0 0
          %7347 = vmatprep.subr.bf16.mxu0 0
          %7348 = vmatpush2.bf16.msra.mxu0 0
          %7349 = vmatprep.subr.bf16.mxu0 0
          %7350 = vmatpush2.bf16.msra.mxu0 0
          %7351 = vmatprep.mubr.bf16.mxu0 0
          %7352 = vmatmul.mubr.bf16.gmra.mxu0 %v7317
          %v7353 = vpop.f32.mrf.mxu0
          %v7354 = vadd.f32 0.0, %v7353
          %v7355 = vpop.f32.mrf.mxu0
          %v7356 = vpop.f32.mrf.mxu0
          %v7357 = vpop.f32.mrf.mxu0
          %7358 = vdwg.mxu0
          %v7360 = vsel %vm1654, %v7313, 0
          %7362 = vmatprep.subr.bf16.mxu0 0
          %7363 = vmatpush1.bf16.msra.mxu0 0
          %7364 = vmatprep.subr.bf16.mxu0 0
          %7365 = vmatpush1.bf16.msra.mxu0 0
          %7366 = vmatprep.subr.bf16.mxu0 0
          %7367 = vmatpush1.bf16.msra.mxu0 0
          %7368 = vmatprep.subr.bf16.mxu0 0
          %7369 = vmatpush1.bf16.msra.mxu0 0
          %7370 = vmatprep.subr.bf16.mxu0 0
          %7371 = vmatpush1.bf16.msra.mxu0 0
          %7372 = vmatprep.subr.bf16.mxu0 0
          %7373 = vmatpush1.bf16.msra.mxu0 0
          %7374 = vmatprep.subr.bf16.mxu0 0
          %7375 = vmatpush1.bf16.msra.mxu0 0
          %7376 = vmatprep.subr.bf16.mxu0 0
          %7377 = vmatpush1.bf16.msra.mxu0 %v7081
          %7378 = vmatprep.subr.bf16.mxu0 0
          %7379 = vmatpush2.bf16.msra.mxu0 0
          %7380 = vmatprep.subr.bf16.mxu0 0
          %7381 = vmatpush2.bf16.msra.mxu0 0
          %7382 = vmatprep.subr.bf16.mxu0 0
          %7383 = vmatpush2.bf16.msra.mxu0 0
          %7384 = vmatprep.subr.bf16.mxu0 0
          %7385 = vmatpush2.bf16.msra.mxu0 0
          %7386 = vmatprep.subr.bf16.mxu0 0
          %7387 = vmatpush2.bf16.msra.mxu0 0
          %7388 = vmatprep.subr.bf16.mxu0 0
          %7389 = vmatpush2.bf16.msra.mxu0 0
          %7390 = vmatprep.subr.bf16.mxu0 0
          %7391 = vmatpush2.bf16.msra.mxu0 0
          %7392 = vmatprep.subr.bf16.mxu0 0
          %7393 = vmatpush2.bf16.msra.mxu0 0
          %7394 = vmatprep.mubr.bf16.mxu0 0
          %7395 = vmatmul.mubr.bf16.gmra.mxu0 %v7360
          %v7396 = vpop.f32.mrf.mxu0
          %v7397 = vadd.f32 0.0, %v7396
          %v7398 = vpop.f32.mrf.mxu0
          %v7399 = vpop.f32.mrf.mxu0
          %v7400 = vpop.f32.mrf.mxu0
          %7401 = vdwg.mxu0
          %v7403 = vsel %vm1654, %v7314, 0
          %7405 = vmatprep.subr.bf16.mxu0 0
          %7406 = vmatpush1.bf16.msra.mxu0 0
          %7407 = vmatprep.subr.bf16.mxu0 0
          %7408 = vmatpush1.bf16.msra.mxu0 0
          %7409 = vmatprep.subr.bf16.mxu0 0
          %7410 = vmatpush1.bf16.msra.mxu0 0
          %7411 = vmatprep.subr.bf16.mxu0 0
          %7412 = vmatpush1.bf16.msra.mxu0 0
          %7413 = vmatprep.subr.bf16.mxu0 0
          %7414 = vmatpush1.bf16.msra.mxu0 0
          %7415 = vmatprep.subr.bf16.mxu0 0
          %7416 = vmatpush1.bf16.msra.mxu0 0
          %7417 = vmatprep.subr.bf16.mxu0 0
          %7418 = vmatpush1.bf16.msra.mxu0 0
          %7419 = vmatprep.subr.bf16.mxu0 0
          %7420 = vmatpush1.bf16.msra.mxu0 %v7082
          %7421 = vmatprep.subr.bf16.mxu0 0
          %7422 = vmatpush2.bf16.msra.mxu0 0
          %7423 = vmatprep.subr.bf16.mxu0 0
          %7424 = vmatpush2.bf16.msra.mxu0 0
          %7425 = vmatprep.subr.bf16.mxu0 0
          %7426 = vmatpush2.bf16.msra.mxu0 0
          %7427 = vmatprep.subr.bf16.mxu0 0
          %7428 = vmatpush2.bf16.msra.mxu0 0
          %7429 = vmatprep.subr.bf16.mxu0 0
          %7430 = vmatpush2.bf16.msra.mxu0 0
          %7431 = vmatprep.subr.bf16.mxu0 0
          %7432 = vmatpush2.bf16.msra.mxu0 0
          %7433 = vmatprep.subr.bf16.mxu0 0
          %7434 = vmatpush2.bf16.msra.mxu0 0
          %7435 = vmatprep.subr.bf16.mxu0 0
          %7436 = vmatpush2.bf16.msra.mxu0 0
          %7437 = vmatprep.mubr.bf16.mxu0 0
          %7438 = vmatmul.mubr.bf16.gmra.mxu0 %v7403
          %v7439 = vpop.f32.mrf.mxu0
          %v7440 = vadd.f32 0.0, %v7439
          %v7441 = vpop.f32.mrf.mxu0
          %v7442 = vpop.f32.mrf.mxu0
          %v7443 = vpop.f32.mrf.mxu0
          %7444 = vdwg.mxu0
          %v7446 = vsel %vm1654, %v7315, 0
          %7448 = vmatprep.subr.bf16.mxu0 0
          %7449 = vmatpush1.bf16.msra.mxu0 0
          %7450 = vmatprep.subr.bf16.mxu0 0
          %7451 = vmatpush1.bf16.msra.mxu0 0
          %7452 = vmatprep.subr.bf16.mxu0 0
          %7453 = vmatpush1.bf16.msra.mxu0 0
          %7454 = vmatprep.subr.bf16.mxu0 0
          %7455 = vmatpush1.bf16.msra.mxu0 0
          %7456 = vmatprep.subr.bf16.mxu0 0
          %7457 = vmatpush1.bf16.msra.mxu0 0
          %7458 = vmatprep.subr.bf16.mxu0 0
          %7459 = vmatpush1.bf16.msra.mxu0 0
          %7460 = vmatprep.subr.bf16.mxu0 0
          %7461 = vmatpush1.bf16.msra.mxu0 0
          %7462 = vmatprep.subr.bf16.mxu0 0
          %7463 = vmatpush1.bf16.msra.mxu0 %v7083
          %7464 = vmatprep.subr.bf16.mxu0 0
          %7465 = vmatpush2.bf16.msra.mxu0 0
          %7466 = vmatprep.subr.bf16.mxu0 0
          %7467 = vmatpush2.bf16.msra.mxu0 0
          %7468 = vmatprep.subr.bf16.mxu0 0
          %7469 = vmatpush2.bf16.msra.mxu0 0
          %7470 = vmatprep.subr.bf16.mxu0 0
          %7471 = vmatpush2.bf16.msra.mxu0 0
          %7472 = vmatprep.subr.bf16.mxu0 0
          %7473 = vmatpush2.bf16.msra.mxu0 0
          %7474 = vmatprep.subr.bf16.mxu0 0
          %7475 = vmatpush2.bf16.msra.mxu0 0
          %7476 = vmatprep.subr.bf16.mxu0 0
          %7477 = vmatpush2.bf16.msra.mxu0 0
          %7478 = vmatprep.subr.bf16.mxu0 0
          %7479 = vmatpush2.bf16.msra.mxu0 0
          %7480 = vmatprep.mubr.bf16.mxu0 0
          %7481 = vmatmul.mubr.bf16.gmra.mxu0 %v7446
          %v7482 = vpop.f32.mrf.mxu0
          %v7483 = vadd.f32 0.0, %v7482
          %v7484 = vpop.f32.mrf.mxu0
          %v7485 = vpop.f32.mrf.mxu0
          %v7486 = vpop.f32.mrf.mxu0
          %7487 = vdwg.mxu0
          %7489 = vrot.lane.b32.xlu0 %v7397, 32
          %v7490 = vpop.permute.xlu0 %7489
          %7493 = vrot.lane.b32.xlu0 %v7440, 64
          %v7494 = vpop.permute.xlu0 %7493
          %7497 = vrot.lane.b32.xlu0 %v7483, 96
          %v7498 = vpop.permute.xlu0 %7497
          %v7500 = vsel %vm1465, %v7354, %v7490
          %v7501 = vsel %vm1949, %v7500, %v7494
          %v7502 = vsel %vm1952, %v7501, %v7498
          %v7503 = vpack.c.bf16 %v7502, %v7502
          %v7520 = vunpack.c.l.b16 %v7006
          %v7521 = vunpack.c.l.b16 %v7007
          %v7522 = vunpack.c.l.b16 %v7008
          %v7523 = vunpack.c.l.b16 %v7009
          %v7524 = vunpack.c.l.b16 %v7010
          %v7525 = vunpack.c.l.b16 %v7011
          %v7526 = vunpack.c.l.b16 %v7012
          %v7527 = vunpack.c.l.b16 %v7013
          %v7528 = vunpack.c.l.b16 %v7014
          %v7529 = vunpack.c.l.b16 %v7015
          %v7530 = vunpack.c.l.b16 %v7016
          %v7531 = vunpack.c.l.b16 %v7017
          %v7532 = vunpack.c.l.b16 %v7018
          %v7533 = vunpack.c.l.b16 %v7019
          %v7534 = vunpack.c.l.b16 %v7020
          %v7535 = vunpack.c.l.b16 %v7021
          %v7536 = vpack.c.b16 %v7521, %v7520
          %v7537 = vpack.c.b16 %v7523, %v7522
          %v7538 = vpack.c.b16 %v7525, %v7524
          %v7539 = vpack.c.b16 %v7527, %v7526
          %v7540 = vpack.c.b16 %v7529, %v7528
          %v7541 = vpack.c.b16 %v7531, %v7530
          %v7542 = vpack.c.b16 %v7533, %v7532
          %v7543 = vpack.c.b16 %v7535, %v7534
          %7552 = vmatprep.subr.bf16.mxu0 0
          %7553 = vmatpush1.bf16.msra.mxu0 %v7543
          %7554 = vmatprep.subr.bf16.mxu0 0
          %7555 = vmatpush1.bf16.msra.mxu0 %v7542
          %7556 = vmatprep.subr.bf16.mxu0 0
          %7557 = vmatpush1.bf16.msra.mxu0 %v7541
          %7558 = vmatprep.subr.bf16.mxu0 0
          %7559 = vmatpush1.bf16.msra.mxu0 %v7540
          %7560 = vmatprep.subr.bf16.mxu0 0
          %7561 = vmatpush1.bf16.msra.mxu0 %v7539
          %7562 = vmatprep.subr.bf16.mxu0 0
          %7563 = vmatpush1.bf16.msra.mxu0 %v7538
          %7564 = vmatprep.subr.bf16.mxu0 0
          %7565 = vmatpush1.bf16.msra.mxu0 %v7537
          %7566 = vmatprep.subr.bf16.mxu0 0
          %7567 = vmatpush1.bf16.msra.mxu0 %v7536
          %7568 = vmatprep.subr.bf16.mxu0 0
          %7569 = vmatpush2.bf16.msra.mxu0 0
          %7570 = vmatprep.subr.bf16.mxu0 0
          %7571 = vmatpush2.bf16.msra.mxu0 0
          %7572 = vmatprep.subr.bf16.mxu0 0
          %7573 = vmatpush2.bf16.msra.mxu0 0
          %7574 = vmatprep.subr.bf16.mxu0 0
          %7575 = vmatpush2.bf16.msra.mxu0 0
          %7576 = vmatprep.subr.bf16.mxu0 0
          %7577 = vmatpush2.bf16.msra.mxu0 0
          %7578 = vmatprep.subr.bf16.mxu0 0
          %7579 = vmatpush2.bf16.msra.mxu0 0
          %7580 = vmatprep.subr.bf16.mxu0 0
          %7581 = vmatpush2.bf16.msra.mxu0 0
          %7582 = vmatprep.subr.bf16.mxu0 0
          %7583 = vmatpush2.bf16.msra.mxu0 0
          %7584 = vmatprep.mubr.bf16.mxu0 0
          %7585 = vmatmul.mubr.bf16.gmra.mxu0 %v7503
          %v7586 = vpop.f32.mrf.mxu0
          %v7587 = vadd.f32 0.0, %v7586
          %v7588 = vpop.f32.mrf.mxu0
          %v7589 = vpop.f32.mrf.mxu0
          %v7590 = vpop.f32.mrf.mxu0
          %7591 = vdwg.mxu0
          %v7592 = vadd.f32 %v6887, %v7587
          %s7593 = scalar_lea.vmem %s20, 1
          %v7594 = vld [vmem:[%s7593] sm:$0x1]
          %v7595 = vmul.f32 %v7592, %v7592
          %v7596 = vsel %vm4111, %v7595, 0.0
          %7597 = vadd.xlane.f32.xlu0 %v7596
          %v7598 = vpop.xlane.xlu0 %7597
          %v7599 = vmul.f32 %v7598, %v1115
          %v7600 = vadd.f32 %v7599, 1e-06
          %v7601 = vrsqrt.pop %v7600
          %v7602 = vmul.f32 %v7592, %v7601
          %v7603 = vmul.f32 %v7602, %v7594
          %v7604 = vpack.c.bf16 %v7603, %v7603
          %s7605 = scalar_lea.vmem [#allocation29], 128
          %v7606 = vld [vmem:[%s7605] sm:$0xff]
          %v7607 = vld [vmem:[%s7605 + $0x8] sm:$0xff]
          %v7608 = vld [vmem:[%s7605 + $0x10] sm:$0xff]
          %v7609 = vld [vmem:[%s7605 + $0x18] sm:$0xff]
          %v7610 = vld [vmem:[%s7605 + $0x20] sm:$0xff]
          %v7611 = vld [vmem:[%s7605 + $0x28] sm:$0xff]
          %v7612 = vld [vmem:[%s7605 + $0x30] sm:$0xff]
          %v7613 = vld [vmem:[%s7605 + $0x38] sm:$0xff]
          %v7614 = vld [vmem:[%s7605 + $0x40] sm:$0xff]
          %v7615 = vld [vmem:[%s7605 + $0x48] sm:$0xff]
          %v7616 = vld [vmem:[%s7605 + $0x50] sm:$0xff]
          %v7617 = vld [vmem:[%s7605 + $0x58] sm:$0xff]
          %v7618 = vld [vmem:[%s7605 + $0x60] sm:$0xff]
          %v7619 = vld [vmem:[%s7605 + $0x68] sm:$0xff]
          %v7620 = vld [vmem:[%s7605 + $0x70] sm:$0xff]
          %v7621 = vld [vmem:[%s7605 + $0x78] sm:$0xff]
          %v7638 = vunpack.c.l.b16 %v7606
          %v7639 = vunpack.c.h.b16 %v7606
          %v7640 = vunpack.c.l.b16 %v7607
          %v7641 = vunpack.c.h.b16 %v7607
          %v7642 = vunpack.c.l.b16 %v7608
          %v7643 = vunpack.c.h.b16 %v7608
          %v7644 = vunpack.c.l.b16 %v7609
          %v7645 = vunpack.c.h.b16 %v7609
          %v7646 = vunpack.c.l.b16 %v7610
          %v7647 = vunpack.c.h.b16 %v7610
          %v7648 = vunpack.c.l.b16 %v7611
          %v7649 = vunpack.c.h.b16 %v7611
          %v7650 = vunpack.c.l.b16 %v7612
          %v7651 = vunpack.c.h.b16 %v7612
          %v7652 = vunpack.c.l.b16 %v7613
          %v7653 = vunpack.c.h.b16 %v7613
          %v7654 = vunpack.c.l.b16 %v7614
          %v7655 = vunpack.c.h.b16 %v7614
          %v7656 = vunpack.c.l.b16 %v7615
          %v7657 = vunpack.c.h.b16 %v7615
          %v7658 = vunpack.c.l.b16 %v7616
          %v7659 = vunpack.c.h.b16 %v7616
          %v7660 = vunpack.c.l.b16 %v7617
          %v7661 = vunpack.c.h.b16 %v7617
          %v7662 = vunpack.c.l.b16 %v7618
          %v7663 = vunpack.c.h.b16 %v7618
          %v7664 = vunpack.c.l.b16 %v7619
          %v7665 = vunpack.c.h.b16 %v7619
          %v7666 = vunpack.c.l.b16 %v7620
          %v7667 = vunpack.c.h.b16 %v7620
          %v7668 = vunpack.c.l.b16 %v7621
          %v7669 = vunpack.c.h.b16 %v7621
          %v7670 = vpack.c.b16 %v7640, %v7638
          %v7671 = vpack.c.b16 %v7641, %v7639
          %v7672 = vpack.c.b16 %v7644, %v7642
          %v7673 = vpack.c.b16 %v7645, %v7643
          %v7674 = vpack.c.b16 %v7648, %v7646
          %v7675 = vpack.c.b16 %v7649, %v7647
          %v7676 = vpack.c.b16 %v7652, %v7650
          %v7677 = vpack.c.b16 %v7653, %v7651
          %v7678 = vpack.c.b16 %v7656, %v7654
          %v7679 = vpack.c.b16 %v7657, %v7655
          %v7680 = vpack.c.b16 %v7660, %v7658
          %v7681 = vpack.c.b16 %v7661, %v7659
          %v7682 = vpack.c.b16 %v7664, %v7662
          %v7683 = vpack.c.b16 %v7665, %v7663
          %v7684 = vpack.c.b16 %v7668, %v7666
          %v7685 = vpack.c.b16 %v7669, %v7667
          %7702 = vmatprep.subr.bf16.mxu0 %v7685
          %7703 = vmatpush1.bf16.msra.mxu0 %v7684
          %7704 = vmatprep.subr.bf16.mxu0 %v7683
          %7705 = vmatpush1.bf16.msra.mxu0 %v7682
          %7706 = vmatprep.subr.bf16.mxu0 %v7681
          %7707 = vmatpush1.bf16.msra.mxu0 %v7680
          %7708 = vmatprep.subr.bf16.mxu0 %v7679
          %7709 = vmatpush1.bf16.msra.mxu0 %v7678
          %7710 = vmatprep.subr.bf16.mxu0 %v7677
          %7711 = vmatpush1.bf16.msra.mxu0 %v7676
          %7712 = vmatprep.subr.bf16.mxu0 %v7675
          %7713 = vmatpush1.bf16.msra.mxu0 %v7674
          %7714 = vmatprep.subr.bf16.mxu0 %v7673
          %7715 = vmatpush1.bf16.msra.mxu0 %v7672
          %7716 = vmatprep.subr.bf16.mxu0 %v7671
          %7717 = vmatpush1.bf16.msra.mxu0 %v7670
          %7718 = vmatprep.subr.bf16.mxu0 0
          %7719 = vmatpush2.bf16.msra.mxu0 0
          %7720 = vmatprep.subr.bf16.mxu0 0
          %7721 = vmatpush2.bf16.msra.mxu0 0
          %7722 = vmatprep.subr.bf16.mxu0 0
          %7723 = vmatpush2.bf16.msra.mxu0 0
          %7724 = vmatprep.subr.bf16.mxu0 0
          %7725 = vmatpush2.bf16.msra.mxu0 0
          %7726 = vmatprep.subr.bf16.mxu0 0
          %7727 = vmatpush2.bf16.msra.mxu0 0
          %7728 = vmatprep.subr.bf16.mxu0 0
          %7729 = vmatpush2.bf16.msra.mxu0 0
          %7730 = vmatprep.subr.bf16.mxu0 0
          %7731 = vmatpush2.bf16.msra.mxu0 0
          %7732 = vmatprep.subr.bf16.mxu0 0
          %7733 = vmatpush2.bf16.msra.mxu0 0
          %7734 = vmatprep.mubr.bf16.mxu0 0
          %7735 = vmatmul.mubr.bf16.gmra.mxu0 %v7604
          %v7736 = vpop.f32.mrf.mxu0
          %v7737 = vadd.f32 0.0, %v7736
          %v7738 = vpop.f32.mrf.mxu0
          %v7739 = vadd.f32 0.0, %v7738
          %v7740 = vpop.f32.mrf.mxu0
          %v7741 = vpop.f32.mrf.mxu0
          %7742 = vdwg.mxu0
          %v7743 = vmax.f32 %v7737, 0.0
          %v7744 = vmax.f32 %v7739, 0.0
          %v7745 = vpack.c.bf16 %v7743, %v7743
          %v7746 = vpack.c.bf16 %v7744, %v7744
          %s7747 = scalar_lea.vmem [#allocation30], 128
          %v7748 = vld [vmem:[%s7747] sm:$0xf]
          %v7749 = vld [vmem:[%s7747 + $0x4] sm:$0xf]
          %v7750 = vld [vmem:[%s7747 + $0x8] sm:$0xf]
          %v7751 = vld [vmem:[%s7747 + $0xc] sm:$0xf]
          %v7752 = vld [vmem:[%s7747 + $0x10] sm:$0xf]
          %v7753 = vld [vmem:[%s7747 + $0x14] sm:$0xf]
          %v7754 = vld [vmem:[%s7747 + $0x18] sm:$0xf]
          %v7755 = vld [vmem:[%s7747 + $0x1c] sm:$0xf]
          %v7756 = vld [vmem:[%s7747 + $0x20] sm:$0xf]
          %v7757 = vld [vmem:[%s7747 + $0x24] sm:$0xf]
          %v7758 = vld [vmem:[%s7747 + $0x28] sm:$0xf]
          %v7759 = vld [vmem:[%s7747 + $0x2c] sm:$0xf]
          %v7760 = vld [vmem:[%s7747 + $0x30] sm:$0xf]
          %v7761 = vld [vmem:[%s7747 + $0x34] sm:$0xf]
          %v7762 = vld [vmem:[%s7747 + $0x38] sm:$0xf]
          %v7763 = vld [vmem:[%s7747 + $0x3c] sm:$0xf]
          %v7764 = vld [vmem:[%s7747 + $0x40] sm:$0xf]
          %v7765 = vld [vmem:[%s7747 + $0x44] sm:$0xf]
          %v7766 = vld [vmem:[%s7747 + $0x48] sm:$0xf]
          %v7767 = vld [vmem:[%s7747 + $0x4c] sm:$0xf]
          %v7768 = vld [vmem:[%s7747 + $0x50] sm:$0xf]
          %v7769 = vld [vmem:[%s7747 + $0x54] sm:$0xf]
          %v7770 = vld [vmem:[%s7747 + $0x58] sm:$0xf]
          %v7771 = vld [vmem:[%s7747 + $0x5c] sm:$0xf]
          %v7772 = vld [vmem:[%s7747 + $0x60] sm:$0xf]
          %v7773 = vld [vmem:[%s7747 + $0x64] sm:$0xf]
          %v7774 = vld [vmem:[%s7747 + $0x68] sm:$0xf]
          %v7775 = vld [vmem:[%s7747 + $0x6c] sm:$0xf]
          %v7776 = vld [vmem:[%s7747 + $0x70] sm:$0xf]
          %v7777 = vld [vmem:[%s7747 + $0x74] sm:$0xf]
          %v7778 = vld [vmem:[%s7747 + $0x78] sm:$0xf]
          %v7779 = vld [vmem:[%s7747 + $0x7c] sm:$0xf]
          %v7812 = vunpack.c.l.b16 %v7748
          %v7813 = vunpack.c.l.b16 %v7749
          %v7814 = vunpack.c.l.b16 %v7750
          %v7815 = vunpack.c.l.b16 %v7751
          %v7816 = vunpack.c.l.b16 %v7752
          %v7817 = vunpack.c.l.b16 %v7753
          %v7818 = vunpack.c.l.b16 %v7754
          %v7819 = vunpack.c.l.b16 %v7755
          %v7820 = vunpack.c.l.b16 %v7756
          %v7821 = vunpack.c.l.b16 %v7757
          %v7822 = vunpack.c.l.b16 %v7758
          %v7823 = vunpack.c.l.b16 %v7759
          %v7824 = vunpack.c.l.b16 %v7760
          %v7825 = vunpack.c.l.b16 %v7761
          %v7826 = vunpack.c.l.b16 %v7762
          %v7827 = vunpack.c.l.b16 %v7763
          %v7828 = vunpack.c.l.b16 %v7764
          %v7829 = vunpack.c.l.b16 %v7765
          %v7830 = vunpack.c.l.b16 %v7766
          %v7831 = vunpack.c.l.b16 %v7767
          %v7832 = vunpack.c.l.b16 %v7768
          %v7833 = vunpack.c.l.b16 %v7769
          %v7834 = vunpack.c.l.b16 %v7770
          %v7835 = vunpack.c.l.b16 %v7771
          %v7836 = vunpack.c.l.b16 %v7772
          %v7837 = vunpack.c.l.b16 %v7773
          %v7838 = vunpack.c.l.b16 %v7774
          %v7839 = vunpack.c.l.b16 %v7775
          %v7840 = vunpack.c.l.b16 %v7776
          %v7841 = vunpack.c.l.b16 %v7777
          %v7842 = vunpack.c.l.b16 %v7778
          %v7843 = vunpack.c.l.b16 %v7779
          %v7844 = vpack.c.b16 %v7813, %v7812
          %v7845 = vpack.c.b16 %v7815, %v7814
          %v7846 = vpack.c.b16 %v7817, %v7816
          %v7847 = vpack.c.b16 %v7819, %v7818
          %v7848 = vpack.c.b16 %v7821, %v7820
          %v7849 = vpack.c.b16 %v7823, %v7822
          %v7850 = vpack.c.b16 %v7825, %v7824
          %v7851 = vpack.c.b16 %v7827, %v7826
          %v7852 = vpack.c.b16 %v7829, %v7828
          %v7853 = vpack.c.b16 %v7831, %v7830
          %v7854 = vpack.c.b16 %v7833, %v7832
          %v7855 = vpack.c.b16 %v7835, %v7834
          %v7856 = vpack.c.b16 %v7837, %v7836
          %v7857 = vpack.c.b16 %v7839, %v7838
          %v7858 = vpack.c.b16 %v7841, %v7840
          %v7859 = vpack.c.b16 %v7843, %v7842
          %7876 = vmatprep.subr.bf16.mxu0 0
          %7877 = vmatpush1.bf16.msra.mxu0 %v7851
          %7878 = vmatprep.subr.bf16.mxu0 0
          %7879 = vmatpush1.bf16.msra.mxu0 %v7850
          %7880 = vmatprep.subr.bf16.mxu0 0
          %7881 = vmatpush1.bf16.msra.mxu0 %v7849
          %7882 = vmatprep.subr.bf16.mxu0 0
          %7883 = vmatpush1.bf16.msra.mxu0 %v7848
          %7884 = vmatprep.subr.bf16.mxu0 0
          %7885 = vmatpush1.bf16.msra.mxu0 %v7847
          %7886 = vmatprep.subr.bf16.mxu0 0
          %7887 = vmatpush1.bf16.msra.mxu0 %v7846
          %7888 = vmatprep.subr.bf16.mxu0 0
          %7889 = vmatpush1.bf16.msra.mxu0 %v7845
          %7890 = vmatprep.subr.bf16.mxu0 0
          %7891 = vmatpush1.bf16.msra.mxu0 %v7844
          %7892 = vmatprep.subr.bf16.mxu0 0
          %7893 = vmatpush2.bf16.msra.mxu0 %v7859
          %7894 = vmatprep.subr.bf16.mxu0 0
          %7895 = vmatpush2.bf16.msra.mxu0 %v7858
          %7896 = vmatprep.subr.bf16.mxu0 0
          %7897 = vmatpush2.bf16.msra.mxu0 %v7857
          %7898 = vmatprep.subr.bf16.mxu0 0
          %7899 = vmatpush2.bf16.msra.mxu0 %v7856
          %7900 = vmatprep.subr.bf16.mxu0 0
          %7901 = vmatpush2.bf16.msra.mxu0 %v7855
          %7902 = vmatprep.subr.bf16.mxu0 0
          %7903 = vmatpush2.bf16.msra.mxu0 %v7854
          %7904 = vmatprep.subr.bf16.mxu0 0
          %7905 = vmatpush2.bf16.msra.mxu0 %v7853
          %7906 = vmatprep.subr.bf16.mxu0 0
          %7907 = vmatpush2.bf16.msra.mxu0 %v7852
          %7908 = vmatprep.mubr.bf16.mxu0 %v7746
          %7909 = vmatmul.mubr.bf16.gmra.mxu0 %v7745
          %v7910 = vpop.f32.mrf.mxu0
          %v7911 = vadd.f32 0.0, %v7910
          %v7912 = vpop.f32.mrf.mxu0
          %v7913 = vpop.f32.mrf.mxu0
          %v7914 = vpop.f32.mrf.mxu0
          %7915 = vdwg.mxu0
          %v7916 = vadd.f32 %v7592, %v7911
          %v7917 = vld [vmem:[#allocation32] sm:$0x1]
          %v7918 = vmul.f32 %v7916, %v7916
          %v7919 = vsel %vm4111, %v7918, 0.0
          %7920 = vadd.xlane.f32.xlu0 %v7919
          %v7921 = vpop.xlane.xlu0 %7920
          %v7922 = vmul.f32 %v7921, %v1115
          %v7923 = vadd.f32 %v7922, 1e-06
          %v7924 = vrsqrt.pop %v7923
          %v7925 = vmul.f32 %v7916, %v7924
          %v7926 = vmul.f32 %v7925, %v7917
          %v7927 = vmul.f32 %v7926, 0.088388346
          %v7928 = vpack.c.bf16 %v7927, %v7927
          %v7945 = vunpack.c.l.b16 %v3989
          %v7946 = vunpack.c.l.b16 %v3990
          %v7947 = vunpack.c.l.b16 %v3991
          %v7948 = vunpack.c.l.b16 %v3992
          %v7949 = vunpack.c.l.b16 %v3993
          %v7950 = vunpack.c.l.b16 %v3994
          %v7951 = vunpack.c.l.b16 %v3995
          %v7952 = vunpack.c.l.b16 %v3996
          %v7953 = vunpack.c.l.b16 %v3997
          %v7954 = vunpack.c.l.b16 %v3998
          %v7955 = vunpack.c.l.b16 %v3999
          %v7956 = vunpack.c.l.b16 %v4000
          %v7957 = vunpack.c.l.b16 %v4001
          %v7958 = vunpack.c.l.b16 %v4002
          %v7959 = vunpack.c.l.b16 %v4003
          %v7960 = vunpack.c.l.b16 %v4004
          %v7961 = vpack.c.b16 %v7946, %v7945
          %v7962 = vpack.c.b16 %v7948, %v7947
          %v7963 = vpack.c.b16 %v7950, %v7949
          %v7964 = vpack.c.b16 %v7952, %v7951
          %v7965 = vpack.c.b16 %v7954, %v7953
          %v7966 = vpack.c.b16 %v7956, %v7955
          %v7967 = vpack.c.b16 %v7958, %v7957
          %v7968 = vpack.c.b16 %v7960, %v7959
          %7977 = vmatprep.subr.bf16.mxu0 0
          %7978 = vmatpush1.bf16.msra.mxu0 %v7968
          %7979 = vmatprep.subr.bf16.mxu0 0
          %7980 = vmatpush1.bf16.msra.mxu0 %v7967
          %7981 = vmatprep.subr.bf16.mxu0 0
          %7982 = vmatpush1.bf16.msra.mxu0 %v7966
          %7983 = vmatprep.subr.bf16.mxu0 0
          %7984 = vmatpush1.bf16.msra.mxu0 %v7965
          %7985 = vmatprep.subr.bf16.mxu0 0
          %7986 = vmatpush1.bf16.msra.mxu0 %v7964
          %7987 = vmatprep.subr.bf16.mxu0 0
          %7988 = vmatpush1.bf16.msra.mxu0 %v7963
          %7989 = vmatprep.subr.bf16.mxu0 0
          %7990 = vmatpush1.bf16.msra.mxu0 %v7962
          %7991 = vmatprep.subr.bf16.mxu0 0
          %7992 = vmatpush1.bf16.msra.mxu0 %v7961
          %7993 = vmatprep.subr.bf16.mxu0 0
          %7994 = vmatpush2.bf16.msra.mxu0 0
          %7995 = vmatprep.subr.bf16.mxu0 0
          %7996 = vmatpush2.bf16.msra.mxu0 0
          %7997 = vmatprep.subr.bf16.mxu0 0
          %7998 = vmatpush2.bf16.msra.mxu0 0
          %7999 = vmatprep.subr.bf16.mxu0 0
          %8000 = vmatpush2.bf16.msra.mxu0 0
          %8001 = vmatprep.subr.bf16.mxu0 0
          %8002 = vmatpush2.bf16.msra.mxu0 0
          %8003 = vmatprep.subr.bf16.mxu0 0
          %8004 = vmatpush2.bf16.msra.mxu0 0
          %8005 = vmatprep.subr.bf16.mxu0 0
          %8006 = vmatpush2.bf16.msra.mxu0 0
          %8007 = vmatprep.subr.bf16.mxu0 0
          %8008 = vmatpush2.bf16.msra.mxu0 0
          %8009 = vmatprep.mubr.bf16.mxu0 0
          %8010 = vmatmul.mubr.bf16.gmra.mxu0 %v7928
          %v8011 = vpop.f32.mrf.mxu0
          %v8012 = vadd.f32 0.0, %v8011
          %v8013 = vpop.f32.mrf.mxu0
          %v8014 = vpop.f32.mrf.mxu0
          %v8015 = vpop.f32.mrf.mxu0
          %8016 = vdwg.mxu0
          %v8017 = vsel %vm4111, %v8012, -inf
          %8018 = vmax.xlane.f32.xlu0 %v8017
          %v8019 = vpop.xlane.xlu0 %8018
          %vm8020 = vcmp.eq.f32.partialorder %v8012, %v8019
          %v8021 = vsel %vm8020, %v4006, 128
          %v8022 = vsel %vm4111, %v8021, 2147483647
          %v8023 = vand.u32 %v8022, 65535
          %v8024 = vshra.s32 %v8022, 16
          %v8025 = vcvt.s32.f32 %v8023
          %v8026 = vcvt.s32.f32 %v8024
          %8027 = vmin.xlane.f32.xlu0 %v8026
          %v8028 = vpop.xlane.xlu0 %8027
          %vm8029 = vcmp.eq.f32.partialorder %v8026, %v8028
          %v8030 = vsel %vm8029, %v8025, inf
          %8031 = vmin.xlane.f32.xlu0 %v8030
          %v8032 = vpop.xlane.xlu0 %8031
          %v8033 = vcvt.f32.s32 %v8032
          %v8034 = vcvt.f32.s32 %v8028
          %v8035 = vshll.u32 %v8034, 16
          %v8036 = vadd.s32 %v8035, %v8033
          %v8037 = vrot.slane %v8036, 4
          %vm8038 = vcmp.lt.s32.totalorder %v8036, %v8037
          %v8039 = vsel %vm8038, %v8036, %v8037
          %v8040 = vrot.slane %v8039, 2
          %vm8041 = vcmp.lt.s32.totalorder %v8039, %v8040
          %v8042 = vsel %vm8041, %v8039, %v8040
          %v8043 = vrot.slane %v8042, 1
          %vm8044 = vcmp.lt.s32.totalorder %v8042, %v8043
          %v8045 = vsel %vm8044, %v8042, %v8043
          %s8046 = vtos %v8045
          %s8047 = scalar_select %p4015, 0, %s8046
          %p8048 = scmp.eq.s32.totalorder %s8047, 1
          %p8049 = por %p4015, %p8048
          %s8050 = sadd.s32 %s4008, 1
          %v8051 = vstv %s8050
          %vm8052 = vcmp.eq.s32.totalorder %v4006, %v8051
          %v8053 = vstv %s8047
          %v8054 = vsel %vm8052, %v8053, %v4013
        $region205: #{generate_ids.1} parent=119 // loop_footer
          %s4012 = sadd.s32 1, %s4008
        $region206: #{generate_ids.1} parent=119 // loop_footer_branch
          %4007 = sbr.rel target = $region202
        $region207: #{generate_ids.1} parent=119 // loop_exit
          _
        %8055 = vst [vmem:[%s1076] sm:$0x1] %v4013
        %s8056 = sand.u32 %s593, 1
        %s8057 = scalar_lea.sflag [#allocation5], %s8056
        %s8058 = sand.u32 %s593, 1
        %s8059 = scalar_lea.vmem [#allocation35], %s8058
        %s8060 = sand.u32 %s619, 1
        %s8061 = scalar_lea.sflag [#allocation37], %s8060
        %s8062 = sand.u32 %s619, 1
        %s8063 = smul.addr %s8062, 16
        %s8064 = scalar_lea.vmem [#allocation36], %s8063
        // Predicated region
        $region208: #{generate_ids.1} parent=119 // pred_check
          %p8065 = pneg %p603
        $region209: #{generate_ids.1} parent=119 // pred_check_branch
          %8067 = sbr.rel (%p8065) target = $region211
        $region210: #{generate_ids.1} parent=119 // pred_region
          %s8069 = ssub.s32 16, 16
          %8070 = vsyncadd %s8057, %s8069
          %s8071 = smul.addr %s55, 16
          %s8072 = scalar_lea.hbm %s25, %s8071
          %s8074 = sshll.u32 %s8059, 4
          %s8075 = int_to_ptr.vmem [resolvable:$true] %s8074
          %8077 = dma.vmem_to_hbm [thread:$0]  %s8075, 16, %s8072, %s8057
        $region211: #{generate_ids.1} parent=119 // pred_fallthru
          _
        // Predicated region
        $region212: #{generate_ids.1} parent=119 // pred_check
          %p8078 = pneg %p629
        $region213: #{generate_ids.1} parent=119 // pred_check_branch
          %8080 = sbr.rel (%p8078) target = $region215
        $region214: #{generate_ids.1} parent=119 // pred_region
          %s8082 = ssub.s32 256, 256
          %8083 = vsyncadd %s8061, %s8082
          %s8084 = smul.addr %s55, 2
          %s8085 = smul.addr %s8084, 128
          %s8086 = scalar_lea.hbm %s26, %s8085
          %s8087 = sshll.u32 %s8064, 4
          %s8088 = int_to_ptr.vmem [resolvable:$true] %s8087
          %8093 = dma.vmem_to_hbm [thread:$0]  %s8088, 256, %s8086, %s8061, 128, 128, 8
        $region215: #{generate_ids.1} parent=119 // pred_fallthru
          _
      $region120: #{generate_ids.1} parent=5 // pred_fallthru
        _
      %p8094 = scmp.le.s32.totalorder 2, %s50
      // Predicated region
      $region216: #{generate_ids.1} parent=5 // pred_check
        %p8095 = pneg %p8094
      $region217: #{generate_ids.1} parent=5 // pred_check_branch
        %8097 = sbr.rel (%p8095) target = $region219
      $region218: #{generate_ids.1} parent=5 // pred_region
        %s8098 = ssub.s32 %s50, 2
        // Predicated region
        $region220: #{generate_ids.1} parent=218 // pred_check
          %p8099 = pneg %p609
        $region221: #{generate_ids.1} parent=218 // pred_check_branch
          %8101 = sbr.rel (%p8099) target = $region223
        $region222: #{generate_ids.1} parent=218 // pred_region
          %s8102 = sand.u32 %s594, 1
          %s8103 = scalar_lea.sflag [#allocation5], %s8102
          %s8104 = sand.u32 %s594, 1
          %s8105 = scalar_lea.vmem [#allocation35], %s8104
          %8106 = dma.done %s8103, 16
        $region223: #{generate_ids.1} parent=218 // pred_fallthru
          _
        // Predicated region
        $region224: #{generate_ids.1} parent=218 // pred_check
          %p8107 = pneg %p635
        $region225: #{generate_ids.1} parent=218 // pred_check_branch
          %8109 = sbr.rel (%p8107) target = $region227
        $region226: #{generate_ids.1} parent=218 // pred_region
          %s8110 = sand.u32 %s620, 1
          %s8111 = scalar_lea.sflag [#allocation37], %s8110
          %s8112 = sand.u32 %s620, 1
          %s8113 = smul.addr %s8112, 16
          %s8114 = scalar_lea.vmem [#allocation36], %s8113
          %8115 = dma.done %s8111, 256
        $region227: #{generate_ids.1} parent=218 // pred_fallthru
          _
      $region219: #{generate_ids.1} parent=5 // pred_fallthru
        _
    $region6: #{generate_ids.1} parent=1 // loop_footer
      %s54 = sadd.s32 1, %s50
    $region7: #{generate_ids.1} parent=1 // loop_footer_branch
      %49 = sbr.rel target = $region3
    $region8: #{generate_ids.1} parent=1 // loop_exit
      _
    %8116 = vsyncpa [#allocation4], 1
    %s8117 = scalar_lea.sflag [#allocation4], 1
    %8118 = vsyncpa %s8117, 1
    %8119 = vsyncpa [#allocation7], 1
    %8120 = vsyncpa [#allocation10], 1
    %8121 = vsyncpa [#allocation13], 1
    %8122 = vsyncpa [#allocation16], 1
    %8123 = vsyncpa [#allocation19], 1
    %8124 = vsyncpa [#allocation22], 1
    %8125 = vsyncpa [#allocation25], 1
    %8126 = vsyncpa [#allocation28], 1
    %8127 = vsyncpa [#allocation31], 1
    %8128 = vsyncpa [#allocation34], 1
    %8129 = vsyncpa [#allocation5], 1
    %s8130 = scalar_lea.sflag [#allocation5], 1
    %8131 = vsyncpa %s8130, 1
    %8132 = vsyncpa [#allocation37], 1
    %s8133 = scalar_lea.sflag [#allocation37], 1
    %8134 = vsyncpa %s8133, 1

</llo_original>
